<compile_context>
chip_gen: v7x
topology: tpu7x:2x2x1
jax: 0.10.0
libtpu: 0.0.40
codegen_flags: <defaults>
</compile_context>

<pallas_src>
import functools

import jax
import jax.numpy as jnp
from jax.experimental import pallas as pl
from jax.experimental.pallas import tpu as pltpu

# ----------------------------- dataset metadata (from the PyTorch module) ----
AVAILABLE_DATASETS_MOS_TYPES = {
    'live': 'dmos', 'csiq': 'dmos', 'tid2013': 'mos', 'kadid10k': 'mos',
    'flive': 'mos', 'spaq': 'mos', 'clive': 'mos', 'koniq10k': 'mos'}
AVAILABLE_DATASETS_RANGES = {
    'live': (1, 100), 'csiq': (0, 1), 'tid2013': (0, 9), 'kadid10k': (1, 5),
    'flive': (1, 100), 'spaq': (1, 100), 'clive': (1, 100), 'koniq10k': (1, 100)}


def _rup(x, m):
    return ((x + m - 1) // m) * m


# ----------------------------- fused matmul (conv / linear) kernel -----------
def _mm_kernel(x_ref, w_ref, b_ref, o_ref, *, relu):
    acc = jnp.dot(x_ref[...], w_ref[...], preferred_element_type=jnp.float32)
    acc = acc + b_ref[...]
    if relu:
        acc = jnp.maximum(acc, 0.0)
    o_ref[...] = acc.astype(o_ref.dtype)


def _mm_res_kernel(x_ref, w_ref, b_ref, r_ref, o_ref, *, relu):
    acc = jnp.dot(x_ref[...], w_ref[...], preferred_element_type=jnp.float32)
    acc = acc + b_ref[...] + r_ref[...].astype(jnp.float32)
    if relu:
        acc = jnp.maximum(acc, 0.0)
    o_ref[...] = acc.astype(o_ref.dtype)


def matmul_fused(x, w, b, residual=None, relu=False, out_dtype=jnp.bfloat16):
    """(M, Kp) @ (Kp, Np) + b [+ residual], optional ReLU.

    w is pre-padded bf16 (Kp, Np), b is pre-padded f32 (1, Np).  Single K step
    (K folded into one grid iteration), bf16 MXU inputs, f32 accumulation.
    """
    M, K = x.shape
    Kp, Np = w.shape
    assert K == Kp, (K, Kp)
    assert Np % 128 == 0, Np
    x = x.astype(jnp.bfloat16)

    if M <= 512:
        Mp = _rup(max(M, 8), 8)
        tm = Mp
    else:
        Mp = _rup(M, 256)
        tm = 256
    if Mp != M:
        x = jnp.pad(x, ((0, Mp - M), (0, 0)))
    tn = 256 if Np % 256 == 0 else 128
    grid = (Mp // tm, Np // tn)

    x_spec = pl.BlockSpec((tm, Kp), lambda i, j: (i, 0))
    w_spec = pl.BlockSpec((Kp, tn), lambda i, j: (0, j))
    b_spec = pl.BlockSpec((1, tn), lambda i, j: (0, j))
    o_spec = pl.BlockSpec((tm, tn), lambda i, j: (i, j))

    if residual is None:
        kernel = functools.partial(_mm_kernel, relu=relu)
        in_specs = [x_spec, w_spec, b_spec]
        args = (x, w, b)
    else:
        r = residual.astype(jnp.bfloat16)
        if Mp != M:
            r = jnp.pad(r, ((0, Mp - M), (0, 0)))
        kernel = functools.partial(_mm_res_kernel, relu=relu)
        r_spec = pl.BlockSpec((tm, tn), lambda i, j: (i, j))
        in_specs = [x_spec, w_spec, b_spec, r_spec]
        args = (x, w, b, r)

    out = pl.pallas_call(
        kernel,
        out_shape=jax.ShapeDtypeStruct((Mp, Np), out_dtype),
        grid_spec=pltpu.PrefetchScalarGridSpec(
            num_scalar_prefetch=0, grid=grid,
            in_specs=in_specs, out_specs=o_spec),
        compiler_params=pltpu.CompilerParams(
            dimension_semantics=("parallel", "parallel")),
    )(*args)
    if Mp != M:
        out = out[:M]
    return out


# ----------------------------- convolutions ----------------------------------
def conv_bn_act(x, cp, *, stride=1, pad=0, relu=True, residual=None):
    """Conv (inference-BN folded into cp['w'], cp['b']) + optional fused add+ReLU.

    x: NHWC bf16 activation with channels already padded to a multiple of 128.
    cp: packed conv dict {'w': (Kp,Np) bf16, 'b': (1,Np) f32, 'kh', 'kw'}.
    """
    B, H, W, C = x.shape
    kh, kw = cp['kh'], cp['kw']
    Kp, Np = cp['w'].shape

    if kh == 1 and kw == 1:
        if stride > 1:                        # 1x1 stride-s conv == subsample + matmul
            x = x[:, ::stride, ::stride, :]
            B, H, W, C = x.shape
        assert C == Kp, (C, Kp)
        Hout, Wout = H, W
        xm = x.reshape(B * H * W, C)
    else:
        Hout = (H + 2 * pad - kh) // stride + 1
        Wout = (W + 2 * pad - kw) // stride + 1
        xp = jnp.pad(x.astype(jnp.bfloat16),
                     ((0, 0), (pad, pad), (pad, pad), (0, 0)))
        cols = [xp[:, i:i + stride * Hout:stride, j:j + stride * Wout:stride, :]
                for i in range(kh) for j in range(kw)]
        K = kh * kw * C
        if K < Kp:                            # zero block so K matches the padded weight
            cols.append(jnp.zeros((B, Hout, Wout, Kp - K), jnp.bfloat16))
        xm = jnp.concatenate(cols, axis=-1).reshape(B * Hout * Wout, Kp)

    rm = None
    if residual is not None:
        rm = residual.reshape(B * Hout * Wout, Np)
    out = matmul_fused(xm, cp['w'], cp['b'], residual=rm, relu=relu)
    return out.reshape(B, Hout, Wout, Np)


# ----------------------------- max pool 3x3 / stride 2 / pad 1 ---------------
def _maxpool_kernel(ee_ref, eo_ref, oe_ref, oo_ref, o_ref):
    ee = ee_ref[...]
    eo = eo_ref[...]
    oe = oe_ref[...]
    oo = oo_ref[...]
    Ho, Wo = oo.shape[1], oo.shape[2]
    m = oo
    m = jnp.maximum(m, ee[:, :Ho, :Wo, :])
    m = jnp.maximum(m, ee[:, :Ho, 1:, :])
    m = jnp.maximum(m, ee[:, 1:, :Wo, :])
    m = jnp.maximum(m, ee[:, 1:, 1:, :])
    m = jnp.maximum(m, eo[:, :Ho, :, :])
    m = jnp.maximum(m, eo[:, 1:, :, :])
    m = jnp.maximum(m, oe[:, :, :Wo, :])
    m = jnp.maximum(m, oe[:, :, 1:, :])
    o_ref[...] = m


def maxpool3x3s2(x):
    """MaxPool2d(kernel_size=3, stride=2, padding=1) — reads the input ~once."""
    B, H, W, C = x.shape
    Ho = (H + 2 - 3) // 2 + 1
    Wo = (W + 2 - 3) // 2 + 1
    xp = jnp.pad(x, ((0, 0), (1, 1), (1, 1), (0, 0)), constant_values=-jnp.inf)
    # even/odd split (cheap XLA strided slices, fused) -> only dense slices in-kernel.
    xee = xp[:, 0::2, 0::2, :][:, :Ho + 1, :Wo + 1, :]
    xeo = xp[:, 0::2, 1::2, :][:, :Ho + 1, :Wo, :]
    xoe = xp[:, 1::2, 0::2, :][:, :Ho, :Wo + 1, :]
    xoo = xp[:, 1::2, 1::2, :][:, :Ho, :Wo, :]
    return pl.pallas_call(
        _maxpool_kernel,
        out_shape=jax.ShapeDtypeStruct((B, Ho, Wo, C), x.dtype),
        grid_spec=pltpu.PrefetchScalarGridSpec(
            num_scalar_prefetch=0, grid=(B,),
            in_specs=[
                pl.BlockSpec((1, Ho + 1, Wo + 1, C), lambda b: (b, 0, 0, 0)),
                pl.BlockSpec((1, Ho + 1, Wo, C), lambda b: (b, 0, 0, 0)),
                pl.BlockSpec((1, Ho, Wo + 1, C), lambda b: (b, 0, 0, 0)),
                pl.BlockSpec((1, Ho, Wo, C), lambda b: (b, 0, 0, 0)),
            ],
            out_specs=pl.BlockSpec((1, Ho, Wo, C), lambda b: (b, 0, 0, 0))),
        compiler_params=pltpu.CompilerParams(dimension_semantics=("parallel",)),
    )(xee, xeo, xoe, xoo)


# ----------------------------- global-avg-pool + L2-normalize (fused) --------
def _gap_l2_kernel(x_ref, o_ref):
    x = x_ref[...].astype(jnp.float32)              # (B, HW, C)
    f = jnp.mean(x, axis=1)                         # AdaptiveAvgPool2d(1) -> (B, C)
    ss = jnp.sum(f * f, axis=-1, keepdims=True)
    o_ref[...] = f * jax.lax.rsqrt(jnp.maximum(ss, 1e-24))   # == F.normalize(f, dim=1)


def global_avg_pool_l2norm(x):
    B, H, W, C = x.shape
    xr = x.reshape(B, H * W, C)
    return pl.pallas_call(
        _gap_l2_kernel,
        out_shape=jax.ShapeDtypeStruct((B, C), jnp.float32))(xr)


# ----------------------------- parameters (deterministic init, pre-packed) ---
def _he_normal(key, shape, fan_in):
    return jax.random.normal(key, shape, jnp.float32) * jnp.sqrt(2.0 / fan_in)


def _make_conv_bn(key, kh, kw, cin, cout):
    k1, k2, k3, k4, k5 = jax.random.split(key, 5)
    w = _he_normal(k1, (kh, kw, cin, cout), kh * kw * cin)
    gamma = 1.0 + 0.1 * jax.random.normal(k2, (cout,), jnp.float32)
    beta = 0.1 * jax.random.normal(k3, (cout,), jnp.float32)
    mean = 0.1 * jax.random.normal(k4, (cout,), jnp.float32)
    var = jax.random.uniform(k5, (cout,), jnp.float32, 0.5, 1.5)
    scale = gamma / jnp.sqrt(var + 1e-5)               # fold inference BN
    return w * scale, beta - mean * scale


def _pack_conv(w, b, *, pad_cin):
    """Fold conv weight to padded bf16 matmul form once at init (hoisted padding)."""
    kh, kw, cin, cout = w.shape
    coutp = _rup(cout, 128)
    if pad_cin:                       # activation feeding this conv is channel-padded
        cinp = _rup(cin, 128)
        w4 = jnp.pad(w, ((0, 0), (0, 0), (0, cinp - cin), (0, coutp - cout)))
        w2 = w4.reshape(kh * kw * cinp, coutp)
    else:                             # stem: raw 3-channel image, pad flattened K
        w2 = w.reshape(kh * kw * cin, cout)
        kp = _rup(kh * kw * cin, 128)
        w2 = jnp.pad(w2, ((0, kp - kh * kw * cin), (0, coutp - cout)))
    bp = jnp.pad(b, (0, coutp - cout)).astype(jnp.float32).reshape(1, coutp)
    return {'w': w2.astype(jnp.bfloat16), 'b': bp, 'kh': kh, 'kw': kw}


def _make_bottleneck(key, cin, mid, stride):
    k = jax.random.split(key, 4)
    p = {'stride': stride}
    w, b = _make_conv_bn(k[0], 1, 1, cin, mid)
    p['conv1'] = _pack_conv(w, b, pad_cin=True)
    w, b = _make_conv_bn(k[1], 3, 3, mid, mid)
    p['conv2'] = _pack_conv(w, b, pad_cin=True)
    w, b = _make_conv_bn(k[2], 1, 1, mid, mid * 4)
    p['conv3'] = _pack_conv(w, b, pad_cin=True)
    if stride != 1 or cin != mid * 4:
        w, b = _make_conv_bn(k[3], 1, 1, cin, mid * 4)
        p['down'] = _pack_conv(w, b, pad_cin=True)
    else:
        p['down'] = None
    return p


def make_arniqa_params(key, width=8, blocks=(1, 1, 1, 1), embedding_dim=32):
    keys = jax.random.split(key, 2 + len(blocks))
    params = {}
    w, b = _make_conv_bn(keys[0], 7, 7, 3, width)
    params['stem'] = _pack_conv(w, b, pad_cin=False)
    stages, cin = [], width
    for i, nb in enumerate(blocks):
        mid = width * (2 ** i)
        stride = 1 if i == 0 else 2
        skeys = jax.random.split(keys[1 + i], nb)
        blks = []
        for bidx in range(nb):
            blks.append(_make_bottleneck(skeys[bidx], cin, mid,
                                         stride if bidx == 0 else 1))
            cin = mid * 4
        stages.append(blks)
    params['stages'] = stages
    feat_dim = cin
    params['feat_dim'] = feat_dim
    params['embedding_dim'] = embedding_dim
    k = jax.random.split(keys[-1], 6)
    params['proj1'] = _pack_conv(
        _he_normal(k[0], (1, 1, feat_dim, feat_dim), feat_dim),
        0.01 * jax.random.normal(k[1], (feat_dim,), jnp.float32), pad_cin=True)
    params['proj2'] = _pack_conv(
        _he_normal(k[2], (1, 1, feat_dim, embedding_dim), feat_dim),
        0.01 * jax.random.normal(k[3], (embedding_dim,), jnp.float32), pad_cin=True)
    params['reg'] = _pack_conv(
        _he_normal(k[4], (1, 1, 2 * feat_dim, 1), 2 * feat_dim),
        jnp.array([3.0], jnp.float32), pad_cin=True)
    return params


# ----------------------------- forward passes --------------------------------
def bottleneck_forward(x, p):
    s = p['stride']
    if p['down'] is not None:
        identity = conv_bn_act(x, p['down'], stride=s, relu=False)
    else:
        identity = x
    out = conv_bn_act(x, p['conv1'], relu=True)
    out = conv_bn_act(out, p['conv2'], stride=s, pad=1, relu=True)
    # residual add + ReLU fused into the 3rd 1x1 conv's matmul epilogue
    out = conv_bn_act(out, p['conv3'], relu=True, residual=identity)
    return out


def encoder_forward(x, params, compute_projection=False):
    """ResNet-style encoder. x: NHWC bf16.  Returns (f, g) like ResNet.forward."""
    x = conv_bn_act(x, params['stem'], stride=2, pad=3, relu=True)
    x = maxpool3x3s2(x)
    for stage in params['stages']:
        for blk in stage:
            x = bottleneck_forward(x, blk)
    f = global_avg_pool_l2norm(x)[:, :params['feat_dim']]     # (B, feat_dim), f32
    if not compute_projection:
        # ARNIQA.forward discards the projection head output (`f, _ = encoder(img)`).
        return f, None
    g = matmul_fused(f, params['proj1']['w'], params['proj1']['b'], relu=True)
    g = matmul_fused(g, params['proj2']['w'], params['proj2']['b'],
                     relu=False, out_dtype=jnp.float32)[:, :params['embedding_dim']]
    g = g / jnp.maximum(jnp.sqrt(jnp.sum(g * g, axis=1, keepdims=True)), 1e-12)
    return f, g


def _scale_score(score, regressor_dataset, new_range=(0.0, 1.0)):
    lo, hi = AVAILABLE_DATASETS_RANGES[regressor_dataset]
    scaling = (new_range[1] - new_range[0]) / (hi - lo)
    scaled = new_range[0] + (score - lo) * scaling
    if AVAILABLE_DATASETS_MOS_TYPES[regressor_dataset] == 'dmos':
        scaled = new_range[1] - scaled
    return scaled


def arniqa_forward(img_nchw, params, return_embedding=False, scale_score=True,
                   regressor_dataset='kadid10k'):
    # layout: convert PyTorch NCHW -> NHWC for the TPU kernels.
    img = jnp.transpose(img_nchw, (0, 2, 3, 1)).astype(jnp.float32)
    B, H, W, C = img.shape
    # TODO(synk): torchvision T.Resize((128,128)) uses antialiased bilinear to a fixed
    # size; here we bilinearly downscale to half resolution of the (small) input.
    img_ds = jax.image.resize(img, (B, H // 2, W // 2, C), method='bilinear')
    f, _ = encoder_forward(img.astype(jnp.bfloat16), params)
    f_ds, _ = encoder_forward(img_ds.astype(jnp.bfloat16), params)
    f_combined = jnp.concatenate([f, f_ds], axis=1)           # torch.hstack
    score = matmul_fused(f_combined, params['reg']['w'], params['reg']['b'],
                         relu=False, out_dtype=jnp.float32)[:, :1]   # Ridge regressor
    if scale_score:
        score = _scale_score(score, regressor_dataset)
    if return_embedding:
        return score, f_combined
    return score


# ----------------------------- main -------------------------------------------
if __name__ == "__main__":
    key = jax.random.PRNGKey(0)
    k_param, k_img = jax.random.split(key)
    params = make_arniqa_params(k_param, width=8, blocks=(1, 1, 1, 1),
                                embedding_dim=32)
    # Small NCHW input, like the PyTorch module's expected layout.
    img = jax.random.normal(k_img, (2, 3, 32, 32), jnp.float32)

    fwd = jax.jit(lambda im: arniqa_forward(im, params, return_embedding=True,
                                            scale_score=True,
                                            regressor_dataset='kadid10k'))
    score, f_combined = fwd(img)
    score = jax.block_until_ready(score)
    f_combined = jax.block_until_ready(f_combined)

    assert score.shape == (2, 1)
    assert f_combined.shape == (2, 2 * params['feat_dim'])
    assert bool(jnp.all(jnp.isfinite(score)))
    assert bool(jnp.all(jnp.isfinite(f_combined)))
    print("KERNEL_OK")
</pallas_src>

<mosaic_0001>
module attributes {stable_mosaic.version = 11 : i64} {
  func.func @_mm_kernel(%arg0: i32, %arg1: i32, %arg2: memref<512x256xbf16, #tpu.memory_space<vmem>>, %arg3: memref<256x128xbf16, #tpu.memory_space<vmem>>, %arg4: memref<1x128xf32, #tpu.memory_space<vmem>>, %arg5: memref<512x128xbf16, #tpu.memory_space<vmem>>) attributes {dimension_semantics = [#tpu.dimension_semantics<parallel>, #tpu.dimension_semantics<parallel>], iteration_bounds = array<i64: 1, 1>, scalar_prefetch = 0 : i64, scratch_operands = 0 : i64, tpu.core_type = #tpu.core_type<tc>, window_params = [{transform_indices = @transform_0, window_bounds = array<i64: 512, 256>}, {transform_indices = @transform_1, window_bounds = array<i64: 256, 128>}, {transform_indices = @transform_2, window_bounds = array<i64: 1, 128>}, {transform_indices = @transform_3, window_bounds = array<i64: 512, 128>}]} {
    %c0 = arith.constant 0 : index
    %c0_0 = arith.constant 0 : index
    %0 = vector.load %arg2[%c0, %c0_0] : memref<512x256xbf16, #tpu.memory_space<vmem>>, vector<512x256xbf16>
    %c0_1 = arith.constant 0 : index
    %c0_2 = arith.constant 0 : index
    %1 = vector.load %arg3[%c0_1, %c0_2] : memref<256x128xbf16, #tpu.memory_space<vmem>>, vector<256x128xbf16>
    %cst = arith.constant dense<0.000000e+00> : vector<512x128xf32>
    %2 = tpu.matmul %0, %1, %cst {dimension_numbers = #tpu.dot_dimension_numbers<[1], [0], [0], [1], [0, 0, 1, 1], [], []>} : vector<512x256xbf16>, vector<256x128xbf16>, vector<512x128xf32> -> vector<512x128xf32>
    %c0_3 = arith.constant 0 : index
    %c0_4 = arith.constant 0 : index
    %3 = vector.load %arg4[%c0_3, %c0_4] : memref<1x128xf32, #tpu.memory_space<vmem>>, vector<1x128xf32>
    %4 = vector.broadcast %3 : vector<1x128xf32> to vector<512x128xf32>
    %5 = arith.addf %2, %4 : vector<512x128xf32>
    %cst_5 = arith.constant 0.000000e+00 : f32
    %6 = vector.broadcast %cst_5 : f32 to vector<512x128xf32>
    %7 = arith.maximumf %5, %6 : vector<512x128xf32>
    %8 = arith.truncf %7 : vector<512x128xf32> to vector<512x128xbf16>
    %c0_6 = arith.constant 0 : index
    %c0_7 = arith.constant 0 : index
    %9 = vector.load %arg5[%c0_6, %c0_7] : memref<512x128xbf16, #tpu.memory_space<vmem>>, vector<512x128xbf16>
    tpu.vector_store %arg5[%c0_6, %c0_7], %8 {strides = array<i32>} : memref<512x128xbf16, #tpu.memory_space<vmem>>, vector<512x128xbf16>,
    return
  }
  func.func @transform_0(%arg0: i32, %arg1: i32) -> (i32, i32) {
    %c0_i32 = arith.constant 0 : i32
    %c0_i32_0 = arith.constant 0 : i32
    return %arg0, %c0_i32 : i32, i32
  }
  func.func @transform_1(%arg0: i32, %arg1: i32) -> (i32, i32) {
    %c0_i32 = arith.constant 0 : i32
    %c0_i32_0 = arith.constant 0 : i32
    return %c0_i32, %arg1 : i32, i32
  }
  func.func @transform_2(%arg0: i32, %arg1: i32) -> (i32, i32) {
    %c0_i32 = arith.constant 0 : i32
    %c0_i32_0 = arith.constant 0 : i32
    return %c0_i32, %arg1 : i32, i32
  }
  func.func @transform_3(%arg0: i32, %arg1: i32) -> (i32, i32) {
    %c0_i32 = arith.constant 0 : i32
    return %arg0, %arg1 : i32, i32
  }
}

module attributes {stable_mosaic.version = 11 : i64} {
  func.func @_maxpool_kernel(%arg0: i32, %arg1: memref<1x9x9x128xbf16, #tpu.memory_space<vmem>>, %arg2: memref<1x9x8x128xbf16, #tpu.memory_space<vmem>>, %arg3: memref<1x8x9x128xbf16, #tpu.memory_space<vmem>>, %arg4: memref<1x8x8x128xbf16, #tpu.memory_space<vmem>>, %arg5: memref<1x8x8x128xbf16, #tpu.memory_space<vmem>>) attributes {dimension_semantics = [#tpu.dimension_semantics<parallel>], iteration_bounds = array<i64: 2>, scalar_prefetch = 0 : i64, scratch_operands = 0 : i64, tpu.core_type = #tpu.core_type<tc>, window_params = [{transform_indices = @transform_0, window_bounds = array<i64: 1, 9, 9, 128>}, {transform_indices = @transform_1, window_bounds = array<i64: 1, 9, 8, 128>}, {transform_indices = @transform_2, window_bounds = array<i64: 1, 8, 9, 128>}, {transform_indices = @transform_3, window_bounds = array<i64: 1, 8, 8, 128>}, {transform_indices = @transform_4, window_bounds = array<i64: 1, 8, 8, 128>}]} {
    %c0 = arith.constant 0 : index
    %c0_0 = arith.constant 0 : index
    %c0_1 = arith.constant 0 : index
    %c0_2 = arith.constant 0 : index
    %0 = vector.load %arg1[%c0, %c0_0, %c0_1, %c0_2] : memref<1x9x9x128xbf16, #tpu.memory_space<vmem>>, vector<1x9x9x128xbf16>
    %c0_3 = arith.constant 0 : index
    %c0_4 = arith.constant 0 : index
    %c0_5 = arith.constant 0 : index
    %c0_6 = arith.constant 0 : index
    %1 = vector.load %arg2[%c0_3, %c0_4, %c0_5, %c0_6] : memref<1x9x8x128xbf16, #tpu.memory_space<vmem>>, vector<1x9x8x128xbf16>
    %c0_7 = arith.constant 0 : index
    %c0_8 = arith.constant 0 : index
    %c0_9 = arith.constant 0 : index
    %c0_10 = arith.constant 0 : index
    %2 = vector.load %arg3[%c0_7, %c0_8, %c0_9, %c0_10] : memref<1x8x9x128xbf16, #tpu.memory_space<vmem>>, vector<1x8x9x128xbf16>
    %c0_11 = arith.constant 0 : index
    %c0_12 = arith.constant 0 : index
    %c0_13 = arith.constant 0 : index
    %c0_14 = arith.constant 0 : index
    %3 = vector.load %arg4[%c0_11, %c0_12, %c0_13, %c0_14] : memref<1x8x8x128xbf16, #tpu.memory_space<vmem>>, vector<1x8x8x128xbf16>
    %4 = vector.extract_strided_slice %0 {offsets = [0, 0, 0, 0], sizes = [1, 8, 8, 128], strides = [1, 1, 1, 1]} : vector<1x9x9x128xbf16> to vector<1x8x8x128xbf16>
    %5 = arith.maximumf %3, %4 : vector<1x8x8x128xbf16>
    %6 = vector.extract_strided_slice %0 {offsets = [0, 0, 1, 0], sizes = [1, 8, 8, 128], strides = [1, 1, 1, 1]} : vector<1x9x9x128xbf16> to vector<1x8x8x128xbf16>
    %7 = arith.maximumf %5, %6 : vector<1x8x8x128xbf16>
    %8 = vector.extract_strided_slice %0 {offsets = [0, 1, 0, 0], sizes = [1, 8, 8, 128], strides = [1, 1, 1, 1]} : vector<1x9x9x128xbf16> to vector<1x8x8x128xbf16>
    %9 = arith.maximumf %7, %8 : vector<1x8x8x128xbf16>
    %10 = vector.extract_strided_slice %0 {offsets = [0, 1, 1, 0], sizes = [1, 8, 8, 128], strides = [1, 1, 1, 1]} : vector<1x9x9x128xbf16> to vector<1x8x8x128xbf16>
    %11 = arith.maximumf %9, %10 : vector<1x8x8x128xbf16>
    %12 = vector.extract_strided_slice %1 {offsets = [0, 0, 0, 0], sizes = [1, 8, 8, 128], strides = [1, 1, 1, 1]} : vector<1x9x8x128xbf16> to vector<1x8x8x128xbf16>
    %13 = arith.maximumf %11, %12 : vector<1x8x8x128xbf16>
    %14 = vector.extract_strided_slice %1 {offsets = [0, 1, 0, 0], sizes = [1, 8, 8, 128], strides = [1, 1, 1, 1]} : vector<1x9x8x128xbf16> to vector<1x8x8x128xbf16>
    %15 = arith.maximumf %13, %14 : vector<1x8x8x128xbf16>
    %16 = vector.extract_strided_slice %2 {offsets = [0, 0, 0, 0], sizes = [1, 8, 8, 128], strides = [1, 1, 1, 1]} : vector<1x8x9x128xbf16> to vector<1x8x8x128xbf16>
    %17 = arith.maximumf %15, %16 : vector<1x8x8x128xbf16>
    %18 = vector.extract_strided_slice %2 {offsets = [0, 0, 1, 0], sizes = [1, 8, 8, 128], strides = [1, 1, 1, 1]} : vector<1x8x9x128xbf16> to vector<1x8x8x128xbf16>
    %19 = arith.maximumf %17, %18 : vector<1x8x8x128xbf16>
    %c0_15 = arith.constant 0 : index
    %c0_16 = arith.constant 0 : index
    %c0_17 = arith.constant 0 : index
    %c0_18 = arith.constant 0 : index
    %20 = vector.load %arg5[%c0_15, %c0_16, %c0_17, %c0_18] : memref<1x8x8x128xbf16, #tpu.memory_space<vmem>>, vector<1x8x8x128xbf16>
    tpu.vector_store %arg5[%c0_15, %c0_16, %c0_17, %c0_18], %19 {strides = array<i32>} : memref<1x8x8x128xbf16, #tpu.memory_space<vmem>>, vector<1x8x8x128xbf16>,
    return
  }
  func.func @transform_0(%arg0: i32) -> (i32, i32, i32, i32) {
    %c0_i32 = arith.constant 0 : i32
    %c0_i32_0 = arith.constant 0 : i32
    %c0_i32_1 = arith.constant 0 : i32
    %c0_i32_2 = arith.constant 0 : i32
    return %arg0, %c0_i32, %c0_i32_0, %c0_i32_1 : i32, i32, i32, i32
  }
  func.func @transform_1(%arg0: i32) -> (i32, i32, i32, i32) {
    %c0_i32 = arith.constant 0 : i32
    %c0_i32_0 = arith.constant 0 : i32
    %c0_i32_1 = arith.constant 0 : i32
    %c0_i32_2 = arith.constant 0 : i32
    return %arg0, %c0_i32, %c0_i32_0, %c0_i32_1 : i32, i32, i32, i32
  }
  func.func @transform_2(%arg0: i32) -> (i32, i32, i32, i32) {
    %c0_i32 = arith.constant 0 : i32
    %c0_i32_0 = arith.constant 0 : i32
    %c0_i32_1 = arith.constant 0 : i32
    %c0_i32_2 = arith.constant 0 : i32
    return %arg0, %c0_i32, %c0_i32_0, %c0_i32_1 : i32, i32, i32, i32
  }
  func.func @transform_3(%arg0: i32) -> (i32, i32, i32, i32) {
    %c0_i32 = arith.constant 0 : i32
    %c0_i32_0 = arith.constant 0 : i32
    %c0_i32_1 = arith.constant 0 : i32
    %c0_i32_2 = arith.constant 0 : i32
    return %arg0, %c0_i32, %c0_i32_0, %c0_i32_1 : i32, i32, i32, i32
  }
  func.func @transform_4(%arg0: i32) -> (i32, i32, i32, i32) {
    %c0_i32 = arith.constant 0 : i32
    %c0_i32_0 = arith.constant 0 : i32
    %c0_i32_1 = arith.constant 0 : i32
    %c0_i32_2 = arith.constant 0 : i32
    return %arg0, %c0_i32, %c0_i32_0, %c0_i32_1 : i32, i32, i32, i32
  }
}

module attributes {stable_mosaic.version = 11 : i64} {
  func.func @_mm_kernel(%arg0: i32, %arg1: i32, %arg2: memref<128x128xbf16, #tpu.memory_space<vmem>>, %arg3: memref<128x128xbf16, #tpu.memory_space<vmem>>, %arg4: memref<1x128xf32, #tpu.memory_space<vmem>>, %arg5: memref<128x128xbf16, #tpu.memory_space<vmem>>) attributes {dimension_semantics = [#tpu.dimension_semantics<parallel>, #tpu.dimension_semantics<parallel>], iteration_bounds = array<i64: 1, 1>, scalar_prefetch = 0 : i64, scratch_operands = 0 : i64, tpu.core_type = #tpu.core_type<tc>, window_params = [{transform_indices = @transform_0, window_bounds = array<i64: 128, 128>}, {transform_indices = @transform_1, window_bounds = array<i64: 128, 128>}, {transform_indices = @transform_2, window_bounds = array<i64: 1, 128>}, {transform_indices = @transform_3, window_bounds = array<i64: 128, 128>}]} {
    %c0 = arith.constant 0 : index
    %c0_0 = arith.constant 0 : index
    %0 = vector.load %arg2[%c0, %c0_0] : memref<128x128xbf16, #tpu.memory_space<vmem>>, vector<128x128xbf16>
    %c0_1 = arith.constant 0 : index
    %c0_2 = arith.constant 0 : index
    %1 = vector.load %arg3[%c0_1, %c0_2] : memref<128x128xbf16, #tpu.memory_space<vmem>>, vector<128x128xbf16>
    %cst = arith.constant dense<0.000000e+00> : vector<128x128xf32>
    %2 = tpu.matmul %0, %1, %cst {dimension_numbers = #tpu.dot_dimension_numbers<[1], [0], [0], [1], [0, 0, 1, 1], [], []>} : vector<128x128xbf16>, vector<128x128xbf16>, vector<128x128xf32> -> vector<128x128xf32>
    %c0_3 = arith.constant 0 : index
    %c0_4 = arith.constant 0 : index
    %3 = vector.load %arg4[%c0_3, %c0_4] : memref<1x128xf32, #tpu.memory_space<vmem>>, vector<1x128xf32>
    %4 = vector.broadcast %3 : vector<1x128xf32> to vector<128x128xf32>
    %5 = arith.addf %2, %4 : vector<128x128xf32>
    %cst_5 = arith.constant 0.000000e+00 : f32
    %6 = vector.broadcast %cst_5 : f32 to vector<128x128xf32>
    %7 = arith.maximumf %5, %6 : vector<128x128xf32>
    %8 = arith.truncf %7 : vector<128x128xf32> to vector<128x128xbf16>
    %c0_6 = arith.constant 0 : index
    %c0_7 = arith.constant 0 : index
    %9 = vector.load %arg5[%c0_6, %c0_7] : memref<128x128xbf16, #tpu.memory_space<vmem>>, vector<128x128xbf16>
    tpu.vector_store %arg5[%c0_6, %c0_7], %8 {strides = array<i32>} : memref<128x128xbf16, #tpu.memory_space<vmem>>, vector<128x128xbf16>,
    return
  }
  func.func @transform_0(%arg0: i32, %arg1: i32) -> (i32, i32) {
    %c0_i32 = arith.constant 0 : i32
    %c0_i32_0 = arith.constant 0 : i32
    return %arg0, %c0_i32 : i32, i32
  }
  func.func @transform_1(%arg0: i32, %arg1: i32) -> (i32, i32) {
    %c0_i32 = arith.constant 0 : i32
    %c0_i32_0 = arith.constant 0 : i32
    return %c0_i32, %arg1 : i32, i32
  }
  func.func @transform_2(%arg0: i32, %arg1: i32) -> (i32, i32) {
    %c0_i32 = arith.constant 0 : i32
    %c0_i32_0 = arith.constant 0 : i32
    return %c0_i32, %arg1 : i32, i32
  }
  func.func @transform_3(%arg0: i32, %arg1: i32) -> (i32, i32) {
    %c0_i32 = arith.constant 0 : i32
    return %arg0, %arg1 : i32, i32
  }
}

module attributes {stable_mosaic.version = 11 : i64} {
  func.func @_mm_kernel(%arg0: i32, %arg1: i32, %arg2: memref<128x1152xbf16, #tpu.memory_space<vmem>>, %arg3: memref<1152x128xbf16, #tpu.memory_space<vmem>>, %arg4: memref<1x128xf32, #tpu.memory_space<vmem>>, %arg5: memref<128x128xbf16, #tpu.memory_space<vmem>>) attributes {dimension_semantics = [#tpu.dimension_semantics<parallel>, #tpu.dimension_semantics<parallel>], iteration_bounds = array<i64: 1, 1>, scalar_prefetch = 0 : i64, scratch_operands = 0 : i64, tpu.core_type = #tpu.core_type<tc>, window_params = [{transform_indices = @transform_0, window_bounds = array<i64: 128, 1152>}, {transform_indices = @transform_1, window_bounds = array<i64: 1152, 128>}, {transform_indices = @transform_2, window_bounds = array<i64: 1, 128>}, {transform_indices = @transform_3, window_bounds = array<i64: 128, 128>}]} {
    %c0 = arith.constant 0 : index
    %c0_0 = arith.constant 0 : index
    %0 = vector.load %arg2[%c0, %c0_0] : memref<128x1152xbf16, #tpu.memory_space<vmem>>, vector<128x1152xbf16>
    %c0_1 = arith.constant 0 : index
    %c0_2 = arith.constant 0 : index
    %1 = vector.load %arg3[%c0_1, %c0_2] : memref<1152x128xbf16, #tpu.memory_space<vmem>>, vector<1152x128xbf16>
    %cst = arith.constant dense<0.000000e+00> : vector<128x128xf32>
    %2 = tpu.matmul %0, %1, %cst {dimension_numbers = #tpu.dot_dimension_numbers<[1], [0], [0], [1], [0, 0, 1, 1], [], []>} : vector<128x1152xbf16>, vector<1152x128xbf16>, vector<128x128xf32> -> vector<128x128xf32>
    %c0_3 = arith.constant 0 : index
    %c0_4 = arith.constant 0 : index
    %3 = vector.load %arg4[%c0_3, %c0_4] : memref<1x128xf32, #tpu.memory_space<vmem>>, vector<1x128xf32>
    %4 = vector.broadcast %3 : vector<1x128xf32> to vector<128x128xf32>
    %5 = arith.addf %2, %4 : vector<128x128xf32>
    %cst_5 = arith.constant 0.000000e+00 : f32
    %6 = vector.broadcast %cst_5 : f32 to vector<128x128xf32>
    %7 = arith.maximumf %5, %6 : vector<128x128xf32>
    %8 = arith.truncf %7 : vector<128x128xf32> to vector<128x128xbf16>
    %c0_6 = arith.constant 0 : index
    %c0_7 = arith.constant 0 : index
    %9 = vector.load %arg5[%c0_6, %c0_7] : memref<128x128xbf16, #tpu.memory_space<vmem>>, vector<128x128xbf16>
    tpu.vector_store %arg5[%c0_6, %c0_7], %8 {strides = array<i32>} : memref<128x128xbf16, #tpu.memory_space<vmem>>, vector<128x128xbf16>,
    return
  }
  func.func @transform_0(%arg0: i32, %arg1: i32) -> (i32, i32) {
    %c0_i32 = arith.constant 0 : i32
    %c0_i32_0 = arith.constant 0 : i32
    return %arg0, %c0_i32 : i32, i32
  }
  func.func @transform_1(%arg0: i32, %arg1: i32) -> (i32, i32) {
    %c0_i32 = arith.constant 0 : i32
    %c0_i32_0 = arith.constant 0 : i32
    return %c0_i32, %arg1 : i32, i32
  }
  func.func @transform_2(%arg0: i32, %arg1: i32) -> (i32, i32) {
    %c0_i32 = arith.constant 0 : i32
    %c0_i32_0 = arith.constant 0 : i32
    return %c0_i32, %arg1 : i32, i32
  }
  func.func @transform_3(%arg0: i32, %arg1: i32) -> (i32, i32) {
    %c0_i32 = arith.constant 0 : i32
    return %arg0, %arg1 : i32, i32
  }
}

module attributes {stable_mosaic.version = 11 : i64} {
  func.func @_mm_kernel(%arg0: i32, %arg1: i32, %arg2: memref<128x128xbf16, #tpu.memory_space<vmem>>, %arg3: memref<128x128xbf16, #tpu.memory_space<vmem>>, %arg4: memref<1x128xf32, #tpu.memory_space<vmem>>, %arg5: memref<128x128xbf16, #tpu.memory_space<vmem>>) attributes {dimension_semantics = [#tpu.dimension_semantics<parallel>, #tpu.dimension_semantics<parallel>], iteration_bounds = array<i64: 1, 1>, scalar_prefetch = 0 : i64, scratch_operands = 0 : i64, tpu.core_type = #tpu.core_type<tc>, window_params = [{transform_indices = @transform_0, window_bounds = array<i64: 128, 128>}, {transform_indices = @transform_1, window_bounds = array<i64: 128, 128>}, {transform_indices = @transform_2, window_bounds = array<i64: 1, 128>}, {transform_indices = @transform_3, window_bounds = array<i64: 128, 128>}]} {
    %c0 = arith.constant 0 : index
    %c0_0 = arith.constant 0 : index
    %0 = vector.load %arg2[%c0, %c0_0] : memref<128x128xbf16, #tpu.memory_space<vmem>>, vector<128x128xbf16>
    %c0_1 = arith.constant 0 : index
    %c0_2 = arith.constant 0 : index
    %1 = vector.load %arg3[%c0_1, %c0_2] : memref<128x128xbf16, #tpu.memory_space<vmem>>, vector<128x128xbf16>
    %cst = arith.constant dense<0.000000e+00> : vector<128x128xf32>
    %2 = tpu.matmul %0, %1, %cst {dimension_numbers = #tpu.dot_dimension_numbers<[1], [0], [0], [1], [0, 0, 1, 1], [], []>} : vector<128x128xbf16>, vector<128x128xbf16>, vector<128x128xf32> -> vector<128x128xf32>
    %c0_3 = arith.constant 0 : index
    %c0_4 = arith.constant 0 : index
    %3 = vector.load %arg4[%c0_3, %c0_4] : memref<1x128xf32, #tpu.memory_space<vmem>>, vector<1x128xf32>
    %4 = vector.broadcast %3 : vector<1x128xf32> to vector<128x128xf32>
    %5 = arith.addf %2, %4 : vector<128x128xf32>
    %6 = arith.truncf %5 : vector<128x128xf32> to vector<128x128xbf16>
    %c0_5 = arith.constant 0 : index
    %c0_6 = arith.constant 0 : index
    %7 = vector.load %arg5[%c0_5, %c0_6] : memref<128x128xbf16, #tpu.memory_space<vmem>>, vector<128x128xbf16>
    tpu.vector_store %arg5[%c0_5, %c0_6], %6 {strides = array<i32>} : memref<128x128xbf16, #tpu.memory_space<vmem>>, vector<128x128xbf16>,
    return
  }
  func.func @transform_0(%arg0: i32, %arg1: i32) -> (i32, i32) {
    %c0_i32 = arith.constant 0 : i32
    %c0_i32_0 = arith.constant 0 : i32
    return %arg0, %c0_i32 : i32, i32
  }
  func.func @transform_1(%arg0: i32, %arg1: i32) -> (i32, i32) {
    %c0_i32 = arith.constant 0 : i32
    %c0_i32_0 = arith.constant 0 : i32
    return %c0_i32, %arg1 : i32, i32
  }
  func.func @transform_2(%arg0: i32, %arg1: i32) -> (i32, i32) {
    %c0_i32 = arith.constant 0 : i32
    %c0_i32_0 = arith.constant 0 : i32
    return %c0_i32, %arg1 : i32, i32
  }
  func.func @transform_3(%arg0: i32, %arg1: i32) -> (i32, i32) {
    %c0_i32 = arith.constant 0 : i32
    return %arg0, %arg1 : i32, i32
  }
}

module attributes {stable_mosaic.version = 11 : i64} {
  func.func @_mm_res_kernel(%arg0: i32, %arg1: i32, %arg2: memref<128x128xbf16, #tpu.memory_space<vmem>>, %arg3: memref<128x128xbf16, #tpu.memory_space<vmem>>, %arg4: memref<1x128xf32, #tpu.memory_space<vmem>>, %arg5: memref<128x128xbf16, #tpu.memory_space<vmem>>, %arg6: memref<128x128xbf16, #tpu.memory_space<vmem>>) attributes {dimension_semantics = [#tpu.dimension_semantics<parallel>, #tpu.dimension_semantics<parallel>], iteration_bounds = array<i64: 1, 1>, scalar_prefetch = 0 : i64, scratch_operands = 0 : i64, tpu.core_type = #tpu.core_type<tc>, window_params = [{transform_indices = @transform_0, window_bounds = array<i64: 128, 128>}, {transform_indices = @transform_1, window_bounds = array<i64: 128, 128>}, {transform_indices = @transform_2, window_bounds = array<i64: 1, 128>}, {transform_indices = @transform_3, window_bounds = array<i64: 128, 128>}, {transform_indices = @transform_4, window_bounds = array<i64: 128, 128>}]} {
    %c0 = arith.constant 0 : index
    %c0_0 = arith.constant 0 : index
    %0 = vector.load %arg2[%c0, %c0_0] : memref<128x128xbf16, #tpu.memory_space<vmem>>, vector<128x128xbf16>
    %c0_1 = arith.constant 0 : index
    %c0_2 = arith.constant 0 : index
    %1 = vector.load %arg3[%c0_1, %c0_2] : memref<128x128xbf16, #tpu.memory_space<vmem>>, vector<128x128xbf16>
    %cst = arith.constant dense<0.000000e+00> : vector<128x128xf32>
    %2 = tpu.matmul %0, %1, %cst {dimension_numbers = #tpu.dot_dimension_numbers<[1], [0], [0], [1], [0, 0, 1, 1], [], []>} : vector<128x128xbf16>, vector<128x128xbf16>, vector<128x128xf32> -> vector<128x128xf32>
    %c0_3 = arith.constant 0 : index
    %c0_4 = arith.constant 0 : index
    %3 = vector.load %arg4[%c0_3, %c0_4] : memref<1x128xf32, #tpu.memory_space<vmem>>, vector<1x128xf32>
    %4 = vector.broadcast %3 : vector<1x128xf32> to vector<128x128xf32>
    %5 = arith.addf %2, %4 : vector<128x128xf32>
    %c0_5 = arith.constant 0 : index
    %c0_6 = arith.constant 0 : index
    %6 = vector.load %arg5[%c0_5, %c0_6] : memref<128x128xbf16, #tpu.memory_space<vmem>>, vector<128x128xbf16>
    %7 = arith.extf %6 : vector<128x128xbf16> to vector<128x128xf32>
    %8 = arith.addf %5, %7 : vector<128x128xf32>
    %cst_7 = arith.constant 0.000000e+00 : f32
    %9 = vector.broadcast %cst_7 : f32 to vector<128x128xf32>
    %10 = arith.maximumf %8, %9 : vector<128x128xf32>
    %11 = arith.truncf %10 : vector<128x128xf32> to vector<128x128xbf16>
    %c0_8 = arith.constant 0 : index
    %c0_9 = arith.constant 0 : index
    %12 = vector.load %arg6[%c0_8, %c0_9] : memref<128x128xbf16, #tpu.memory_space<vmem>>, vector<128x128xbf16>
    tpu.vector_store %arg6[%c0_8, %c0_9], %11 {strides = array<i32>} : memref<128x128xbf16, #tpu.memory_space<vmem>>, vector<128x128xbf16>,
    return
  }
  func.func @transform_0(%arg0: i32, %arg1: i32) -> (i32, i32) {
    %c0_i32 = arith.constant 0 : i32
    %c0_i32_0 = arith.constant 0 : i32
    return %arg0, %c0_i32 : i32, i32
  }
  func.func @transform_1(%arg0: i32, %arg1: i32) -> (i32, i32) {
    %c0_i32 = arith.constant 0 : i32
    %c0_i32_0 = arith.constant 0 : i32
    return %c0_i32, %arg1 : i32, i32
  }
  func.func @transform_2(%arg0: i32, %arg1: i32) -> (i32, i32) {
    %c0_i32 = arith.constant 0 : i32
    %c0_i32_0 = arith.constant 0 : i32
    return %c0_i32, %arg1 : i32, i32
  }
  func.func @transform_3(%arg0: i32, %arg1: i32) -> (i32, i32) {
    %c0_i32 = arith.constant 0 : i32
    return %arg0, %arg1 : i32, i32
  }
  func.func @transform_4(%arg0: i32, %arg1: i32) -> (i32, i32) {
    %c0_i32 = arith.constant 0 : i32
    return %arg0, %arg1 : i32, i32
  }
}

module attributes {stable_mosaic.version = 11 : i64} {
  func.func @_mm_kernel(%arg0: i32, %arg1: i32, %arg2: memref<32x1152xbf16, #tpu.memory_space<vmem>>, %arg3: memref<1152x128xbf16, #tpu.memory_space<vmem>>, %arg4: memref<1x128xf32, #tpu.memory_space<vmem>>, %arg5: memref<32x128xbf16, #tpu.memory_space<vmem>>) attributes {dimension_semantics = [#tpu.dimension_semantics<parallel>, #tpu.dimension_semantics<parallel>], iteration_bounds = array<i64: 1, 1>, scalar_prefetch = 0 : i64, scratch_operands = 0 : i64, tpu.core_type = #tpu.core_type<tc>, window_params = [{transform_indices = @transform_0, window_bounds = array<i64: 32, 1152>}, {transform_indices = @transform_1, window_bounds = array<i64: 1152, 128>}, {transform_indices = @transform_2, window_bounds = array<i64: 1, 128>}, {transform_indices = @transform_3, window_bounds = array<i64: 32, 128>}]} {
    %c0 = arith.constant 0 : index
    %c0_0 = arith.constant 0 : index
    %0 = vector.load %arg2[%c0, %c0_0] : memref<32x1152xbf16, #tpu.memory_space<vmem>>, vector<32x1152xbf16>
    %c0_1 = arith.constant 0 : index
    %c0_2 = arith.constant 0 : index
    %1 = vector.load %arg3[%c0_1, %c0_2] : memref<1152x128xbf16, #tpu.memory_space<vmem>>, vector<1152x128xbf16>
    %cst = arith.constant dense<0.000000e+00> : vector<32x128xf32>
    %2 = tpu.matmul %0, %1, %cst {dimension_numbers = #tpu.dot_dimension_numbers<[1], [0], [0], [1], [0, 0, 1, 1], [], []>} : vector<32x1152xbf16>, vector<1152x128xbf16>, vector<32x128xf32> -> vector<32x128xf32>
    %c0_3 = arith.constant 0 : index
    %c0_4 = arith.constant 0 : index
    %3 = vector.load %arg4[%c0_3, %c0_4] : memref<1x128xf32, #tpu.memory_space<vmem>>, vector<1x128xf32>
    %4 = vector.broadcast %3 : vector<1x128xf32> to vector<32x128xf32>
    %5 = arith.addf %2, %4 : vector<32x128xf32>
    %cst_5 = arith.constant 0.000000e+00 : f32
    %6 = vector.broadcast %cst_5 : f32 to vector<32x128xf32>
    %7 = arith.maximumf %5, %6 : vector<32x128xf32>
    %8 = arith.truncf %7 : vector<32x128xf32> to vector<32x128xbf16>
    %c0_6 = arith.constant 0 : index
    %c0_7 = arith.constant 0 : index
    %9 = vector.load %arg5[%c0_6, %c0_7] : memref<32x128xbf16, #tpu.memory_space<vmem>>, vector<32x128xbf16>
    tpu.vector_store %arg5[%c0_6, %c0_7], %8 {strides = array<i32>} : memref<32x128xbf16, #tpu.memory_space<vmem>>, vector<32x128xbf16>,
    return
  }
  func.func @transform_0(%arg0: i32, %arg1: i32) -> (i32, i32) {
    %c0_i32 = arith.constant 0 : i32
    %c0_i32_0 = arith.constant 0 : i32
    return %arg0, %c0_i32 : i32, i32
  }
  func.func @transform_1(%arg0: i32, %arg1: i32) -> (i32, i32) {
    %c0_i32 = arith.constant 0 : i32
    %c0_i32_0 = arith.constant 0 : i32
    return %c0_i32, %arg1 : i32, i32
  }
  func.func @transform_2(%arg0: i32, %arg1: i32) -> (i32, i32) {
    %c0_i32 = arith.constant 0 : i32
    %c0_i32_0 = arith.constant 0 : i32
    return %c0_i32, %arg1 : i32, i32
  }
  func.func @transform_3(%arg0: i32, %arg1: i32) -> (i32, i32) {
    %c0_i32 = arith.constant 0 : i32
    return %arg0, %arg1 : i32, i32
  }
}

module attributes {stable_mosaic.version = 11 : i64} {
  func.func @_mm_kernel(%arg0: i32, %arg1: i32, %arg2: memref<32x128xbf16, #tpu.memory_space<vmem>>, %arg3: memref<128x128xbf16, #tpu.memory_space<vmem>>, %arg4: memref<1x128xf32, #tpu.memory_space<vmem>>, %arg5: memref<32x128xbf16, #tpu.memory_space<vmem>>) attributes {dimension_semantics = [#tpu.dimension_semantics<parallel>, #tpu.dimension_semantics<parallel>], iteration_bounds = array<i64: 1, 1>, scalar_prefetch = 0 : i64, scratch_operands = 0 : i64, tpu.core_type = #tpu.core_type<tc>, window_params = [{transform_indices = @transform_0, window_bounds = array<i64: 32, 128>}, {transform_indices = @transform_1, window_bounds = array<i64: 128, 128>}, {transform_indices = @transform_2, window_bounds = array<i64: 1, 128>}, {transform_indices = @transform_3, window_bounds = array<i64: 32, 128>}]} {
    %c0 = arith.constant 0 : index
    %c0_0 = arith.constant 0 : index
    %0 = vector.load %arg2[%c0, %c0_0] : memref<32x128xbf16, #tpu.memory_space<vmem>>, vector<32x128xbf16>
    %c0_1 = arith.constant 0 : index
    %c0_2 = arith.constant 0 : index
    %1 = vector.load %arg3[%c0_1, %c0_2] : memref<128x128xbf16, #tpu.memory_space<vmem>>, vector<128x128xbf16>
    %cst = arith.constant dense<0.000000e+00> : vector<32x128xf32>
    %2 = tpu.matmul %0, %1, %cst {dimension_numbers = #tpu.dot_dimension_numbers<[1], [0], [0], [1], [0, 0, 1, 1], [], []>} : vector<32x128xbf16>, vector<128x128xbf16>, vector<32x128xf32> -> vector<32x128xf32>
    %c0_3 = arith.constant 0 : index
    %c0_4 = arith.constant 0 : index
    %3 = vector.load %arg4[%c0_3, %c0_4] : memref<1x128xf32, #tpu.memory_space<vmem>>, vector<1x128xf32>
    %4 = vector.broadcast %3 : vector<1x128xf32> to vector<32x128xf32>
    %5 = arith.addf %2, %4 : vector<32x128xf32>
    %6 = arith.truncf %5 : vector<32x128xf32> to vector<32x128xbf16>
    %c0_5 = arith.constant 0 : index
    %c0_6 = arith.constant 0 : index
    %7 = vector.load %arg5[%c0_5, %c0_6] : memref<32x128xbf16, #tpu.memory_space<vmem>>, vector<32x128xbf16>
    tpu.vector_store %arg5[%c0_5, %c0_6], %6 {strides = array<i32>} : memref<32x128xbf16, #tpu.memory_space<vmem>>, vector<32x128xbf16>,
    return
  }
  func.func @transform_0(%arg0: i32, %arg1: i32) -> (i32, i32) {
    %c0_i32 = arith.constant 0 : i32
    %c0_i32_0 = arith.constant 0 : i32
    return %arg0, %c0_i32 : i32, i32
  }
  func.func @transform_1(%arg0: i32, %arg1: i32) -> (i32, i32) {
    %c0_i32 = arith.constant 0 : i32
    %c0_i32_0 = arith.constant 0 : i32
    return %c0_i32, %arg1 : i32, i32
  }
  func.func @transform_2(%arg0: i32, %arg1: i32) -> (i32, i32) {
    %c0_i32 = arith.constant 0 : i32
    %c0_i32_0 = arith.constant 0 : i32
    return %c0_i32, %arg1 : i32, i32
  }
  func.func @transform_3(%arg0: i32, %arg1: i32) -> (i32, i32) {
    %c0_i32 = arith.constant 0 : i32
    return %arg0, %arg1 : i32, i32
  }
}

module attributes {stable_mosaic.version = 11 : i64} {
  func.func @_mm_res_kernel(%arg0: i32, %arg1: i32, %arg2: memref<32x128xbf16, #tpu.memory_space<vmem>>, %arg3: memref<128x128xbf16, #tpu.memory_space<vmem>>, %arg4: memref<1x128xf32, #tpu.memory_space<vmem>>, %arg5: memref<32x128xbf16, #tpu.memory_space<vmem>>, %arg6: memref<32x128xbf16, #tpu.memory_space<vmem>>) attributes {dimension_semantics = [#tpu.dimension_semantics<parallel>, #tpu.dimension_semantics<parallel>], iteration_bounds = array<i64: 1, 1>, scalar_prefetch = 0 : i64, scratch_operands = 0 : i64, tpu.core_type = #tpu.core_type<tc>, window_params = [{transform_indices = @transform_0, window_bounds = array<i64: 32, 128>}, {transform_indices = @transform_1, window_bounds = array<i64: 128, 128>}, {transform_indices = @transform_2, window_bounds = array<i64: 1, 128>}, {transform_indices = @transform_3, window_bounds = array<i64: 32, 128>}, {transform_indices = @transform_4, window_bounds = array<i64: 32, 128>}]} {
    %c0 = arith.constant 0 : index
    %c0_0 = arith.constant 0 : index
    %0 = vector.load %arg2[%c0, %c0_0] : memref<32x128xbf16, #tpu.memory_space<vmem>>, vector<32x128xbf16>
    %c0_1 = arith.constant 0 : index
    %c0_2 = arith.constant 0 : index
    %1 = vector.load %arg3[%c0_1, %c0_2] : memref<128x128xbf16, #tpu.memory_space<vmem>>, vector<128x128xbf16>
    %cst = arith.constant dense<0.000000e+00> : vector<32x128xf32>
    %2 = tpu.matmul %0, %1, %cst {dimension_numbers = #tpu.dot_dimension_numbers<[1], [0], [0], [1], [0, 0, 1, 1], [], []>} : vector<32x128xbf16>, vector<128x128xbf16>, vector<32x128xf32> -> vector<32x128xf32>
    %c0_3 = arith.constant 0 : index
    %c0_4 = arith.constant 0 : index
    %3 = vector.load %arg4[%c0_3, %c0_4] : memref<1x128xf32, #tpu.memory_space<vmem>>, vector<1x128xf32>
    %4 = vector.broadcast %3 : vector<1x128xf32> to vector<32x128xf32>
    %5 = arith.addf %2, %4 : vector<32x128xf32>
    %c0_5 = arith.constant 0 : index
    %c0_6 = arith.constant 0 : index
    %6 = vector.load %arg5[%c0_5, %c0_6] : memref<32x128xbf16, #tpu.memory_space<vmem>>, vector<32x128xbf16>
    %7 = arith.extf %6 : vector<32x128xbf16> to vector<32x128xf32>
    %8 = arith.addf %5, %7 : vector<32x128xf32>
    %cst_7 = arith.constant 0.000000e+00 : f32
    %9 = vector.broadcast %cst_7 : f32 to vector<32x128xf32>
    %10 = arith.maximumf %8, %9 : vector<32x128xf32>
    %11 = arith.truncf %10 : vector<32x128xf32> to vector<32x128xbf16>
    %c0_8 = arith.constant 0 : index
    %c0_9 = arith.constant 0 : index
    %12 = vector.load %arg6[%c0_8, %c0_9] : memref<32x128xbf16, #tpu.memory_space<vmem>>, vector<32x128xbf16>
    tpu.vector_store %arg6[%c0_8, %c0_9], %11 {strides = array<i32>} : memref<32x128xbf16, #tpu.memory_space<vmem>>, vector<32x128xbf16>,
    return
  }
  func.func @transform_0(%arg0: i32, %arg1: i32) -> (i32, i32) {
    %c0_i32 = arith.constant 0 : i32
    %c0_i32_0 = arith.constant 0 : i32
    return %arg0, %c0_i32 : i32, i32
  }
  func.func @transform_1(%arg0: i32, %arg1: i32) -> (i32, i32) {
    %c0_i32 = arith.constant 0 : i32
    %c0_i32_0 = arith.constant 0 : i32
    return %c0_i32, %arg1 : i32, i32
  }
  func.func @transform_2(%arg0: i32, %arg1: i32) -> (i32, i32) {
    %c0_i32 = arith.constant 0 : i32
    %c0_i32_0 = arith.constant 0 : i32
    return %c0_i32, %arg1 : i32, i32
  }
  func.func @transform_3(%arg0: i32, %arg1: i32) -> (i32, i32) {
    %c0_i32 = arith.constant 0 : i32
    return %arg0, %arg1 : i32, i32
  }
  func.func @transform_4(%arg0: i32, %arg1: i32) -> (i32, i32) {
    %c0_i32 = arith.constant 0 : i32
    return %arg0, %arg1 : i32, i32
  }
}

module attributes {stable_mosaic.version = 11 : i64} {
  func.func @_mm_kernel(%arg0: i32, %arg1: i32, %arg2: memref<32x128xbf16, #tpu.memory_space<vmem>>, %arg3: memref<128x128xbf16, #tpu.memory_space<vmem>>, %arg4: memref<1x128xf32, #tpu.memory_space<vmem>>, %arg5: memref<32x128xbf16, #tpu.memory_space<vmem>>) attributes {dimension_semantics = [#tpu.dimension_semantics<parallel>, #tpu.dimension_semantics<parallel>], iteration_bounds = array<i64: 1, 1>, scalar_prefetch = 0 : i64, scratch_operands = 0 : i64, tpu.core_type = #tpu.core_type<tc>, window_params = [{transform_indices = @transform_0, window_bounds = array<i64: 32, 128>}, {transform_indices = @transform_1, window_bounds = array<i64: 128, 128>}, {transform_indices = @transform_2, window_bounds = array<i64: 1, 128>}, {transform_indices = @transform_3, window_bounds = array<i64: 32, 128>}]} {
    %c0 = arith.constant 0 : index
    %c0_0 = arith.constant 0 : index
    %0 = vector.load %arg2[%c0, %c0_0] : memref<32x128xbf16, #tpu.memory_space<vmem>>, vector<32x128xbf16>
    %c0_1 = arith.constant 0 : index
    %c0_2 = arith.constant 0 : index
    %1 = vector.load %arg3[%c0_1, %c0_2] : memref<128x128xbf16, #tpu.memory_space<vmem>>, vector<128x128xbf16>
    %cst = arith.constant dense<0.000000e+00> : vector<32x128xf32>
    %2 = tpu.matmul %0, %1, %cst {dimension_numbers = #tpu.dot_dimension_numbers<[1], [0], [0], [1], [0, 0, 1, 1], [], []>} : vector<32x128xbf16>, vector<128x128xbf16>, vector<32x128xf32> -> vector<32x128xf32>
    %c0_3 = arith.constant 0 : index
    %c0_4 = arith.constant 0 : index
    %3 = vector.load %arg4[%c0_3, %c0_4] : memref<1x128xf32, #tpu.memory_space<vmem>>, vector<1x128xf32>
    %4 = vector.broadcast %3 : vector<1x128xf32> to vector<32x128xf32>
    %5 = arith.addf %2, %4 : vector<32x128xf32>
    %cst_5 = arith.constant 0.000000e+00 : f32
    %6 = vector.broadcast %cst_5 : f32 to vector<32x128xf32>
    %7 = arith.maximumf %5, %6 : vector<32x128xf32>
    %8 = arith.truncf %7 : vector<32x128xf32> to vector<32x128xbf16>
    %c0_6 = arith.constant 0 : index
    %c0_7 = arith.constant 0 : index
    %9 = vector.load %arg5[%c0_6, %c0_7] : memref<32x128xbf16, #tpu.memory_space<vmem>>, vector<32x128xbf16>
    tpu.vector_store %arg5[%c0_6, %c0_7], %8 {strides = array<i32>} : memref<32x128xbf16, #tpu.memory_space<vmem>>, vector<32x128xbf16>,
    return
  }
  func.func @transform_0(%arg0: i32, %arg1: i32) -> (i32, i32) {
    %c0_i32 = arith.constant 0 : i32
    %c0_i32_0 = arith.constant 0 : i32
    return %arg0, %c0_i32 : i32, i32
  }
  func.func @transform_1(%arg0: i32, %arg1: i32) -> (i32, i32) {
    %c0_i32 = arith.constant 0 : i32
    %c0_i32_0 = arith.constant 0 : i32
    return %c0_i32, %arg1 : i32, i32
  }
  func.func @transform_2(%arg0: i32, %arg1: i32) -> (i32, i32) {
    %c0_i32 = arith.constant 0 : i32
    %c0_i32_0 = arith.constant 0 : i32
    return %c0_i32, %arg1 : i32, i32
  }
  func.func @transform_3(%arg0: i32, %arg1: i32) -> (i32, i32) {
    %c0_i32 = arith.constant 0 : i32
    return %arg0, %arg1 : i32, i32
  }
}

module attributes {stable_mosaic.version = 11 : i64} {
  func.func @_mm_kernel(%arg0: i32, %arg1: i32, %arg2: memref<8x1152xbf16, #tpu.memory_space<vmem>>, %arg3: memref<1152x128xbf16, #tpu.memory_space<vmem>>, %arg4: memref<1x128xf32, #tpu.memory_space<vmem>>, %arg5: memref<8x128xbf16, #tpu.memory_space<vmem>>) attributes {dimension_semantics = [#tpu.dimension_semantics<parallel>, #tpu.dimension_semantics<parallel>], iteration_bounds = array<i64: 1, 1>, scalar_prefetch = 0 : i64, scratch_operands = 0 : i64, tpu.core_type = #tpu.core_type<tc>, window_params = [{transform_indices = @transform_0, window_bounds = array<i64: 8, 1152>}, {transform_indices = @transform_1, window_bounds = array<i64: 1152, 128>}, {transform_indices = @transform_2, window_bounds = array<i64: 1, 128>}, {transform_indices = @transform_3, window_bounds = array<i64: 8, 128>}]} {
    %c0 = arith.constant 0 : index
    %c0_0 = arith.constant 0 : index
    %0 = vector.load %arg2[%c0, %c0_0] : memref<8x1152xbf16, #tpu.memory_space<vmem>>, vector<8x1152xbf16>
    %c0_1 = arith.constant 0 : index
    %c0_2 = arith.constant 0 : index
    %1 = vector.load %arg3[%c0_1, %c0_2] : memref<1152x128xbf16, #tpu.memory_space<vmem>>, vector<1152x128xbf16>
    %cst = arith.constant dense<0.000000e+00> : vector<8x128xf32>
    %2 = tpu.matmul %0, %1, %cst {dimension_numbers = #tpu.dot_dimension_numbers<[1], [0], [0], [1], [0, 0, 1, 1], [], []>} : vector<8x1152xbf16>, vector<1152x128xbf16>, vector<8x128xf32> -> vector<8x128xf32>
    %c0_3 = arith.constant 0 : index
    %c0_4 = arith.constant 0 : index
    %3 = vector.load %arg4[%c0_3, %c0_4] : memref<1x128xf32, #tpu.memory_space<vmem>>, vector<1x128xf32>
    %4 = vector.broadcast %3 : vector<1x128xf32> to vector<8x128xf32>
    %5 = arith.addf %2, %4 : vector<8x128xf32>
    %cst_5 = arith.constant 0.000000e+00 : f32
    %6 = vector.broadcast %cst_5 : f32 to vector<8x128xf32>
    %7 = arith.maximumf %5, %6 : vector<8x128xf32>
    %8 = arith.truncf %7 : vector<8x128xf32> to vector<8x128xbf16>
    %c0_6 = arith.constant 0 : index
    %c0_7 = arith.constant 0 : index
    %9 = vector.load %arg5[%c0_6, %c0_7] : memref<8x128xbf16, #tpu.memory_space<vmem>>, vector<8x128xbf16>
    tpu.vector_store %arg5[%c0_6, %c0_7], %8 {strides = array<i32>} : memref<8x128xbf16, #tpu.memory_space<vmem>>, vector<8x128xbf16>,
    return
  }
  func.func @transform_0(%arg0: i32, %arg1: i32) -> (i32, i32) {
    %c0_i32 = arith.constant 0 : i32
    %c0_i32_0 = arith.constant 0 : i32
    return %arg0, %c0_i32 : i32, i32
  }
  func.func @transform_1(%arg0: i32, %arg1: i32) -> (i32, i32) {
    %c0_i32 = arith.constant 0 : i32
    %c0_i32_0 = arith.constant 0 : i32
    return %c0_i32, %arg1 : i32, i32
  }
  func.func @transform_2(%arg0: i32, %arg1: i32) -> (i32, i32) {
    %c0_i32 = arith.constant 0 : i32
    %c0_i32_0 = arith.constant 0 : i32
    return %c0_i32, %arg1 : i32, i32
  }
  func.func @transform_3(%arg0: i32, %arg1: i32) -> (i32, i32) {
    %c0_i32 = arith.constant 0 : i32
    return %arg0, %arg1 : i32, i32
  }
}

module attributes {stable_mosaic.version = 11 : i64} {
  func.func @_mm_res_kernel(%arg0: i32, %arg1: i32, %arg2: memref<8x128xbf16, #tpu.memory_space<vmem>>, %arg3: memref<128x128xbf16, #tpu.memory_space<vmem>>, %arg4: memref<1x128xf32, #tpu.memory_space<vmem>>, %arg5: memref<8x128xbf16, #tpu.memory_space<vmem>>, %arg6: memref<8x128xbf16, #tpu.memory_space<vmem>>) attributes {dimension_semantics = [#tpu.dimension_semantics<parallel>, #tpu.dimension_semantics<parallel>], iteration_bounds = array<i64: 1, 1>, scalar_prefetch = 0 : i64, scratch_operands = 0 : i64, tpu.core_type = #tpu.core_type<tc>, window_params = [{transform_indices = @transform_0, window_bounds = array<i64: 8, 128>}, {transform_indices = @transform_1, window_bounds = array<i64: 128, 128>}, {transform_indices = @transform_2, window_bounds = array<i64: 1, 128>}, {transform_indices = @transform_3, window_bounds = array<i64: 8, 128>}, {transform_indices = @transform_4, window_bounds = array<i64: 8, 128>}]} {
    %c0 = arith.constant 0 : index
    %c0_0 = arith.constant 0 : index
    %0 = vector.load %arg2[%c0, %c0_0] : memref<8x128xbf16, #tpu.memory_space<vmem>>, vector<8x128xbf16>
    %c0_1 = arith.constant 0 : index
    %c0_2 = arith.constant 0 : index
    %1 = vector.load %arg3[%c0_1, %c0_2] : memref<128x128xbf16, #tpu.memory_space<vmem>>, vector<128x128xbf16>
    %cst = arith.constant dense<0.000000e+00> : vector<8x128xf32>
    %2 = tpu.matmul %0, %1, %cst {dimension_numbers = #tpu.dot_dimension_numbers<[1], [0], [0], [1], [0, 0, 1, 1], [], []>} : vector<8x128xbf16>, vector<128x128xbf16>, vector<8x128xf32> -> vector<8x128xf32>
    %c0_3 = arith.constant 0 : index
    %c0_4 = arith.constant 0 : index
    %3 = vector.load %arg4[%c0_3, %c0_4] : memref<1x128xf32, #tpu.memory_space<vmem>>, vector<1x128xf32>
    %4 = vector.broadcast %3 : vector<1x128xf32> to vector<8x128xf32>
    %5 = arith.addf %2, %4 : vector<8x128xf32>
    %c0_5 = arith.constant 0 : index
    %c0_6 = arith.constant 0 : index
    %6 = vector.load %arg5[%c0_5, %c0_6] : memref<8x128xbf16, #tpu.memory_space<vmem>>, vector<8x128xbf16>
    %7 = arith.extf %6 : vector<8x128xbf16> to vector<8x128xf32>
    %8 = arith.addf %5, %7 : vector<8x128xf32>
    %cst_7 = arith.constant 0.000000e+00 : f32
    %9 = vector.broadcast %cst_7 : f32 to vector<8x128xf32>
    %10 = arith.maximumf %8, %9 : vector<8x128xf32>
    %11 = arith.truncf %10 : vector<8x128xf32> to vector<8x128xbf16>
    %c0_8 = arith.constant 0 : index
    %c0_9 = arith.constant 0 : index
    %12 = vector.load %arg6[%c0_8, %c0_9] : memref<8x128xbf16, #tpu.memory_space<vmem>>, vector<8x128xbf16>
    tpu.vector_store %arg6[%c0_8, %c0_9], %11 {strides = array<i32>} : memref<8x128xbf16, #tpu.memory_space<vmem>>, vector<8x128xbf16>,
    return
  }
  func.func @transform_0(%arg0: i32, %arg1: i32) -> (i32, i32) {
    %c0_i32 = arith.constant 0 : i32
    %c0_i32_0 = arith.constant 0 : i32
    return %arg0, %c0_i32 : i32, i32
  }
  func.func @transform_1(%arg0: i32, %arg1: i32) -> (i32, i32) {
    %c0_i32 = arith.constant 0 : i32
    %c0_i32_0 = arith.constant 0 : i32
    return %c0_i32, %arg1 : i32, i32
  }
  func.func @transform_2(%arg0: i32, %arg1: i32) -> (i32, i32) {
    %c0_i32 = arith.constant 0 : i32
    %c0_i32_0 = arith.constant 0 : i32
    return %c0_i32, %arg1 : i32, i32
  }
  func.func @transform_3(%arg0: i32, %arg1: i32) -> (i32, i32) {
    %c0_i32 = arith.constant 0 : i32
    return %arg0, %arg1 : i32, i32
  }
  func.func @transform_4(%arg0: i32, %arg1: i32) -> (i32, i32) {
    %c0_i32 = arith.constant 0 : i32
    return %arg0, %arg1 : i32, i32
  }
}

module attributes {stable_mosaic.version = 11 : i64} {
  func.func @_mm_kernel(%arg0: i32, %arg1: i32, %arg2: memref<8x128xbf16, #tpu.memory_space<vmem>>, %arg3: memref<128x128xbf16, #tpu.memory_space<vmem>>, %arg4: memref<1x128xf32, #tpu.memory_space<vmem>>, %arg5: memref<8x128xbf16, #tpu.memory_space<vmem>>) attributes {dimension_semantics = [#tpu.dimension_semantics<parallel>, #tpu.dimension_semantics<parallel>], iteration_bounds = array<i64: 1, 1>, scalar_prefetch = 0 : i64, scratch_operands = 0 : i64, tpu.core_type = #tpu.core_type<tc>, window_params = [{transform_indices = @transform_0, window_bounds = array<i64: 8, 128>}, {transform_indices = @transform_1, window_bounds = array<i64: 128, 128>}, {transform_indices = @transform_2, window_bounds = array<i64: 1, 128>}, {transform_indices = @transform_3, window_bounds = array<i64: 8, 128>}]} {
    %c0 = arith.constant 0 : index
    %c0_0 = arith.constant 0 : index
    %0 = vector.load %arg2[%c0, %c0_0] : memref<8x128xbf16, #tpu.memory_space<vmem>>, vector<8x128xbf16>
    %c0_1 = arith.constant 0 : index
    %c0_2 = arith.constant 0 : index
    %1 = vector.load %arg3[%c0_1, %c0_2] : memref<128x128xbf16, #tpu.memory_space<vmem>>, vector<128x128xbf16>
    %cst = arith.constant dense<0.000000e+00> : vector<8x128xf32>
    %2 = tpu.matmul %0, %1, %cst {dimension_numbers = #tpu.dot_dimension_numbers<[1], [0], [0], [1], [0, 0, 1, 1], [], []>} : vector<8x128xbf16>, vector<128x128xbf16>, vector<8x128xf32> -> vector<8x128xf32>
    %c0_3 = arith.constant 0 : index
    %c0_4 = arith.constant 0 : index
    %3 = vector.load %arg4[%c0_3, %c0_4] : memref<1x128xf32, #tpu.memory_space<vmem>>, vector<1x128xf32>
    %4 = vector.broadcast %3 : vector<1x128xf32> to vector<8x128xf32>
    %5 = arith.addf %2, %4 : vector<8x128xf32>
    %6 = arith.truncf %5 : vector<8x128xf32> to vector<8x128xbf16>
    %c0_5 = arith.constant 0 : index
    %c0_6 = arith.constant 0 : index
    %7 = vector.load %arg5[%c0_5, %c0_6] : memref<8x128xbf16, #tpu.memory_space<vmem>>, vector<8x128xbf16>
    tpu.vector_store %arg5[%c0_5, %c0_6], %6 {strides = array<i32>} : memref<8x128xbf16, #tpu.memory_space<vmem>>, vector<8x128xbf16>,
    return
  }
  func.func @transform_0(%arg0: i32, %arg1: i32) -> (i32, i32) {
    %c0_i32 = arith.constant 0 : i32
    %c0_i32_0 = arith.constant 0 : i32
    return %arg0, %c0_i32 : i32, i32
  }
  func.func @transform_1(%arg0: i32, %arg1: i32) -> (i32, i32) {
    %c0_i32 = arith.constant 0 : i32
    %c0_i32_0 = arith.constant 0 : i32
    return %c0_i32, %arg1 : i32, i32
  }
  func.func @transform_2(%arg0: i32, %arg1: i32) -> (i32, i32) {
    %c0_i32 = arith.constant 0 : i32
    %c0_i32_0 = arith.constant 0 : i32
    return %c0_i32, %arg1 : i32, i32
  }
  func.func @transform_3(%arg0: i32, %arg1: i32) -> (i32, i32) {
    %c0_i32 = arith.constant 0 : i32
    return %arg0, %arg1 : i32, i32
  }
}

module attributes {stable_mosaic.version = 11 : i64} {
  func.func @_mm_kernel(%arg0: i32, %arg1: i32, %arg2: memref<8x128xbf16, #tpu.memory_space<vmem>>, %arg3: memref<128x128xbf16, #tpu.memory_space<vmem>>, %arg4: memref<1x128xf32, #tpu.memory_space<vmem>>, %arg5: memref<8x128xbf16, #tpu.memory_space<vmem>>) attributes {dimension_semantics = [#tpu.dimension_semantics<parallel>, #tpu.dimension_semantics<parallel>], iteration_bounds = array<i64: 1, 1>, scalar_prefetch = 0 : i64, scratch_operands = 0 : i64, tpu.core_type = #tpu.core_type<tc>, window_params = [{transform_indices = @transform_0, window_bounds = array<i64: 8, 128>}, {transform_indices = @transform_1, window_bounds = array<i64: 128, 128>}, {transform_indices = @transform_2, window_bounds = array<i64: 1, 128>}, {transform_indices = @transform_3, window_bounds = array<i64: 8, 128>}]} {
    %c0 = arith.constant 0 : index
    %c0_0 = arith.constant 0 : index
    %0 = vector.load %arg2[%c0, %c0_0] : memref<8x128xbf16, #tpu.memory_space<vmem>>, vector<8x128xbf16>
    %c0_1 = arith.constant 0 : index
    %c0_2 = arith.constant 0 : index
    %1 = vector.load %arg3[%c0_1, %c0_2] : memref<128x128xbf16, #tpu.memory_space<vmem>>, vector<128x128xbf16>
    %cst = arith.constant dense<0.000000e+00> : vector<8x128xf32>
    %2 = tpu.matmul %0, %1, %cst {dimension_numbers = #tpu.dot_dimension_numbers<[1], [0], [0], [1], [0, 0, 1, 1], [], []>} : vector<8x128xbf16>, vector<128x128xbf16>, vector<8x128xf32> -> vector<8x128xf32>
    %c0_3 = arith.constant 0 : index
    %c0_4 = arith.constant 0 : index
    %3 = vector.load %arg4[%c0_3, %c0_4] : memref<1x128xf32, #tpu.memory_space<vmem>>, vector<1x128xf32>
    %4 = vector.broadcast %3 : vector<1x128xf32> to vector<8x128xf32>
    %5 = arith.addf %2, %4 : vector<8x128xf32>
    %cst_5 = arith.constant 0.000000e+00 : f32
    %6 = vector.broadcast %cst_5 : f32 to vector<8x128xf32>
    %7 = arith.maximumf %5, %6 : vector<8x128xf32>
    %8 = arith.truncf %7 : vector<8x128xf32> to vector<8x128xbf16>
    %c0_6 = arith.constant 0 : index
    %c0_7 = arith.constant 0 : index
    %9 = vector.load %arg5[%c0_6, %c0_7] : memref<8x128xbf16, #tpu.memory_space<vmem>>, vector<8x128xbf16>
    tpu.vector_store %arg5[%c0_6, %c0_7], %8 {strides = array<i32>} : memref<8x128xbf16, #tpu.memory_space<vmem>>, vector<8x128xbf16>,
    return
  }
  func.func @transform_0(%arg0: i32, %arg1: i32) -> (i32, i32) {
    %c0_i32 = arith.constant 0 : i32
    %c0_i32_0 = arith.constant 0 : i32
    return %arg0, %c0_i32 : i32, i32
  }
  func.func @transform_1(%arg0: i32, %arg1: i32) -> (i32, i32) {
    %c0_i32 = arith.constant 0 : i32
    %c0_i32_0 = arith.constant 0 : i32
    return %c0_i32, %arg1 : i32, i32
  }
  func.func @transform_2(%arg0: i32, %arg1: i32) -> (i32, i32) {
    %c0_i32 = arith.constant 0 : i32
    %c0_i32_0 = arith.constant 0 : i32
    return %c0_i32, %arg1 : i32, i32
  }
  func.func @transform_3(%arg0: i32, %arg1: i32) -> (i32, i32) {
    %c0_i32 = arith.constant 0 : i32
    return %arg0, %arg1 : i32, i32
  }
}

module attributes {stable_mosaic.version = 11 : i64} {
  func.func @_mm_kernel(%arg0: i32, %arg1: i32, %arg2: memref<128x256xbf16, #tpu.memory_space<vmem>>, %arg3: memref<256x128xbf16, #tpu.memory_space<vmem>>, %arg4: memref<1x128xf32, #tpu.memory_space<vmem>>, %arg5: memref<128x128xbf16, #tpu.memory_space<vmem>>) attributes {dimension_semantics = [#tpu.dimension_semantics<parallel>, #tpu.dimension_semantics<parallel>], iteration_bounds = array<i64: 1, 1>, scalar_prefetch = 0 : i64, scratch_operands = 0 : i64, tpu.core_type = #tpu.core_type<tc>, window_params = [{transform_indices = @transform_0, window_bounds = array<i64: 128, 256>}, {transform_indices = @transform_1, window_bounds = array<i64: 256, 128>}, {transform_indices = @transform_2, window_bounds = array<i64: 1, 128>}, {transform_indices = @transform_3, window_bounds = array<i64: 128, 128>}]} {
    %c0 = arith.constant 0 : index
    %c0_0 = arith.constant 0 : index
    %0 = vector.load %arg2[%c0, %c0_0] : memref<128x256xbf16, #tpu.memory_space<vmem>>, vector<128x256xbf16>
    %c0_1 = arith.constant 0 : index
    %c0_2 = arith.constant 0 : index
    %1 = vector.load %arg3[%c0_1, %c0_2] : memref<256x128xbf16, #tpu.memory_space<vmem>>, vector<256x128xbf16>
    %cst = arith.constant dense<0.000000e+00> : vector<128x128xf32>
    %2 = tpu.matmul %0, %1, %cst {dimension_numbers = #tpu.dot_dimension_numbers<[1], [0], [0], [1], [0, 0, 1, 1], [], []>} : vector<128x256xbf16>, vector<256x128xbf16>, vector<128x128xf32> -> vector<128x128xf32>
    %c0_3 = arith.constant 0 : index
    %c0_4 = arith.constant 0 : index
    %3 = vector.load %arg4[%c0_3, %c0_4] : memref<1x128xf32, #tpu.memory_space<vmem>>, vector<1x128xf32>
    %4 = vector.broadcast %3 : vector<1x128xf32> to vector<128x128xf32>
    %5 = arith.addf %2, %4 : vector<128x128xf32>
    %cst_5 = arith.constant 0.000000e+00 : f32
    %6 = vector.broadcast %cst_5 : f32 to vector<128x128xf32>
    %7 = arith.maximumf %5, %6 : vector<128x128xf32>
    %8 = arith.truncf %7 : vector<128x128xf32> to vector<128x128xbf16>
    %c0_6 = arith.constant 0 : index
    %c0_7 = arith.constant 0 : index
    %9 = vector.load %arg5[%c0_6, %c0_7] : memref<128x128xbf16, #tpu.memory_space<vmem>>, vector<128x128xbf16>
    tpu.vector_store %arg5[%c0_6, %c0_7], %8 {strides = array<i32>} : memref<128x128xbf16, #tpu.memory_space<vmem>>, vector<128x128xbf16>,
    return
  }
  func.func @transform_0(%arg0: i32, %arg1: i32) -> (i32, i32) {
    %c0_i32 = arith.constant 0 : i32
    %c0_i32_0 = arith.constant 0 : i32
    return %arg0, %c0_i32 : i32, i32
  }
  func.func @transform_1(%arg0: i32, %arg1: i32) -> (i32, i32) {
    %c0_i32 = arith.constant 0 : i32
    %c0_i32_0 = arith.constant 0 : i32
    return %c0_i32, %arg1 : i32, i32
  }
  func.func @transform_2(%arg0: i32, %arg1: i32) -> (i32, i32) {
    %c0_i32 = arith.constant 0 : i32
    %c0_i32_0 = arith.constant 0 : i32
    return %c0_i32, %arg1 : i32, i32
  }
  func.func @transform_3(%arg0: i32, %arg1: i32) -> (i32, i32) {
    %c0_i32 = arith.constant 0 : i32
    return %arg0, %arg1 : i32, i32
  }
}

module attributes {stable_mosaic.version = 11 : i64} {
  func.func @_maxpool_kernel(%arg0: i32, %arg1: memref<1x5x5x128xbf16, #tpu.memory_space<vmem>>, %arg2: memref<1x5x4x128xbf16, #tpu.memory_space<vmem>>, %arg3: memref<1x4x5x128xbf16, #tpu.memory_space<vmem>>, %arg4: memref<1x4x4x128xbf16, #tpu.memory_space<vmem>>, %arg5: memref<1x4x4x128xbf16, #tpu.memory_space<vmem>>) attributes {dimension_semantics = [#tpu.dimension_semantics<parallel>], iteration_bounds = array<i64: 2>, scalar_prefetch = 0 : i64, scratch_operands = 0 : i64, tpu.core_type = #tpu.core_type<tc>, window_params = [{transform_indices = @transform_0, window_bounds = array<i64: 1, 5, 5, 128>}, {transform_indices = @transform_1, window_bounds = array<i64: 1, 5, 4, 128>}, {transform_indices = @transform_2, window_bounds = array<i64: 1, 4, 5, 128>}, {transform_indices = @transform_3, window_bounds = array<i64: 1, 4, 4, 128>}, {transform_indices = @transform_4, window_bounds = array<i64: 1, 4, 4, 128>}]} {
    %c0 = arith.constant 0 : index
    %c0_0 = arith.constant 0 : index
    %c0_1 = arith.constant 0 : index
    %c0_2 = arith.constant 0 : index
    %0 = vector.load %arg1[%c0, %c0_0, %c0_1, %c0_2] : memref<1x5x5x128xbf16, #tpu.memory_space<vmem>>, vector<1x5x5x128xbf16>
    %c0_3 = arith.constant 0 : index
    %c0_4 = arith.constant 0 : index
    %c0_5 = arith.constant 0 : index
    %c0_6 = arith.constant 0 : index
    %1 = vector.load %arg2[%c0_3, %c0_4, %c0_5, %c0_6] : memref<1x5x4x128xbf16, #tpu.memory_space<vmem>>, vector<1x5x4x128xbf16>
    %c0_7 = arith.constant 0 : index
    %c0_8 = arith.constant 0 : index
    %c0_9 = arith.constant 0 : index
    %c0_10 = arith.constant 0 : index
    %2 = vector.load %arg3[%c0_7, %c0_8, %c0_9, %c0_10] : memref<1x4x5x128xbf16, #tpu.memory_space<vmem>>, vector<1x4x5x128xbf16>
    %c0_11 = arith.constant 0 : index
    %c0_12 = arith.constant 0 : index
    %c0_13 = arith.constant 0 : index
    %c0_14 = arith.constant 0 : index
    %3 = vector.load %arg4[%c0_11, %c0_12, %c0_13, %c0_14] : memref<1x4x4x128xbf16, #tpu.memory_space<vmem>>, vector<1x4x4x128xbf16>
    %4 = vector.extract_strided_slice %0 {offsets = [0, 0, 0, 0], sizes = [1, 4, 4, 128], strides = [1, 1, 1, 1]} : vector<1x5x5x128xbf16> to vector<1x4x4x128xbf16>
    %5 = arith.maximumf %3, %4 : vector<1x4x4x128xbf16>
    %6 = vector.extract_strided_slice %0 {offsets = [0, 0, 1, 0], sizes = [1, 4, 4, 128], strides = [1, 1, 1, 1]} : vector<1x5x5x128xbf16> to vector<1x4x4x128xbf16>
    %7 = arith.maximumf %5, %6 : vector<1x4x4x128xbf16>
    %8 = vector.extract_strided_slice %0 {offsets = [0, 1, 0, 0], sizes = [1, 4, 4, 128], strides = [1, 1, 1, 1]} : vector<1x5x5x128xbf16> to vector<1x4x4x128xbf16>
    %9 = arith.maximumf %7, %8 : vector<1x4x4x128xbf16>
    %10 = vector.extract_strided_slice %0 {offsets = [0, 1, 1, 0], sizes = [1, 4, 4, 128], strides = [1, 1, 1, 1]} : vector<1x5x5x128xbf16> to vector<1x4x4x128xbf16>
    %11 = arith.maximumf %9, %10 : vector<1x4x4x128xbf16>
    %12 = vector.extract_strided_slice %1 {offsets = [0, 0, 0, 0], sizes = [1, 4, 4, 128], strides = [1, 1, 1, 1]} : vector<1x5x4x128xbf16> to vector<1x4x4x128xbf16>
    %13 = arith.maximumf %11, %12 : vector<1x4x4x128xbf16>
    %14 = vector.extract_strided_slice %1 {offsets = [0, 1, 0, 0], sizes = [1, 4, 4, 128], strides = [1, 1, 1, 1]} : vector<1x5x4x128xbf16> to vector<1x4x4x128xbf16>
    %15 = arith.maximumf %13, %14 : vector<1x4x4x128xbf16>
    %16 = vector.extract_strided_slice %2 {offsets = [0, 0, 0, 0], sizes = [1, 4, 4, 128], strides = [1, 1, 1, 1]} : vector<1x4x5x128xbf16> to vector<1x4x4x128xbf16>
    %17 = arith.maximumf %15, %16 : vector<1x4x4x128xbf16>
    %18 = vector.extract_strided_slice %2 {offsets = [0, 0, 1, 0], sizes = [1, 4, 4, 128], strides = [1, 1, 1, 1]} : vector<1x4x5x128xbf16> to vector<1x4x4x128xbf16>
    %19 = arith.maximumf %17, %18 : vector<1x4x4x128xbf16>
    %c0_15 = arith.constant 0 : index
    %c0_16 = arith.constant 0 : index
    %c0_17 = arith.constant 0 : index
    %c0_18 = arith.constant 0 : index
    %20 = vector.load %arg5[%c0_15, %c0_16, %c0_17, %c0_18] : memref<1x4x4x128xbf16, #tpu.memory_space<vmem>>, vector<1x4x4x128xbf16>
    tpu.vector_store %arg5[%c0_15, %c0_16, %c0_17, %c0_18], %19 {strides = array<i32>} : memref<1x4x4x128xbf16, #tpu.memory_space<vmem>>, vector<1x4x4x128xbf16>,
    return
  }
  func.func @transform_0(%arg0: i32) -> (i32, i32, i32, i32) {
    %c0_i32 = arith.constant 0 : i32
    %c0_i32_0 = arith.constant 0 : i32
    %c0_i32_1 = arith.constant 0 : i32
    %c0_i32_2 = arith.constant 0 : i32
    return %arg0, %c0_i32, %c0_i32_0, %c0_i32_1 : i32, i32, i32, i32
  }
  func.func @transform_1(%arg0: i32) -> (i32, i32, i32, i32) {
    %c0_i32 = arith.constant 0 : i32
    %c0_i32_0 = arith.constant 0 : i32
    %c0_i32_1 = arith.constant 0 : i32
    %c0_i32_2 = arith.constant 0 : i32
    return %arg0, %c0_i32, %c0_i32_0, %c0_i32_1 : i32, i32, i32, i32
  }
  func.func @transform_2(%arg0: i32) -> (i32, i32, i32, i32) {
    %c0_i32 = arith.constant 0 : i32
    %c0_i32_0 = arith.constant 0 : i32
    %c0_i32_1 = arith.constant 0 : i32
    %c0_i32_2 = arith.constant 0 : i32
    return %arg0, %c0_i32, %c0_i32_0, %c0_i32_1 : i32, i32, i32, i32
  }
  func.func @transform_3(%arg0: i32) -> (i32, i32, i32, i32) {
    %c0_i32 = arith.constant 0 : i32
    %c0_i32_0 = arith.constant 0 : i32
    %c0_i32_1 = arith.constant 0 : i32
    %c0_i32_2 = arith.constant 0 : i32
    return %arg0, %c0_i32, %c0_i32_0, %c0_i32_1 : i32, i32, i32, i32
  }
  func.func @transform_4(%arg0: i32) -> (i32, i32, i32, i32) {
    %c0_i32 = arith.constant 0 : i32
    %c0_i32_0 = arith.constant 0 : i32
    %c0_i32_1 = arith.constant 0 : i32
    %c0_i32_2 = arith.constant 0 : i32
    return %arg0, %c0_i32, %c0_i32_0, %c0_i32_1 : i32, i32, i32, i32
  }
}

module attributes {stable_mosaic.version = 11 : i64} {
  func.func @_mm_kernel(%arg0: i32, %arg1: i32, %arg2: memref<8x128xbf16, #tpu.memory_space<vmem>>, %arg3: memref<128x256xbf16, #tpu.memory_space<vmem>>, %arg4: memref<1x256xf32, #tpu.memory_space<vmem>>, %arg5: memref<8x256xbf16, #tpu.memory_space<vmem>>) attributes {dimension_semantics = [#tpu.dimension_semantics<parallel>, #tpu.dimension_semantics<parallel>], iteration_bounds = array<i64: 1, 1>, scalar_prefetch = 0 : i64, scratch_operands = 0 : i64, tpu.core_type = #tpu.core_type<tc>, window_params = [{transform_indices = @transform_0, window_bounds = array<i64: 8, 128>}, {transform_indices = @transform_1, window_bounds = array<i64: 128, 256>}, {transform_indices = @transform_2, window_bounds = array<i64: 1, 256>}, {transform_indices = @transform_3, window_bounds = array<i64: 8, 256>}]} {
    %c0 = arith.constant 0 : index
    %c0_0 = arith.constant 0 : index
    %0 = vector.load %arg2[%c0, %c0_0] : memref<8x128xbf16, #tpu.memory_space<vmem>>, vector<8x128xbf16>
    %c0_1 = arith.constant 0 : index
    %c0_2 = arith.constant 0 : index
    %1 = vector.load %arg3[%c0_1, %c0_2] : memref<128x256xbf16, #tpu.memory_space<vmem>>, vector<128x256xbf16>
    %cst = arith.constant dense<0.000000e+00> : vector<8x256xf32>
    %2 = tpu.matmul %0, %1, %cst {dimension_numbers = #tpu.dot_dimension_numbers<[1], [0], [0], [1], [0, 0, 1, 1], [], []>} : vector<8x128xbf16>, vector<128x256xbf16>, vector<8x256xf32> -> vector<8x256xf32>
    %c0_3 = arith.constant 0 : index
    %c0_4 = arith.constant 0 : index
    %3 = vector.load %arg4[%c0_3, %c0_4] : memref<1x256xf32, #tpu.memory_space<vmem>>, vector<1x256xf32>
    %4 = vector.broadcast %3 : vector<1x256xf32> to vector<8x256xf32>
    %5 = arith.addf %2, %4 : vector<8x256xf32>
    %6 = arith.truncf %5 : vector<8x256xf32> to vector<8x256xbf16>
    %c0_5 = arith.constant 0 : index
    %c0_6 = arith.constant 0 : index
    %7 = vector.load %arg5[%c0_5, %c0_6] : memref<8x256xbf16, #tpu.memory_space<vmem>>, vector<8x256xbf16>
    tpu.vector_store %arg5[%c0_5, %c0_6], %6 {strides = array<i32>} : memref<8x256xbf16, #tpu.memory_space<vmem>>, vector<8x256xbf16>,
    return
  }
  func.func @transform_0(%arg0: i32, %arg1: i32) -> (i32, i32) {
    %c0_i32 = arith.constant 0 : i32
    %c0_i32_0 = arith.constant 0 : i32
    return %arg0, %c0_i32 : i32, i32
  }
  func.func @transform_1(%arg0: i32, %arg1: i32) -> (i32, i32) {
    %c0_i32 = arith.constant 0 : i32
    %c0_i32_0 = arith.constant 0 : i32
    return %c0_i32, %arg1 : i32, i32
  }
  func.func @transform_2(%arg0: i32, %arg1: i32) -> (i32, i32) {
    %c0_i32 = arith.constant 0 : i32
    %c0_i32_0 = arith.constant 0 : i32
    return %c0_i32, %arg1 : i32, i32
  }
  func.func @transform_3(%arg0: i32, %arg1: i32) -> (i32, i32) {
    %c0_i32 = arith.constant 0 : i32
    return %arg0, %arg1 : i32, i32
  }
}

module attributes {stable_mosaic.version = 11 : i64} {
  func.func @_gap_l2_kernel(%arg0: memref<2x1x256xbf16, #tpu.memory_space<vmem>>, %arg1: memref<2x256xf32, #tpu.memory_space<vmem>>) attributes {dimension_semantics = [], scalar_prefetch = 0 : i64, scratch_operands = 0 : i64, tpu.core_type = #tpu.core_type<tc>} {
    %c0 = arith.constant 0 : index
    %c0_0 = arith.constant 0 : index
    %c0_1 = arith.constant 0 : index
    %0 = vector.load %arg0[%c0, %c0_0, %c0_1] : memref<2x1x256xbf16, #tpu.memory_space<vmem>>, vector<2x1x256xbf16>
    %1 = arith.extf %0 : vector<2x1x256xbf16> to vector<2x1x256xf32>
    %cst = arith.constant dense<0.000000e+00> : vector<2x256xf32>
    %2 = vector.multi_reduction <add>, %1, %cst [1] : vector<2x1x256xf32> to vector<2x256xf32>
    %cst_2 = arith.constant 1.000000e+00 : f32
    %3 = vector.broadcast %cst_2 : f32 to vector<2x256xf32>
    %4 = arith.divf %2, %3 : vector<2x256xf32>
    %5 = arith.mulf %4, %4 : vector<2x256xf32>
    %cst_3 = arith.constant dense<0.000000e+00> : vector<2xf32>
    %6 = vector.multi_reduction <add>, %5, %cst_3 [1] : vector<2x256xf32> to vector<2xf32>
    %7 = vector.shape_cast %6 : vector<2xf32> to vector<2x1xf32>
    %cst_4 = arith.constant 1.000000e-24 : f32
    %8 = vector.broadcast %cst_4 : f32 to vector<2x1xf32>
    %9 = arith.maximumf %7, %8 : vector<2x1xf32>
    %10 = math.rsqrt %9 : vector<2x1xf32>
    %11 = vector.broadcast %10 : vector<2x1xf32> to vector<2x256xf32>
    %12 = arith.mulf %4, %11 : vector<2x256xf32>
    %c0_5 = arith.constant 0 : index
    %c0_6 = arith.constant 0 : index
    %13 = vector.load %arg1[%c0_5, %c0_6] : memref<2x256xf32, #tpu.memory_space<vmem>>, vector<2x256xf32>
    tpu.vector_store %arg1[%c0_5, %c0_6], %12 {strides = array<i32>} : memref<2x256xf32, #tpu.memory_space<vmem>>, vector<2x256xf32>,
    return
  }
}

module attributes {stable_mosaic.version = 11 : i64} {
  func.func @_mm_res_kernel(%arg0: i32, %arg1: i32, %arg2: memref<8x128xbf16, #tpu.memory_space<vmem>>, %arg3: memref<128x256xbf16, #tpu.memory_space<vmem>>, %arg4: memref<1x256xf32, #tpu.memory_space<vmem>>, %arg5: memref<8x256xbf16, #tpu.memory_space<vmem>>, %arg6: memref<8x256xbf16, #tpu.memory_space<vmem>>) attributes {dimension_semantics = [#tpu.dimension_semantics<parallel>, #tpu.dimension_semantics<parallel>], iteration_bounds = array<i64: 1, 1>, scalar_prefetch = 0 : i64, scratch_operands = 0 : i64, tpu.core_type = #tpu.core_type<tc>, window_params = [{transform_indices = @transform_0, window_bounds = array<i64: 8, 128>}, {transform_indices = @transform_1, window_bounds = array<i64: 128, 256>}, {transform_indices = @transform_2, window_bounds = array<i64: 1, 256>}, {transform_indices = @transform_3, window_bounds = array<i64: 8, 256>}, {transform_indices = @transform_4, window_bounds = array<i64: 8, 256>}]} {
    %c0 = arith.constant 0 : index
    %c0_0 = arith.constant 0 : index
    %0 = vector.load %arg2[%c0, %c0_0] : memref<8x128xbf16, #tpu.memory_space<vmem>>, vector<8x128xbf16>
    %c0_1 = arith.constant 0 : index
    %c0_2 = arith.constant 0 : index
    %1 = vector.load %arg3[%c0_1, %c0_2] : memref<128x256xbf16, #tpu.memory_space<vmem>>, vector<128x256xbf16>
    %cst = arith.constant dense<0.000000e+00> : vector<8x256xf32>
    %2 = tpu.matmul %0, %1, %cst {dimension_numbers = #tpu.dot_dimension_numbers<[1], [0], [0], [1], [0, 0, 1, 1], [], []>} : vector<8x128xbf16>, vector<128x256xbf16>, vector<8x256xf32> -> vector<8x256xf32>
    %c0_3 = arith.constant 0 : index
    %c0_4 = arith.constant 0 : index
    %3 = vector.load %arg4[%c0_3, %c0_4] : memref<1x256xf32, #tpu.memory_space<vmem>>, vector<1x256xf32>
    %4 = vector.broadcast %3 : vector<1x256xf32> to vector<8x256xf32>
    %5 = arith.addf %2, %4 : vector<8x256xf32>
    %c0_5 = arith.constant 0 : index
    %c0_6 = arith.constant 0 : index
    %6 = vector.load %arg5[%c0_5, %c0_6] : memref<8x256xbf16, #tpu.memory_space<vmem>>, vector<8x256xbf16>
    %7 = arith.extf %6 : vector<8x256xbf16> to vector<8x256xf32>
    %8 = arith.addf %5, %7 : vector<8x256xf32>
    %cst_7 = arith.constant 0.000000e+00 : f32
    %9 = vector.broadcast %cst_7 : f32 to vector<8x256xf32>
    %10 = arith.maximumf %8, %9 : vector<8x256xf32>
    %11 = arith.truncf %10 : vector<8x256xf32> to vector<8x256xbf16>
    %c0_8 = arith.constant 0 : index
    %c0_9 = arith.constant 0 : index
    %12 = vector.load %arg6[%c0_8, %c0_9] : memref<8x256xbf16, #tpu.memory_space<vmem>>, vector<8x256xbf16>
    tpu.vector_store %arg6[%c0_8, %c0_9], %11 {strides = array<i32>} : memref<8x256xbf16, #tpu.memory_space<vmem>>, vector<8x256xbf16>,
    return
  }
  func.func @transform_0(%arg0: i32, %arg1: i32) -> (i32, i32) {
    %c0_i32 = arith.constant 0 : i32
    %c0_i32_0 = arith.constant 0 : i32
    return %arg0, %c0_i32 : i32, i32
  }
  func.func @transform_1(%arg0: i32, %arg1: i32) -> (i32, i32) {
    %c0_i32 = arith.constant 0 : i32
    %c0_i32_0 = arith.constant 0 : i32
    return %c0_i32, %arg1 : i32, i32
  }
  func.func @transform_2(%arg0: i32, %arg1: i32) -> (i32, i32) {
    %c0_i32 = arith.constant 0 : i32
    %c0_i32_0 = arith.constant 0 : i32
    return %c0_i32, %arg1 : i32, i32
  }
  func.func @transform_3(%arg0: i32, %arg1: i32) -> (i32, i32) {
    %c0_i32 = arith.constant 0 : i32
    return %arg0, %arg1 : i32, i32
  }
  func.func @transform_4(%arg0: i32, %arg1: i32) -> (i32, i32) {
    %c0_i32 = arith.constant 0 : i32
    return %arg0, %arg1 : i32, i32
  }
}

module attributes {stable_mosaic.version = 11 : i64} {
  func.func @_mm_kernel(%arg0: i32, %arg1: i32, %arg2: memref<8x512xbf16, #tpu.memory_space<vmem>>, %arg3: memref<512x128xbf16, #tpu.memory_space<vmem>>, %arg4: memref<1x128xf32, #tpu.memory_space<vmem>>, %arg5: memref<8x128xf32, #tpu.memory_space<vmem>>) attributes {dimension_semantics = [#tpu.dimension_semantics<parallel>, #tpu.dimension_semantics<parallel>], iteration_bounds = array<i64: 1, 1>, scalar_prefetch = 0 : i64, scratch_operands = 0 : i64, tpu.core_type = #tpu.core_type<tc>, window_params = [{transform_indices = @transform_0, window_bounds = array<i64: 8, 512>}, {transform_indices = @transform_1, window_bounds = array<i64: 512, 128>}, {transform_indices = @transform_2, window_bounds = array<i64: 1, 128>}, {transform_indices = @transform_3, window_bounds = array<i64: 8, 128>}]} {
    %c0 = arith.constant 0 : index
    %c0_0 = arith.constant 0 : index
    %0 = vector.load %arg2[%c0, %c0_0] : memref<8x512xbf16, #tpu.memory_space<vmem>>, vector<8x512xbf16>
    %c0_1 = arith.constant 0 : index
    %c0_2 = arith.constant 0 : index
    %1 = vector.load %arg3[%c0_1, %c0_2] : memref<512x128xbf16, #tpu.memory_space<vmem>>, vector<512x128xbf16>
    %cst = arith.constant dense<0.000000e+00> : vector<8x128xf32>
    %2 = tpu.matmul %0, %1, %cst {dimension_numbers = #tpu.dot_dimension_numbers<[1], [0], [0], [1], [0, 0, 1, 1], [], []>} : vector<8x512xbf16>, vector<512x128xbf16>, vector<8x128xf32> -> vector<8x128xf32>
    %c0_3 = arith.constant 0 : index
    %c0_4 = arith.constant 0 : index
    %3 = vector.load %arg4[%c0_3, %c0_4] : memref<1x128xf32, #tpu.memory_space<vmem>>, vector<1x128xf32>
    %4 = vector.broadcast %3 : vector<1x128xf32> to vector<8x128xf32>
    %5 = arith.addf %2, %4 : vector<8x128xf32>
    %c0_5 = arith.constant 0 : index
    %c0_6 = arith.constant 0 : index
    %6 = vector.load %arg5[%c0_5, %c0_6] : memref<8x128xf32, #tpu.memory_space<vmem>>, vector<8x128xf32>
    tpu.vector_store %arg5[%c0_5, %c0_6], %5 {strides = array<i32>} : memref<8x128xf32, #tpu.memory_space<vmem>>, vector<8x128xf32>,
    return
  }
  func.func @transform_0(%arg0: i32, %arg1: i32) -> (i32, i32) {
    %c0_i32 = arith.constant 0 : i32
    %c0_i32_0 = arith.constant 0 : i32
    return %arg0, %c0_i32 : i32, i32
  }
  func.func @transform_1(%arg0: i32, %arg1: i32) -> (i32, i32) {
    %c0_i32 = arith.constant 0 : i32
    %c0_i32_0 = arith.constant 0 : i32
    return %c0_i32, %arg1 : i32, i32
  }
  func.func @transform_2(%arg0: i32, %arg1: i32) -> (i32, i32) {
    %c0_i32 = arith.constant 0 : i32
    %c0_i32_0 = arith.constant 0 : i32
    return %c0_i32, %arg1 : i32, i32
  }
  func.func @transform_3(%arg0: i32, %arg1: i32) -> (i32, i32) {
    %c0_i32 = arith.constant 0 : i32
    return %arg0, %arg1 : i32, i32
  }
}

</mosaic_0001>

<llo_original>
// kernel: _lambda_.40
$region0: #{_lambda_.40}
  #allocation0 [shape = 'u32[]', space=smem, size = 0x4, offset = 0x4, fixed_abs, tag = 'smem constant byte address 0x4 - core index']
  #allocation1 [shape = 'u32[144,128]{1,0:T(1,128)}', space=vmem, size = 0x12000, scoped, tag = 'internal scratch']
  %s0 = inlined_call_operand.vmem [shape: bf16[2,9,9,128], index: 0, kind: input, shape index: {}]
  %s1 = inlined_call_operand.vmem [shape: bf16[2,9,8,128], index: 1, kind: input, shape index: {}]
  %s2 = inlined_call_operand.vmem [shape: bf16[2,8,9,128], index: 2, kind: input, shape index: {}]
  %s3 = inlined_call_operand.vmem [shape: bf16[2,8,8,128], index: 3, kind: input, shape index: {}]
  %s4 = inlined_call_operand.vmem [shape: bf16[2,8,8,128], index: 4, kind: output, shape index: {}]
  %s5 = sld [smem:[#allocation0]]
  $region49: #{_lambda_.40} parent=0
    _
  %s7 = ssub.s32 1, %s5
  %s8 = scalar_select 0, %s7, %s5
  loop: start=0, step=1, limit=4
  $region2: #{_lambda_.40} parent=0 // loop_pre_header
    _
  $region3: #{_lambda_.40} parent=0 // loop_header
    %s10 = sphi 0, %s14
    %p11 = scmp.ge.s32.totalorder %s10, 4
    %s20 = sphi 0, %s22
    %s23 = sphi 0, %s20
    %s24 = sphi 0, %s23
    %s40 = sphi 0, %s24
    %s46 = sphi 0, %s48
    %s49 = sphi 0, %s46
    %s50 = sphi 0, %s49
    %s66 = sphi 0, %s50
    %s72 = sphi 0, %s74
    %s75 = sphi 0, %s72
    %s76 = sphi 0, %s75
    %s92 = sphi 0, %s76
    %s98 = sphi 0, %s100
    %s101 = sphi 0, %s98
    %s102 = sphi 0, %s101
    %s118 = sphi 0, %s102
    %s124 = sphi 0, %s126
    %s127 = sphi 0, %s124
    %s128 = sphi 0, %s127
    %s144 = sphi 0, %s128
  $region4: #{_lambda_.40} parent=0 // loop_header_branch
    %13 = sbr.rel (%p11) target = $region8
  $region5: #{_lambda_.40} parent=0 // loop_body
    %s15 = ssub.s32 %s10, 1
    %s16 = ssub.s32 %s10, 2
    %s17 = sadd.s32 %s10, 1
    %s18 = ssub.s32 %s10, %s17
    %p19 = scmp.eq.s32.totalorder %s18, 0
    %s21 = sadd.s32 %s20, 1
    %s22 = scalar_select %p19, %s20, %s21
    %p25 = pneg %p19
    %p26 = scmp.eq.s32.totalorder %s10, 1
    %p27 = por %p25, %p26
    %p28 = scmp.ne.s32.totalorder %s20, %s23
    %p29 = scmp.eq.s32.totalorder %s10, 0
    %p30 = por %p28, %p29
    %p31 = scmp.ne.s32.totalorder %s20, %s23
    %p32 = scmp.eq.s32.totalorder %s15, 1
    %p33 = por %p31, %p32
    %p34 = scmp.ne.s32.totalorder %s23, %s24
    %p35 = scmp.eq.s32.totalorder %s15, 0
    %p36 = por %p34, %p35
    %p37 = scmp.ne.s32.totalorder %s23, %s24
    %p38 = scmp.eq.s32.totalorder %s16, 1
    %p39 = por %p37, %p38
    %p41 = scmp.ne.s32.totalorder %s24, %s40
    %p42 = scmp.eq.s32.totalorder %s16, 0
    %p43 = por %p41, %p42
    %s44 = ssub.s32 %s10, %s17
    %p45 = scmp.eq.s32.totalorder %s44, 0
    %s47 = sadd.s32 %s46, 1
    %s48 = scalar_select %p45, %s46, %s47
    %p51 = pneg %p45
    %p52 = scmp.eq.s32.totalorder %s10, 1
    %p53 = por %p51, %p52
    %p54 = scmp.ne.s32.totalorder %s46, %s49
    %p55 = scmp.eq.s32.totalorder %s10, 0
    %p56 = por %p54, %p55
    %p57 = scmp.ne.s32.totalorder %s46, %s49
    %p58 = scmp.eq.s32.totalorder %s15, 1
    %p59 = por %p57, %p58
    %p60 = scmp.ne.s32.totalorder %s49, %s50
    %p61 = scmp.eq.s32.totalorder %s15, 0
    %p62 = por %p60, %p61
    %p63 = scmp.ne.s32.totalorder %s49, %s50
    %p64 = scmp.eq.s32.totalorder %s16, 1
    %p65 = por %p63, %p64
    %p67 = scmp.ne.s32.totalorder %s50, %s66
    %p68 = scmp.eq.s32.totalorder %s16, 0
    %p69 = por %p67, %p68
    %s70 = ssub.s32 %s10, %s17
    %p71 = scmp.eq.s32.totalorder %s70, 0
    %s73 = sadd.s32 %s72, 1
    %s74 = scalar_select %p71, %s72, %s73
    %p77 = pneg %p71
    %p78 = scmp.eq.s32.totalorder %s10, 1
    %p79 = por %p77, %p78
    %p80 = scmp.ne.s32.totalorder %s72, %s75
    %p81 = scmp.eq.s32.totalorder %s10, 0
    %p82 = por %p80, %p81
    %p83 = scmp.ne.s32.totalorder %s72, %s75
    %p84 = scmp.eq.s32.totalorder %s15, 1
    %p85 = por %p83, %p84
    %p86 = scmp.ne.s32.totalorder %s75, %s76
    %p87 = scmp.eq.s32.totalorder %s15, 0
    %p88 = por %p86, %p87
    %p89 = scmp.ne.s32.totalorder %s75, %s76
    %p90 = scmp.eq.s32.totalorder %s16, 1
    %p91 = por %p89, %p90
    %p93 = scmp.ne.s32.totalorder %s76, %s92
    %p94 = scmp.eq.s32.totalorder %s16, 0
    %p95 = por %p93, %p94
    %s96 = ssub.s32 %s10, %s17
    %p97 = scmp.eq.s32.totalorder %s96, 0
    %s99 = sadd.s32 %s98, 1
    %s100 = scalar_select %p97, %s98, %s99
    %p103 = pneg %p97
    %p104 = scmp.eq.s32.totalorder %s10, 1
    %p105 = por %p103, %p104
    %p106 = scmp.ne.s32.totalorder %s98, %s101
    %p107 = scmp.eq.s32.totalorder %s10, 0
    %p108 = por %p106, %p107
    %p109 = scmp.ne.s32.totalorder %s98, %s101
    %p110 = scmp.eq.s32.totalorder %s15, 1
    %p111 = por %p109, %p110
    %p112 = scmp.ne.s32.totalorder %s101, %s102
    %p113 = scmp.eq.s32.totalorder %s15, 0
    %p114 = por %p112, %p113
    %p115 = scmp.ne.s32.totalorder %s101, %s102
    %p116 = scmp.eq.s32.totalorder %s16, 1
    %p117 = por %p115, %p116
    %p119 = scmp.ne.s32.totalorder %s102, %s118
    %p120 = scmp.eq.s32.totalorder %s16, 0
    %p121 = por %p119, %p120
    %s122 = ssub.s32 %s10, %s17
    %p123 = scmp.eq.s32.totalorder %s122, 0
    %s125 = sadd.s32 %s124, 1
    %s126 = scalar_select %p123, %s124, %s125
    %p129 = pneg %p123
    %p130 = scmp.eq.s32.totalorder %s10, 1
    %p131 = por %p129, %p130
    %p132 = scmp.ne.s32.totalorder %s124, %s127
    %p133 = scmp.eq.s32.totalorder %s10, 0
    %p134 = por %p132, %p133
    %p135 = scmp.ne.s32.totalorder %s124, %s127
    %p136 = scmp.eq.s32.totalorder %s15, 1
    %p137 = por %p135, %p136
    %p138 = scmp.ne.s32.totalorder %s127, %s128
    %p139 = scmp.eq.s32.totalorder %s15, 0
    %p140 = por %p138, %p139
    %p141 = scmp.ne.s32.totalorder %s127, %s128
    %p142 = scmp.eq.s32.totalorder %s16, 1
    %p143 = por %p141, %p142
    %p145 = scmp.ne.s32.totalorder %s128, %s144
    %p146 = scmp.eq.s32.totalorder %s16, 0
    %p147 = por %p145, %p146
    %p148 = scmp.le.s32.totalorder 1, %s10
    %p149 = scmp.lt.s32.totalorder %s10, 3
    %p150 = pnand %p148, %p149
    %p151 = pneg %p150
    // Predicated region
    $region9: #{_lambda_.40} parent=5 // pred_check
      _
    $region10: #{_lambda_.40} parent=5 // pred_check_branch
      %153 = sbr.rel (%p150) target = $region12
    $region11: #{_lambda_.40} parent=5 // pred_region
      %s154 = ssub.s32 %s10, 1
    $region12: #{_lambda_.40} parent=5 // pred_fallthru
      _
    %p155 = scmp.lt.s32.totalorder %s10, 2
    // Predicated region
    $region13: #{_lambda_.40} parent=5 // pred_check
      %p156 = pneg %p155
    $region14: #{_lambda_.40} parent=5 // pred_check_branch
      %158 = sbr.rel (%p156) target = $region16
    $region15: #{_lambda_.40} parent=5 // pred_region
      // Predicated region
      $region17: #{_lambda_.40} parent=15 // pred_check
        %p159 = pneg %p30
      $region18: #{_lambda_.40} parent=15 // pred_check_branch
        %161 = sbr.rel (%p159) target = $region20
      $region19: #{_lambda_.40} parent=15 // pred_region
        %p162 = scmp.lt.s32.totalorder %s10, 1
        %s163 = scalar_select %p162, %s10, 1
        %s164 = smul.addr %s163, 18
        %s165 = smul.addr %s164, 4
        %s166 = scalar_lea.vmem %s0, %s165
      $region20: #{_lambda_.40} parent=15 // pred_fallthru
        _
      // Predicated region
      $region21: #{_lambda_.40} parent=15 // pred_check
        %p167 = pneg %p56
      $region22: #{_lambda_.40} parent=15 // pred_check_branch
        %169 = sbr.rel (%p167) target = $region24
      $region23: #{_lambda_.40} parent=15 // pred_region
        %p170 = scmp.lt.s32.totalorder %s10, 1
        %s171 = scalar_select %p170, %s10, 1
        %s172 = smul.addr %s171, 9
        %s173 = smul.addr %s172, 4
        %s174 = scalar_lea.vmem %s1, %s173
      $region24: #{_lambda_.40} parent=15 // pred_fallthru
        _
      // Predicated region
      $region25: #{_lambda_.40} parent=15 // pred_check
        %p175 = pneg %p82
      $region26: #{_lambda_.40} parent=15 // pred_check_branch
        %177 = sbr.rel (%p175) target = $region28
      $region27: #{_lambda_.40} parent=15 // pred_region
        %p178 = scmp.lt.s32.totalorder %s10, 1
        %s179 = scalar_select %p178, %s10, 1
        %s180 = smul.addr %s179, 16
        %s181 = smul.addr %s180, 4
        %s182 = scalar_lea.vmem %s2, %s181
      $region28: #{_lambda_.40} parent=15 // pred_fallthru
        _
      // Predicated region
      $region29: #{_lambda_.40} parent=15 // pred_check
        %p183 = pneg %p108
      $region30: #{_lambda_.40} parent=15 // pred_check_branch
        %185 = sbr.rel (%p183) target = $region32
      $region31: #{_lambda_.40} parent=15 // pred_region
        %p186 = scmp.lt.s32.totalorder %s10, 1
        %s187 = scalar_select %p186, %s10, 1
        %s188 = smul.addr %s187, 8
        %s189 = smul.addr %s188, 4
        %s190 = scalar_lea.vmem %s3, %s189
      $region32: #{_lambda_.40} parent=15 // pred_fallthru
        _
    $region16: #{_lambda_.40} parent=5 // pred_fallthru
      _
    %p191 = scmp.le.s32.totalorder 1, %s10
    %p192 = scmp.lt.s32.totalorder %s10, 3
    %p193 = pnand %p191, %p192
    %p194 = pneg %p193
    // Predicated region
    $region33: #{_lambda_.40} parent=5 // pred_check
      _
    $region34: #{_lambda_.40} parent=5 // pred_check_branch
      %196 = sbr.rel (%p193) target = $region36
    $region35: #{_lambda_.40} parent=5 // pred_region
      %s197 = ssub.s32 %s10, 1
      %p198 = scmp.lt.s32.totalorder %s15, 1
      %s199 = scalar_select %p198, %s15, 1
      %s200 = smul.addr %s199, 18
      %s201 = smul.addr %s200, 4
      %s202 = scalar_lea.vmem %s0, %s201
      %p203 = pneg %p36
      %p204 = pneg %p33
      %p205 = scmp.lt.s32.totalorder %s15, 1
      %s206 = scalar_select %p205, %s15, 1
      %s207 = smul.addr %s206, 9
      %s208 = smul.addr %s207, 4
      %s209 = scalar_lea.vmem %s1, %s208
      %p210 = pneg %p62
      %p211 = pneg %p59
      %p212 = scmp.lt.s32.totalorder %s15, 1
      %s213 = scalar_select %p212, %s15, 1
      %s214 = smul.addr %s213, 16
      %s215 = smul.addr %s214, 4
      %s216 = scalar_lea.vmem %s2, %s215
      %p217 = pneg %p88
      %p218 = pneg %p85
      %p219 = scmp.lt.s32.totalorder %s15, 1
      %s220 = scalar_select %p219, %s15, 1
      %s221 = smul.addr %s220, 8
      %s222 = smul.addr %s221, 4
      %s223 = scalar_lea.vmem %s3, %s222
      %p224 = pneg %p114
      %p225 = pneg %p111
      %p226 = pneg %p140
      %p227 = pneg %p137
      %p228 = scmp.lt.s32.totalorder %s15, 1
      %s229 = scalar_select %p228, %s15, 1
      %s230 = smul.addr %s229, 8
      %s231 = smul.addr %s230, 4
      %s232 = scalar_lea.vmem %s4, %s231
      %p233 = scmp.lt.s32.totalorder %s15, 1
      %s234 = scalar_select %p233, %s15, 1
      %s235 = smul.addr %s234, 18
      %s236 = smul.addr %s235, 4
      %s237 = scalar_lea.vmem %s0, %s236
      %p238 = scmp.lt.s32.totalorder %s15, 1
      %s239 = scalar_select %p238, %s15, 1
      %s240 = smul.addr %s239, 9
      %s241 = smul.addr %s240, 4
      %s242 = scalar_lea.vmem %s1, %s241
      %p243 = scmp.lt.s32.totalorder %s15, 1
      %s244 = scalar_select %p243, %s15, 1
      %s245 = smul.addr %s244, 16
      %s246 = smul.addr %s245, 4
      %s247 = scalar_lea.vmem %s2, %s246
      %p248 = scmp.lt.s32.totalorder %s15, 1
      %s249 = scalar_select %p248, %s15, 1
      %s250 = smul.addr %s249, 8
      %s251 = smul.addr %s250, 4
      %s252 = scalar_lea.vmem %s3, %s251
      %p253 = scmp.lt.s32.totalorder %s15, 1
      %s254 = scalar_select %p253, %s15, 1
      %s255 = smul.addr %s254, 8
      %s256 = smul.addr %s255, 4
      %s257 = scalar_lea.vmem %s4, %s256
      %v258 = vld [vmem:[%s237] sm:$0xf]
      %v259 = vld [vmem:[%s237 + $0x4] sm:$0x1]
      %v260 = vld [vmem:[%s237 + $0x8] sm:$0xf]
      %v261 = vld [vmem:[%s237 + $0xc] sm:$0x1]
      %v262 = vld [vmem:[%s237 + $0x10] sm:$0xf]
      %v263 = vld [vmem:[%s237 + $0x14] sm:$0x1]
      %v264 = vld [vmem:[%s237 + $0x18] sm:$0xf]
      %v265 = vld [vmem:[%s237 + $0x1c] sm:$0x1]
      %v266 = vld [vmem:[%s237 + $0x20] sm:$0xf]
      %v267 = vld [vmem:[%s237 + $0x24] sm:$0x1]
      %v268 = vld [vmem:[%s237 + $0x28] sm:$0xf]
      %v269 = vld [vmem:[%s237 + $0x2c] sm:$0x1]
      %v270 = vld [vmem:[%s237 + $0x30] sm:$0xf]
      %v271 = vld [vmem:[%s237 + $0x34] sm:$0x1]
      %v272 = vld [vmem:[%s237 + $0x38] sm:$0xf]
      %v273 = vld [vmem:[%s237 + $0x3c] sm:$0x1]
      %v274 = vld [vmem:[%s237 + $0x40] sm:$0xf]
      %v275 = vld [vmem:[%s237 + $0x44] sm:$0x1]
      %v276 = vld [vmem:[%s242] sm:$0xf]
      %v277 = vld [vmem:[%s242 + $0x4] sm:$0xf]
      %v278 = vld [vmem:[%s242 + $0x8] sm:$0xf]
      %v279 = vld [vmem:[%s242 + $0xc] sm:$0xf]
      %v280 = vld [vmem:[%s242 + $0x10] sm:$0xf]
      %v281 = vld [vmem:[%s242 + $0x14] sm:$0xf]
      %v282 = vld [vmem:[%s242 + $0x18] sm:$0xf]
      %v283 = vld [vmem:[%s242 + $0x1c] sm:$0xf]
      %v284 = vld [vmem:[%s242 + $0x20] sm:$0xf]
      %v285 = vld [vmem:[%s247] sm:$0xf]
      %v286 = vld [vmem:[%s247 + $0x4] sm:$0x1]
      %v287 = vld [vmem:[%s247 + $0x8] sm:$0xf]
      %v288 = vld [vmem:[%s247 + $0xc] sm:$0x1]
      %v289 = vld [vmem:[%s247 + $0x10] sm:$0xf]
      %v290 = vld [vmem:[%s247 + $0x14] sm:$0x1]
      %v291 = vld [vmem:[%s247 + $0x18] sm:$0xf]
      %v292 = vld [vmem:[%s247 + $0x1c] sm:$0x1]
      %v293 = vld [vmem:[%s247 + $0x20] sm:$0xf]
      %v294 = vld [vmem:[%s247 + $0x24] sm:$0x1]
      %v295 = vld [vmem:[%s247 + $0x28] sm:$0xf]
      %v296 = vld [vmem:[%s247 + $0x2c] sm:$0x1]
      %v297 = vld [vmem:[%s247 + $0x30] sm:$0xf]
      %v298 = vld [vmem:[%s247 + $0x34] sm:$0x1]
      %v299 = vld [vmem:[%s247 + $0x38] sm:$0xf]
      %v300 = vld [vmem:[%s247 + $0x3c] sm:$0x1]
      %v301 = vld [vmem:[%s252] sm:$0xf]
      %v302 = vld [vmem:[%s252 + $0x4] sm:$0xf]
      %v303 = vld [vmem:[%s252 + $0x8] sm:$0xf]
      %v304 = vld [vmem:[%s252 + $0xc] sm:$0xf]
      %v305 = vld [vmem:[%s252 + $0x10] sm:$0xf]
      %v306 = vld [vmem:[%s252 + $0x14] sm:$0xf]
      %v307 = vld [vmem:[%s252 + $0x18] sm:$0xf]
      %v308 = vld [vmem:[%s252 + $0x1c] sm:$0xf]
      %v309 = vmax.bf16 %v301, %v258
      %v310 = vmax.bf16 %v302, %v260
      %v311 = vmax.bf16 %v303, %v262
      %v312 = vmax.bf16 %v304, %v264
      %v313 = vmax.bf16 %v305, %v266
      %v314 = vmax.bf16 %v306, %v268
      %v315 = vmax.bf16 %v307, %v270
      %v316 = vmax.bf16 %v308, %v272
      %vm317 = vsmask.f32 3328
      %vm318 = vsmask.f32 7440
      %vm319 = vmor %vm317, %vm318
      %v321 = vshrl.u32 %v258, 16
      %v323 = vrot.slane %v321, 4
      %v324 = vshll.u32 %v258, 16
      %v326 = vrot.slane %v324, 5
      %v327 = vor.u32 %v323, %v326
      %v328 = vrot.slane %v327, 4
      %v330 = vshll.u32 %v259, 16
      %v332 = vrot.slane %v330, 5
      %v333 = vsel %vm319, %v328, %v332
      %v335 = vshrl.u32 %v260, 16
      %v337 = vrot.slane %v335, 4
      %v338 = vshll.u32 %v260, 16
      %v340 = vrot.slane %v338, 5
      %v341 = vor.u32 %v337, %v340
      %v342 = vrot.slane %v341, 4
      %v344 = vshll.u32 %v261, 16
      %v346 = vrot.slane %v344, 5
      %v347 = vsel %vm319, %v342, %v346
      %v349 = vshrl.u32 %v262, 16
      %v351 = vrot.slane %v349, 4
      %v352 = vshll.u32 %v262, 16
      %v354 = vrot.slane %v352, 5
      %v355 = vor.u32 %v351, %v354
      %v356 = vrot.slane %v355, 4
      %v358 = vshll.u32 %v263, 16
      %v360 = vrot.slane %v358, 5
      %v361 = vsel %vm319, %v356, %v360
      %v363 = vshrl.u32 %v264, 16
      %v365 = vrot.slane %v363, 4
      %v366 = vshll.u32 %v264, 16
      %v368 = vrot.slane %v366, 5
      %v369 = vor.u32 %v365, %v368
      %v370 = vrot.slane %v369, 4
      %v372 = vshll.u32 %v265, 16
      %v374 = vrot.slane %v372, 5
      %v375 = vsel %vm319, %v370, %v374
      %v377 = vshrl.u32 %v266, 16
      %v379 = vrot.slane %v377, 4
      %v380 = vshll.u32 %v266, 16
      %v382 = vrot.slane %v380, 5
      %v383 = vor.u32 %v379, %v382
      %v384 = vrot.slane %v383, 4
      %v386 = vshll.u32 %v267, 16
      %v388 = vrot.slane %v386, 5
      %v389 = vsel %vm319, %v384, %v388
      %v391 = vshrl.u32 %v268, 16
      %v393 = vrot.slane %v391, 4
      %v394 = vshll.u32 %v268, 16
      %v396 = vrot.slane %v394, 5
      %v397 = vor.u32 %v393, %v396
      %v398 = vrot.slane %v397, 4
      %v400 = vshll.u32 %v269, 16
      %v402 = vrot.slane %v400, 5
      %v403 = vsel %vm319, %v398, %v402
      %v405 = vshrl.u32 %v270, 16
      %v407 = vrot.slane %v405, 4
      %v408 = vshll.u32 %v270, 16
      %v410 = vrot.slane %v408, 5
      %v411 = vor.u32 %v407, %v410
      %v412 = vrot.slane %v411, 4
      %v414 = vshll.u32 %v271, 16
      %v416 = vrot.slane %v414, 5
      %v417 = vsel %vm319, %v412, %v416
      %v419 = vshrl.u32 %v272, 16
      %v421 = vrot.slane %v419, 4
      %v422 = vshll.u32 %v272, 16
      %v424 = vrot.slane %v422, 5
      %v425 = vor.u32 %v421, %v424
      %v426 = vrot.slane %v425, 4
      %v428 = vshll.u32 %v273, 16
      %v430 = vrot.slane %v428, 5
      %v431 = vsel %vm319, %v426, %v430
      %v440 = vmax.bf16 %v309, %v333
      %v441 = vmax.bf16 %v310, %v347
      %v442 = vmax.bf16 %v311, %v361
      %v443 = vmax.bf16 %v312, %v375
      %v444 = vmax.bf16 %v313, %v389
      %v445 = vmax.bf16 %v314, %v403
      %v446 = vmax.bf16 %v315, %v417
      %v447 = vmax.bf16 %v316, %v431
      %v448 = vmax.bf16 %v440, %v260
      %v449 = vmax.bf16 %v441, %v262
      %v450 = vmax.bf16 %v442, %v264
      %v451 = vmax.bf16 %v443, %v266
      %v452 = vmax.bf16 %v444, %v268
      %v453 = vmax.bf16 %v445, %v270
      %v454 = vmax.bf16 %v446, %v272
      %v455 = vmax.bf16 %v447, %v274
      %v457 = vshrl.u32 %v274, 16
      %v459 = vrot.slane %v457, 4
      %v460 = vshll.u32 %v274, 16
      %v462 = vrot.slane %v460, 5
      %v463 = vor.u32 %v459, %v462
      %v464 = vrot.slane %v463, 4
      %v466 = vshll.u32 %v275, 16
      %v468 = vrot.slane %v466, 5
      %v469 = vsel %vm319, %v464, %v468
      %v471 = vmax.bf16 %v448, %v347
      %v472 = vmax.bf16 %v449, %v361
      %v473 = vmax.bf16 %v450, %v375
      %v474 = vmax.bf16 %v451, %v389
      %v475 = vmax.bf16 %v452, %v403
      %v476 = vmax.bf16 %v453, %v417
      %v477 = vmax.bf16 %v454, %v431
      %v478 = vmax.bf16 %v455, %v469
      %v479 = vmax.bf16 %v471, %v276
      %v480 = vmax.bf16 %v472, %v277
      %v481 = vmax.bf16 %v473, %v278
      %v482 = vmax.bf16 %v474, %v279
      %v483 = vmax.bf16 %v475, %v280
      %v484 = vmax.bf16 %v476, %v281
      %v485 = vmax.bf16 %v477, %v282
      %v486 = vmax.bf16 %v478, %v283
      %v487 = vmax.bf16 %v479, %v277
      %v488 = vmax.bf16 %v480, %v278
      %v489 = vmax.bf16 %v481, %v279
      %v490 = vmax.bf16 %v482, %v280
      %v491 = vmax.bf16 %v483, %v281
      %v492 = vmax.bf16 %v484, %v282
      %v493 = vmax.bf16 %v485, %v283
      %v494 = vmax.bf16 %v486, %v284
      %v495 = vmax.bf16 %v487, %v285
      %v496 = vmax.bf16 %v488, %v287
      %v497 = vmax.bf16 %v489, %v289
      %v498 = vmax.bf16 %v490, %v291
      %v499 = vmax.bf16 %v491, %v293
      %v500 = vmax.bf16 %v492, %v295
      %v501 = vmax.bf16 %v493, %v297
      %v502 = vmax.bf16 %v494, %v299
      %v504 = vshrl.u32 %v285, 16
      %v506 = vrot.slane %v504, 4
      %v507 = vshll.u32 %v285, 16
      %v509 = vrot.slane %v507, 5
      %v510 = vor.u32 %v506, %v509
      %v511 = vrot.slane %v510, 4
      %v513 = vshll.u32 %v286, 16
      %v515 = vrot.slane %v513, 5
      %v516 = vsel %vm319, %v511, %v515
      %v518 = vshrl.u32 %v287, 16
      %v520 = vrot.slane %v518, 4
      %v521 = vshll.u32 %v287, 16
      %v523 = vrot.slane %v521, 5
      %v524 = vor.u32 %v520, %v523
      %v525 = vrot.slane %v524, 4
      %v527 = vshll.u32 %v288, 16
      %v529 = vrot.slane %v527, 5
      %v530 = vsel %vm319, %v525, %v529
      %v532 = vshrl.u32 %v289, 16
      %v534 = vrot.slane %v532, 4
      %v535 = vshll.u32 %v289, 16
      %v537 = vrot.slane %v535, 5
      %v538 = vor.u32 %v534, %v537
      %v539 = vrot.slane %v538, 4
      %v541 = vshll.u32 %v290, 16
      %v543 = vrot.slane %v541, 5
      %v544 = vsel %vm319, %v539, %v543
      %v546 = vshrl.u32 %v291, 16
      %v548 = vrot.slane %v546, 4
      %v549 = vshll.u32 %v291, 16
      %v551 = vrot.slane %v549, 5
      %v552 = vor.u32 %v548, %v551
      %v553 = vrot.slane %v552, 4
      %v555 = vshll.u32 %v292, 16
      %v557 = vrot.slane %v555, 5
      %v558 = vsel %vm319, %v553, %v557
      %v560 = vshrl.u32 %v293, 16
      %v562 = vrot.slane %v560, 4
      %v563 = vshll.u32 %v293, 16
      %v565 = vrot.slane %v563, 5
      %v566 = vor.u32 %v562, %v565
      %v567 = vrot.slane %v566, 4
      %v569 = vshll.u32 %v294, 16
      %v571 = vrot.slane %v569, 5
      %v572 = vsel %vm319, %v567, %v571
      %v574 = vshrl.u32 %v295, 16
      %v576 = vrot.slane %v574, 4
      %v577 = vshll.u32 %v295, 16
      %v579 = vrot.slane %v577, 5
      %v580 = vor.u32 %v576, %v579
      %v581 = vrot.slane %v580, 4
      %v583 = vshll.u32 %v296, 16
      %v585 = vrot.slane %v583, 5
      %v586 = vsel %vm319, %v581, %v585
      %v588 = vshrl.u32 %v297, 16
      %v590 = vrot.slane %v588, 4
      %v591 = vshll.u32 %v297, 16
      %v593 = vrot.slane %v591, 5
      %v594 = vor.u32 %v590, %v593
      %v595 = vrot.slane %v594, 4
      %v597 = vshll.u32 %v298, 16
      %v599 = vrot.slane %v597, 5
      %v600 = vsel %vm319, %v595, %v599
      %v602 = vshrl.u32 %v299, 16
      %v604 = vrot.slane %v602, 4
      %v605 = vshll.u32 %v299, 16
      %v607 = vrot.slane %v605, 5
      %v608 = vor.u32 %v604, %v607
      %v609 = vrot.slane %v608, 4
      %v611 = vshll.u32 %v300, 16
      %v613 = vrot.slane %v611, 5
      %v614 = vsel %vm319, %v609, %v613
      %v623 = vmax.bf16 %v495, %v516
      %v624 = vmax.bf16 %v496, %v530
      %v625 = vmax.bf16 %v497, %v544
      %v626 = vmax.bf16 %v498, %v558
      %v627 = vmax.bf16 %v499, %v572
      %v628 = vmax.bf16 %v500, %v586
      %v629 = vmax.bf16 %v501, %v600
      %v630 = vmax.bf16 %v502, %v614
      %631 = vst [vmem:[%s257] sm:$0xf] %v623
      %632 = vst [vmem:[%s257 + $0x4] sm:$0xf] %v624
      %633 = vst [vmem:[%s257 + $0x8] sm:$0xf] %v625
      %634 = vst [vmem:[%s257 + $0xc] sm:$0xf] %v626
      %635 = vst [vmem:[%s257 + $0x10] sm:$0xf] %v627
      %636 = vst [vmem:[%s257 + $0x14] sm:$0xf] %v628
      %637 = vst [vmem:[%s257 + $0x18] sm:$0xf] %v629
      %638 = vst [vmem:[%s257 + $0x1c] sm:$0xf] %v630
      %p639 = scmp.lt.s32.totalorder %s15, 1
      %s640 = scalar_select %p639, %s15, 1
      %s641 = smul.addr %s640, 8
      %s642 = smul.addr %s641, 4
      %s643 = scalar_lea.vmem %s4, %s642
      // Predicated region
      $region37: #{_lambda_.40} parent=35 // pred_check
        %p644 = pneg %p137
      $region38: #{_lambda_.40} parent=35 // pred_check_branch
        %646 = sbr.rel (%p644) target = $region40
      $region39: #{_lambda_.40} parent=35 // pred_region
        _
      $region40: #{_lambda_.40} parent=35 // pred_fallthru
        _
    $region36: #{_lambda_.40} parent=5 // pred_fallthru
      _
    %p647 = scmp.le.s32.totalorder 2, %s10
    // Predicated region
    $region41: #{_lambda_.40} parent=5 // pred_check
      %p648 = pneg %p647
    $region42: #{_lambda_.40} parent=5 // pred_check_branch
      %650 = sbr.rel (%p648) target = $region44
    $region43: #{_lambda_.40} parent=5 // pred_region
      %s651 = ssub.s32 %s10, 2
      // Predicated region
      $region45: #{_lambda_.40} parent=43 // pred_check
        %p652 = pneg %p143
      $region46: #{_lambda_.40} parent=43 // pred_check_branch
        %654 = sbr.rel (%p652) target = $region48
      $region47: #{_lambda_.40} parent=43 // pred_region
        %p655 = scmp.lt.s32.totalorder %s16, 1
        %s656 = scalar_select %p655, %s16, 1
        %s657 = smul.addr %s656, 8
        %s658 = smul.addr %s657, 4
        %s659 = scalar_lea.vmem %s4, %s658
      $region48: #{_lambda_.40} parent=43 // pred_fallthru
        _
    $region44: #{_lambda_.40} parent=5 // pred_fallthru
      _
  $region6: #{_lambda_.40} parent=0 // loop_footer
    %s14 = sadd.s32 1, %s10
  $region7: #{_lambda_.40} parent=0 // loop_footer_branch
    %9 = sbr.rel target = $region3
  $region8: #{_lambda_.40} parent=0 // loop_exit
    _

// kernel: _lambda_.42
$region0: #{_lambda_.42}
  #allocation0 [shape = 'u32[]', space=smem, size = 0x4, offset = 0x4, fixed_abs, tag = 'smem constant byte address 0x4 - core index']
  #allocation1 [shape = 'u32[144,128]{1,0:T(1,128)}', space=vmem, size = 0x12000, scoped, tag = 'internal scratch']
  %s0 = inlined_call_operand.vmem [shape: bf16[128,128], index: 0, kind: input, shape index: {}]
  %s1 = inlined_call_operand.vmem [shape: bf16[128,128], index: 1, kind: input, shape index: {}]
  %s2 = inlined_call_operand.vmem [shape: f32[1,128], index: 2, kind: input, shape index: {}]
  %s3 = inlined_call_operand.vmem [shape: bf16[128,128], index: 3, kind: output, shape index: {}]
  %s4 = sld [smem:[#allocation0]]
  $region22: #{_lambda_.42} parent=0
    _
  %s6 = ssub.s32 1, %s4
  %s7 = scalar_select 0, %s6, %s4
  // Predicated region
  $region2: #{_lambda_.42} parent=0 // pred_check
    _
  $region3: #{_lambda_.42} parent=0 // pred_check_branch
    %9 = sbr.rel (0) target = $region5
  $region4: #{_lambda_.42} parent=0 // pred_region
    _
  $region5: #{_lambda_.42} parent=0 // pred_fallthru
    _
  // Predicated region
  $region6: #{_lambda_.42} parent=0 // pred_check
    _
  $region7: #{_lambda_.42} parent=0 // pred_check_branch
    %11 = sbr.rel (0) target = $region9
  $region8: #{_lambda_.42} parent=0 // pred_region
    _
  $region9: #{_lambda_.42} parent=0 // pred_fallthru
    _
  // Predicated region
  $region10: #{_lambda_.42} parent=0 // pred_check
    _
  $region11: #{_lambda_.42} parent=0 // pred_check_branch
    %13 = sbr.rel (0) target = $region13
  $region12: #{_lambda_.42} parent=0 // pred_region
    _
  $region13: #{_lambda_.42} parent=0 // pred_fallthru
    _
  %v15 = vld [vmem:[%s0] sm:$0xf]
  %v16 = vld [vmem:[%s0 + $0x4] sm:$0xf]
  %v17 = vld [vmem:[%s0 + $0x8] sm:$0xf]
  %v18 = vld [vmem:[%s0 + $0xc] sm:$0xf]
  %v19 = vld [vmem:[%s0 + $0x10] sm:$0xf]
  %v20 = vld [vmem:[%s0 + $0x14] sm:$0xf]
  %v21 = vld [vmem:[%s0 + $0x18] sm:$0xf]
  %v22 = vld [vmem:[%s0 + $0x1c] sm:$0xf]
  %v23 = vld [vmem:[%s0 + $0x20] sm:$0xf]
  %v24 = vld [vmem:[%s0 + $0x24] sm:$0xf]
  %v25 = vld [vmem:[%s0 + $0x28] sm:$0xf]
  %v26 = vld [vmem:[%s0 + $0x2c] sm:$0xf]
  %v27 = vld [vmem:[%s0 + $0x30] sm:$0xf]
  %v28 = vld [vmem:[%s0 + $0x34] sm:$0xf]
  %v29 = vld [vmem:[%s0 + $0x38] sm:$0xf]
  %v30 = vld [vmem:[%s0 + $0x3c] sm:$0xf]
  %v31 = vld [vmem:[%s1] sm:$0xf]
  %v32 = vld [vmem:[%s1 + $0x4] sm:$0xf]
  %v33 = vld [vmem:[%s1 + $0x8] sm:$0xf]
  %v34 = vld [vmem:[%s1 + $0xc] sm:$0xf]
  %v35 = vld [vmem:[%s1 + $0x10] sm:$0xf]
  %v36 = vld [vmem:[%s1 + $0x14] sm:$0xf]
  %v37 = vld [vmem:[%s1 + $0x18] sm:$0xf]
  %v38 = vld [vmem:[%s1 + $0x1c] sm:$0xf]
  %v39 = vld [vmem:[%s1 + $0x20] sm:$0xf]
  %v40 = vld [vmem:[%s1 + $0x24] sm:$0xf]
  %v41 = vld [vmem:[%s1 + $0x28] sm:$0xf]
  %v42 = vld [vmem:[%s1 + $0x2c] sm:$0xf]
  %v43 = vld [vmem:[%s1 + $0x30] sm:$0xf]
  %v44 = vld [vmem:[%s1 + $0x34] sm:$0xf]
  %v45 = vld [vmem:[%s1 + $0x38] sm:$0xf]
  %v46 = vld [vmem:[%s1 + $0x3c] sm:$0xf]
  %v47 = vld [vmem:[%s2] sm:$0x1]
  %v49 = vlaneseq
  %v50 = vshrl.u32 %v49, 7
  %v51 = vsub.s32 0, %v50
  %v52 = vrot.slane %v47, %v51
  %v70 = vunpack.c.l.b16 %v15
  %v71 = vunpack.c.l.b16 %v16
  %v72 = vunpack.c.l.b16 %v17
  %v73 = vunpack.c.l.b16 %v18
  %v74 = vunpack.c.l.b16 %v19
  %v75 = vunpack.c.l.b16 %v20
  %v76 = vunpack.c.l.b16 %v21
  %v77 = vunpack.c.l.b16 %v22
  %v78 = vunpack.c.l.b16 %v23
  %v79 = vunpack.c.l.b16 %v24
  %v80 = vunpack.c.l.b16 %v25
  %v81 = vunpack.c.l.b16 %v26
  %v82 = vunpack.c.l.b16 %v27
  %v83 = vunpack.c.l.b16 %v28
  %v84 = vunpack.c.l.b16 %v29
  %v85 = vunpack.c.l.b16 %v30
  %v86 = vpack.c.b16 %v71, %v70
  %v87 = vpack.c.b16 %v73, %v72
  %v88 = vpack.c.b16 %v75, %v74
  %v89 = vpack.c.b16 %v77, %v76
  %v90 = vpack.c.b16 %v79, %v78
  %v91 = vpack.c.b16 %v81, %v80
  %v92 = vpack.c.b16 %v83, %v82
  %v93 = vpack.c.b16 %v85, %v84
  %v118 = vunpack.c.l.b16 %v31
  %v119 = vunpack.c.l.b16 %v32
  %v120 = vunpack.c.l.b16 %v33
  %v121 = vunpack.c.l.b16 %v34
  %v122 = vunpack.c.l.b16 %v35
  %v123 = vunpack.c.l.b16 %v36
  %v124 = vunpack.c.l.b16 %v37
  %v125 = vunpack.c.l.b16 %v38
  %v126 = vunpack.c.l.b16 %v39
  %v127 = vunpack.c.l.b16 %v40
  %v128 = vunpack.c.l.b16 %v41
  %v129 = vunpack.c.l.b16 %v42
  %v130 = vunpack.c.l.b16 %v43
  %v131 = vunpack.c.l.b16 %v44
  %v132 = vunpack.c.l.b16 %v45
  %v133 = vunpack.c.l.b16 %v46
  %v134 = vpack.c.b16 %v119, %v118
  %v135 = vpack.c.b16 %v121, %v120
  %v136 = vpack.c.b16 %v123, %v122
  %v137 = vpack.c.b16 %v125, %v124
  %v138 = vpack.c.b16 %v127, %v126
  %v139 = vpack.c.b16 %v129, %v128
  %v140 = vpack.c.b16 %v131, %v130
  %v141 = vpack.c.b16 %v133, %v132
  %150 = vmatprep.subr.bf16.mxu0 0
  %151 = vmatpush1.bf16.msra.mxu0 %v134
  %152 = vmatprep.subr.bf16.mxu0 0
  %153 = vmatpush1.bf16.msra.mxu0 %v135
  %154 = vmatprep.subr.bf16.mxu0 0
  %155 = vmatpush1.bf16.msra.mxu0 %v136
  %156 = vmatprep.subr.bf16.mxu0 0
  %157 = vmatpush1.bf16.msra.mxu0 %v137
  %158 = vmatprep.subr.bf16.mxu0 0
  %159 = vmatpush1.bf16.msra.mxu0 %v138
  %160 = vmatprep.subr.bf16.mxu0 0
  %161 = vmatpush1.bf16.msra.mxu0 %v139
  %162 = vmatprep.subr.bf16.mxu0 0
  %163 = vmatpush1.bf16.msra.mxu0 %v140
  %164 = vmatprep.subr.bf16.mxu0 0
  %165 = vmatpush1.bf16.msra.mxu0 %v141
  %166 = vmatprep.subr.bf16.mxu0 0
  %167 = vmatpush1.bf16.msra.mxu0 0
  %168 = vmatprep.subr.bf16.mxu0 0
  %169 = vmatpush1.bf16.msra.mxu0 0
  %170 = vmatprep.subr.bf16.mxu0 0
  %171 = vmatpush1.bf16.msra.mxu0 0
  %172 = vmatprep.subr.bf16.mxu0 0
  %173 = vmatpush1.bf16.msra.mxu0 0
  %174 = vmatprep.subr.bf16.mxu0 0
  %175 = vmatpush1.bf16.msra.mxu0 0
  %176 = vmatprep.subr.bf16.mxu0 0
  %177 = vmatpush1.bf16.msra.mxu0 0
  %178 = vmatprep.subr.bf16.mxu0 0
  %179 = vmatpush1.bf16.msra.mxu0 0
  %180 = vmatprep.subr.bf16.mxu0 0
  %181 = vmatpush1.bf16.msra.mxu0 0
  %182 = vmatprep.mubr.bf16.mxu0 0
  %183 = vmatmul.mubr.bf16.gmra.mrb[0].mxu0 %v86
  %v184 = vpop.f32.mrb[0].mxu0
  %v185 = vadd.f32 %v52, %v184
  %v186 = vpop.f32.mrb[0].mxu0
  %v187 = vpop.f32.mrb[0].mxu0
  %v188 = vadd.f32 %v52, %v187
  %v189 = vpop.f32.mrb[0].mxu0
  %190 = vmatprep.mubr.bf16.mxu0 0
  %191 = vmatmul.mubr.bf16.gmra.mrb[0].mxu0 %v87
  %v192 = vpop.f32.mrb[0].mxu0
  %v193 = vadd.f32 %v52, %v192
  %v194 = vpop.f32.mrb[0].mxu0
  %v195 = vpop.f32.mrb[0].mxu0
  %v196 = vadd.f32 %v52, %v195
  %v197 = vpop.f32.mrb[0].mxu0
  %198 = vmatprep.mubr.bf16.mxu0 0
  %199 = vmatmul.mubr.bf16.gmra.mrb[0].mxu0 %v88
  %v200 = vpop.f32.mrb[0].mxu0
  %v201 = vadd.f32 %v52, %v200
  %v202 = vpop.f32.mrb[0].mxu0
  %v203 = vpop.f32.mrb[0].mxu0
  %v204 = vadd.f32 %v52, %v203
  %v205 = vpop.f32.mrb[0].mxu0
  %206 = vmatprep.mubr.bf16.mxu0 0
  %207 = vmatmul.mubr.bf16.gmra.mrb[0].mxu0 %v89
  %v208 = vpop.f32.mrb[0].mxu0
  %v209 = vadd.f32 %v52, %v208
  %v210 = vpop.f32.mrb[0].mxu0
  %v211 = vpop.f32.mrb[0].mxu0
  %v212 = vadd.f32 %v52, %v211
  %v213 = vpop.f32.mrb[0].mxu0
  %214 = vmatprep.mubr.bf16.mxu0 0
  %215 = vmatmul.mubr.bf16.gmra.mrb[0].mxu0 %v90
  %v216 = vpop.f32.mrb[0].mxu0
  %v217 = vadd.f32 %v52, %v216
  %v218 = vpop.f32.mrb[0].mxu0
  %v219 = vpop.f32.mrb[0].mxu0
  %v220 = vadd.f32 %v52, %v219
  %v221 = vpop.f32.mrb[0].mxu0
  %222 = vmatprep.mubr.bf16.mxu0 0
  %223 = vmatmul.mubr.bf16.gmra.mrb[0].mxu0 %v91
  %v224 = vpop.f32.mrb[0].mxu0
  %v225 = vadd.f32 %v52, %v224
  %v226 = vpop.f32.mrb[0].mxu0
  %v227 = vpop.f32.mrb[0].mxu0
  %v228 = vadd.f32 %v52, %v227
  %v229 = vpop.f32.mrb[0].mxu0
  %230 = vmatprep.mubr.bf16.mxu0 0
  %231 = vmatmul.mubr.bf16.gmra.mrb[0].mxu0 %v92
  %v232 = vpop.f32.mrb[0].mxu0
  %v233 = vadd.f32 %v52, %v232
  %v234 = vpop.f32.mrb[0].mxu0
  %v235 = vpop.f32.mrb[0].mxu0
  %v236 = vadd.f32 %v52, %v235
  %v237 = vpop.f32.mrb[0].mxu0
  %238 = vmatprep.mubr.bf16.mxu0 0
  %239 = vmatmul.mubr.bf16.gmra.mrb[0].mxu0 %v93
  %v240 = vpop.f32.mrb[0].mxu0
  %v241 = vadd.f32 %v52, %v240
  %v242 = vpop.f32.mrb[0].mxu0
  %v243 = vpop.f32.mrb[0].mxu0
  %v244 = vadd.f32 %v52, %v243
  %v245 = vpop.f32.mrb[0].mxu0
  %246 = vdwg.mxu0
  %v247 = vmax.f32 %v185, 0.0
  %v248 = vmax.f32 %v188, 0.0
  %v249 = vmax.f32 %v193, 0.0
  %v250 = vmax.f32 %v196, 0.0
  %v251 = vmax.f32 %v201, 0.0
  %v252 = vmax.f32 %v204, 0.0
  %v253 = vmax.f32 %v209, 0.0
  %v254 = vmax.f32 %v212, 0.0
  %v255 = vmax.f32 %v217, 0.0
  %v256 = vmax.f32 %v220, 0.0
  %v257 = vmax.f32 %v225, 0.0
  %v258 = vmax.f32 %v228, 0.0
  %v259 = vmax.f32 %v233, 0.0
  %v260 = vmax.f32 %v236, 0.0
  %v261 = vmax.f32 %v241, 0.0
  %v262 = vmax.f32 %v244, 0.0
  %v263 = vpack.c.bf16 %v248, %v247
  %v264 = vpack.c.bf16 %v250, %v249
  %v265 = vpack.c.bf16 %v252, %v251
  %v266 = vpack.c.bf16 %v254, %v253
  %v267 = vpack.c.bf16 %v256, %v255
  %v268 = vpack.c.bf16 %v258, %v257
  %v269 = vpack.c.bf16 %v260, %v259
  %v270 = vpack.c.bf16 %v262, %v261
  %v279 = vunpack.c.l.b16 %v263
  %v280 = vunpack.c.h.b16 %v263
  %v281 = vunpack.c.l.b16 %v264
  %v282 = vunpack.c.h.b16 %v264
  %v283 = vunpack.c.l.b16 %v265
  %v284 = vunpack.c.h.b16 %v265
  %v285 = vunpack.c.l.b16 %v266
  %v286 = vunpack.c.h.b16 %v266
  %v287 = vunpack.c.l.b16 %v267
  %v288 = vunpack.c.h.b16 %v267
  %v289 = vunpack.c.l.b16 %v268
  %v290 = vunpack.c.h.b16 %v268
  %v291 = vunpack.c.l.b16 %v269
  %v292 = vunpack.c.h.b16 %v269
  %v293 = vunpack.c.l.b16 %v270
  %v294 = vunpack.c.h.b16 %v270
  %v295 = vpack.c.b16 %v279, %v279
  %v296 = vpack.c.b16 %v280, %v280
  %v297 = vpack.c.b16 %v281, %v281
  %v298 = vpack.c.b16 %v282, %v282
  %v299 = vpack.c.b16 %v283, %v283
  %v300 = vpack.c.b16 %v284, %v284
  %v301 = vpack.c.b16 %v285, %v285
  %v302 = vpack.c.b16 %v286, %v286
  %v303 = vpack.c.b16 %v287, %v287
  %v304 = vpack.c.b16 %v288, %v288
  %v305 = vpack.c.b16 %v289, %v289
  %v306 = vpack.c.b16 %v290, %v290
  %v307 = vpack.c.b16 %v291, %v291
  %v308 = vpack.c.b16 %v292, %v292
  %v309 = vpack.c.b16 %v293, %v293
  %v310 = vpack.c.b16 %v294, %v294
  %327 = vst [vmem:[%s3] sm:$0xf] %v295
  %328 = vst [vmem:[%s3 + $0x4] sm:$0xf] %v296
  %329 = vst [vmem:[%s3 + $0x8] sm:$0xf] %v297
  %330 = vst [vmem:[%s3 + $0xc] sm:$0xf] %v298
  %331 = vst [vmem:[%s3 + $0x10] sm:$0xf] %v299
  %332 = vst [vmem:[%s3 + $0x14] sm:$0xf] %v300
  %333 = vst [vmem:[%s3 + $0x18] sm:$0xf] %v301
  %334 = vst [vmem:[%s3 + $0x1c] sm:$0xf] %v302
  %335 = vst [vmem:[%s3 + $0x20] sm:$0xf] %v303
  %336 = vst [vmem:[%s3 + $0x24] sm:$0xf] %v304
  %337 = vst [vmem:[%s3 + $0x28] sm:$0xf] %v305
  %338 = vst [vmem:[%s3 + $0x2c] sm:$0xf] %v306
  %339 = vst [vmem:[%s3 + $0x30] sm:$0xf] %v307
  %340 = vst [vmem:[%s3 + $0x34] sm:$0xf] %v308
  %341 = vst [vmem:[%s3 + $0x38] sm:$0xf] %v309
  %342 = vst [vmem:[%s3 + $0x3c] sm:$0xf] %v310
  // Predicated region
  $region14: #{_lambda_.42} parent=0 // pred_check
    _
  $region15: #{_lambda_.42} parent=0 // pred_check_branch
    %344 = sbr.rel (0) target = $region17
  $region16: #{_lambda_.42} parent=0 // pred_region
    _
  $region17: #{_lambda_.42} parent=0 // pred_fallthru
    _
  // Predicated region
  $region18: #{_lambda_.42} parent=0 // pred_check
    _
  $region19: #{_lambda_.42} parent=0 // pred_check_branch
    %346 = sbr.rel (0) target = $region21
  $region20: #{_lambda_.42} parent=0 // pred_region
    _
  $region21: #{_lambda_.42} parent=0 // pred_fallthru
    _

// kernel: _lambda_.39
$region0: #{_lambda_.39}
  #allocation0 [shape = 'u32[]', space=smem, size = 0x4, offset = 0x4, fixed_abs, tag = 'smem constant byte address 0x4 - core index']
  #allocation1 [shape = 'u32[144,128]{1,0:T(1,128)}', space=vmem, size = 0x12000, scoped, tag = 'internal scratch']
  %s0 = inlined_call_operand.vmem [shape: bf16[512,256], index: 0, kind: input, shape index: {}]
  %s1 = inlined_call_operand.vmem [shape: bf16[256,128], index: 1, kind: input, shape index: {}]
  %s2 = inlined_call_operand.vmem [shape: f32[1,128], index: 2, kind: input, shape index: {}]
  %s3 = inlined_call_operand.vmem [shape: bf16[512,128], index: 3, kind: output, shape index: {}]
  %s4 = sld [smem:[#allocation0]]
  $region22: #{_lambda_.39} parent=0
    _
  %s6 = ssub.s32 1, %s4
  %s7 = scalar_select 0, %s6, %s4
  // Predicated region
  $region2: #{_lambda_.39} parent=0 // pred_check
    _
  $region3: #{_lambda_.39} parent=0 // pred_check_branch
    %9 = sbr.rel (0) target = $region5
  $region4: #{_lambda_.39} parent=0 // pred_region
    _
  $region5: #{_lambda_.39} parent=0 // pred_fallthru
    _
  // Predicated region
  $region6: #{_lambda_.39} parent=0 // pred_check
    _
  $region7: #{_lambda_.39} parent=0 // pred_check_branch
    %11 = sbr.rel (0) target = $region9
  $region8: #{_lambda_.39} parent=0 // pred_region
    _
  $region9: #{_lambda_.39} parent=0 // pred_fallthru
    _
  // Predicated region
  $region10: #{_lambda_.39} parent=0 // pred_check
    _
  $region11: #{_lambda_.39} parent=0 // pred_check_branch
    %13 = sbr.rel (0) target = $region13
  $region12: #{_lambda_.39} parent=0 // pred_region
    _
  $region13: #{_lambda_.39} parent=0 // pred_fallthru
    _
  %v15 = vld [vmem:[%s0] sm:$0xff]
  %v16 = vld [vmem:[%s0 + $0x8] sm:$0xff]
  %v17 = vld [vmem:[%s0 + $0x10] sm:$0xff]
  %v18 = vld [vmem:[%s0 + $0x18] sm:$0xff]
  %v19 = vld [vmem:[%s0 + $0x20] sm:$0xff]
  %v20 = vld [vmem:[%s0 + $0x28] sm:$0xff]
  %v21 = vld [vmem:[%s0 + $0x30] sm:$0xff]
  %v22 = vld [vmem:[%s0 + $0x38] sm:$0xff]
  %v23 = vld [vmem:[%s0 + $0x40] sm:$0xff]
  %v24 = vld [vmem:[%s0 + $0x48] sm:$0xff]
  %v25 = vld [vmem:[%s0 + $0x50] sm:$0xff]
  %v26 = vld [vmem:[%s0 + $0x58] sm:$0xff]
  %v27 = vld [vmem:[%s0 + $0x60] sm:$0xff]
  %v28 = vld [vmem:[%s0 + $0x68] sm:$0xff]
  %v29 = vld [vmem:[%s0 + $0x70] sm:$0xff]
  %v30 = vld [vmem:[%s0 + $0x78] sm:$0xff]
  %v31 = vld [vmem:[%s0 + $0x80] sm:$0xff]
  %v32 = vld [vmem:[%s0 + $0x88] sm:$0xff]
  %v33 = vld [vmem:[%s0 + $0x90] sm:$0xff]
  %v34 = vld [vmem:[%s0 + $0x98] sm:$0xff]
  %v35 = vld [vmem:[%s0 + $0xa0] sm:$0xff]
  %v36 = vld [vmem:[%s0 + $0xa8] sm:$0xff]
  %v37 = vld [vmem:[%s0 + $0xb0] sm:$0xff]
  %v38 = vld [vmem:[%s0 + $0xb8] sm:$0xff]
  %v39 = vld [vmem:[%s0 + $0xc0] sm:$0xff]
  %v40 = vld [vmem:[%s0 + $0xc8] sm:$0xff]
  %v41 = vld [vmem:[%s0 + $0xd0] sm:$0xff]
  %v42 = vld [vmem:[%s0 + $0xd8] sm:$0xff]
  %v43 = vld [vmem:[%s0 + $0xe0] sm:$0xff]
  %v44 = vld [vmem:[%s0 + $0xe8] sm:$0xff]
  %v45 = vld [vmem:[%s0 + $0xf0] sm:$0xff]
  %v46 = vld [vmem:[%s0 + $0xf8] sm:$0xff]
  %v47 = vld [vmem:[%s0 + $0x100] sm:$0xff]
  %v48 = vld [vmem:[%s0 + $0x108] sm:$0xff]
  %v49 = vld [vmem:[%s0 + $0x110] sm:$0xff]
  %v50 = vld [vmem:[%s0 + $0x118] sm:$0xff]
  %v51 = vld [vmem:[%s0 + $0x120] sm:$0xff]
  %v52 = vld [vmem:[%s0 + $0x128] sm:$0xff]
  %v53 = vld [vmem:[%s0 + $0x130] sm:$0xff]
  %v54 = vld [vmem:[%s0 + $0x138] sm:$0xff]
  %v55 = vld [vmem:[%s0 + $0x140] sm:$0xff]
  %v56 = vld [vmem:[%s0 + $0x148] sm:$0xff]
  %v57 = vld [vmem:[%s0 + $0x150] sm:$0xff]
  %v58 = vld [vmem:[%s0 + $0x158] sm:$0xff]
  %v59 = vld [vmem:[%s0 + $0x160] sm:$0xff]
  %v60 = vld [vmem:[%s0 + $0x168] sm:$0xff]
  %v61 = vld [vmem:[%s0 + $0x170] sm:$0xff]
  %v62 = vld [vmem:[%s0 + $0x178] sm:$0xff]
  %v63 = vld [vmem:[%s0 + $0x180] sm:$0xff]
  %v64 = vld [vmem:[%s0 + $0x188] sm:$0xff]
  %v65 = vld [vmem:[%s0 + $0x190] sm:$0xff]
  %v66 = vld [vmem:[%s0 + $0x198] sm:$0xff]
  %v67 = vld [vmem:[%s0 + $0x1a0] sm:$0xff]
  %v68 = vld [vmem:[%s0 + $0x1a8] sm:$0xff]
  %v69 = vld [vmem:[%s0 + $0x1b0] sm:$0xff]
  %v70 = vld [vmem:[%s0 + $0x1b8] sm:$0xff]
  %v71 = vld [vmem:[%s0 + $0x1c0] sm:$0xff]
  %v72 = vld [vmem:[%s0 + $0x1c8] sm:$0xff]
  %v73 = vld [vmem:[%s0 + $0x1d0] sm:$0xff]
  %v74 = vld [vmem:[%s0 + $0x1d8] sm:$0xff]
  %v75 = vld [vmem:[%s0 + $0x1e0] sm:$0xff]
  %v76 = vld [vmem:[%s0 + $0x1e8] sm:$0xff]
  %v77 = vld [vmem:[%s0 + $0x1f0] sm:$0xff]
  %v78 = vld [vmem:[%s0 + $0x1f8] sm:$0xff]
  %v79 = vld [vmem:[%s1] sm:$0xf]
  %v80 = vld [vmem:[%s1 + $0x4] sm:$0xf]
  %v81 = vld [vmem:[%s1 + $0x8] sm:$0xf]
  %v82 = vld [vmem:[%s1 + $0xc] sm:$0xf]
  %v83 = vld [vmem:[%s1 + $0x10] sm:$0xf]
  %v84 = vld [vmem:[%s1 + $0x14] sm:$0xf]
  %v85 = vld [vmem:[%s1 + $0x18] sm:$0xf]
  %v86 = vld [vmem:[%s1 + $0x1c] sm:$0xf]
  %v87 = vld [vmem:[%s1 + $0x20] sm:$0xf]
  %v88 = vld [vmem:[%s1 + $0x24] sm:$0xf]
  %v89 = vld [vmem:[%s1 + $0x28] sm:$0xf]
  %v90 = vld [vmem:[%s1 + $0x2c] sm:$0xf]
  %v91 = vld [vmem:[%s1 + $0x30] sm:$0xf]
  %v92 = vld [vmem:[%s1 + $0x34] sm:$0xf]
  %v93 = vld [vmem:[%s1 + $0x38] sm:$0xf]
  %v94 = vld [vmem:[%s1 + $0x3c] sm:$0xf]
  %v95 = vld [vmem:[%s1 + $0x40] sm:$0xf]
  %v96 = vld [vmem:[%s1 + $0x44] sm:$0xf]
  %v97 = vld [vmem:[%s1 + $0x48] sm:$0xf]
  %v98 = vld [vmem:[%s1 + $0x4c] sm:$0xf]
  %v99 = vld [vmem:[%s1 + $0x50] sm:$0xf]
  %v100 = vld [vmem:[%s1 + $0x54] sm:$0xf]
  %v101 = vld [vmem:[%s1 + $0x58] sm:$0xf]
  %v102 = vld [vmem:[%s1 + $0x5c] sm:$0xf]
  %v103 = vld [vmem:[%s1 + $0x60] sm:$0xf]
  %v104 = vld [vmem:[%s1 + $0x64] sm:$0xf]
  %v105 = vld [vmem:[%s1 + $0x68] sm:$0xf]
  %v106 = vld [vmem:[%s1 + $0x6c] sm:$0xf]
  %v107 = vld [vmem:[%s1 + $0x70] sm:$0xf]
  %v108 = vld [vmem:[%s1 + $0x74] sm:$0xf]
  %v109 = vld [vmem:[%s1 + $0x78] sm:$0xf]
  %v110 = vld [vmem:[%s1 + $0x7c] sm:$0xf]
  %v111 = vld [vmem:[%s2] sm:$0x1]
  %v113 = vlaneseq
  %v114 = vshrl.u32 %v113, 7
  %v115 = vsub.s32 0, %v114
  %v116 = vrot.slane %v111, %v115
  %v182 = vunpack.c.l.b16 %v15
  %v183 = vunpack.c.h.b16 %v15
  %v184 = vunpack.c.l.b16 %v16
  %v185 = vunpack.c.h.b16 %v16
  %v186 = vunpack.c.l.b16 %v17
  %v187 = vunpack.c.h.b16 %v17
  %v188 = vunpack.c.l.b16 %v18
  %v189 = vunpack.c.h.b16 %v18
  %v190 = vunpack.c.l.b16 %v19
  %v191 = vunpack.c.h.b16 %v19
  %v192 = vunpack.c.l.b16 %v20
  %v193 = vunpack.c.h.b16 %v20
  %v194 = vunpack.c.l.b16 %v21
  %v195 = vunpack.c.h.b16 %v21
  %v196 = vunpack.c.l.b16 %v22
  %v197 = vunpack.c.h.b16 %v22
  %v198 = vunpack.c.l.b16 %v23
  %v199 = vunpack.c.h.b16 %v23
  %v200 = vunpack.c.l.b16 %v24
  %v201 = vunpack.c.h.b16 %v24
  %v202 = vunpack.c.l.b16 %v25
  %v203 = vunpack.c.h.b16 %v25
  %v204 = vunpack.c.l.b16 %v26
  %v205 = vunpack.c.h.b16 %v26
  %v206 = vunpack.c.l.b16 %v27
  %v207 = vunpack.c.h.b16 %v27
  %v208 = vunpack.c.l.b16 %v28
  %v209 = vunpack.c.h.b16 %v28
  %v210 = vunpack.c.l.b16 %v29
  %v211 = vunpack.c.h.b16 %v29
  %v212 = vunpack.c.l.b16 %v30
  %v213 = vunpack.c.h.b16 %v30
  %v214 = vunpack.c.l.b16 %v31
  %v215 = vunpack.c.h.b16 %v31
  %v216 = vunpack.c.l.b16 %v32
  %v217 = vunpack.c.h.b16 %v32
  %v218 = vunpack.c.l.b16 %v33
  %v219 = vunpack.c.h.b16 %v33
  %v220 = vunpack.c.l.b16 %v34
  %v221 = vunpack.c.h.b16 %v34
  %v222 = vunpack.c.l.b16 %v35
  %v223 = vunpack.c.h.b16 %v35
  %v224 = vunpack.c.l.b16 %v36
  %v225 = vunpack.c.h.b16 %v36
  %v226 = vunpack.c.l.b16 %v37
  %v227 = vunpack.c.h.b16 %v37
  %v228 = vunpack.c.l.b16 %v38
  %v229 = vunpack.c.h.b16 %v38
  %v230 = vunpack.c.l.b16 %v39
  %v231 = vunpack.c.h.b16 %v39
  %v232 = vunpack.c.l.b16 %v40
  %v233 = vunpack.c.h.b16 %v40
  %v234 = vunpack.c.l.b16 %v41
  %v235 = vunpack.c.h.b16 %v41
  %v236 = vunpack.c.l.b16 %v42
  %v237 = vunpack.c.h.b16 %v42
  %v238 = vunpack.c.l.b16 %v43
  %v239 = vunpack.c.h.b16 %v43
  %v240 = vunpack.c.l.b16 %v44
  %v241 = vunpack.c.h.b16 %v44
  %v242 = vunpack.c.l.b16 %v45
  %v243 = vunpack.c.h.b16 %v45
  %v244 = vunpack.c.l.b16 %v46
  %v245 = vunpack.c.h.b16 %v46
  %v246 = vunpack.c.l.b16 %v47
  %v247 = vunpack.c.h.b16 %v47
  %v248 = vunpack.c.l.b16 %v48
  %v249 = vunpack.c.h.b16 %v48
  %v250 = vunpack.c.l.b16 %v49
  %v251 = vunpack.c.h.b16 %v49
  %v252 = vunpack.c.l.b16 %v50
  %v253 = vunpack.c.h.b16 %v50
  %v254 = vunpack.c.l.b16 %v51
  %v255 = vunpack.c.h.b16 %v51
  %v256 = vunpack.c.l.b16 %v52
  %v257 = vunpack.c.h.b16 %v52
  %v258 = vunpack.c.l.b16 %v53
  %v259 = vunpack.c.h.b16 %v53
  %v260 = vunpack.c.l.b16 %v54
  %v261 = vunpack.c.h.b16 %v54
  %v262 = vunpack.c.l.b16 %v55
  %v263 = vunpack.c.h.b16 %v55
  %v264 = vunpack.c.l.b16 %v56
  %v265 = vunpack.c.h.b16 %v56
  %v266 = vunpack.c.l.b16 %v57
  %v267 = vunpack.c.h.b16 %v57
  %v268 = vunpack.c.l.b16 %v58
  %v269 = vunpack.c.h.b16 %v58
  %v270 = vunpack.c.l.b16 %v59
  %v271 = vunpack.c.h.b16 %v59
  %v272 = vunpack.c.l.b16 %v60
  %v273 = vunpack.c.h.b16 %v60
  %v274 = vunpack.c.l.b16 %v61
  %v275 = vunpack.c.h.b16 %v61
  %v276 = vunpack.c.l.b16 %v62
  %v277 = vunpack.c.h.b16 %v62
  %v278 = vunpack.c.l.b16 %v63
  %v279 = vunpack.c.h.b16 %v63
  %v280 = vunpack.c.l.b16 %v64
  %v281 = vunpack.c.h.b16 %v64
  %v282 = vunpack.c.l.b16 %v65
  %v283 = vunpack.c.h.b16 %v65
  %v284 = vunpack.c.l.b16 %v66
  %v285 = vunpack.c.h.b16 %v66
  %v286 = vunpack.c.l.b16 %v67
  %v287 = vunpack.c.h.b16 %v67
  %v288 = vunpack.c.l.b16 %v68
  %v289 = vunpack.c.h.b16 %v68
  %v290 = vunpack.c.l.b16 %v69
  %v291 = vunpack.c.h.b16 %v69
  %v292 = vunpack.c.l.b16 %v70
  %v293 = vunpack.c.h.b16 %v70
  %v294 = vunpack.c.l.b16 %v71
  %v295 = vunpack.c.h.b16 %v71
  %v296 = vunpack.c.l.b16 %v72
  %v297 = vunpack.c.h.b16 %v72
  %v298 = vunpack.c.l.b16 %v73
  %v299 = vunpack.c.h.b16 %v73
  %v300 = vunpack.c.l.b16 %v74
  %v301 = vunpack.c.h.b16 %v74
  %v302 = vunpack.c.l.b16 %v75
  %v303 = vunpack.c.h.b16 %v75
  %v304 = vunpack.c.l.b16 %v76
  %v305 = vunpack.c.h.b16 %v76
  %v306 = vunpack.c.l.b16 %v77
  %v307 = vunpack.c.h.b16 %v77
  %v308 = vunpack.c.l.b16 %v78
  %v309 = vunpack.c.h.b16 %v78
  %v310 = vpack.c.b16 %v184, %v182
  %v311 = vpack.c.b16 %v185, %v183
  %v312 = vpack.c.b16 %v188, %v186
  %v313 = vpack.c.b16 %v189, %v187
  %v314 = vpack.c.b16 %v192, %v190
  %v315 = vpack.c.b16 %v193, %v191
  %v316 = vpack.c.b16 %v196, %v194
  %v317 = vpack.c.b16 %v197, %v195
  %v318 = vpack.c.b16 %v200, %v198
  %v319 = vpack.c.b16 %v201, %v199
  %v320 = vpack.c.b16 %v204, %v202
  %v321 = vpack.c.b16 %v205, %v203
  %v322 = vpack.c.b16 %v208, %v206
  %v323 = vpack.c.b16 %v209, %v207
  %v324 = vpack.c.b16 %v212, %v210
  %v325 = vpack.c.b16 %v213, %v211
  %v326 = vpack.c.b16 %v216, %v214
  %v327 = vpack.c.b16 %v217, %v215
  %v328 = vpack.c.b16 %v220, %v218
  %v329 = vpack.c.b16 %v221, %v219
  %v330 = vpack.c.b16 %v224, %v222
  %v331 = vpack.c.b16 %v225, %v223
  %v332 = vpack.c.b16 %v228, %v226
  %v333 = vpack.c.b16 %v229, %v227
  %v334 = vpack.c.b16 %v232, %v230
  %v335 = vpack.c.b16 %v233, %v231
  %v336 = vpack.c.b16 %v236, %v234
  %v337 = vpack.c.b16 %v237, %v235
  %v338 = vpack.c.b16 %v240, %v238
  %v339 = vpack.c.b16 %v241, %v239
  %v340 = vpack.c.b16 %v244, %v242
  %v341 = vpack.c.b16 %v245, %v243
  %v342 = vpack.c.b16 %v248, %v246
  %v343 = vpack.c.b16 %v249, %v247
  %v344 = vpack.c.b16 %v252, %v250
  %v345 = vpack.c.b16 %v253, %v251
  %v346 = vpack.c.b16 %v256, %v254
  %v347 = vpack.c.b16 %v257, %v255
  %v348 = vpack.c.b16 %v260, %v258
  %v349 = vpack.c.b16 %v261, %v259
  %v350 = vpack.c.b16 %v264, %v262
  %v351 = vpack.c.b16 %v265, %v263
  %v352 = vpack.c.b16 %v268, %v266
  %v353 = vpack.c.b16 %v269, %v267
  %v354 = vpack.c.b16 %v272, %v270
  %v355 = vpack.c.b16 %v273, %v271
  %v356 = vpack.c.b16 %v276, %v274
  %v357 = vpack.c.b16 %v277, %v275
  %v358 = vpack.c.b16 %v280, %v278
  %v359 = vpack.c.b16 %v281, %v279
  %v360 = vpack.c.b16 %v284, %v282
  %v361 = vpack.c.b16 %v285, %v283
  %v362 = vpack.c.b16 %v288, %v286
  %v363 = vpack.c.b16 %v289, %v287
  %v364 = vpack.c.b16 %v292, %v290
  %v365 = vpack.c.b16 %v293, %v291
  %v366 = vpack.c.b16 %v296, %v294
  %v367 = vpack.c.b16 %v297, %v295
  %v368 = vpack.c.b16 %v300, %v298
  %v369 = vpack.c.b16 %v301, %v299
  %v370 = vpack.c.b16 %v304, %v302
  %v371 = vpack.c.b16 %v305, %v303
  %v372 = vpack.c.b16 %v308, %v306
  %v373 = vpack.c.b16 %v309, %v307
  %v470 = vunpack.c.l.b16 %v79
  %v471 = vunpack.c.l.b16 %v80
  %v472 = vunpack.c.l.b16 %v81
  %v473 = vunpack.c.l.b16 %v82
  %v474 = vunpack.c.l.b16 %v83
  %v475 = vunpack.c.l.b16 %v84
  %v476 = vunpack.c.l.b16 %v85
  %v477 = vunpack.c.l.b16 %v86
  %v478 = vunpack.c.l.b16 %v87
  %v479 = vunpack.c.l.b16 %v88
  %v480 = vunpack.c.l.b16 %v89
  %v481 = vunpack.c.l.b16 %v90
  %v482 = vunpack.c.l.b16 %v91
  %v483 = vunpack.c.l.b16 %v92
  %v484 = vunpack.c.l.b16 %v93
  %v485 = vunpack.c.l.b16 %v94
  %v486 = vunpack.c.l.b16 %v95
  %v487 = vunpack.c.l.b16 %v96
  %v488 = vunpack.c.l.b16 %v97
  %v489 = vunpack.c.l.b16 %v98
  %v490 = vunpack.c.l.b16 %v99
  %v491 = vunpack.c.l.b16 %v100
  %v492 = vunpack.c.l.b16 %v101
  %v493 = vunpack.c.l.b16 %v102
  %v494 = vunpack.c.l.b16 %v103
  %v495 = vunpack.c.l.b16 %v104
  %v496 = vunpack.c.l.b16 %v105
  %v497 = vunpack.c.l.b16 %v106
  %v498 = vunpack.c.l.b16 %v107
  %v499 = vunpack.c.l.b16 %v108
  %v500 = vunpack.c.l.b16 %v109
  %v501 = vunpack.c.l.b16 %v110
  %v502 = vpack.c.b16 %v471, %v470
  %v503 = vpack.c.b16 %v473, %v472
  %v504 = vpack.c.b16 %v475, %v474
  %v505 = vpack.c.b16 %v477, %v476
  %v506 = vpack.c.b16 %v479, %v478
  %v507 = vpack.c.b16 %v481, %v480
  %v508 = vpack.c.b16 %v483, %v482
  %v509 = vpack.c.b16 %v485, %v484
  %v510 = vpack.c.b16 %v487, %v486
  %v511 = vpack.c.b16 %v489, %v488
  %v512 = vpack.c.b16 %v491, %v490
  %v513 = vpack.c.b16 %v493, %v492
  %v514 = vpack.c.b16 %v495, %v494
  %v515 = vpack.c.b16 %v497, %v496
  %v516 = vpack.c.b16 %v499, %v498
  %v517 = vpack.c.b16 %v501, %v500
  %534 = vmatprep.subr.bf16.mxu0 0
  %535 = vmatpush1.bf16.msra.mxu0 %v502
  %536 = vmatprep.subr.bf16.mxu0 0
  %537 = vmatpush1.bf16.msra.mxu0 %v503
  %538 = vmatprep.subr.bf16.mxu0 0
  %539 = vmatpush1.bf16.msra.mxu0 %v504
  %540 = vmatprep.subr.bf16.mxu0 0
  %541 = vmatpush1.bf16.msra.mxu0 %v505
  %542 = vmatprep.subr.bf16.mxu0 0
  %543 = vmatpush1.bf16.msra.mxu0 %v506
  %544 = vmatprep.subr.bf16.mxu0 0
  %545 = vmatpush1.bf16.msra.mxu0 %v507
  %546 = vmatprep.subr.bf16.mxu0 0
  %547 = vmatpush1.bf16.msra.mxu0 %v508
  %548 = vmatprep.subr.bf16.mxu0 0
  %549 = vmatpush1.bf16.msra.mxu0 %v509
  %550 = vmatprep.subr.bf16.mxu0 0
  %551 = vmatpush1.bf16.msra.mxu0 %v510
  %552 = vmatprep.subr.bf16.mxu0 0
  %553 = vmatpush1.bf16.msra.mxu0 %v511
  %554 = vmatprep.subr.bf16.mxu0 0
  %555 = vmatpush1.bf16.msra.mxu0 %v512
  %556 = vmatprep.subr.bf16.mxu0 0
  %557 = vmatpush1.bf16.msra.mxu0 %v513
  %558 = vmatprep.subr.bf16.mxu0 0
  %559 = vmatpush1.bf16.msra.mxu0 %v514
  %560 = vmatprep.subr.bf16.mxu0 0
  %561 = vmatpush1.bf16.msra.mxu0 %v515
  %562 = vmatprep.subr.bf16.mxu0 0
  %563 = vmatpush1.bf16.msra.mxu0 %v516
  %564 = vmatprep.subr.bf16.mxu0 0
  %565 = vmatpush1.bf16.msra.mxu0 %v517
  %566 = vmatprep.mubr.bf16.mxu0 %v311
  %567 = vmatmul.mubr.bf16.gmra.mrb[0].mxu0 %v310
  %v568 = vpop.f32.mrb[0].mxu0
  %v569 = vadd.f32 %v116, %v568
  %v570 = vpop.f32.mrb[0].mxu0
  %v571 = vpop.f32.mrb[0].mxu0
  %v572 = vadd.f32 %v116, %v571
  %v573 = vpop.f32.mrb[0].mxu0
  %574 = vmatprep.mubr.bf16.mxu0 %v313
  %575 = vmatmul.mubr.bf16.gmra.mrb[0].mxu0 %v312
  %v576 = vpop.f32.mrb[0].mxu0
  %v577 = vadd.f32 %v116, %v576
  %v578 = vpop.f32.mrb[0].mxu0
  %v579 = vpop.f32.mrb[0].mxu0
  %v580 = vadd.f32 %v116, %v579
  %v581 = vpop.f32.mrb[0].mxu0
  %582 = vmatprep.mubr.bf16.mxu0 %v315
  %583 = vmatmul.mubr.bf16.gmra.mrb[0].mxu0 %v314
  %v584 = vpop.f32.mrb[0].mxu0
  %v585 = vadd.f32 %v116, %v584
  %v586 = vpop.f32.mrb[0].mxu0
  %v587 = vpop.f32.mrb[0].mxu0
  %v588 = vadd.f32 %v116, %v587
  %v589 = vpop.f32.mrb[0].mxu0
  %590 = vmatprep.mubr.bf16.mxu0 %v317
  %591 = vmatmul.mubr.bf16.gmra.mrb[0].mxu0 %v316
  %v592 = vpop.f32.mrb[0].mxu0
  %v593 = vadd.f32 %v116, %v592
  %v594 = vpop.f32.mrb[0].mxu0
  %v595 = vpop.f32.mrb[0].mxu0
  %v596 = vadd.f32 %v116, %v595
  %v597 = vpop.f32.mrb[0].mxu0
  %598 = vmatprep.mubr.bf16.mxu0 %v319
  %599 = vmatmul.mubr.bf16.gmra.mrb[0].mxu0 %v318
  %v600 = vpop.f32.mrb[0].mxu0
  %v601 = vadd.f32 %v116, %v600
  %v602 = vpop.f32.mrb[0].mxu0
  %v603 = vpop.f32.mrb[0].mxu0
  %v604 = vadd.f32 %v116, %v603
  %v605 = vpop.f32.mrb[0].mxu0
  %606 = vmatprep.mubr.bf16.mxu0 %v321
  %607 = vmatmul.mubr.bf16.gmra.mrb[0].mxu0 %v320
  %v608 = vpop.f32.mrb[0].mxu0
  %v609 = vadd.f32 %v116, %v608
  %v610 = vpop.f32.mrb[0].mxu0
  %v611 = vpop.f32.mrb[0].mxu0
  %v612 = vadd.f32 %v116, %v611
  %v613 = vpop.f32.mrb[0].mxu0
  %614 = vmatprep.mubr.bf16.mxu0 %v323
  %615 = vmatmul.mubr.bf16.gmra.mrb[0].mxu0 %v322
  %v616 = vpop.f32.mrb[0].mxu0
  %v617 = vadd.f32 %v116, %v616
  %v618 = vpop.f32.mrb[0].mxu0
  %v619 = vpop.f32.mrb[0].mxu0
  %v620 = vadd.f32 %v116, %v619
  %v621 = vpop.f32.mrb[0].mxu0
  %622 = vmatprep.mubr.bf16.mxu0 %v325
  %623 = vmatmul.mubr.bf16.gmra.mrb[0].mxu0 %v324
  %v624 = vpop.f32.mrb[0].mxu0
  %v625 = vadd.f32 %v116, %v624
  %v626 = vpop.f32.mrb[0].mxu0
  %v627 = vpop.f32.mrb[0].mxu0
  %v628 = vadd.f32 %v116, %v627
  %v629 = vpop.f32.mrb[0].mxu0
  %630 = vmatprep.mubr.bf16.mxu0 %v327
  %631 = vmatmul.mubr.bf16.gmra.mrb[0].mxu0 %v326
  %v632 = vpop.f32.mrb[0].mxu0
  %v633 = vadd.f32 %v116, %v632
  %v634 = vpop.f32.mrb[0].mxu0
  %v635 = vpop.f32.mrb[0].mxu0
  %v636 = vadd.f32 %v116, %v635
  %v637 = vpop.f32.mrb[0].mxu0
  %638 = vmatprep.mubr.bf16.mxu0 %v329
  %639 = vmatmul.mubr.bf16.gmra.mrb[0].mxu0 %v328
  %v640 = vpop.f32.mrb[0].mxu0
  %v641 = vadd.f32 %v116, %v640
  %v642 = vpop.f32.mrb[0].mxu0
  %v643 = vpop.f32.mrb[0].mxu0
  %v644 = vadd.f32 %v116, %v643
  %v645 = vpop.f32.mrb[0].mxu0
  %646 = vmatprep.mubr.bf16.mxu0 %v331
  %647 = vmatmul.mubr.bf16.gmra.mrb[0].mxu0 %v330
  %v648 = vpop.f32.mrb[0].mxu0
  %v649 = vadd.f32 %v116, %v648
  %v650 = vpop.f32.mrb[0].mxu0
  %v651 = vpop.f32.mrb[0].mxu0
  %v652 = vadd.f32 %v116, %v651
  %v653 = vpop.f32.mrb[0].mxu0
  %654 = vmatprep.mubr.bf16.mxu0 %v333
  %655 = vmatmul.mubr.bf16.gmra.mrb[0].mxu0 %v332
  %v656 = vpop.f32.mrb[0].mxu0
  %v657 = vadd.f32 %v116, %v656
  %v658 = vpop.f32.mrb[0].mxu0
  %v659 = vpop.f32.mrb[0].mxu0
  %v660 = vadd.f32 %v116, %v659
  %v661 = vpop.f32.mrb[0].mxu0
  %662 = vmatprep.mubr.bf16.mxu0 %v335
  %663 = vmatmul.mubr.bf16.gmra.mrb[0].mxu0 %v334
  %v664 = vpop.f32.mrb[0].mxu0
  %v665 = vadd.f32 %v116, %v664
  %v666 = vpop.f32.mrb[0].mxu0
  %v667 = vpop.f32.mrb[0].mxu0
  %v668 = vadd.f32 %v116, %v667
  %v669 = vpop.f32.mrb[0].mxu0
  %670 = vmatprep.mubr.bf16.mxu0 %v337
  %671 = vmatmul.mubr.bf16.gmra.mrb[0].mxu0 %v336
  %v672 = vpop.f32.mrb[0].mxu0
  %v673 = vadd.f32 %v116, %v672
  %v674 = vpop.f32.mrb[0].mxu0
  %v675 = vpop.f32.mrb[0].mxu0
  %v676 = vadd.f32 %v116, %v675
  %v677 = vpop.f32.mrb[0].mxu0
  %678 = vmatprep.mubr.bf16.mxu0 %v339
  %679 = vmatmul.mubr.bf16.gmra.mrb[0].mxu0 %v338
  %v680 = vpop.f32.mrb[0].mxu0
  %v681 = vadd.f32 %v116, %v680
  %v682 = vpop.f32.mrb[0].mxu0
  %v683 = vpop.f32.mrb[0].mxu0
  %v684 = vadd.f32 %v116, %v683
  %v685 = vpop.f32.mrb[0].mxu0
  %686 = vmatprep.mubr.bf16.mxu0 %v341
  %687 = vmatmul.mubr.bf16.gmra.mrb[0].mxu0 %v340
  %v688 = vpop.f32.mrb[0].mxu0
  %v689 = vadd.f32 %v116, %v688
  %v690 = vpop.f32.mrb[0].mxu0
  %v691 = vpop.f32.mrb[0].mxu0
  %v692 = vadd.f32 %v116, %v691
  %v693 = vpop.f32.mrb[0].mxu0
  %694 = vmatprep.mubr.bf16.mxu0 %v343
  %695 = vmatmul.mubr.bf16.gmra.mrb[0].mxu0 %v342
  %v696 = vpop.f32.mrb[0].mxu0
  %v697 = vadd.f32 %v116, %v696
  %v698 = vpop.f32.mrb[0].mxu0
  %v699 = vpop.f32.mrb[0].mxu0
  %v700 = vadd.f32 %v116, %v699
  %v701 = vpop.f32.mrb[0].mxu0
  %702 = vmatprep.mubr.bf16.mxu0 %v345
  %703 = vmatmul.mubr.bf16.gmra.mrb[0].mxu0 %v344
  %v704 = vpop.f32.mrb[0].mxu0
  %v705 = vadd.f32 %v116, %v704
  %v706 = vpop.f32.mrb[0].mxu0
  %v707 = vpop.f32.mrb[0].mxu0
  %v708 = vadd.f32 %v116, %v707
  %v709 = vpop.f32.mrb[0].mxu0
  %710 = vmatprep.mubr.bf16.mxu0 %v347
  %711 = vmatmul.mubr.bf16.gmra.mrb[0].mxu0 %v346
  %v712 = vpop.f32.mrb[0].mxu0
  %v713 = vadd.f32 %v116, %v712
  %v714 = vpop.f32.mrb[0].mxu0
  %v715 = vpop.f32.mrb[0].mxu0
  %v716 = vadd.f32 %v116, %v715
  %v717 = vpop.f32.mrb[0].mxu0
  %718 = vmatprep.mubr.bf16.mxu0 %v349
  %719 = vmatmul.mubr.bf16.gmra.mrb[0].mxu0 %v348
  %v720 = vpop.f32.mrb[0].mxu0
  %v721 = vadd.f32 %v116, %v720
  %v722 = vpop.f32.mrb[0].mxu0
  %v723 = vpop.f32.mrb[0].mxu0
  %v724 = vadd.f32 %v116, %v723
  %v725 = vpop.f32.mrb[0].mxu0
  %726 = vmatprep.mubr.bf16.mxu0 %v351
  %727 = vmatmul.mubr.bf16.gmra.mrb[0].mxu0 %v350
  %v728 = vpop.f32.mrb[0].mxu0
  %v729 = vadd.f32 %v116, %v728
  %v730 = vpop.f32.mrb[0].mxu0
  %v731 = vpop.f32.mrb[0].mxu0
  %v732 = vadd.f32 %v116, %v731
  %v733 = vpop.f32.mrb[0].mxu0
  %734 = vmatprep.mubr.bf16.mxu0 %v353
  %735 = vmatmul.mubr.bf16.gmra.mrb[0].mxu0 %v352
  %v736 = vpop.f32.mrb[0].mxu0
  %v737 = vadd.f32 %v116, %v736
  %v738 = vpop.f32.mrb[0].mxu0
  %v739 = vpop.f32.mrb[0].mxu0
  %v740 = vadd.f32 %v116, %v739
  %v741 = vpop.f32.mrb[0].mxu0
  %742 = vmatprep.mubr.bf16.mxu0 %v355
  %743 = vmatmul.mubr.bf16.gmra.mrb[0].mxu0 %v354
  %v744 = vpop.f32.mrb[0].mxu0
  %v745 = vadd.f32 %v116, %v744
  %v746 = vpop.f32.mrb[0].mxu0
  %v747 = vpop.f32.mrb[0].mxu0
  %v748 = vadd.f32 %v116, %v747
  %v749 = vpop.f32.mrb[0].mxu0
  %750 = vmatprep.mubr.bf16.mxu0 %v357
  %751 = vmatmul.mubr.bf16.gmra.mrb[0].mxu0 %v356
  %v752 = vpop.f32.mrb[0].mxu0
  %v753 = vadd.f32 %v116, %v752
  %v754 = vpop.f32.mrb[0].mxu0
  %v755 = vpop.f32.mrb[0].mxu0
  %v756 = vadd.f32 %v116, %v755
  %v757 = vpop.f32.mrb[0].mxu0
  %758 = vmatprep.mubr.bf16.mxu0 %v359
  %759 = vmatmul.mubr.bf16.gmra.mrb[0].mxu0 %v358
  %v760 = vpop.f32.mrb[0].mxu0
  %v761 = vadd.f32 %v116, %v760
  %v762 = vpop.f32.mrb[0].mxu0
  %v763 = vpop.f32.mrb[0].mxu0
  %v764 = vadd.f32 %v116, %v763
  %v765 = vpop.f32.mrb[0].mxu0
  %766 = vmatprep.mubr.bf16.mxu0 %v361
  %767 = vmatmul.mubr.bf16.gmra.mrb[0].mxu0 %v360
  %v768 = vpop.f32.mrb[0].mxu0
  %v769 = vadd.f32 %v116, %v768
  %v770 = vpop.f32.mrb[0].mxu0
  %v771 = vpop.f32.mrb[0].mxu0
  %v772 = vadd.f32 %v116, %v771
  %v773 = vpop.f32.mrb[0].mxu0
  %774 = vmatprep.mubr.bf16.mxu0 %v363
  %775 = vmatmul.mubr.bf16.gmra.mrb[0].mxu0 %v362
  %v776 = vpop.f32.mrb[0].mxu0
  %v777 = vadd.f32 %v116, %v776
  %v778 = vpop.f32.mrb[0].mxu0
  %v779 = vpop.f32.mrb[0].mxu0
  %v780 = vadd.f32 %v116, %v779
  %v781 = vpop.f32.mrb[0].mxu0
  %782 = vmatprep.mubr.bf16.mxu0 %v365
  %783 = vmatmul.mubr.bf16.gmra.mrb[0].mxu0 %v364
  %v784 = vpop.f32.mrb[0].mxu0
  %v785 = vadd.f32 %v116, %v784
  %v786 = vpop.f32.mrb[0].mxu0
  %v787 = vpop.f32.mrb[0].mxu0
  %v788 = vadd.f32 %v116, %v787
  %v789 = vpop.f32.mrb[0].mxu0
  %790 = vmatprep.mubr.bf16.mxu0 %v367
  %791 = vmatmul.mubr.bf16.gmra.mrb[0].mxu0 %v366
  %v792 = vpop.f32.mrb[0].mxu0
  %v793 = vadd.f32 %v116, %v792
  %v794 = vpop.f32.mrb[0].mxu0
  %v795 = vpop.f32.mrb[0].mxu0
  %v796 = vadd.f32 %v116, %v795
  %v797 = vpop.f32.mrb[0].mxu0
  %798 = vmatprep.mubr.bf16.mxu0 %v369
  %799 = vmatmul.mubr.bf16.gmra.mrb[0].mxu0 %v368
  %v800 = vpop.f32.mrb[0].mxu0
  %v801 = vadd.f32 %v116, %v800
  %v802 = vpop.f32.mrb[0].mxu0
  %v803 = vpop.f32.mrb[0].mxu0
  %v804 = vadd.f32 %v116, %v803
  %v805 = vpop.f32.mrb[0].mxu0
  %806 = vmatprep.mubr.bf16.mxu0 %v371
  %807 = vmatmul.mubr.bf16.gmra.mrb[0].mxu0 %v370
  %v808 = vpop.f32.mrb[0].mxu0
  %v809 = vadd.f32 %v116, %v808
  %v810 = vpop.f32.mrb[0].mxu0
  %v811 = vpop.f32.mrb[0].mxu0
  %v812 = vadd.f32 %v116, %v811
  %v813 = vpop.f32.mrb[0].mxu0
  %814 = vmatprep.mubr.bf16.mxu0 %v373
  %815 = vmatmul.mubr.bf16.gmra.mrb[0].mxu0 %v372
  %v816 = vpop.f32.mrb[0].mxu0
  %v817 = vadd.f32 %v116, %v816
  %v818 = vpop.f32.mrb[0].mxu0
  %v819 = vpop.f32.mrb[0].mxu0
  %v820 = vadd.f32 %v116, %v819
  %v821 = vpop.f32.mrb[0].mxu0
  %822 = vdwg.mxu0
  %v823 = vmax.f32 %v569, 0.0
  %v824 = vmax.f32 %v572, 0.0
  %v825 = vmax.f32 %v577, 0.0
  %v826 = vmax.f32 %v580, 0.0
  %v827 = vmax.f32 %v585, 0.0
  %v828 = vmax.f32 %v588, 0.0
  %v829 = vmax.f32 %v593, 0.0
  %v830 = vmax.f32 %v596, 0.0
  %v831 = vmax.f32 %v601, 0.0
  %v832 = vmax.f32 %v604, 0.0
  %v833 = vmax.f32 %v609, 0.0
  %v834 = vmax.f32 %v612, 0.0
  %v835 = vmax.f32 %v617, 0.0
  %v836 = vmax.f32 %v620, 0.0
  %v837 = vmax.f32 %v625, 0.0
  %v838 = vmax.f32 %v628, 0.0
  %v839 = vmax.f32 %v633, 0.0
  %v840 = vmax.f32 %v636, 0.0
  %v841 = vmax.f32 %v641, 0.0
  %v842 = vmax.f32 %v644, 0.0
  %v843 = vmax.f32 %v649, 0.0
  %v844 = vmax.f32 %v652, 0.0
  %v845 = vmax.f32 %v657, 0.0
  %v846 = vmax.f32 %v660, 0.0
  %v847 = vmax.f32 %v665, 0.0
  %v848 = vmax.f32 %v668, 0.0
  %v849 = vmax.f32 %v673, 0.0
  %v850 = vmax.f32 %v676, 0.0
  %v851 = vmax.f32 %v681, 0.0
  %v852 = vmax.f32 %v684, 0.0
  %v853 = vmax.f32 %v689, 0.0
  %v854 = vmax.f32 %v692, 0.0
  %v855 = vmax.f32 %v697, 0.0
  %v856 = vmax.f32 %v700, 0.0
  %v857 = vmax.f32 %v705, 0.0
  %v858 = vmax.f32 %v708, 0.0
  %v859 = vmax.f32 %v713, 0.0
  %v860 = vmax.f32 %v716, 0.0
  %v861 = vmax.f32 %v721, 0.0
  %v862 = vmax.f32 %v724, 0.0
  %v863 = vmax.f32 %v729, 0.0
  %v864 = vmax.f32 %v732, 0.0
  %v865 = vmax.f32 %v737, 0.0
  %v866 = vmax.f32 %v740, 0.0
  %v867 = vmax.f32 %v745, 0.0
  %v868 = vmax.f32 %v748, 0.0
  %v869 = vmax.f32 %v753, 0.0
  %v870 = vmax.f32 %v756, 0.0
  %v871 = vmax.f32 %v761, 0.0
  %v872 = vmax.f32 %v764, 0.0
  %v873 = vmax.f32 %v769, 0.0
  %v874 = vmax.f32 %v772, 0.0
  %v875 = vmax.f32 %v777, 0.0
  %v876 = vmax.f32 %v780, 0.0
  %v877 = vmax.f32 %v785, 0.0
  %v878 = vmax.f32 %v788, 0.0
  %v879 = vmax.f32 %v793, 0.0
  %v880 = vmax.f32 %v796, 0.0
  %v881 = vmax.f32 %v801, 0.0
  %v882 = vmax.f32 %v804, 0.0
  %v883 = vmax.f32 %v809, 0.0
  %v884 = vmax.f32 %v812, 0.0
  %v885 = vmax.f32 %v817, 0.0
  %v886 = vmax.f32 %v820, 0.0
  %v887 = vpack.c.bf16 %v824, %v823
  %v888 = vpack.c.bf16 %v826, %v825
  %v889 = vpack.c.bf16 %v828, %v827
  %v890 = vpack.c.bf16 %v830, %v829
  %v891 = vpack.c.bf16 %v832, %v831
  %v892 = vpack.c.bf16 %v834, %v833
  %v893 = vpack.c.bf16 %v836, %v835
  %v894 = vpack.c.bf16 %v838, %v837
  %v895 = vpack.c.bf16 %v840, %v839
  %v896 = vpack.c.bf16 %v842, %v841
  %v897 = vpack.c.bf16 %v844, %v843
  %v898 = vpack.c.bf16 %v846, %v845
  %v899 = vpack.c.bf16 %v848, %v847
  %v900 = vpack.c.bf16 %v850, %v849
  %v901 = vpack.c.bf16 %v852, %v851
  %v902 = vpack.c.bf16 %v854, %v853
  %v903 = vpack.c.bf16 %v856, %v855
  %v904 = vpack.c.bf16 %v858, %v857
  %v905 = vpack.c.bf16 %v860, %v859
  %v906 = vpack.c.bf16 %v862, %v861
  %v907 = vpack.c.bf16 %v864, %v863
  %v908 = vpack.c.bf16 %v866, %v865
  %v909 = vpack.c.bf16 %v868, %v867
  %v910 = vpack.c.bf16 %v870, %v869
  %v911 = vpack.c.bf16 %v872, %v871
  %v912 = vpack.c.bf16 %v874, %v873
  %v913 = vpack.c.bf16 %v876, %v875
  %v914 = vpack.c.bf16 %v878, %v877
  %v915 = vpack.c.bf16 %v880, %v879
  %v916 = vpack.c.bf16 %v882, %v881
  %v917 = vpack.c.bf16 %v884, %v883
  %v918 = vpack.c.bf16 %v886, %v885
  %v951 = vunpack.c.l.b16 %v887
  %v952 = vunpack.c.h.b16 %v887
  %v953 = vunpack.c.l.b16 %v888
  %v954 = vunpack.c.h.b16 %v888
  %v955 = vunpack.c.l.b16 %v889
  %v956 = vunpack.c.h.b16 %v889
  %v957 = vunpack.c.l.b16 %v890
  %v958 = vunpack.c.h.b16 %v890
  %v959 = vunpack.c.l.b16 %v891
  %v960 = vunpack.c.h.b16 %v891
  %v961 = vunpack.c.l.b16 %v892
  %v962 = vunpack.c.h.b16 %v892
  %v963 = vunpack.c.l.b16 %v893
  %v964 = vunpack.c.h.b16 %v893
  %v965 = vunpack.c.l.b16 %v894
  %v966 = vunpack.c.h.b16 %v894
  %v967 = vunpack.c.l.b16 %v895
  %v968 = vunpack.c.h.b16 %v895
  %v969 = vunpack.c.l.b16 %v896
  %v970 = vunpack.c.h.b16 %v896
  %v971 = vunpack.c.l.b16 %v897
  %v972 = vunpack.c.h.b16 %v897
  %v973 = vunpack.c.l.b16 %v898
  %v974 = vunpack.c.h.b16 %v898
  %v975 = vunpack.c.l.b16 %v899
  %v976 = vunpack.c.h.b16 %v899
  %v977 = vunpack.c.l.b16 %v900
  %v978 = vunpack.c.h.b16 %v900
  %v979 = vunpack.c.l.b16 %v901
  %v980 = vunpack.c.h.b16 %v901
  %v981 = vunpack.c.l.b16 %v902
  %v982 = vunpack.c.h.b16 %v902
  %v983 = vunpack.c.l.b16 %v903
  %v984 = vunpack.c.h.b16 %v903
  %v985 = vunpack.c.l.b16 %v904
  %v986 = vunpack.c.h.b16 %v904
  %v987 = vunpack.c.l.b16 %v905
  %v988 = vunpack.c.h.b16 %v905
  %v989 = vunpack.c.l.b16 %v906
  %v990 = vunpack.c.h.b16 %v906
  %v991 = vunpack.c.l.b16 %v907
  %v992 = vunpack.c.h.b16 %v907
  %v993 = vunpack.c.l.b16 %v908
  %v994 = vunpack.c.h.b16 %v908
  %v995 = vunpack.c.l.b16 %v909
  %v996 = vunpack.c.h.b16 %v909
  %v997 = vunpack.c.l.b16 %v910
  %v998 = vunpack.c.h.b16 %v910
  %v999 = vunpack.c.l.b16 %v911
  %v1000 = vunpack.c.h.b16 %v911
  %v1001 = vunpack.c.l.b16 %v912
  %v1002 = vunpack.c.h.b16 %v912
  %v1003 = vunpack.c.l.b16 %v913
  %v1004 = vunpack.c.h.b16 %v913
  %v1005 = vunpack.c.l.b16 %v914
  %v1006 = vunpack.c.h.b16 %v914
  %v1007 = vunpack.c.l.b16 %v915
  %v1008 = vunpack.c.h.b16 %v915
  %v1009 = vunpack.c.l.b16 %v916
  %v1010 = vunpack.c.h.b16 %v916
  %v1011 = vunpack.c.l.b16 %v917
  %v1012 = vunpack.c.h.b16 %v917
  %v1013 = vunpack.c.l.b16 %v918
  %v1014 = vunpack.c.h.b16 %v918
  %v1015 = vpack.c.b16 %v951, %v951
  %v1016 = vpack.c.b16 %v952, %v952
  %v1017 = vpack.c.b16 %v953, %v953
  %v1018 = vpack.c.b16 %v954, %v954
  %v1019 = vpack.c.b16 %v955, %v955
  %v1020 = vpack.c.b16 %v956, %v956
  %v1021 = vpack.c.b16 %v957, %v957
  %v1022 = vpack.c.b16 %v958, %v958
  %v1023 = vpack.c.b16 %v959, %v959
  %v1024 = vpack.c.b16 %v960, %v960
  %v1025 = vpack.c.b16 %v961, %v961
  %v1026 = vpack.c.b16 %v962, %v962
  %v1027 = vpack.c.b16 %v963, %v963
  %v1028 = vpack.c.b16 %v964, %v964
  %v1029 = vpack.c.b16 %v965, %v965
  %v1030 = vpack.c.b16 %v966, %v966
  %v1031 = vpack.c.b16 %v967, %v967
  %v1032 = vpack.c.b16 %v968, %v968
  %v1033 = vpack.c.b16 %v969, %v969
  %v1034 = vpack.c.b16 %v970, %v970
  %v1035 = vpack.c.b16 %v971, %v971
  %v1036 = vpack.c.b16 %v972, %v972
  %v1037 = vpack.c.b16 %v973, %v973
  %v1038 = vpack.c.b16 %v974, %v974
  %v1039 = vpack.c.b16 %v975, %v975
  %v1040 = vpack.c.b16 %v976, %v976
  %v1041 = vpack.c.b16 %v977, %v977
  %v1042 = vpack.c.b16 %v978, %v978
  %v1043 = vpack.c.b16 %v979, %v979
  %v1044 = vpack.c.b16 %v980, %v980
  %v1045 = vpack.c.b16 %v981, %v981
  %v1046 = vpack.c.b16 %v982, %v982
  %v1047 = vpack.c.b16 %v983, %v983
  %v1048 = vpack.c.b16 %v984, %v984
  %v1049 = vpack.c.b16 %v985, %v985
  %v1050 = vpack.c.b16 %v986, %v986
  %v1051 = vpack.c.b16 %v987, %v987
  %v1052 = vpack.c.b16 %v988, %v988
  %v1053 = vpack.c.b16 %v989, %v989
  %v1054 = vpack.c.b16 %v990, %v990
  %v1055 = vpack.c.b16 %v991, %v991
  %v1056 = vpack.c.b16 %v992, %v992
  %v1057 = vpack.c.b16 %v993, %v993
  %v1058 = vpack.c.b16 %v994, %v994
  %v1059 = vpack.c.b16 %v995, %v995
  %v1060 = vpack.c.b16 %v996, %v996
  %v1061 = vpack.c.b16 %v997, %v997
  %v1062 = vpack.c.b16 %v998, %v998
  %v1063 = vpack.c.b16 %v999, %v999
  %v1064 = vpack.c.b16 %v1000, %v1000
  %v1065 = vpack.c.b16 %v1001, %v1001
  %v1066 = vpack.c.b16 %v1002, %v1002
  %v1067 = vpack.c.b16 %v1003, %v1003
  %v1068 = vpack.c.b16 %v1004, %v1004
  %v1069 = vpack.c.b16 %v1005, %v1005
  %v1070 = vpack.c.b16 %v1006, %v1006
  %v1071 = vpack.c.b16 %v1007, %v1007
  %v1072 = vpack.c.b16 %v1008, %v1008
  %v1073 = vpack.c.b16 %v1009, %v1009
  %v1074 = vpack.c.b16 %v1010, %v1010
  %v1075 = vpack.c.b16 %v1011, %v1011
  %v1076 = vpack.c.b16 %v1012, %v1012
  %v1077 = vpack.c.b16 %v1013, %v1013
  %v1078 = vpack.c.b16 %v1014, %v1014
  %1143 = vst [vmem:[%s3] sm:$0xf] %v1015
  %1144 = vst [vmem:[%s3 + $0x4] sm:$0xf] %v1016
  %1145 = vst [vmem:[%s3 + $0x8] sm:$0xf] %v1017
  %1146 = vst [vmem:[%s3 + $0xc] sm:$0xf] %v1018
  %1147 = vst [vmem:[%s3 + $0x10] sm:$0xf] %v1019
  %1148 = vst [vmem:[%s3 + $0x14] sm:$0xf] %v1020
  %1149 = vst [vmem:[%s3 + $0x18] sm:$0xf] %v1021
  %1150 = vst [vmem:[%s3 + $0x1c] sm:$0xf] %v1022
  %1151 = vst [vmem:[%s3 + $0x20] sm:$0xf] %v1023
  %1152 = vst [vmem:[%s3 + $0x24] sm:$0xf] %v1024
  %1153 = vst [vmem:[%s3 + $0x28] sm:$0xf] %v1025
  %1154 = vst [vmem:[%s3 + $0x2c] sm:$0xf] %v1026
  %1155 = vst [vmem:[%s3 + $0x30] sm:$0xf] %v1027
  %1156 = vst [vmem:[%s3 + $0x34] sm:$0xf] %v1028
  %1157 = vst [vmem:[%s3 + $0x38] sm:$0xf] %v1029
  %1158 = vst [vmem:[%s3 + $0x3c] sm:$0xf] %v1030
  %1159 = vst [vmem:[%s3 + $0x40] sm:$0xf] %v1031
  %1160 = vst [vmem:[%s3 + $0x44] sm:$0xf] %v1032
  %1161 = vst [vmem:[%s3 + $0x48] sm:$0xf] %v1033
  %1162 = vst [vmem:[%s3 + $0x4c] sm:$0xf] %v1034
  %1163 = vst [vmem:[%s3 + $0x50] sm:$0xf] %v1035
  %1164 = vst [vmem:[%s3 + $0x54] sm:$0xf] %v1036
  %1165 = vst [vmem:[%s3 + $0x58] sm:$0xf] %v1037
  %1166 = vst [vmem:[%s3 + $0x5c] sm:$0xf] %v1038
  %1167 = vst [vmem:[%s3 + $0x60] sm:$0xf] %v1039
  %1168 = vst [vmem:[%s3 + $0x64] sm:$0xf] %v1040
  %1169 = vst [vmem:[%s3 + $0x68] sm:$0xf] %v1041
  %1170 = vst [vmem:[%s3 + $0x6c] sm:$0xf] %v1042
  %1171 = vst [vmem:[%s3 + $0x70] sm:$0xf] %v1043
  %1172 = vst [vmem:[%s3 + $0x74] sm:$0xf] %v1044
  %1173 = vst [vmem:[%s3 + $0x78] sm:$0xf] %v1045
  %1174 = vst [vmem:[%s3 + $0x7c] sm:$0xf] %v1046
  %1175 = vst [vmem:[%s3 + $0x80] sm:$0xf] %v1047
  %1176 = vst [vmem:[%s3 + $0x84] sm:$0xf] %v1048
  %1177 = vst [vmem:[%s3 + $0x88] sm:$0xf] %v1049
  %1178 = vst [vmem:[%s3 + $0x8c] sm:$0xf] %v1050
  %1179 = vst [vmem:[%s3 + $0x90] sm:$0xf] %v1051
  %1180 = vst [vmem:[%s3 + $0x94] sm:$0xf] %v1052
  %1181 = vst [vmem:[%s3 + $0x98] sm:$0xf] %v1053
  %1182 = vst [vmem:[%s3 + $0x9c] sm:$0xf] %v1054
  %1183 = vst [vmem:[%s3 + $0xa0] sm:$0xf] %v1055
  %1184 = vst [vmem:[%s3 + $0xa4] sm:$0xf] %v1056
  %1185 = vst [vmem:[%s3 + $0xa8] sm:$0xf] %v1057
  %1186 = vst [vmem:[%s3 + $0xac] sm:$0xf] %v1058
  %1187 = vst [vmem:[%s3 + $0xb0] sm:$0xf] %v1059
  %1188 = vst [vmem:[%s3 + $0xb4] sm:$0xf] %v1060
  %1189 = vst [vmem:[%s3 + $0xb8] sm:$0xf] %v1061
  %1190 = vst [vmem:[%s3 + $0xbc] sm:$0xf] %v1062
  %1191 = vst [vmem:[%s3 + $0xc0] sm:$0xf] %v1063
  %1192 = vst [vmem:[%s3 + $0xc4] sm:$0xf] %v1064
  %1193 = vst [vmem:[%s3 + $0xc8] sm:$0xf] %v1065
  %1194 = vst [vmem:[%s3 + $0xcc] sm:$0xf] %v1066
  %1195 = vst [vmem:[%s3 + $0xd0] sm:$0xf] %v1067
  %1196 = vst [vmem:[%s3 + $0xd4] sm:$0xf] %v1068
  %1197 = vst [vmem:[%s3 + $0xd8] sm:$0xf] %v1069
  %1198 = vst [vmem:[%s3 + $0xdc] sm:$0xf] %v1070
  %1199 = vst [vmem:[%s3 + $0xe0] sm:$0xf] %v1071
  %1200 = vst [vmem:[%s3 + $0xe4] sm:$0xf] %v1072
  %1201 = vst [vmem:[%s3 + $0xe8] sm:$0xf] %v1073
  %1202 = vst [vmem:[%s3 + $0xec] sm:$0xf] %v1074
  %1203 = vst [vmem:[%s3 + $0xf0] sm:$0xf] %v1075
  %1204 = vst [vmem:[%s3 + $0xf4] sm:$0xf] %v1076
  %1205 = vst [vmem:[%s3 + $0xf8] sm:$0xf] %v1077
  %1206 = vst [vmem:[%s3 + $0xfc] sm:$0xf] %v1078
  // Predicated region
  $region14: #{_lambda_.39} parent=0 // pred_check
    _
  $region15: #{_lambda_.39} parent=0 // pred_check_branch
    %1208 = sbr.rel (0) target = $region17
  $region16: #{_lambda_.39} parent=0 // pred_region
    _
  $region17: #{_lambda_.39} parent=0 // pred_fallthru
    _
  // Predicated region
  $region18: #{_lambda_.39} parent=0 // pred_check
    _
  $region19: #{_lambda_.39} parent=0 // pred_check_branch
    %1210 = sbr.rel (0) target = $region21
  $region20: #{_lambda_.39} parent=0 // pred_region
    _
  $region21: #{_lambda_.39} parent=0 // pred_fallthru
    _

// kernel: _lambda_.41
$region0: #{_lambda_.41}
  #allocation0 [shape = 'u32[]', space=smem, size = 0x4, offset = 0x4, fixed_abs, tag = 'smem constant byte address 0x4 - core index']
  #allocation1 [shape = 'u32[144,128]{1,0:T(1,128)}', space=vmem, size = 0x12000, scoped, tag = 'internal scratch']
  %s0 = inlined_call_operand.vmem [shape: bf16[128,128], index: 0, kind: input, shape index: {}]
  %s1 = inlined_call_operand.vmem [shape: bf16[128,128], index: 1, kind: input, shape index: {}]
  %s2 = inlined_call_operand.vmem [shape: f32[1,128], index: 2, kind: input, shape index: {}]
  %s3 = inlined_call_operand.vmem [shape: bf16[128,128], index: 3, kind: output, shape index: {}]
  %s4 = sld [smem:[#allocation0]]
  $region22: #{_lambda_.41} parent=0
    _
  %s6 = ssub.s32 1, %s4
  %s7 = scalar_select 0, %s6, %s4
  // Predicated region
  $region2: #{_lambda_.41} parent=0 // pred_check
    _
  $region3: #{_lambda_.41} parent=0 // pred_check_branch
    %9 = sbr.rel (0) target = $region5
  $region4: #{_lambda_.41} parent=0 // pred_region
    _
  $region5: #{_lambda_.41} parent=0 // pred_fallthru
    _
  // Predicated region
  $region6: #{_lambda_.41} parent=0 // pred_check
    _
  $region7: #{_lambda_.41} parent=0 // pred_check_branch
    %11 = sbr.rel (0) target = $region9
  $region8: #{_lambda_.41} parent=0 // pred_region
    _
  $region9: #{_lambda_.41} parent=0 // pred_fallthru
    _
  // Predicated region
  $region10: #{_lambda_.41} parent=0 // pred_check
    _
  $region11: #{_lambda_.41} parent=0 // pred_check_branch
    %13 = sbr.rel (0) target = $region13
  $region12: #{_lambda_.41} parent=0 // pred_region
    _
  $region13: #{_lambda_.41} parent=0 // pred_fallthru
    _
  %v15 = vld [vmem:[%s0] sm:$0xf]
  %v16 = vld [vmem:[%s0 + $0x4] sm:$0xf]
  %v17 = vld [vmem:[%s0 + $0x8] sm:$0xf]
  %v18 = vld [vmem:[%s0 + $0xc] sm:$0xf]
  %v19 = vld [vmem:[%s0 + $0x10] sm:$0xf]
  %v20 = vld [vmem:[%s0 + $0x14] sm:$0xf]
  %v21 = vld [vmem:[%s0 + $0x18] sm:$0xf]
  %v22 = vld [vmem:[%s0 + $0x1c] sm:$0xf]
  %v23 = vld [vmem:[%s0 + $0x20] sm:$0xf]
  %v24 = vld [vmem:[%s0 + $0x24] sm:$0xf]
  %v25 = vld [vmem:[%s0 + $0x28] sm:$0xf]
  %v26 = vld [vmem:[%s0 + $0x2c] sm:$0xf]
  %v27 = vld [vmem:[%s0 + $0x30] sm:$0xf]
  %v28 = vld [vmem:[%s0 + $0x34] sm:$0xf]
  %v29 = vld [vmem:[%s0 + $0x38] sm:$0xf]
  %v30 = vld [vmem:[%s0 + $0x3c] sm:$0xf]
  %v31 = vld [vmem:[%s1] sm:$0xf]
  %v32 = vld [vmem:[%s1 + $0x4] sm:$0xf]
  %v33 = vld [vmem:[%s1 + $0x8] sm:$0xf]
  %v34 = vld [vmem:[%s1 + $0xc] sm:$0xf]
  %v35 = vld [vmem:[%s1 + $0x10] sm:$0xf]
  %v36 = vld [vmem:[%s1 + $0x14] sm:$0xf]
  %v37 = vld [vmem:[%s1 + $0x18] sm:$0xf]
  %v38 = vld [vmem:[%s1 + $0x1c] sm:$0xf]
  %v39 = vld [vmem:[%s1 + $0x20] sm:$0xf]
  %v40 = vld [vmem:[%s1 + $0x24] sm:$0xf]
  %v41 = vld [vmem:[%s1 + $0x28] sm:$0xf]
  %v42 = vld [vmem:[%s1 + $0x2c] sm:$0xf]
  %v43 = vld [vmem:[%s1 + $0x30] sm:$0xf]
  %v44 = vld [vmem:[%s1 + $0x34] sm:$0xf]
  %v45 = vld [vmem:[%s1 + $0x38] sm:$0xf]
  %v46 = vld [vmem:[%s1 + $0x3c] sm:$0xf]
  %v47 = vld [vmem:[%s2] sm:$0x1]
  %v49 = vlaneseq
  %v50 = vshrl.u32 %v49, 7
  %v51 = vsub.s32 0, %v50
  %v52 = vrot.slane %v47, %v51
  %v70 = vunpack.c.l.b16 %v15
  %v71 = vunpack.c.l.b16 %v16
  %v72 = vunpack.c.l.b16 %v17
  %v73 = vunpack.c.l.b16 %v18
  %v74 = vunpack.c.l.b16 %v19
  %v75 = vunpack.c.l.b16 %v20
  %v76 = vunpack.c.l.b16 %v21
  %v77 = vunpack.c.l.b16 %v22
  %v78 = vunpack.c.l.b16 %v23
  %v79 = vunpack.c.l.b16 %v24
  %v80 = vunpack.c.l.b16 %v25
  %v81 = vunpack.c.l.b16 %v26
  %v82 = vunpack.c.l.b16 %v27
  %v83 = vunpack.c.l.b16 %v28
  %v84 = vunpack.c.l.b16 %v29
  %v85 = vunpack.c.l.b16 %v30
  %v86 = vpack.c.b16 %v71, %v70
  %v87 = vpack.c.b16 %v73, %v72
  %v88 = vpack.c.b16 %v75, %v74
  %v89 = vpack.c.b16 %v77, %v76
  %v90 = vpack.c.b16 %v79, %v78
  %v91 = vpack.c.b16 %v81, %v80
  %v92 = vpack.c.b16 %v83, %v82
  %v93 = vpack.c.b16 %v85, %v84
  %v118 = vunpack.c.l.b16 %v31
  %v119 = vunpack.c.l.b16 %v32
  %v120 = vunpack.c.l.b16 %v33
  %v121 = vunpack.c.l.b16 %v34
  %v122 = vunpack.c.l.b16 %v35
  %v123 = vunpack.c.l.b16 %v36
  %v124 = vunpack.c.l.b16 %v37
  %v125 = vunpack.c.l.b16 %v38
  %v126 = vunpack.c.l.b16 %v39
  %v127 = vunpack.c.l.b16 %v40
  %v128 = vunpack.c.l.b16 %v41
  %v129 = vunpack.c.l.b16 %v42
  %v130 = vunpack.c.l.b16 %v43
  %v131 = vunpack.c.l.b16 %v44
  %v132 = vunpack.c.l.b16 %v45
  %v133 = vunpack.c.l.b16 %v46
  %v134 = vpack.c.b16 %v119, %v118
  %v135 = vpack.c.b16 %v121, %v120
  %v136 = vpack.c.b16 %v123, %v122
  %v137 = vpack.c.b16 %v125, %v124
  %v138 = vpack.c.b16 %v127, %v126
  %v139 = vpack.c.b16 %v129, %v128
  %v140 = vpack.c.b16 %v131, %v130
  %v141 = vpack.c.b16 %v133, %v132
  %150 = vmatprep.subr.bf16.mxu0 0
  %151 = vmatpush1.bf16.msra.mxu0 %v134
  %152 = vmatprep.subr.bf16.mxu0 0
  %153 = vmatpush1.bf16.msra.mxu0 %v135
  %154 = vmatprep.subr.bf16.mxu0 0
  %155 = vmatpush1.bf16.msra.mxu0 %v136
  %156 = vmatprep.subr.bf16.mxu0 0
  %157 = vmatpush1.bf16.msra.mxu0 %v137
  %158 = vmatprep.subr.bf16.mxu0 0
  %159 = vmatpush1.bf16.msra.mxu0 %v138
  %160 = vmatprep.subr.bf16.mxu0 0
  %161 = vmatpush1.bf16.msra.mxu0 %v139
  %162 = vmatprep.subr.bf16.mxu0 0
  %163 = vmatpush1.bf16.msra.mxu0 %v140
  %164 = vmatprep.subr.bf16.mxu0 0
  %165 = vmatpush1.bf16.msra.mxu0 %v141
  %166 = vmatprep.subr.bf16.mxu0 0
  %167 = vmatpush1.bf16.msra.mxu0 0
  %168 = vmatprep.subr.bf16.mxu0 0
  %169 = vmatpush1.bf16.msra.mxu0 0
  %170 = vmatprep.subr.bf16.mxu0 0
  %171 = vmatpush1.bf16.msra.mxu0 0
  %172 = vmatprep.subr.bf16.mxu0 0
  %173 = vmatpush1.bf16.msra.mxu0 0
  %174 = vmatprep.subr.bf16.mxu0 0
  %175 = vmatpush1.bf16.msra.mxu0 0
  %176 = vmatprep.subr.bf16.mxu0 0
  %177 = vmatpush1.bf16.msra.mxu0 0
  %178 = vmatprep.subr.bf16.mxu0 0
  %179 = vmatpush1.bf16.msra.mxu0 0
  %180 = vmatprep.subr.bf16.mxu0 0
  %181 = vmatpush1.bf16.msra.mxu0 0
  %182 = vmatprep.mubr.bf16.mxu0 0
  %183 = vmatmul.mubr.bf16.gmra.mrb[0].mxu0 %v86
  %v184 = vpop.f32.mrb[0].mxu0
  %v185 = vadd.f32 %v52, %v184
  %v186 = vpop.f32.mrb[0].mxu0
  %v187 = vpop.f32.mrb[0].mxu0
  %v188 = vadd.f32 %v52, %v187
  %v189 = vpop.f32.mrb[0].mxu0
  %190 = vmatprep.mubr.bf16.mxu0 0
  %191 = vmatmul.mubr.bf16.gmra.mrb[0].mxu0 %v87
  %v192 = vpop.f32.mrb[0].mxu0
  %v193 = vadd.f32 %v52, %v192
  %v194 = vpop.f32.mrb[0].mxu0
  %v195 = vpop.f32.mrb[0].mxu0
  %v196 = vadd.f32 %v52, %v195
  %v197 = vpop.f32.mrb[0].mxu0
  %198 = vmatprep.mubr.bf16.mxu0 0
  %199 = vmatmul.mubr.bf16.gmra.mrb[0].mxu0 %v88
  %v200 = vpop.f32.mrb[0].mxu0
  %v201 = vadd.f32 %v52, %v200
  %v202 = vpop.f32.mrb[0].mxu0
  %v203 = vpop.f32.mrb[0].mxu0
  %v204 = vadd.f32 %v52, %v203
  %v205 = vpop.f32.mrb[0].mxu0
  %206 = vmatprep.mubr.bf16.mxu0 0
  %207 = vmatmul.mubr.bf16.gmra.mrb[0].mxu0 %v89
  %v208 = vpop.f32.mrb[0].mxu0
  %v209 = vadd.f32 %v52, %v208
  %v210 = vpop.f32.mrb[0].mxu0
  %v211 = vpop.f32.mrb[0].mxu0
  %v212 = vadd.f32 %v52, %v211
  %v213 = vpop.f32.mrb[0].mxu0
  %214 = vmatprep.mubr.bf16.mxu0 0
  %215 = vmatmul.mubr.bf16.gmra.mrb[0].mxu0 %v90
  %v216 = vpop.f32.mrb[0].mxu0
  %v217 = vadd.f32 %v52, %v216
  %v218 = vpop.f32.mrb[0].mxu0
  %v219 = vpop.f32.mrb[0].mxu0
  %v220 = vadd.f32 %v52, %v219
  %v221 = vpop.f32.mrb[0].mxu0
  %222 = vmatprep.mubr.bf16.mxu0 0
  %223 = vmatmul.mubr.bf16.gmra.mrb[0].mxu0 %v91
  %v224 = vpop.f32.mrb[0].mxu0
  %v225 = vadd.f32 %v52, %v224
  %v226 = vpop.f32.mrb[0].mxu0
  %v227 = vpop.f32.mrb[0].mxu0
  %v228 = vadd.f32 %v52, %v227
  %v229 = vpop.f32.mrb[0].mxu0
  %230 = vmatprep.mubr.bf16.mxu0 0
  %231 = vmatmul.mubr.bf16.gmra.mrb[0].mxu0 %v92
  %v232 = vpop.f32.mrb[0].mxu0
  %v233 = vadd.f32 %v52, %v232
  %v234 = vpop.f32.mrb[0].mxu0
  %v235 = vpop.f32.mrb[0].mxu0
  %v236 = vadd.f32 %v52, %v235
  %v237 = vpop.f32.mrb[0].mxu0
  %238 = vmatprep.mubr.bf16.mxu0 0
  %239 = vmatmul.mubr.bf16.gmra.mrb[0].mxu0 %v93
  %v240 = vpop.f32.mrb[0].mxu0
  %v241 = vadd.f32 %v52, %v240
  %v242 = vpop.f32.mrb[0].mxu0
  %v243 = vpop.f32.mrb[0].mxu0
  %v244 = vadd.f32 %v52, %v243
  %v245 = vpop.f32.mrb[0].mxu0
  %246 = vdwg.mxu0
  %v247 = vpack.c.bf16 %v188, %v185
  %v248 = vpack.c.bf16 %v196, %v193
  %v249 = vpack.c.bf16 %v204, %v201
  %v250 = vpack.c.bf16 %v212, %v209
  %v251 = vpack.c.bf16 %v220, %v217
  %v252 = vpack.c.bf16 %v228, %v225
  %v253 = vpack.c.bf16 %v236, %v233
  %v254 = vpack.c.bf16 %v244, %v241
  %v263 = vunpack.c.l.b16 %v247
  %v264 = vunpack.c.h.b16 %v247
  %v265 = vunpack.c.l.b16 %v248
  %v266 = vunpack.c.h.b16 %v248
  %v267 = vunpack.c.l.b16 %v249
  %v268 = vunpack.c.h.b16 %v249
  %v269 = vunpack.c.l.b16 %v250
  %v270 = vunpack.c.h.b16 %v250
  %v271 = vunpack.c.l.b16 %v251
  %v272 = vunpack.c.h.b16 %v251
  %v273 = vunpack.c.l.b16 %v252
  %v274 = vunpack.c.h.b16 %v252
  %v275 = vunpack.c.l.b16 %v253
  %v276 = vunpack.c.h.b16 %v253
  %v277 = vunpack.c.l.b16 %v254
  %v278 = vunpack.c.h.b16 %v254
  %v279 = vpack.c.b16 %v263, %v263
  %v280 = vpack.c.b16 %v264, %v264
  %v281 = vpack.c.b16 %v265, %v265
  %v282 = vpack.c.b16 %v266, %v266
  %v283 = vpack.c.b16 %v267, %v267
  %v284 = vpack.c.b16 %v268, %v268
  %v285 = vpack.c.b16 %v269, %v269
  %v286 = vpack.c.b16 %v270, %v270
  %v287 = vpack.c.b16 %v271, %v271
  %v288 = vpack.c.b16 %v272, %v272
  %v289 = vpack.c.b16 %v273, %v273
  %v290 = vpack.c.b16 %v274, %v274
  %v291 = vpack.c.b16 %v275, %v275
  %v292 = vpack.c.b16 %v276, %v276
  %v293 = vpack.c.b16 %v277, %v277
  %v294 = vpack.c.b16 %v278, %v278
  %311 = vst [vmem:[%s3] sm:$0xf] %v279
  %312 = vst [vmem:[%s3 + $0x4] sm:$0xf] %v280
  %313 = vst [vmem:[%s3 + $0x8] sm:$0xf] %v281
  %314 = vst [vmem:[%s3 + $0xc] sm:$0xf] %v282
  %315 = vst [vmem:[%s3 + $0x10] sm:$0xf] %v283
  %316 = vst [vmem:[%s3 + $0x14] sm:$0xf] %v284
  %317 = vst [vmem:[%s3 + $0x18] sm:$0xf] %v285
  %318 = vst [vmem:[%s3 + $0x1c] sm:$0xf] %v286
  %319 = vst [vmem:[%s3 + $0x20] sm:$0xf] %v287
  %320 = vst [vmem:[%s3 + $0x24] sm:$0xf] %v288
  %321 = vst [vmem:[%s3 + $0x28] sm:$0xf] %v289
  %322 = vst [vmem:[%s3 + $0x2c] sm:$0xf] %v290
  %323 = vst [vmem:[%s3 + $0x30] sm:$0xf] %v291
  %324 = vst [vmem:[%s3 + $0x34] sm:$0xf] %v292
  %325 = vst [vmem:[%s3 + $0x38] sm:$0xf] %v293
  %326 = vst [vmem:[%s3 + $0x3c] sm:$0xf] %v294
  // Predicated region
  $region14: #{_lambda_.41} parent=0 // pred_check
    _
  $region15: #{_lambda_.41} parent=0 // pred_check_branch
    %328 = sbr.rel (0) target = $region17
  $region16: #{_lambda_.41} parent=0 // pred_region
    _
  $region17: #{_lambda_.41} parent=0 // pred_fallthru
    _
  // Predicated region
  $region18: #{_lambda_.41} parent=0 // pred_check
    _
  $region19: #{_lambda_.41} parent=0 // pred_check_branch
    %330 = sbr.rel (0) target = $region21
  $region20: #{_lambda_.41} parent=0 // pred_region
    _
  $region21: #{_lambda_.41} parent=0 // pred_fallthru
    _

// kernel: _lambda_.44
$region0: #{_lambda_.44}
  #allocation0 [shape = 'u32[]', space=smem, size = 0x4, offset = 0x4, fixed_abs, tag = 'smem constant byte address 0x4 - core index']
  #allocation1 [shape = 'u32[144,128]{1,0:T(1,128)}', space=vmem, size = 0x12000, scoped, tag = 'internal scratch']
  %s0 = inlined_call_operand.vmem [shape: bf16[128,128], index: 0, kind: input, shape index: {}]
  %s1 = inlined_call_operand.vmem [shape: bf16[128,128], index: 1, kind: input, shape index: {}]
  %s2 = inlined_call_operand.vmem [shape: f32[1,128], index: 2, kind: input, shape index: {}]
  %s3 = inlined_call_operand.vmem [shape: bf16[128,128], index: 3, kind: input, shape index: {}]
  %s4 = inlined_call_operand.vmem [shape: bf16[128,128], index: 4, kind: output, shape index: {}]
  %s5 = sld [smem:[#allocation0]]
  $region26: #{_lambda_.44} parent=0
    _
  %s7 = ssub.s32 1, %s5
  %s8 = scalar_select 0, %s7, %s5
  // Predicated region
  $region2: #{_lambda_.44} parent=0 // pred_check
    _
  $region3: #{_lambda_.44} parent=0 // pred_check_branch
    %10 = sbr.rel (0) target = $region5
  $region4: #{_lambda_.44} parent=0 // pred_region
    _
  $region5: #{_lambda_.44} parent=0 // pred_fallthru
    _
  // Predicated region
  $region6: #{_lambda_.44} parent=0 // pred_check
    _
  $region7: #{_lambda_.44} parent=0 // pred_check_branch
    %12 = sbr.rel (0) target = $region9
  $region8: #{_lambda_.44} parent=0 // pred_region
    _
  $region9: #{_lambda_.44} parent=0 // pred_fallthru
    _
  // Predicated region
  $region10: #{_lambda_.44} parent=0 // pred_check
    _
  $region11: #{_lambda_.44} parent=0 // pred_check_branch
    %14 = sbr.rel (0) target = $region13
  $region12: #{_lambda_.44} parent=0 // pred_region
    _
  $region13: #{_lambda_.44} parent=0 // pred_fallthru
    _
  // Predicated region
  $region14: #{_lambda_.44} parent=0 // pred_check
    _
  $region15: #{_lambda_.44} parent=0 // pred_check_branch
    %16 = sbr.rel (0) target = $region17
  $region16: #{_lambda_.44} parent=0 // pred_region
    _
  $region17: #{_lambda_.44} parent=0 // pred_fallthru
    _
  %v18 = vld [vmem:[%s0] sm:$0xf]
  %v19 = vld [vmem:[%s0 + $0x4] sm:$0xf]
  %v20 = vld [vmem:[%s0 + $0x8] sm:$0xf]
  %v21 = vld [vmem:[%s0 + $0xc] sm:$0xf]
  %v22 = vld [vmem:[%s0 + $0x10] sm:$0xf]
  %v23 = vld [vmem:[%s0 + $0x14] sm:$0xf]
  %v24 = vld [vmem:[%s0 + $0x18] sm:$0xf]
  %v25 = vld [vmem:[%s0 + $0x1c] sm:$0xf]
  %v26 = vld [vmem:[%s0 + $0x20] sm:$0xf]
  %v27 = vld [vmem:[%s0 + $0x24] sm:$0xf]
  %v28 = vld [vmem:[%s0 + $0x28] sm:$0xf]
  %v29 = vld [vmem:[%s0 + $0x2c] sm:$0xf]
  %v30 = vld [vmem:[%s0 + $0x30] sm:$0xf]
  %v31 = vld [vmem:[%s0 + $0x34] sm:$0xf]
  %v32 = vld [vmem:[%s0 + $0x38] sm:$0xf]
  %v33 = vld [vmem:[%s0 + $0x3c] sm:$0xf]
  %v34 = vld [vmem:[%s1] sm:$0xf]
  %v35 = vld [vmem:[%s1 + $0x4] sm:$0xf]
  %v36 = vld [vmem:[%s1 + $0x8] sm:$0xf]
  %v37 = vld [vmem:[%s1 + $0xc] sm:$0xf]
  %v38 = vld [vmem:[%s1 + $0x10] sm:$0xf]
  %v39 = vld [vmem:[%s1 + $0x14] sm:$0xf]
  %v40 = vld [vmem:[%s1 + $0x18] sm:$0xf]
  %v41 = vld [vmem:[%s1 + $0x1c] sm:$0xf]
  %v42 = vld [vmem:[%s1 + $0x20] sm:$0xf]
  %v43 = vld [vmem:[%s1 + $0x24] sm:$0xf]
  %v44 = vld [vmem:[%s1 + $0x28] sm:$0xf]
  %v45 = vld [vmem:[%s1 + $0x2c] sm:$0xf]
  %v46 = vld [vmem:[%s1 + $0x30] sm:$0xf]
  %v47 = vld [vmem:[%s1 + $0x34] sm:$0xf]
  %v48 = vld [vmem:[%s1 + $0x38] sm:$0xf]
  %v49 = vld [vmem:[%s1 + $0x3c] sm:$0xf]
  %v50 = vld [vmem:[%s2] sm:$0x1]
  %v52 = vlaneseq
  %v53 = vshrl.u32 %v52, 7
  %v54 = vsub.s32 0, %v53
  %v55 = vrot.slane %v50, %v54
  %v73 = vunpack.c.l.b16 %v18
  %v74 = vunpack.c.l.b16 %v19
  %v75 = vunpack.c.l.b16 %v20
  %v76 = vunpack.c.l.b16 %v21
  %v77 = vunpack.c.l.b16 %v22
  %v78 = vunpack.c.l.b16 %v23
  %v79 = vunpack.c.l.b16 %v24
  %v80 = vunpack.c.l.b16 %v25
  %v81 = vunpack.c.l.b16 %v26
  %v82 = vunpack.c.l.b16 %v27
  %v83 = vunpack.c.l.b16 %v28
  %v84 = vunpack.c.l.b16 %v29
  %v85 = vunpack.c.l.b16 %v30
  %v86 = vunpack.c.l.b16 %v31
  %v87 = vunpack.c.l.b16 %v32
  %v88 = vunpack.c.l.b16 %v33
  %v89 = vpack.c.b16 %v74, %v73
  %v90 = vpack.c.b16 %v76, %v75
  %v91 = vpack.c.b16 %v78, %v77
  %v92 = vpack.c.b16 %v80, %v79
  %v93 = vpack.c.b16 %v82, %v81
  %v94 = vpack.c.b16 %v84, %v83
  %v95 = vpack.c.b16 %v86, %v85
  %v96 = vpack.c.b16 %v88, %v87
  %v121 = vunpack.c.l.b16 %v34
  %v122 = vunpack.c.l.b16 %v35
  %v123 = vunpack.c.l.b16 %v36
  %v124 = vunpack.c.l.b16 %v37
  %v125 = vunpack.c.l.b16 %v38
  %v126 = vunpack.c.l.b16 %v39
  %v127 = vunpack.c.l.b16 %v40
  %v128 = vunpack.c.l.b16 %v41
  %v129 = vunpack.c.l.b16 %v42
  %v130 = vunpack.c.l.b16 %v43
  %v131 = vunpack.c.l.b16 %v44
  %v132 = vunpack.c.l.b16 %v45
  %v133 = vunpack.c.l.b16 %v46
  %v134 = vunpack.c.l.b16 %v47
  %v135 = vunpack.c.l.b16 %v48
  %v136 = vunpack.c.l.b16 %v49
  %v137 = vpack.c.b16 %v122, %v121
  %v138 = vpack.c.b16 %v124, %v123
  %v139 = vpack.c.b16 %v126, %v125
  %v140 = vpack.c.b16 %v128, %v127
  %v141 = vpack.c.b16 %v130, %v129
  %v142 = vpack.c.b16 %v132, %v131
  %v143 = vpack.c.b16 %v134, %v133
  %v144 = vpack.c.b16 %v136, %v135
  %153 = vmatprep.subr.bf16.mxu0 0
  %154 = vmatpush1.bf16.msra.mxu0 %v137
  %155 = vmatprep.subr.bf16.mxu0 0
  %156 = vmatpush1.bf16.msra.mxu0 %v138
  %157 = vmatprep.subr.bf16.mxu0 0
  %158 = vmatpush1.bf16.msra.mxu0 %v139
  %159 = vmatprep.subr.bf16.mxu0 0
  %160 = vmatpush1.bf16.msra.mxu0 %v140
  %161 = vmatprep.subr.bf16.mxu0 0
  %162 = vmatpush1.bf16.msra.mxu0 %v141
  %163 = vmatprep.subr.bf16.mxu0 0
  %164 = vmatpush1.bf16.msra.mxu0 %v142
  %165 = vmatprep.subr.bf16.mxu0 0
  %166 = vmatpush1.bf16.msra.mxu0 %v143
  %167 = vmatprep.subr.bf16.mxu0 0
  %168 = vmatpush1.bf16.msra.mxu0 %v144
  %169 = vmatprep.subr.bf16.mxu0 0
  %170 = vmatpush1.bf16.msra.mxu0 0
  %171 = vmatprep.subr.bf16.mxu0 0
  %172 = vmatpush1.bf16.msra.mxu0 0
  %173 = vmatprep.subr.bf16.mxu0 0
  %174 = vmatpush1.bf16.msra.mxu0 0
  %175 = vmatprep.subr.bf16.mxu0 0
  %176 = vmatpush1.bf16.msra.mxu0 0
  %177 = vmatprep.subr.bf16.mxu0 0
  %178 = vmatpush1.bf16.msra.mxu0 0
  %179 = vmatprep.subr.bf16.mxu0 0
  %180 = vmatpush1.bf16.msra.mxu0 0
  %181 = vmatprep.subr.bf16.mxu0 0
  %182 = vmatpush1.bf16.msra.mxu0 0
  %183 = vmatprep.subr.bf16.mxu0 0
  %184 = vmatpush1.bf16.msra.mxu0 0
  %185 = vmatprep.mubr.bf16.mxu0 0
  %186 = vmatmul.mubr.bf16.gmra.mrb[0].mxu0 %v89
  %v187 = vpop.f32.mrb[0].mxu0
  %v188 = vadd.f32 %v55, %v187
  %v189 = vpop.f32.mrb[0].mxu0
  %v190 = vpop.f32.mrb[0].mxu0
  %v191 = vadd.f32 %v55, %v190
  %v192 = vpop.f32.mrb[0].mxu0
  %193 = vmatprep.mubr.bf16.mxu0 0
  %194 = vmatmul.mubr.bf16.gmra.mrb[0].mxu0 %v90
  %v195 = vpop.f32.mrb[0].mxu0
  %v196 = vadd.f32 %v55, %v195
  %v197 = vpop.f32.mrb[0].mxu0
  %v198 = vpop.f32.mrb[0].mxu0
  %v199 = vadd.f32 %v55, %v198
  %v200 = vpop.f32.mrb[0].mxu0
  %201 = vmatprep.mubr.bf16.mxu0 0
  %202 = vmatmul.mubr.bf16.gmra.mrb[0].mxu0 %v91
  %v203 = vpop.f32.mrb[0].mxu0
  %v204 = vadd.f32 %v55, %v203
  %v205 = vpop.f32.mrb[0].mxu0
  %v206 = vpop.f32.mrb[0].mxu0
  %v207 = vadd.f32 %v55, %v206
  %v208 = vpop.f32.mrb[0].mxu0
  %209 = vmatprep.mubr.bf16.mxu0 0
  %210 = vmatmul.mubr.bf16.gmra.mrb[0].mxu0 %v92
  %v211 = vpop.f32.mrb[0].mxu0
  %v212 = vadd.f32 %v55, %v211
  %v213 = vpop.f32.mrb[0].mxu0
  %v214 = vpop.f32.mrb[0].mxu0
  %v215 = vadd.f32 %v55, %v214
  %v216 = vpop.f32.mrb[0].mxu0
  %217 = vmatprep.mubr.bf16.mxu0 0
  %218 = vmatmul.mubr.bf16.gmra.mrb[0].mxu0 %v93
  %v219 = vpop.f32.mrb[0].mxu0
  %v220 = vadd.f32 %v55, %v219
  %v221 = vpop.f32.mrb[0].mxu0
  %v222 = vpop.f32.mrb[0].mxu0
  %v223 = vadd.f32 %v55, %v222
  %v224 = vpop.f32.mrb[0].mxu0
  %225 = vmatprep.mubr.bf16.mxu0 0
  %226 = vmatmul.mubr.bf16.gmra.mrb[0].mxu0 %v94
  %v227 = vpop.f32.mrb[0].mxu0
  %v228 = vadd.f32 %v55, %v227
  %v229 = vpop.f32.mrb[0].mxu0
  %v230 = vpop.f32.mrb[0].mxu0
  %v231 = vadd.f32 %v55, %v230
  %v232 = vpop.f32.mrb[0].mxu0
  %233 = vmatprep.mubr.bf16.mxu0 0
  %234 = vmatmul.mubr.bf16.gmra.mrb[0].mxu0 %v95
  %v235 = vpop.f32.mrb[0].mxu0
  %v236 = vadd.f32 %v55, %v235
  %v237 = vpop.f32.mrb[0].mxu0
  %v238 = vpop.f32.mrb[0].mxu0
  %v239 = vadd.f32 %v55, %v238
  %v240 = vpop.f32.mrb[0].mxu0
  %241 = vmatprep.mubr.bf16.mxu0 0
  %242 = vmatmul.mubr.bf16.gmra.mrb[0].mxu0 %v96
  %v243 = vpop.f32.mrb[0].mxu0
  %v244 = vadd.f32 %v55, %v243
  %v245 = vpop.f32.mrb[0].mxu0
  %v246 = vpop.f32.mrb[0].mxu0
  %v247 = vadd.f32 %v55, %v246
  %v248 = vpop.f32.mrb[0].mxu0
  %249 = vdwg.mxu0
  %v250 = vld [vmem:[%s3] sm:$0xf]
  %v251 = vld [vmem:[%s3 + $0x4] sm:$0xf]
  %v252 = vld [vmem:[%s3 + $0x8] sm:$0xf]
  %v253 = vld [vmem:[%s3 + $0xc] sm:$0xf]
  %v254 = vld [vmem:[%s3 + $0x10] sm:$0xf]
  %v255 = vld [vmem:[%s3 + $0x14] sm:$0xf]
  %v256 = vld [vmem:[%s3 + $0x18] sm:$0xf]
  %v257 = vld [vmem:[%s3 + $0x1c] sm:$0xf]
  %v258 = vld [vmem:[%s3 + $0x20] sm:$0xf]
  %v259 = vld [vmem:[%s3 + $0x24] sm:$0xf]
  %v260 = vld [vmem:[%s3 + $0x28] sm:$0xf]
  %v261 = vld [vmem:[%s3 + $0x2c] sm:$0xf]
  %v262 = vld [vmem:[%s3 + $0x30] sm:$0xf]
  %v263 = vld [vmem:[%s3 + $0x34] sm:$0xf]
  %v264 = vld [vmem:[%s3 + $0x38] sm:$0xf]
  %v265 = vld [vmem:[%s3 + $0x3c] sm:$0xf]
  %v266 = vunpack.c.l.bf16 %v250
  %v267 = vunpack.c.l.bf16 %v251
  %v268 = vunpack.c.l.bf16 %v252
  %v269 = vunpack.c.l.bf16 %v253
  %v270 = vunpack.c.l.bf16 %v254
  %v271 = vunpack.c.l.bf16 %v255
  %v272 = vunpack.c.l.bf16 %v256
  %v273 = vunpack.c.l.bf16 %v257
  %v274 = vunpack.c.l.bf16 %v258
  %v275 = vunpack.c.l.bf16 %v259
  %v276 = vunpack.c.l.bf16 %v260
  %v277 = vunpack.c.l.bf16 %v261
  %v278 = vunpack.c.l.bf16 %v262
  %v279 = vunpack.c.l.bf16 %v263
  %v280 = vunpack.c.l.bf16 %v264
  %v281 = vunpack.c.l.bf16 %v265
  %v282 = vadd.f32 %v188, %v266
  %v283 = vadd.f32 %v191, %v267
  %v284 = vadd.f32 %v196, %v268
  %v285 = vadd.f32 %v199, %v269
  %v286 = vadd.f32 %v204, %v270
  %v287 = vadd.f32 %v207, %v271
  %v288 = vadd.f32 %v212, %v272
  %v289 = vadd.f32 %v215, %v273
  %v290 = vadd.f32 %v220, %v274
  %v291 = vadd.f32 %v223, %v275
  %v292 = vadd.f32 %v228, %v276
  %v293 = vadd.f32 %v231, %v277
  %v294 = vadd.f32 %v236, %v278
  %v295 = vadd.f32 %v239, %v279
  %v296 = vadd.f32 %v244, %v280
  %v297 = vadd.f32 %v247, %v281
  %v298 = vmax.f32 %v282, 0.0
  %v299 = vmax.f32 %v283, 0.0
  %v300 = vmax.f32 %v284, 0.0
  %v301 = vmax.f32 %v285, 0.0
  %v302 = vmax.f32 %v286, 0.0
  %v303 = vmax.f32 %v287, 0.0
  %v304 = vmax.f32 %v288, 0.0
  %v305 = vmax.f32 %v289, 0.0
  %v306 = vmax.f32 %v290, 0.0
  %v307 = vmax.f32 %v291, 0.0
  %v308 = vmax.f32 %v292, 0.0
  %v309 = vmax.f32 %v293, 0.0
  %v310 = vmax.f32 %v294, 0.0
  %v311 = vmax.f32 %v295, 0.0
  %v312 = vmax.f32 %v296, 0.0
  %v313 = vmax.f32 %v297, 0.0
  %v314 = vpack.c.bf16 %v299, %v298
  %v315 = vpack.c.bf16 %v301, %v300
  %v316 = vpack.c.bf16 %v303, %v302
  %v317 = vpack.c.bf16 %v305, %v304
  %v318 = vpack.c.bf16 %v307, %v306
  %v319 = vpack.c.bf16 %v309, %v308
  %v320 = vpack.c.bf16 %v311, %v310
  %v321 = vpack.c.bf16 %v313, %v312
  %v330 = vunpack.c.l.b16 %v314
  %v331 = vunpack.c.h.b16 %v314
  %v332 = vunpack.c.l.b16 %v315
  %v333 = vunpack.c.h.b16 %v315
  %v334 = vunpack.c.l.b16 %v316
  %v335 = vunpack.c.h.b16 %v316
  %v336 = vunpack.c.l.b16 %v317
  %v337 = vunpack.c.h.b16 %v317
  %v338 = vunpack.c.l.b16 %v318
  %v339 = vunpack.c.h.b16 %v318
  %v340 = vunpack.c.l.b16 %v319
  %v341 = vunpack.c.h.b16 %v319
  %v342 = vunpack.c.l.b16 %v320
  %v343 = vunpack.c.h.b16 %v320
  %v344 = vunpack.c.l.b16 %v321
  %v345 = vunpack.c.h.b16 %v321
  %v346 = vpack.c.b16 %v330, %v330
  %v347 = vpack.c.b16 %v331, %v331
  %v348 = vpack.c.b16 %v332, %v332
  %v349 = vpack.c.b16 %v333, %v333
  %v350 = vpack.c.b16 %v334, %v334
  %v351 = vpack.c.b16 %v335, %v335
  %v352 = vpack.c.b16 %v336, %v336
  %v353 = vpack.c.b16 %v337, %v337
  %v354 = vpack.c.b16 %v338, %v338
  %v355 = vpack.c.b16 %v339, %v339
  %v356 = vpack.c.b16 %v340, %v340
  %v357 = vpack.c.b16 %v341, %v341
  %v358 = vpack.c.b16 %v342, %v342
  %v359 = vpack.c.b16 %v343, %v343
  %v360 = vpack.c.b16 %v344, %v344
  %v361 = vpack.c.b16 %v345, %v345
  %378 = vst [vmem:[%s4] sm:$0xf] %v346
  %379 = vst [vmem:[%s4 + $0x4] sm:$0xf] %v347
  %380 = vst [vmem:[%s4 + $0x8] sm:$0xf] %v348
  %381 = vst [vmem:[%s4 + $0xc] sm:$0xf] %v349
  %382 = vst [vmem:[%s4 + $0x10] sm:$0xf] %v350
  %383 = vst [vmem:[%s4 + $0x14] sm:$0xf] %v351
  %384 = vst [vmem:[%s4 + $0x18] sm:$0xf] %v352
  %385 = vst [vmem:[%s4 + $0x1c] sm:$0xf] %v353
  %386 = vst [vmem:[%s4 + $0x20] sm:$0xf] %v354
  %387 = vst [vmem:[%s4 + $0x24] sm:$0xf] %v355
  %388 = vst [vmem:[%s4 + $0x28] sm:$0xf] %v356
  %389 = vst [vmem:[%s4 + $0x2c] sm:$0xf] %v357
  %390 = vst [vmem:[%s4 + $0x30] sm:$0xf] %v358
  %391 = vst [vmem:[%s4 + $0x34] sm:$0xf] %v359
  %392 = vst [vmem:[%s4 + $0x38] sm:$0xf] %v360
  %393 = vst [vmem:[%s4 + $0x3c] sm:$0xf] %v361
  // Predicated region
  $region18: #{_lambda_.44} parent=0 // pred_check
    _
  $region19: #{_lambda_.44} parent=0 // pred_check_branch
    %395 = sbr.rel (0) target = $region21
  $region20: #{_lambda_.44} parent=0 // pred_region
    _
  $region21: #{_lambda_.44} parent=0 // pred_fallthru
    _
  // Predicated region
  $region22: #{_lambda_.44} parent=0 // pred_check
    _
  $region23: #{_lambda_.44} parent=0 // pred_check_branch
    %397 = sbr.rel (0) target = $region25
  $region24: #{_lambda_.44} parent=0 // pred_region
    _
  $region25: #{_lambda_.44} parent=0 // pred_fallthru
    _

// kernel: _lambda_.43
$region0: #{_lambda_.43}
  #allocation0 [shape = 'u32[]', space=smem, size = 0x4, offset = 0x4, fixed_abs, tag = 'smem constant byte address 0x4 - core index']
  #allocation1 [shape = 'u32[144,128]{1,0:T(1,128)}', space=vmem, size = 0x12000, scoped, tag = 'internal scratch']
  %s0 = inlined_call_operand.vmem [shape: bf16[128,1152], index: 0, kind: input, shape index: {}]
  %s1 = inlined_call_operand.vmem [shape: bf16[1152,128], index: 1, kind: input, shape index: {}]
  %s2 = inlined_call_operand.vmem [shape: f32[1,128], index: 2, kind: input, shape index: {}]
  %s3 = inlined_call_operand.vmem [shape: bf16[128,128], index: 3, kind: output, shape index: {}]
  %s4 = sld [smem:[#allocation0]]
  $region22: #{_lambda_.43} parent=0
    _
  %s6 = ssub.s32 1, %s4
  %s7 = scalar_select 0, %s6, %s4
  // Predicated region
  $region2: #{_lambda_.43} parent=0 // pred_check
    _
  $region3: #{_lambda_.43} parent=0 // pred_check_branch
    %9 = sbr.rel (0) target = $region5
  $region4: #{_lambda_.43} parent=0 // pred_region
    _
  $region5: #{_lambda_.43} parent=0 // pred_fallthru
    _
  // Predicated region
  $region6: #{_lambda_.43} parent=0 // pred_check
    _
  $region7: #{_lambda_.43} parent=0 // pred_check_branch
    %11 = sbr.rel (0) target = $region9
  $region8: #{_lambda_.43} parent=0 // pred_region
    _
  $region9: #{_lambda_.43} parent=0 // pred_fallthru
    _
  // Predicated region
  $region10: #{_lambda_.43} parent=0 // pred_check
    _
  $region11: #{_lambda_.43} parent=0 // pred_check_branch
    %13 = sbr.rel (0) target = $region13
  $region12: #{_lambda_.43} parent=0 // pred_region
    _
  $region13: #{_lambda_.43} parent=0 // pred_fallthru
    _
  %v15 = vld [vmem:[%s0] sm:$0xff]
  %v16 = vld [vmem:[%s0 + $0x8] sm:$0xff]
  %v17 = vld [vmem:[%s0 + $0x10] sm:$0xff]
  %v18 = vld [vmem:[%s0 + $0x18] sm:$0xff]
  %v19 = vld [vmem:[%s0 + $0x20] sm:$0xf]
  %v20 = vld [vmem:[%s0 + $0x24] sm:$0xff]
  %v21 = vld [vmem:[%s0 + $0x2c] sm:$0xff]
  %v22 = vld [vmem:[%s0 + $0x34] sm:$0xff]
  %v23 = vld [vmem:[%s0 + $0x3c] sm:$0xff]
  %v24 = vld [vmem:[%s0 + $0x44] sm:$0xf]
  %v25 = vld [vmem:[%s0 + $0x48] sm:$0xff]
  %v26 = vld [vmem:[%s0 + $0x50] sm:$0xff]
  %v27 = vld [vmem:[%s0 + $0x58] sm:$0xff]
  %v28 = vld [vmem:[%s0 + $0x60] sm:$0xff]
  %v29 = vld [vmem:[%s0 + $0x68] sm:$0xf]
  %v30 = vld [vmem:[%s0 + $0x6c] sm:$0xff]
  %v31 = vld [vmem:[%s0 + $0x74] sm:$0xff]
  %v32 = vld [vmem:[%s0 + $0x7c] sm:$0xff]
  %v33 = vld [vmem:[%s0 + $0x84] sm:$0xff]
  %v34 = vld [vmem:[%s0 + $0x8c] sm:$0xf]
  %v35 = vld [vmem:[%s0 + $0x90] sm:$0xff]
  %v36 = vld [vmem:[%s0 + $0x98] sm:$0xff]
  %v37 = vld [vmem:[%s0 + $0xa0] sm:$0xff]
  %v38 = vld [vmem:[%s0 + $0xa8] sm:$0xff]
  %v39 = vld [vmem:[%s0 + $0xb0] sm:$0xf]
  %v40 = vld [vmem:[%s0 + $0xb4] sm:$0xff]
  %v41 = vld [vmem:[%s0 + $0xbc] sm:$0xff]
  %v42 = vld [vmem:[%s0 + $0xc4] sm:$0xff]
  %v43 = vld [vmem:[%s0 + $0xcc] sm:$0xff]
  %v44 = vld [vmem:[%s0 + $0xd4] sm:$0xf]
  %v45 = vld [vmem:[%s0 + $0xd8] sm:$0xff]
  %v46 = vld [vmem:[%s0 + $0xe0] sm:$0xff]
  %v47 = vld [vmem:[%s0 + $0xe8] sm:$0xff]
  %v48 = vld [vmem:[%s0 + $0xf0] sm:$0xff]
  %v49 = vld [vmem:[%s0 + $0xf8] sm:$0xf]
  %v50 = vld [vmem:[%s0 + $0xfc] sm:$0xff]
  %v51 = vld [vmem:[%s0 + $0x104] sm:$0xff]
  %v52 = vld [vmem:[%s0 + $0x10c] sm:$0xff]
  %v53 = vld [vmem:[%s0 + $0x114] sm:$0xff]
  %v54 = vld [vmem:[%s0 + $0x11c] sm:$0xf]
  %v55 = vld [vmem:[%s0 + $0x120] sm:$0xff]
  %v56 = vld [vmem:[%s0 + $0x128] sm:$0xff]
  %v57 = vld [vmem:[%s0 + $0x130] sm:$0xff]
  %v58 = vld [vmem:[%s0 + $0x138] sm:$0xff]
  %v59 = vld [vmem:[%s0 + $0x140] sm:$0xf]
  %v60 = vld [vmem:[%s0 + $0x144] sm:$0xff]
  %v61 = vld [vmem:[%s0 + $0x14c] sm:$0xff]
  %v62 = vld [vmem:[%s0 + $0x154] sm:$0xff]
  %v63 = vld [vmem:[%s0 + $0x15c] sm:$0xff]
  %v64 = vld [vmem:[%s0 + $0x164] sm:$0xf]
  %v65 = vld [vmem:[%s0 + $0x168] sm:$0xff]
  %v66 = vld [vmem:[%s0 + $0x170] sm:$0xff]
  %v67 = vld [vmem:[%s0 + $0x178] sm:$0xff]
  %v68 = vld [vmem:[%s0 + $0x180] sm:$0xff]
  %v69 = vld [vmem:[%s0 + $0x188] sm:$0xf]
  %v70 = vld [vmem:[%s0 + $0x18c] sm:$0xff]
  %v71 = vld [vmem:[%s0 + $0x194] sm:$0xff]
  %v72 = vld [vmem:[%s0 + $0x19c] sm:$0xff]
  %v73 = vld [vmem:[%s0 + $0x1a4] sm:$0xff]
  %v74 = vld [vmem:[%s0 + $0x1ac] sm:$0xf]
  %v75 = vld [vmem:[%s0 + $0x1b0] sm:$0xff]
  %v76 = vld [vmem:[%s0 + $0x1b8] sm:$0xff]
  %v77 = vld [vmem:[%s0 + $0x1c0] sm:$0xff]
  %v78 = vld [vmem:[%s0 + $0x1c8] sm:$0xff]
  %v79 = vld [vmem:[%s0 + $0x1d0] sm:$0xf]
  %v80 = vld [vmem:[%s0 + $0x1d4] sm:$0xff]
  %v81 = vld [vmem:[%s0 + $0x1dc] sm:$0xff]
  %v82 = vld [vmem:[%s0 + $0x1e4] sm:$0xff]
  %v83 = vld [vmem:[%s0 + $0x1ec] sm:$0xff]
  %v84 = vld [vmem:[%s0 + $0x1f4] sm:$0xf]
  %v85 = vld [vmem:[%s0 + $0x1f8] sm:$0xff]
  %v86 = vld [vmem:[%s0 + $0x200] sm:$0xff]
  %v87 = vld [vmem:[%s0 + $0x208] sm:$0xff]
  %v88 = vld [vmem:[%s0 + $0x210] sm:$0xff]
  %v89 = vld [vmem:[%s0 + $0x218] sm:$0xf]
  %v90 = vld [vmem:[%s0 + $0x21c] sm:$0xff]
  %v91 = vld [vmem:[%s0 + $0x224] sm:$0xff]
  %v92 = vld [vmem:[%s0 + $0x22c] sm:$0xff]
  %v93 = vld [vmem:[%s0 + $0x234] sm:$0xff]
  %v94 = vld [vmem:[%s0 + $0x23c] sm:$0xf]
  %v95 = vld [vmem:[%s1] sm:$0xf]
  %v96 = vld [vmem:[%s1 + $0x4] sm:$0xf]
  %v97 = vld [vmem:[%s1 + $0x8] sm:$0xf]
  %v98 = vld [vmem:[%s1 + $0xc] sm:$0xf]
  %v99 = vld [vmem:[%s1 + $0x10] sm:$0xf]
  %v100 = vld [vmem:[%s1 + $0x14] sm:$0xf]
  %v101 = vld [vmem:[%s1 + $0x18] sm:$0xf]
  %v102 = vld [vmem:[%s1 + $0x1c] sm:$0xf]
  %v103 = vld [vmem:[%s1 + $0x20] sm:$0xf]
  %v104 = vld [vmem:[%s1 + $0x24] sm:$0xf]
  %v105 = vld [vmem:[%s1 + $0x28] sm:$0xf]
  %v106 = vld [vmem:[%s1 + $0x2c] sm:$0xf]
  %v107 = vld [vmem:[%s1 + $0x30] sm:$0xf]
  %v108 = vld [vmem:[%s1 + $0x34] sm:$0xf]
  %v109 = vld [vmem:[%s1 + $0x38] sm:$0xf]
  %v110 = vld [vmem:[%s1 + $0x3c] sm:$0xf]
  %v111 = vld [vmem:[%s1 + $0x40] sm:$0xf]
  %v112 = vld [vmem:[%s1 + $0x44] sm:$0xf]
  %v113 = vld [vmem:[%s1 + $0x48] sm:$0xf]
  %v114 = vld [vmem:[%s1 + $0x4c] sm:$0xf]
  %v115 = vld [vmem:[%s1 + $0x50] sm:$0xf]
  %v116 = vld [vmem:[%s1 + $0x54] sm:$0xf]
  %v117 = vld [vmem:[%s1 + $0x58] sm:$0xf]
  %v118 = vld [vmem:[%s1 + $0x5c] sm:$0xf]
  %v119 = vld [vmem:[%s1 + $0x60] sm:$0xf]
  %v120 = vld [vmem:[%s1 + $0x64] sm:$0xf]
  %v121 = vld [vmem:[%s1 + $0x68] sm:$0xf]
  %v122 = vld [vmem:[%s1 + $0x6c] sm:$0xf]
  %v123 = vld [vmem:[%s1 + $0x70] sm:$0xf]
  %v124 = vld [vmem:[%s1 + $0x74] sm:$0xf]
  %v125 = vld [vmem:[%s1 + $0x78] sm:$0xf]
  %v126 = vld [vmem:[%s1 + $0x7c] sm:$0xf]
  %v127 = vld [vmem:[%s1 + $0x80] sm:$0xf]
  %v128 = vld [vmem:[%s1 + $0x84] sm:$0xf]
  %v129 = vld [vmem:[%s1 + $0x88] sm:$0xf]
  %v130 = vld [vmem:[%s1 + $0x8c] sm:$0xf]
  %v131 = vld [vmem:[%s1 + $0x90] sm:$0xf]
  %v132 = vld [vmem:[%s1 + $0x94] sm:$0xf]
  %v133 = vld [vmem:[%s1 + $0x98] sm:$0xf]
  %v134 = vld [vmem:[%s1 + $0x9c] sm:$0xf]
  %v135 = vld [vmem:[%s1 + $0xa0] sm:$0xf]
  %v136 = vld [vmem:[%s1 + $0xa4] sm:$0xf]
  %v137 = vld [vmem:[%s1 + $0xa8] sm:$0xf]
  %v138 = vld [vmem:[%s1 + $0xac] sm:$0xf]
  %v139 = vld [vmem:[%s1 + $0xb0] sm:$0xf]
  %v140 = vld [vmem:[%s1 + $0xb4] sm:$0xf]
  %v141 = vld [vmem:[%s1 + $0xb8] sm:$0xf]
  %v142 = vld [vmem:[%s1 + $0xbc] sm:$0xf]
  %v143 = vld [vmem:[%s1 + $0xc0] sm:$0xf]
  %v144 = vld [vmem:[%s1 + $0xc4] sm:$0xf]
  %v145 = vld [vmem:[%s1 + $0xc8] sm:$0xf]
  %v146 = vld [vmem:[%s1 + $0xcc] sm:$0xf]
  %v147 = vld [vmem:[%s1 + $0xd0] sm:$0xf]
  %v148 = vld [vmem:[%s1 + $0xd4] sm:$0xf]
  %v149 = vld [vmem:[%s1 + $0xd8] sm:$0xf]
  %v150 = vld [vmem:[%s1 + $0xdc] sm:$0xf]
  %v151 = vld [vmem:[%s1 + $0xe0] sm:$0xf]
  %v152 = vld [vmem:[%s1 + $0xe4] sm:$0xf]
  %v153 = vld [vmem:[%s1 + $0xe8] sm:$0xf]
  %v154 = vld [vmem:[%s1 + $0xec] sm:$0xf]
  %v155 = vld [vmem:[%s1 + $0xf0] sm:$0xf]
  %v156 = vld [vmem:[%s1 + $0xf4] sm:$0xf]
  %v157 = vld [vmem:[%s1 + $0xf8] sm:$0xf]
  %v158 = vld [vmem:[%s1 + $0xfc] sm:$0xf]
  %v159 = vld [vmem:[%s1 + $0x100] sm:$0xf]
  %v160 = vld [vmem:[%s1 + $0x104] sm:$0xf]
  %v161 = vld [vmem:[%s1 + $0x108] sm:$0xf]
  %v162 = vld [vmem:[%s1 + $0x10c] sm:$0xf]
  %v163 = vld [vmem:[%s1 + $0x110] sm:$0xf]
  %v164 = vld [vmem:[%s1 + $0x114] sm:$0xf]
  %v165 = vld [vmem:[%s1 + $0x118] sm:$0xf]
  %v166 = vld [vmem:[%s1 + $0x11c] sm:$0xf]
  %v167 = vld [vmem:[%s1 + $0x120] sm:$0xf]
  %v168 = vld [vmem:[%s1 + $0x124] sm:$0xf]
  %v169 = vld [vmem:[%s1 + $0x128] sm:$0xf]
  %v170 = vld [vmem:[%s1 + $0x12c] sm:$0xf]
  %v171 = vld [vmem:[%s1 + $0x130] sm:$0xf]
  %v172 = vld [vmem:[%s1 + $0x134] sm:$0xf]
  %v173 = vld [vmem:[%s1 + $0x138] sm:$0xf]
  %v174 = vld [vmem:[%s1 + $0x13c] sm:$0xf]
  %v175 = vld [vmem:[%s1 + $0x140] sm:$0xf]
  %v176 = vld [vmem:[%s1 + $0x144] sm:$0xf]
  %v177 = vld [vmem:[%s1 + $0x148] sm:$0xf]
  %v178 = vld [vmem:[%s1 + $0x14c] sm:$0xf]
  %v179 = vld [vmem:[%s1 + $0x150] sm:$0xf]
  %v180 = vld [vmem:[%s1 + $0x154] sm:$0xf]
  %v181 = vld [vmem:[%s1 + $0x158] sm:$0xf]
  %v182 = vld [vmem:[%s1 + $0x15c] sm:$0xf]
  %v183 = vld [vmem:[%s1 + $0x160] sm:$0xf]
  %v184 = vld [vmem:[%s1 + $0x164] sm:$0xf]
  %v185 = vld [vmem:[%s1 + $0x168] sm:$0xf]
  %v186 = vld [vmem:[%s1 + $0x16c] sm:$0xf]
  %v187 = vld [vmem:[%s1 + $0x170] sm:$0xf]
  %v188 = vld [vmem:[%s1 + $0x174] sm:$0xf]
  %v189 = vld [vmem:[%s1 + $0x178] sm:$0xf]
  %v190 = vld [vmem:[%s1 + $0x17c] sm:$0xf]
  %v191 = vld [vmem:[%s1 + $0x180] sm:$0xf]
  %v192 = vld [vmem:[%s1 + $0x184] sm:$0xf]
  %v193 = vld [vmem:[%s1 + $0x188] sm:$0xf]
  %v194 = vld [vmem:[%s1 + $0x18c] sm:$0xf]
  %v195 = vld [vmem:[%s1 + $0x190] sm:$0xf]
  %v196 = vld [vmem:[%s1 + $0x194] sm:$0xf]
  %v197 = vld [vmem:[%s1 + $0x198] sm:$0xf]
  %v198 = vld [vmem:[%s1 + $0x19c] sm:$0xf]
  %v199 = vld [vmem:[%s1 + $0x1a0] sm:$0xf]
  %v200 = vld [vmem:[%s1 + $0x1a4] sm:$0xf]
  %v201 = vld [vmem:[%s1 + $0x1a8] sm:$0xf]
  %v202 = vld [vmem:[%s1 + $0x1ac] sm:$0xf]
  %v203 = vld [vmem:[%s1 + $0x1b0] sm:$0xf]
  %v204 = vld [vmem:[%s1 + $0x1b4] sm:$0xf]
  %v205 = vld [vmem:[%s1 + $0x1b8] sm:$0xf]
  %v206 = vld [vmem:[%s1 + $0x1bc] sm:$0xf]
  %v207 = vld [vmem:[%s1 + $0x1c0] sm:$0xf]
  %v208 = vld [vmem:[%s1 + $0x1c4] sm:$0xf]
  %v209 = vld [vmem:[%s1 + $0x1c8] sm:$0xf]
  %v210 = vld [vmem:[%s1 + $0x1cc] sm:$0xf]
  %v211 = vld [vmem:[%s1 + $0x1d0] sm:$0xf]
  %v212 = vld [vmem:[%s1 + $0x1d4] sm:$0xf]
  %v213 = vld [vmem:[%s1 + $0x1d8] sm:$0xf]
  %v214 = vld [vmem:[%s1 + $0x1dc] sm:$0xf]
  %v215 = vld [vmem:[%s1 + $0x1e0] sm:$0xf]
  %v216 = vld [vmem:[%s1 + $0x1e4] sm:$0xf]
  %v217 = vld [vmem:[%s1 + $0x1e8] sm:$0xf]
  %v218 = vld [vmem:[%s1 + $0x1ec] sm:$0xf]
  %v219 = vld [vmem:[%s1 + $0x1f0] sm:$0xf]
  %v220 = vld [vmem:[%s1 + $0x1f4] sm:$0xf]
  %v221 = vld [vmem:[%s1 + $0x1f8] sm:$0xf]
  %v222 = vld [vmem:[%s1 + $0x1fc] sm:$0xf]
  %v223 = vld [vmem:[%s1 + $0x200] sm:$0xf]
  %v224 = vld [vmem:[%s1 + $0x204] sm:$0xf]
  %v225 = vld [vmem:[%s1 + $0x208] sm:$0xf]
  %v226 = vld [vmem:[%s1 + $0x20c] sm:$0xf]
  %v227 = vld [vmem:[%s1 + $0x210] sm:$0xf]
  %v228 = vld [vmem:[%s1 + $0x214] sm:$0xf]
  %v229 = vld [vmem:[%s1 + $0x218] sm:$0xf]
  %v230 = vld [vmem:[%s1 + $0x21c] sm:$0xf]
  %v231 = vld [vmem:[%s1 + $0x220] sm:$0xf]
  %v232 = vld [vmem:[%s1 + $0x224] sm:$0xf]
  %v233 = vld [vmem:[%s1 + $0x228] sm:$0xf]
  %v234 = vld [vmem:[%s1 + $0x22c] sm:$0xf]
  %v235 = vld [vmem:[%s1 + $0x230] sm:$0xf]
  %v236 = vld [vmem:[%s1 + $0x234] sm:$0xf]
  %v237 = vld [vmem:[%s1 + $0x238] sm:$0xf]
  %v238 = vld [vmem:[%s1 + $0x23c] sm:$0xf]
  %v239 = vld [vmem:[%s2] sm:$0x1]
  %v241 = vlaneseq
  %v242 = vshrl.u32 %v241, 7
  %v243 = vsub.s32 0, %v242
  %v244 = vrot.slane %v239, %v243
  %v326 = vunpack.c.l.b16 %v15
  %v327 = vunpack.c.h.b16 %v15
  %v328 = vunpack.c.l.b16 %v16
  %v329 = vunpack.c.h.b16 %v16
  %v330 = vunpack.c.l.b16 %v17
  %v331 = vunpack.c.h.b16 %v17
  %v332 = vunpack.c.l.b16 %v18
  %v333 = vunpack.c.h.b16 %v18
  %v334 = vunpack.c.l.b16 %v19
  %v335 = vunpack.c.l.b16 %v20
  %v336 = vunpack.c.h.b16 %v20
  %v337 = vunpack.c.l.b16 %v21
  %v338 = vunpack.c.h.b16 %v21
  %v339 = vunpack.c.l.b16 %v22
  %v340 = vunpack.c.h.b16 %v22
  %v341 = vunpack.c.l.b16 %v23
  %v342 = vunpack.c.h.b16 %v23
  %v343 = vunpack.c.l.b16 %v24
  %v344 = vunpack.c.l.b16 %v25
  %v345 = vunpack.c.h.b16 %v25
  %v346 = vunpack.c.l.b16 %v26
  %v347 = vunpack.c.h.b16 %v26
  %v348 = vunpack.c.l.b16 %v27
  %v349 = vunpack.c.h.b16 %v27
  %v350 = vunpack.c.l.b16 %v28
  %v351 = vunpack.c.h.b16 %v28
  %v352 = vunpack.c.l.b16 %v29
  %v353 = vunpack.c.l.b16 %v30
  %v354 = vunpack.c.h.b16 %v30
  %v355 = vunpack.c.l.b16 %v31
  %v356 = vunpack.c.h.b16 %v31
  %v357 = vunpack.c.l.b16 %v32
  %v358 = vunpack.c.h.b16 %v32
  %v359 = vunpack.c.l.b16 %v33
  %v360 = vunpack.c.h.b16 %v33
  %v361 = vunpack.c.l.b16 %v34
  %v362 = vunpack.c.l.b16 %v35
  %v363 = vunpack.c.h.b16 %v35
  %v364 = vunpack.c.l.b16 %v36
  %v365 = vunpack.c.h.b16 %v36
  %v366 = vunpack.c.l.b16 %v37
  %v367 = vunpack.c.h.b16 %v37
  %v368 = vunpack.c.l.b16 %v38
  %v369 = vunpack.c.h.b16 %v38
  %v370 = vunpack.c.l.b16 %v39
  %v371 = vunpack.c.l.b16 %v40
  %v372 = vunpack.c.h.b16 %v40
  %v373 = vunpack.c.l.b16 %v41
  %v374 = vunpack.c.h.b16 %v41
  %v375 = vunpack.c.l.b16 %v42
  %v376 = vunpack.c.h.b16 %v42
  %v377 = vunpack.c.l.b16 %v43
  %v378 = vunpack.c.h.b16 %v43
  %v379 = vunpack.c.l.b16 %v44
  %v380 = vunpack.c.l.b16 %v45
  %v381 = vunpack.c.h.b16 %v45
  %v382 = vunpack.c.l.b16 %v46
  %v383 = vunpack.c.h.b16 %v46
  %v384 = vunpack.c.l.b16 %v47
  %v385 = vunpack.c.h.b16 %v47
  %v386 = vunpack.c.l.b16 %v48
  %v387 = vunpack.c.h.b16 %v48
  %v388 = vunpack.c.l.b16 %v49
  %v389 = vunpack.c.l.b16 %v50
  %v390 = vunpack.c.h.b16 %v50
  %v391 = vunpack.c.l.b16 %v51
  %v392 = vunpack.c.h.b16 %v51
  %v393 = vunpack.c.l.b16 %v52
  %v394 = vunpack.c.h.b16 %v52
  %v395 = vunpack.c.l.b16 %v53
  %v396 = vunpack.c.h.b16 %v53
  %v397 = vunpack.c.l.b16 %v54
  %v398 = vunpack.c.l.b16 %v55
  %v399 = vunpack.c.h.b16 %v55
  %v400 = vunpack.c.l.b16 %v56
  %v401 = vunpack.c.h.b16 %v56
  %v402 = vunpack.c.l.b16 %v57
  %v403 = vunpack.c.h.b16 %v57
  %v404 = vunpack.c.l.b16 %v58
  %v405 = vunpack.c.h.b16 %v58
  %v406 = vunpack.c.l.b16 %v59
  %v407 = vunpack.c.l.b16 %v60
  %v408 = vunpack.c.h.b16 %v60
  %v409 = vunpack.c.l.b16 %v61
  %v410 = vunpack.c.h.b16 %v61
  %v411 = vunpack.c.l.b16 %v62
  %v412 = vunpack.c.h.b16 %v62
  %v413 = vunpack.c.l.b16 %v63
  %v414 = vunpack.c.h.b16 %v63
  %v415 = vunpack.c.l.b16 %v64
  %v416 = vunpack.c.l.b16 %v65
  %v417 = vunpack.c.h.b16 %v65
  %v418 = vunpack.c.l.b16 %v66
  %v419 = vunpack.c.h.b16 %v66
  %v420 = vunpack.c.l.b16 %v67
  %v421 = vunpack.c.h.b16 %v67
  %v422 = vunpack.c.l.b16 %v68
  %v423 = vunpack.c.h.b16 %v68
  %v424 = vunpack.c.l.b16 %v69
  %v425 = vunpack.c.l.b16 %v70
  %v426 = vunpack.c.h.b16 %v70
  %v427 = vunpack.c.l.b16 %v71
  %v428 = vunpack.c.h.b16 %v71
  %v429 = vunpack.c.l.b16 %v72
  %v430 = vunpack.c.h.b16 %v72
  %v431 = vunpack.c.l.b16 %v73
  %v432 = vunpack.c.h.b16 %v73
  %v433 = vunpack.c.l.b16 %v74
  %v434 = vunpack.c.l.b16 %v75
  %v435 = vunpack.c.h.b16 %v75
  %v436 = vunpack.c.l.b16 %v76
  %v437 = vunpack.c.h.b16 %v76
  %v438 = vunpack.c.l.b16 %v77
  %v439 = vunpack.c.h.b16 %v77
  %v440 = vunpack.c.l.b16 %v78
  %v441 = vunpack.c.h.b16 %v78
  %v442 = vunpack.c.l.b16 %v79
  %v443 = vunpack.c.l.b16 %v80
  %v444 = vunpack.c.h.b16 %v80
  %v445 = vunpack.c.l.b16 %v81
  %v446 = vunpack.c.h.b16 %v81
  %v447 = vunpack.c.l.b16 %v82
  %v448 = vunpack.c.h.b16 %v82
  %v449 = vunpack.c.l.b16 %v83
  %v450 = vunpack.c.h.b16 %v83
  %v451 = vunpack.c.l.b16 %v84
  %v452 = vunpack.c.l.b16 %v85
  %v453 = vunpack.c.h.b16 %v85
  %v454 = vunpack.c.l.b16 %v86
  %v455 = vunpack.c.h.b16 %v86
  %v456 = vunpack.c.l.b16 %v87
  %v457 = vunpack.c.h.b16 %v87
  %v458 = vunpack.c.l.b16 %v88
  %v459 = vunpack.c.h.b16 %v88
  %v460 = vunpack.c.l.b16 %v89
  %v461 = vunpack.c.l.b16 %v90
  %v462 = vunpack.c.h.b16 %v90
  %v463 = vunpack.c.l.b16 %v91
  %v464 = vunpack.c.h.b16 %v91
  %v465 = vunpack.c.l.b16 %v92
  %v466 = vunpack.c.h.b16 %v92
  %v467 = vunpack.c.l.b16 %v93
  %v468 = vunpack.c.h.b16 %v93
  %v469 = vunpack.c.l.b16 %v94
  %v470 = vpack.c.b16 %v335, %v326
  %v471 = vpack.c.b16 %v336, %v327
  %v472 = vpack.c.b16 %v337, %v328
  %v473 = vpack.c.b16 %v338, %v329
  %v474 = vpack.c.b16 %v339, %v330
  %v475 = vpack.c.b16 %v340, %v331
  %v476 = vpack.c.b16 %v341, %v332
  %v477 = vpack.c.b16 %v342, %v333
  %v478 = vpack.c.b16 %v343, %v334
  %v479 = vpack.c.b16 %v353, %v344
  %v480 = vpack.c.b16 %v354, %v345
  %v481 = vpack.c.b16 %v355, %v346
  %v482 = vpack.c.b16 %v356, %v347
  %v483 = vpack.c.b16 %v357, %v348
  %v484 = vpack.c.b16 %v358, %v349
  %v485 = vpack.c.b16 %v359, %v350
  %v486 = vpack.c.b16 %v360, %v351
  %v487 = vpack.c.b16 %v361, %v352
  %v488 = vpack.c.b16 %v371, %v362
  %v489 = vpack.c.b16 %v372, %v363
  %v490 = vpack.c.b16 %v373, %v364
  %v491 = vpack.c.b16 %v374, %v365
  %v492 = vpack.c.b16 %v375, %v366
  %v493 = vpack.c.b16 %v376, %v367
  %v494 = vpack.c.b16 %v377, %v368
  %v495 = vpack.c.b16 %v378, %v369
  %v496 = vpack.c.b16 %v379, %v370
  %v497 = vpack.c.b16 %v389, %v380
  %v498 = vpack.c.b16 %v390, %v381
  %v499 = vpack.c.b16 %v391, %v382
  %v500 = vpack.c.b16 %v392, %v383
  %v501 = vpack.c.b16 %v393, %v384
  %v502 = vpack.c.b16 %v394, %v385
  %v503 = vpack.c.b16 %v395, %v386
  %v504 = vpack.c.b16 %v396, %v387
  %v505 = vpack.c.b16 %v397, %v388
  %v506 = vpack.c.b16 %v407, %v398
  %v507 = vpack.c.b16 %v408, %v399
  %v508 = vpack.c.b16 %v409, %v400
  %v509 = vpack.c.b16 %v410, %v401
  %v510 = vpack.c.b16 %v411, %v402
  %v511 = vpack.c.b16 %v412, %v403
  %v512 = vpack.c.b16 %v413, %v404
  %v513 = vpack.c.b16 %v414, %v405
  %v514 = vpack.c.b16 %v415, %v406
  %v515 = vpack.c.b16 %v425, %v416
  %v516 = vpack.c.b16 %v426, %v417
  %v517 = vpack.c.b16 %v427, %v418
  %v518 = vpack.c.b16 %v428, %v419
  %v519 = vpack.c.b16 %v429, %v420
  %v520 = vpack.c.b16 %v430, %v421
  %v521 = vpack.c.b16 %v431, %v422
  %v522 = vpack.c.b16 %v432, %v423
  %v523 = vpack.c.b16 %v433, %v424
  %v524 = vpack.c.b16 %v443, %v434
  %v525 = vpack.c.b16 %v444, %v435
  %v526 = vpack.c.b16 %v445, %v436
  %v527 = vpack.c.b16 %v446, %v437
  %v528 = vpack.c.b16 %v447, %v438
  %v529 = vpack.c.b16 %v448, %v439
  %v530 = vpack.c.b16 %v449, %v440
  %v531 = vpack.c.b16 %v450, %v441
  %v532 = vpack.c.b16 %v451, %v442
  %v533 = vpack.c.b16 %v461, %v452
  %v534 = vpack.c.b16 %v462, %v453
  %v535 = vpack.c.b16 %v463, %v454
  %v536 = vpack.c.b16 %v464, %v455
  %v537 = vpack.c.b16 %v465, %v456
  %v538 = vpack.c.b16 %v466, %v457
  %v539 = vpack.c.b16 %v467, %v458
  %v540 = vpack.c.b16 %v468, %v459
  %v541 = vpack.c.b16 %v469, %v460
  %v758 = vunpack.c.l.b16 %v95
  %v759 = vunpack.c.l.b16 %v96
  %v760 = vunpack.c.l.b16 %v97
  %v761 = vunpack.c.l.b16 %v98
  %v762 = vunpack.c.l.b16 %v99
  %v763 = vunpack.c.l.b16 %v100
  %v764 = vunpack.c.l.b16 %v101
  %v765 = vunpack.c.l.b16 %v102
  %v766 = vunpack.c.l.b16 %v103
  %v767 = vunpack.c.l.b16 %v104
  %v768 = vunpack.c.l.b16 %v105
  %v769 = vunpack.c.l.b16 %v106
  %v770 = vunpack.c.l.b16 %v107
  %v771 = vunpack.c.l.b16 %v108
  %v772 = vunpack.c.l.b16 %v109
  %v773 = vunpack.c.l.b16 %v110
  %v774 = vunpack.c.l.b16 %v111
  %v775 = vunpack.c.l.b16 %v112
  %v776 = vunpack.c.l.b16 %v113
  %v777 = vunpack.c.l.b16 %v114
  %v778 = vunpack.c.l.b16 %v115
  %v779 = vunpack.c.l.b16 %v116
  %v780 = vunpack.c.l.b16 %v117
  %v781 = vunpack.c.l.b16 %v118
  %v782 = vunpack.c.l.b16 %v119
  %v783 = vunpack.c.l.b16 %v120
  %v784 = vunpack.c.l.b16 %v121
  %v785 = vunpack.c.l.b16 %v122
  %v786 = vunpack.c.l.b16 %v123
  %v787 = vunpack.c.l.b16 %v124
  %v788 = vunpack.c.l.b16 %v125
  %v789 = vunpack.c.l.b16 %v126
  %v790 = vunpack.c.l.b16 %v127
  %v791 = vunpack.c.l.b16 %v128
  %v792 = vunpack.c.l.b16 %v129
  %v793 = vunpack.c.l.b16 %v130
  %v794 = vunpack.c.l.b16 %v131
  %v795 = vunpack.c.l.b16 %v132
  %v796 = vunpack.c.l.b16 %v133
  %v797 = vunpack.c.l.b16 %v134
  %v798 = vunpack.c.l.b16 %v135
  %v799 = vunpack.c.l.b16 %v136
  %v800 = vunpack.c.l.b16 %v137
  %v801 = vunpack.c.l.b16 %v138
  %v802 = vunpack.c.l.b16 %v139
  %v803 = vunpack.c.l.b16 %v140
  %v804 = vunpack.c.l.b16 %v141
  %v805 = vunpack.c.l.b16 %v142
  %v806 = vunpack.c.l.b16 %v143
  %v807 = vunpack.c.l.b16 %v144
  %v808 = vunpack.c.l.b16 %v145
  %v809 = vunpack.c.l.b16 %v146
  %v810 = vunpack.c.l.b16 %v147
  %v811 = vunpack.c.l.b16 %v148
  %v812 = vunpack.c.l.b16 %v149
  %v813 = vunpack.c.l.b16 %v150
  %v814 = vunpack.c.l.b16 %v151
  %v815 = vunpack.c.l.b16 %v152
  %v816 = vunpack.c.l.b16 %v153
  %v817 = vunpack.c.l.b16 %v154
  %v818 = vunpack.c.l.b16 %v155
  %v819 = vunpack.c.l.b16 %v156
  %v820 = vunpack.c.l.b16 %v157
  %v821 = vunpack.c.l.b16 %v158
  %v822 = vunpack.c.l.b16 %v159
  %v823 = vunpack.c.l.b16 %v160
  %v824 = vunpack.c.l.b16 %v161
  %v825 = vunpack.c.l.b16 %v162
  %v826 = vunpack.c.l.b16 %v163
  %v827 = vunpack.c.l.b16 %v164
  %v828 = vunpack.c.l.b16 %v165
  %v829 = vunpack.c.l.b16 %v166
  %v830 = vunpack.c.l.b16 %v167
  %v831 = vunpack.c.l.b16 %v168
  %v832 = vunpack.c.l.b16 %v169
  %v833 = vunpack.c.l.b16 %v170
  %v834 = vunpack.c.l.b16 %v171
  %v835 = vunpack.c.l.b16 %v172
  %v836 = vunpack.c.l.b16 %v173
  %v837 = vunpack.c.l.b16 %v174
  %v838 = vunpack.c.l.b16 %v175
  %v839 = vunpack.c.l.b16 %v176
  %v840 = vunpack.c.l.b16 %v177
  %v841 = vunpack.c.l.b16 %v178
  %v842 = vunpack.c.l.b16 %v179
  %v843 = vunpack.c.l.b16 %v180
  %v844 = vunpack.c.l.b16 %v181
  %v845 = vunpack.c.l.b16 %v182
  %v846 = vunpack.c.l.b16 %v183
  %v847 = vunpack.c.l.b16 %v184
  %v848 = vunpack.c.l.b16 %v185
  %v849 = vunpack.c.l.b16 %v186
  %v850 = vunpack.c.l.b16 %v187
  %v851 = vunpack.c.l.b16 %v188
  %v852 = vunpack.c.l.b16 %v189
  %v853 = vunpack.c.l.b16 %v190
  %v854 = vunpack.c.l.b16 %v191
  %v855 = vunpack.c.l.b16 %v192
  %v856 = vunpack.c.l.b16 %v193
  %v857 = vunpack.c.l.b16 %v194
  %v858 = vunpack.c.l.b16 %v195
  %v859 = vunpack.c.l.b16 %v196
  %v860 = vunpack.c.l.b16 %v197
  %v861 = vunpack.c.l.b16 %v198
  %v862 = vunpack.c.l.b16 %v199
  %v863 = vunpack.c.l.b16 %v200
  %v864 = vunpack.c.l.b16 %v201
  %v865 = vunpack.c.l.b16 %v202
  %v866 = vunpack.c.l.b16 %v203
  %v867 = vunpack.c.l.b16 %v204
  %v868 = vunpack.c.l.b16 %v205
  %v869 = vunpack.c.l.b16 %v206
  %v870 = vunpack.c.l.b16 %v207
  %v871 = vunpack.c.l.b16 %v208
  %v872 = vunpack.c.l.b16 %v209
  %v873 = vunpack.c.l.b16 %v210
  %v874 = vunpack.c.l.b16 %v211
  %v875 = vunpack.c.l.b16 %v212
  %v876 = vunpack.c.l.b16 %v213
  %v877 = vunpack.c.l.b16 %v214
  %v878 = vunpack.c.l.b16 %v215
  %v879 = vunpack.c.l.b16 %v216
  %v880 = vunpack.c.l.b16 %v217
  %v881 = vunpack.c.l.b16 %v218
  %v882 = vunpack.c.l.b16 %v219
  %v883 = vunpack.c.l.b16 %v220
  %v884 = vunpack.c.l.b16 %v221
  %v885 = vunpack.c.l.b16 %v222
  %v886 = vunpack.c.l.b16 %v223
  %v887 = vunpack.c.l.b16 %v224
  %v888 = vunpack.c.l.b16 %v225
  %v889 = vunpack.c.l.b16 %v226
  %v890 = vunpack.c.l.b16 %v227
  %v891 = vunpack.c.l.b16 %v228
  %v892 = vunpack.c.l.b16 %v229
  %v893 = vunpack.c.l.b16 %v230
  %v894 = vunpack.c.l.b16 %v231
  %v895 = vunpack.c.l.b16 %v232
  %v896 = vunpack.c.l.b16 %v233
  %v897 = vunpack.c.l.b16 %v234
  %v898 = vunpack.c.l.b16 %v235
  %v899 = vunpack.c.l.b16 %v236
  %v900 = vunpack.c.l.b16 %v237
  %v901 = vunpack.c.l.b16 %v238
  %v902 = vpack.c.b16 %v759, %v758
  %v903 = vpack.c.b16 %v761, %v760
  %v904 = vpack.c.b16 %v763, %v762
  %v905 = vpack.c.b16 %v765, %v764
  %v906 = vpack.c.b16 %v767, %v766
  %v907 = vpack.c.b16 %v769, %v768
  %v908 = vpack.c.b16 %v771, %v770
  %v909 = vpack.c.b16 %v773, %v772
  %v910 = vpack.c.b16 %v775, %v774
  %v911 = vpack.c.b16 %v777, %v776
  %v912 = vpack.c.b16 %v779, %v778
  %v913 = vpack.c.b16 %v781, %v780
  %v914 = vpack.c.b16 %v783, %v782
  %v915 = vpack.c.b16 %v785, %v784
  %v916 = vpack.c.b16 %v787, %v786
  %v917 = vpack.c.b16 %v789, %v788
  %v918 = vpack.c.b16 %v791, %v790
  %v919 = vpack.c.b16 %v793, %v792
  %v920 = vpack.c.b16 %v795, %v794
  %v921 = vpack.c.b16 %v797, %v796
  %v922 = vpack.c.b16 %v799, %v798
  %v923 = vpack.c.b16 %v801, %v800
  %v924 = vpack.c.b16 %v803, %v802
  %v925 = vpack.c.b16 %v805, %v804
  %v926 = vpack.c.b16 %v807, %v806
  %v927 = vpack.c.b16 %v809, %v808
  %v928 = vpack.c.b16 %v811, %v810
  %v929 = vpack.c.b16 %v813, %v812
  %v930 = vpack.c.b16 %v815, %v814
  %v931 = vpack.c.b16 %v817, %v816
  %v932 = vpack.c.b16 %v819, %v818
  %v933 = vpack.c.b16 %v821, %v820
  %v934 = vpack.c.b16 %v823, %v822
  %v935 = vpack.c.b16 %v825, %v824
  %v936 = vpack.c.b16 %v827, %v826
  %v937 = vpack.c.b16 %v829, %v828
  %v938 = vpack.c.b16 %v831, %v830
  %v939 = vpack.c.b16 %v833, %v832
  %v940 = vpack.c.b16 %v835, %v834
  %v941 = vpack.c.b16 %v837, %v836
  %v942 = vpack.c.b16 %v839, %v838
  %v943 = vpack.c.b16 %v841, %v840
  %v944 = vpack.c.b16 %v843, %v842
  %v945 = vpack.c.b16 %v845, %v844
  %v946 = vpack.c.b16 %v847, %v846
  %v947 = vpack.c.b16 %v849, %v848
  %v948 = vpack.c.b16 %v851, %v850
  %v949 = vpack.c.b16 %v853, %v852
  %v950 = vpack.c.b16 %v855, %v854
  %v951 = vpack.c.b16 %v857, %v856
  %v952 = vpack.c.b16 %v859, %v858
  %v953 = vpack.c.b16 %v861, %v860
  %v954 = vpack.c.b16 %v863, %v862
  %v955 = vpack.c.b16 %v865, %v864
  %v956 = vpack.c.b16 %v867, %v866
  %v957 = vpack.c.b16 %v869, %v868
  %v958 = vpack.c.b16 %v871, %v870
  %v959 = vpack.c.b16 %v873, %v872
  %v960 = vpack.c.b16 %v875, %v874
  %v961 = vpack.c.b16 %v877, %v876
  %v962 = vpack.c.b16 %v879, %v878
  %v963 = vpack.c.b16 %v881, %v880
  %v964 = vpack.c.b16 %v883, %v882
  %v965 = vpack.c.b16 %v885, %v884
  %v966 = vpack.c.b16 %v887, %v886
  %v967 = vpack.c.b16 %v889, %v888
  %v968 = vpack.c.b16 %v891, %v890
  %v969 = vpack.c.b16 %v893, %v892
  %v970 = vpack.c.b16 %v895, %v894
  %v971 = vpack.c.b16 %v897, %v896
  %v972 = vpack.c.b16 %v899, %v898
  %v973 = vpack.c.b16 %v901, %v900
  %1046 = vmatprep.subr.bf16.mxu0 0
  %1047 = vmatpush1.bf16.msra.mxu0 %v902
  %1048 = vmatprep.subr.bf16.mxu0 0
  %1049 = vmatpush1.bf16.msra.mxu0 %v903
  %1050 = vmatprep.subr.bf16.mxu0 0
  %1051 = vmatpush1.bf16.msra.mxu0 %v904
  %1052 = vmatprep.subr.bf16.mxu0 0
  %1053 = vmatpush1.bf16.msra.mxu0 %v905
  %1054 = vmatprep.subr.bf16.mxu0 0
  %1055 = vmatpush1.bf16.msra.mxu0 %v906
  %1056 = vmatprep.subr.bf16.mxu0 0
  %1057 = vmatpush1.bf16.msra.mxu0 %v907
  %1058 = vmatprep.subr.bf16.mxu0 0
  %1059 = vmatpush1.bf16.msra.mxu0 %v908
  %1060 = vmatprep.subr.bf16.mxu0 0
  %1061 = vmatpush1.bf16.msra.mxu0 %v909
  %1062 = vmatprep.subr.bf16.mxu0 0
  %1063 = vmatpush1.bf16.msra.mxu0 %v910
  %1064 = vmatprep.subr.bf16.mxu0 0
  %1065 = vmatpush1.bf16.msra.mxu0 %v911
  %1066 = vmatprep.subr.bf16.mxu0 0
  %1067 = vmatpush1.bf16.msra.mxu0 %v912
  %1068 = vmatprep.subr.bf16.mxu0 0
  %1069 = vmatpush1.bf16.msra.mxu0 %v913
  %1070 = vmatprep.subr.bf16.mxu0 0
  %1071 = vmatpush1.bf16.msra.mxu0 %v914
  %1072 = vmatprep.subr.bf16.mxu0 0
  %1073 = vmatpush1.bf16.msra.mxu0 %v915
  %1074 = vmatprep.subr.bf16.mxu0 0
  %1075 = vmatpush1.bf16.msra.mxu0 %v916
  %1076 = vmatprep.subr.bf16.mxu0 0
  %1077 = vmatpush1.bf16.msra.mxu0 %v917
  %1078 = vmatprep.mubr.bf16.mxu0 %v471
  %1079 = vmatmul.mubr.bf16.gmra.mrb[0].mxu0 %v470
  %v1080 = vpop.f32.mrb[0].mxu0
  %v1081 = vadd.f32 %v244, %v1080
  %v1082 = vpop.f32.mrb[0].mxu0
  %v1083 = vpop.f32.mrb[0].mxu0
  %v1084 = vadd.f32 %v244, %v1083
  %v1085 = vpop.f32.mrb[0].mxu0
  %1086 = vmatprep.mubr.bf16.mxu0 %v480
  %1087 = vmatmul.mubr.bf16.gmra.mrb[0].mxu0 %v479
  %v1088 = vpop.f32.mrb[0].mxu0
  %v1089 = vadd.f32 %v244, %v1088
  %v1090 = vpop.f32.mrb[0].mxu0
  %v1091 = vpop.f32.mrb[0].mxu0
  %v1092 = vadd.f32 %v244, %v1091
  %v1093 = vpop.f32.mrb[0].mxu0
  %1094 = vmatprep.mubr.bf16.mxu0 %v489
  %1095 = vmatmul.mubr.bf16.gmra.mrb[0].mxu0 %v488
  %v1096 = vpop.f32.mrb[0].mxu0
  %v1097 = vadd.f32 %v244, %v1096
  %v1098 = vpop.f32.mrb[0].mxu0
  %v1099 = vpop.f32.mrb[0].mxu0
  %v1100 = vadd.f32 %v244, %v1099
  %v1101 = vpop.f32.mrb[0].mxu0
  %1102 = vmatprep.mubr.bf16.mxu0 %v498
  %1103 = vmatmul.mubr.bf16.gmra.mrb[0].mxu0 %v497
  %v1104 = vpop.f32.mrb[0].mxu0
  %v1105 = vadd.f32 %v244, %v1104
  %v1106 = vpop.f32.mrb[0].mxu0
  %v1107 = vpop.f32.mrb[0].mxu0
  %v1108 = vadd.f32 %v244, %v1107
  %v1109 = vpop.f32.mrb[0].mxu0
  %1110 = vmatprep.mubr.bf16.mxu0 %v507
  %1111 = vmatmul.mubr.bf16.gmra.mrb[0].mxu0 %v506
  %v1112 = vpop.f32.mrb[0].mxu0
  %v1113 = vadd.f32 %v244, %v1112
  %v1114 = vpop.f32.mrb[0].mxu0
  %v1115 = vpop.f32.mrb[0].mxu0
  %v1116 = vadd.f32 %v244, %v1115
  %v1117 = vpop.f32.mrb[0].mxu0
  %1118 = vmatprep.mubr.bf16.mxu0 %v516
  %1119 = vmatmul.mubr.bf16.gmra.mrb[0].mxu0 %v515
  %v1120 = vpop.f32.mrb[0].mxu0
  %v1121 = vadd.f32 %v244, %v1120
  %v1122 = vpop.f32.mrb[0].mxu0
  %v1123 = vpop.f32.mrb[0].mxu0
  %v1124 = vadd.f32 %v244, %v1123
  %v1125 = vpop.f32.mrb[0].mxu0
  %1126 = vmatprep.mubr.bf16.mxu0 %v525
  %1127 = vmatmul.mubr.bf16.gmra.mrb[0].mxu0 %v524
  %v1128 = vpop.f32.mrb[0].mxu0
  %v1129 = vadd.f32 %v244, %v1128
  %v1130 = vpop.f32.mrb[0].mxu0
  %v1131 = vpop.f32.mrb[0].mxu0
  %v1132 = vadd.f32 %v244, %v1131
  %v1133 = vpop.f32.mrb[0].mxu0
  %1134 = vmatprep.mubr.bf16.mxu0 %v534
  %1135 = vmatmul.mubr.bf16.gmra.mrb[0].mxu0 %v533
  %v1136 = vpop.f32.mrb[0].mxu0
  %v1137 = vadd.f32 %v244, %v1136
  %v1138 = vpop.f32.mrb[0].mxu0
  %v1139 = vpop.f32.mrb[0].mxu0
  %v1140 = vadd.f32 %v244, %v1139
  %v1141 = vpop.f32.mrb[0].mxu0
  %1142 = vdwg.mxu0
  %1143 = vmatprep.subr.bf16.mxu0 0
  %1144 = vmatpush1.bf16.msra.mxu0 %v918
  %1145 = vmatprep.subr.bf16.mxu0 0
  %1146 = vmatpush1.bf16.msra.mxu0 %v919
  %1147 = vmatprep.subr.bf16.mxu0 0
  %1148 = vmatpush1.bf16.msra.mxu0 %v920
  %1149 = vmatprep.subr.bf16.mxu0 0
  %1150 = vmatpush1.bf16.msra.mxu0 %v921
  %1151 = vmatprep.subr.bf16.mxu0 0
  %1152 = vmatpush1.bf16.msra.mxu0 %v922
  %1153 = vmatprep.subr.bf16.mxu0 0
  %1154 = vmatpush1.bf16.msra.mxu0 %v923
  %1155 = vmatprep.subr.bf16.mxu0 0
  %1156 = vmatpush1.bf16.msra.mxu0 %v924
  %1157 = vmatprep.subr.bf16.mxu0 0
  %1158 = vmatpush1.bf16.msra.mxu0 %v925
  %1159 = vmatprep.subr.bf16.mxu0 0
  %1160 = vmatpush1.bf16.msra.mxu0 %v926
  %1161 = vmatprep.subr.bf16.mxu0 0
  %1162 = vmatpush1.bf16.msra.mxu0 %v927
  %1163 = vmatprep.subr.bf16.mxu0 0
  %1164 = vmatpush1.bf16.msra.mxu0 %v928
  %1165 = vmatprep.subr.bf16.mxu0 0
  %1166 = vmatpush1.bf16.msra.mxu0 %v929
  %1167 = vmatprep.subr.bf16.mxu0 0
  %1168 = vmatpush1.bf16.msra.mxu0 %v930
  %1169 = vmatprep.subr.bf16.mxu0 0
  %1170 = vmatpush1.bf16.msra.mxu0 %v931
  %1171 = vmatprep.subr.bf16.mxu0 0
  %1172 = vmatpush1.bf16.msra.mxu0 %v932
  %1173 = vmatprep.subr.bf16.mxu0 0
  %1174 = vmatpush1.bf16.msra.mxu0 %v933
  %1175 = vmatprep.mubr.bf16.mxu0 %v473
  %1176 = vmatmul.mubr.bf16.gmra.mrb[0].mxu0 %v472
  %v1177 = vpop.f32.mrb[0].mxu0
  %v1178 = vadd.f32 %v1081, %v1177
  %v1179 = vpop.f32.mrb[0].mxu0
  %v1180 = vpop.f32.mrb[0].mxu0
  %v1181 = vadd.f32 %v1084, %v1180
  %v1182 = vpop.f32.mrb[0].mxu0
  %1183 = vmatprep.mubr.bf16.mxu0 %v482
  %1184 = vmatmul.mubr.bf16.gmra.mrb[0].mxu0 %v481
  %v1185 = vpop.f32.mrb[0].mxu0
  %v1186 = vadd.f32 %v1089, %v1185
  %v1187 = vpop.f32.mrb[0].mxu0
  %v1188 = vpop.f32.mrb[0].mxu0
  %v1189 = vadd.f32 %v1092, %v1188
  %v1190 = vpop.f32.mrb[0].mxu0
  %1191 = vmatprep.mubr.bf16.mxu0 %v491
  %1192 = vmatmul.mubr.bf16.gmra.mrb[0].mxu0 %v490
  %v1193 = vpop.f32.mrb[0].mxu0
  %v1194 = vadd.f32 %v1097, %v1193
  %v1195 = vpop.f32.mrb[0].mxu0
  %v1196 = vpop.f32.mrb[0].mxu0
  %v1197 = vadd.f32 %v1100, %v1196
  %v1198 = vpop.f32.mrb[0].mxu0
  %1199 = vmatprep.mubr.bf16.mxu0 %v500
  %1200 = vmatmul.mubr.bf16.gmra.mrb[0].mxu0 %v499
  %v1201 = vpop.f32.mrb[0].mxu0
  %v1202 = vadd.f32 %v1105, %v1201
  %v1203 = vpop.f32.mrb[0].mxu0
  %v1204 = vpop.f32.mrb[0].mxu0
  %v1205 = vadd.f32 %v1108, %v1204
  %v1206 = vpop.f32.mrb[0].mxu0
  %1207 = vmatprep.mubr.bf16.mxu0 %v509
  %1208 = vmatmul.mubr.bf16.gmra.mrb[0].mxu0 %v508
  %v1209 = vpop.f32.mrb[0].mxu0
  %v1210 = vadd.f32 %v1113, %v1209
  %v1211 = vpop.f32.mrb[0].mxu0
  %v1212 = vpop.f32.mrb[0].mxu0
  %v1213 = vadd.f32 %v1116, %v1212
  %v1214 = vpop.f32.mrb[0].mxu0
  %1215 = vmatprep.mubr.bf16.mxu0 %v518
  %1216 = vmatmul.mubr.bf16.gmra.mrb[0].mxu0 %v517
  %v1217 = vpop.f32.mrb[0].mxu0
  %v1218 = vadd.f32 %v1121, %v1217
  %v1219 = vpop.f32.mrb[0].mxu0
  %v1220 = vpop.f32.mrb[0].mxu0
  %v1221 = vadd.f32 %v1124, %v1220
  %v1222 = vpop.f32.mrb[0].mxu0
  %1223 = vmatprep.mubr.bf16.mxu0 %v527
  %1224 = vmatmul.mubr.bf16.gmra.mrb[0].mxu0 %v526
  %v1225 = vpop.f32.mrb[0].mxu0
  %v1226 = vadd.f32 %v1129, %v1225
  %v1227 = vpop.f32.mrb[0].mxu0
  %v1228 = vpop.f32.mrb[0].mxu0
  %v1229 = vadd.f32 %v1132, %v1228
  %v1230 = vpop.f32.mrb[0].mxu0
  %1231 = vmatprep.mubr.bf16.mxu0 %v536
  %1232 = vmatmul.mubr.bf16.gmra.mrb[0].mxu0 %v535
  %v1233 = vpop.f32.mrb[0].mxu0
  %v1234 = vadd.f32 %v1137, %v1233
  %v1235 = vpop.f32.mrb[0].mxu0
  %v1236 = vpop.f32.mrb[0].mxu0
  %v1237 = vadd.f32 %v1140, %v1236
  %v1238 = vpop.f32.mrb[0].mxu0
  %1239 = vdwg.mxu0
  %1240 = vmatprep.subr.bf16.mxu0 0
  %1241 = vmatpush1.bf16.msra.mxu0 %v934
  %1242 = vmatprep.subr.bf16.mxu0 0
  %1243 = vmatpush1.bf16.msra.mxu0 %v935
  %1244 = vmatprep.subr.bf16.mxu0 0
  %1245 = vmatpush1.bf16.msra.mxu0 %v936
  %1246 = vmatprep.subr.bf16.mxu0 0
  %1247 = vmatpush1.bf16.msra.mxu0 %v937
  %1248 = vmatprep.subr.bf16.mxu0 0
  %1249 = vmatpush1.bf16.msra.mxu0 %v938
  %1250 = vmatprep.subr.bf16.mxu0 0
  %1251 = vmatpush1.bf16.msra.mxu0 %v939
  %1252 = vmatprep.subr.bf16.mxu0 0
  %1253 = vmatpush1.bf16.msra.mxu0 %v940
  %1254 = vmatprep.subr.bf16.mxu0 0
  %1255 = vmatpush1.bf16.msra.mxu0 %v941
  %1256 = vmatprep.subr.bf16.mxu0 0
  %1257 = vmatpush1.bf16.msra.mxu0 %v942
  %1258 = vmatprep.subr.bf16.mxu0 0
  %1259 = vmatpush1.bf16.msra.mxu0 %v943
  %1260 = vmatprep.subr.bf16.mxu0 0
  %1261 = vmatpush1.bf16.msra.mxu0 %v944
  %1262 = vmatprep.subr.bf16.mxu0 0
  %1263 = vmatpush1.bf16.msra.mxu0 %v945
  %1264 = vmatprep.subr.bf16.mxu0 0
  %1265 = vmatpush1.bf16.msra.mxu0 %v946
  %1266 = vmatprep.subr.bf16.mxu0 0
  %1267 = vmatpush1.bf16.msra.mxu0 %v947
  %1268 = vmatprep.subr.bf16.mxu0 0
  %1269 = vmatpush1.bf16.msra.mxu0 %v948
  %1270 = vmatprep.subr.bf16.mxu0 0
  %1271 = vmatpush1.bf16.msra.mxu0 %v949
  %1272 = vmatprep.mubr.bf16.mxu0 %v475
  %1273 = vmatmul.mubr.bf16.gmra.mrb[0].mxu0 %v474
  %v1274 = vpop.f32.mrb[0].mxu0
  %v1275 = vadd.f32 %v1178, %v1274
  %v1276 = vpop.f32.mrb[0].mxu0
  %v1277 = vpop.f32.mrb[0].mxu0
  %v1278 = vadd.f32 %v1181, %v1277
  %v1279 = vpop.f32.mrb[0].mxu0
  %1280 = vmatprep.mubr.bf16.mxu0 %v484
  %1281 = vmatmul.mubr.bf16.gmra.mrb[0].mxu0 %v483
  %v1282 = vpop.f32.mrb[0].mxu0
  %v1283 = vadd.f32 %v1186, %v1282
  %v1284 = vpop.f32.mrb[0].mxu0
  %v1285 = vpop.f32.mrb[0].mxu0
  %v1286 = vadd.f32 %v1189, %v1285
  %v1287 = vpop.f32.mrb[0].mxu0
  %1288 = vmatprep.mubr.bf16.mxu0 %v493
  %1289 = vmatmul.mubr.bf16.gmra.mrb[0].mxu0 %v492
  %v1290 = vpop.f32.mrb[0].mxu0
  %v1291 = vadd.f32 %v1194, %v1290
  %v1292 = vpop.f32.mrb[0].mxu0
  %v1293 = vpop.f32.mrb[0].mxu0
  %v1294 = vadd.f32 %v1197, %v1293
  %v1295 = vpop.f32.mrb[0].mxu0
  %1296 = vmatprep.mubr.bf16.mxu0 %v502
  %1297 = vmatmul.mubr.bf16.gmra.mrb[0].mxu0 %v501
  %v1298 = vpop.f32.mrb[0].mxu0
  %v1299 = vadd.f32 %v1202, %v1298
  %v1300 = vpop.f32.mrb[0].mxu0
  %v1301 = vpop.f32.mrb[0].mxu0
  %v1302 = vadd.f32 %v1205, %v1301
  %v1303 = vpop.f32.mrb[0].mxu0
  %1304 = vmatprep.mubr.bf16.mxu0 %v511
  %1305 = vmatmul.mubr.bf16.gmra.mrb[0].mxu0 %v510
  %v1306 = vpop.f32.mrb[0].mxu0
  %v1307 = vadd.f32 %v1210, %v1306
  %v1308 = vpop.f32.mrb[0].mxu0
  %v1309 = vpop.f32.mrb[0].mxu0
  %v1310 = vadd.f32 %v1213, %v1309
  %v1311 = vpop.f32.mrb[0].mxu0
  %1312 = vmatprep.mubr.bf16.mxu0 %v520
  %1313 = vmatmul.mubr.bf16.gmra.mrb[0].mxu0 %v519
  %v1314 = vpop.f32.mrb[0].mxu0
  %v1315 = vadd.f32 %v1218, %v1314
  %v1316 = vpop.f32.mrb[0].mxu0
  %v1317 = vpop.f32.mrb[0].mxu0
  %v1318 = vadd.f32 %v1221, %v1317
  %v1319 = vpop.f32.mrb[0].mxu0
  %1320 = vmatprep.mubr.bf16.mxu0 %v529
  %1321 = vmatmul.mubr.bf16.gmra.mrb[0].mxu0 %v528
  %v1322 = vpop.f32.mrb[0].mxu0
  %v1323 = vadd.f32 %v1226, %v1322
  %v1324 = vpop.f32.mrb[0].mxu0
  %v1325 = vpop.f32.mrb[0].mxu0
  %v1326 = vadd.f32 %v1229, %v1325
  %v1327 = vpop.f32.mrb[0].mxu0
  %1328 = vmatprep.mubr.bf16.mxu0 %v538
  %1329 = vmatmul.mubr.bf16.gmra.mrb[0].mxu0 %v537
  %v1330 = vpop.f32.mrb[0].mxu0
  %v1331 = vadd.f32 %v1234, %v1330
  %v1332 = vpop.f32.mrb[0].mxu0
  %v1333 = vpop.f32.mrb[0].mxu0
  %v1334 = vadd.f32 %v1237, %v1333
  %v1335 = vpop.f32.mrb[0].mxu0
  %1336 = vdwg.mxu0
  %1337 = vmatprep.subr.bf16.mxu0 0
  %1338 = vmatpush1.bf16.msra.mxu0 %v950
  %1339 = vmatprep.subr.bf16.mxu0 0
  %1340 = vmatpush1.bf16.msra.mxu0 %v951
  %1341 = vmatprep.subr.bf16.mxu0 0
  %1342 = vmatpush1.bf16.msra.mxu0 %v952
  %1343 = vmatprep.subr.bf16.mxu0 0
  %1344 = vmatpush1.bf16.msra.mxu0 %v953
  %1345 = vmatprep.subr.bf16.mxu0 0
  %1346 = vmatpush1.bf16.msra.mxu0 %v954
  %1347 = vmatprep.subr.bf16.mxu0 0
  %1348 = vmatpush1.bf16.msra.mxu0 %v955
  %1349 = vmatprep.subr.bf16.mxu0 0
  %1350 = vmatpush1.bf16.msra.mxu0 %v956
  %1351 = vmatprep.subr.bf16.mxu0 0
  %1352 = vmatpush1.bf16.msra.mxu0 %v957
  %1353 = vmatprep.subr.bf16.mxu0 0
  %1354 = vmatpush1.bf16.msra.mxu0 %v958
  %1355 = vmatprep.subr.bf16.mxu0 0
  %1356 = vmatpush1.bf16.msra.mxu0 %v959
  %1357 = vmatprep.subr.bf16.mxu0 0
  %1358 = vmatpush1.bf16.msra.mxu0 %v960
  %1359 = vmatprep.subr.bf16.mxu0 0
  %1360 = vmatpush1.bf16.msra.mxu0 %v961
  %1361 = vmatprep.subr.bf16.mxu0 0
  %1362 = vmatpush1.bf16.msra.mxu0 %v962
  %1363 = vmatprep.subr.bf16.mxu0 0
  %1364 = vmatpush1.bf16.msra.mxu0 %v963
  %1365 = vmatprep.subr.bf16.mxu0 0
  %1366 = vmatpush1.bf16.msra.mxu0 %v964
  %1367 = vmatprep.subr.bf16.mxu0 0
  %1368 = vmatpush1.bf16.msra.mxu0 %v965
  %1369 = vmatprep.mubr.bf16.mxu0 %v477
  %1370 = vmatmul.mubr.bf16.gmra.mrb[0].mxu0 %v476
  %v1371 = vpop.f32.mrb[0].mxu0
  %v1372 = vadd.f32 %v1275, %v1371
  %v1373 = vpop.f32.mrb[0].mxu0
  %v1374 = vpop.f32.mrb[0].mxu0
  %v1375 = vadd.f32 %v1278, %v1374
  %v1376 = vpop.f32.mrb[0].mxu0
  %1377 = vmatprep.mubr.bf16.mxu0 %v486
  %1378 = vmatmul.mubr.bf16.gmra.mrb[0].mxu0 %v485
  %v1379 = vpop.f32.mrb[0].mxu0
  %v1380 = vadd.f32 %v1283, %v1379
  %v1381 = vpop.f32.mrb[0].mxu0
  %v1382 = vpop.f32.mrb[0].mxu0
  %v1383 = vadd.f32 %v1286, %v1382
  %v1384 = vpop.f32.mrb[0].mxu0
  %1385 = vmatprep.mubr.bf16.mxu0 %v495
  %1386 = vmatmul.mubr.bf16.gmra.mrb[0].mxu0 %v494
  %v1387 = vpop.f32.mrb[0].mxu0
  %v1388 = vadd.f32 %v1291, %v1387
  %v1389 = vpop.f32.mrb[0].mxu0
  %v1390 = vpop.f32.mrb[0].mxu0
  %v1391 = vadd.f32 %v1294, %v1390
  %v1392 = vpop.f32.mrb[0].mxu0
  %1393 = vmatprep.mubr.bf16.mxu0 %v504
  %1394 = vmatmul.mubr.bf16.gmra.mrb[0].mxu0 %v503
  %v1395 = vpop.f32.mrb[0].mxu0
  %v1396 = vadd.f32 %v1299, %v1395
  %v1397 = vpop.f32.mrb[0].mxu0
  %v1398 = vpop.f32.mrb[0].mxu0
  %v1399 = vadd.f32 %v1302, %v1398
  %v1400 = vpop.f32.mrb[0].mxu0
  %1401 = vmatprep.mubr.bf16.mxu0 %v513
  %1402 = vmatmul.mubr.bf16.gmra.mrb[0].mxu0 %v512
  %v1403 = vpop.f32.mrb[0].mxu0
  %v1404 = vadd.f32 %v1307, %v1403
  %v1405 = vpop.f32.mrb[0].mxu0
  %v1406 = vpop.f32.mrb[0].mxu0
  %v1407 = vadd.f32 %v1310, %v1406
  %v1408 = vpop.f32.mrb[0].mxu0
  %1409 = vmatprep.mubr.bf16.mxu0 %v522
  %1410 = vmatmul.mubr.bf16.gmra.mrb[0].mxu0 %v521
  %v1411 = vpop.f32.mrb[0].mxu0
  %v1412 = vadd.f32 %v1315, %v1411
  %v1413 = vpop.f32.mrb[0].mxu0
  %v1414 = vpop.f32.mrb[0].mxu0
  %v1415 = vadd.f32 %v1318, %v1414
  %v1416 = vpop.f32.mrb[0].mxu0
  %1417 = vmatprep.mubr.bf16.mxu0 %v531
  %1418 = vmatmul.mubr.bf16.gmra.mrb[0].mxu0 %v530
  %v1419 = vpop.f32.mrb[0].mxu0
  %v1420 = vadd.f32 %v1323, %v1419
  %v1421 = vpop.f32.mrb[0].mxu0
  %v1422 = vpop.f32.mrb[0].mxu0
  %v1423 = vadd.f32 %v1326, %v1422
  %v1424 = vpop.f32.mrb[0].mxu0
  %1425 = vmatprep.mubr.bf16.mxu0 %v540
  %1426 = vmatmul.mubr.bf16.gmra.mrb[0].mxu0 %v539
  %v1427 = vpop.f32.mrb[0].mxu0
  %v1428 = vadd.f32 %v1331, %v1427
  %v1429 = vpop.f32.mrb[0].mxu0
  %v1430 = vpop.f32.mrb[0].mxu0
  %v1431 = vadd.f32 %v1334, %v1430
  %v1432 = vpop.f32.mrb[0].mxu0
  %1433 = vdwg.mxu0
  %1434 = vmatprep.subr.bf16.mxu0 0
  %1435 = vmatpush1.bf16.msra.mxu0 %v966
  %1436 = vmatprep.subr.bf16.mxu0 0
  %1437 = vmatpush1.bf16.msra.mxu0 %v967
  %1438 = vmatprep.subr.bf16.mxu0 0
  %1439 = vmatpush1.bf16.msra.mxu0 %v968
  %1440 = vmatprep.subr.bf16.mxu0 0
  %1441 = vmatpush1.bf16.msra.mxu0 %v969
  %1442 = vmatprep.subr.bf16.mxu0 0
  %1443 = vmatpush1.bf16.msra.mxu0 %v970
  %1444 = vmatprep.subr.bf16.mxu0 0
  %1445 = vmatpush1.bf16.msra.mxu0 %v971
  %1446 = vmatprep.subr.bf16.mxu0 0
  %1447 = vmatpush1.bf16.msra.mxu0 %v972
  %1448 = vmatprep.subr.bf16.mxu0 0
  %1449 = vmatpush1.bf16.msra.mxu0 %v973
  %1450 = vmatprep.subr.bf16.mxu0 0
  %1451 = vmatpush1.bf16.msra.mxu0 0
  %1452 = vmatprep.subr.bf16.mxu0 0
  %1453 = vmatpush1.bf16.msra.mxu0 0
  %1454 = vmatprep.subr.bf16.mxu0 0
  %1455 = vmatpush1.bf16.msra.mxu0 0
  %1456 = vmatprep.subr.bf16.mxu0 0
  %1457 = vmatpush1.bf16.msra.mxu0 0
  %1458 = vmatprep.subr.bf16.mxu0 0
  %1459 = vmatpush1.bf16.msra.mxu0 0
  %1460 = vmatprep.subr.bf16.mxu0 0
  %1461 = vmatpush1.bf16.msra.mxu0 0
  %1462 = vmatprep.subr.bf16.mxu0 0
  %1463 = vmatpush1.bf16.msra.mxu0 0
  %1464 = vmatprep.subr.bf16.mxu0 0
  %1465 = vmatpush1.bf16.msra.mxu0 0
  %1466 = vmatprep.mubr.bf16.mxu0 0
  %1467 = vmatmul.mubr.bf16.gmra.mrb[0].mxu0 %v478
  %v1468 = vpop.f32.mrb[0].mxu0
  %v1469 = vadd.f32 %v1372, %v1468
  %v1470 = vpop.f32.mrb[0].mxu0
  %v1471 = vpop.f32.mrb[0].mxu0
  %v1472 = vadd.f32 %v1375, %v1471
  %v1473 = vpop.f32.mrb[0].mxu0
  %1474 = vmatprep.mubr.bf16.mxu0 0
  %1475 = vmatmul.mubr.bf16.gmra.mrb[0].mxu0 %v487
  %v1476 = vpop.f32.mrb[0].mxu0
  %v1477 = vadd.f32 %v1380, %v1476
  %v1478 = vpop.f32.mrb[0].mxu0
  %v1479 = vpop.f32.mrb[0].mxu0
  %v1480 = vadd.f32 %v1383, %v1479
  %v1481 = vpop.f32.mrb[0].mxu0
  %1482 = vmatprep.mubr.bf16.mxu0 0
  %1483 = vmatmul.mubr.bf16.gmra.mrb[0].mxu0 %v496
  %v1484 = vpop.f32.mrb[0].mxu0
  %v1485 = vadd.f32 %v1388, %v1484
  %v1486 = vpop.f32.mrb[0].mxu0
  %v1487 = vpop.f32.mrb[0].mxu0
  %v1488 = vadd.f32 %v1391, %v1487
  %v1489 = vpop.f32.mrb[0].mxu0
  %1490 = vmatprep.mubr.bf16.mxu0 0
  %1491 = vmatmul.mubr.bf16.gmra.mrb[0].mxu0 %v505
  %v1492 = vpop.f32.mrb[0].mxu0
  %v1493 = vadd.f32 %v1396, %v1492
  %v1494 = vpop.f32.mrb[0].mxu0
  %v1495 = vpop.f32.mrb[0].mxu0
  %v1496 = vadd.f32 %v1399, %v1495
  %v1497 = vpop.f32.mrb[0].mxu0
  %1498 = vmatprep.mubr.bf16.mxu0 0
  %1499 = vmatmul.mubr.bf16.gmra.mrb[0].mxu0 %v514
  %v1500 = vpop.f32.mrb[0].mxu0
  %v1501 = vadd.f32 %v1404, %v1500
  %v1502 = vpop.f32.mrb[0].mxu0
  %v1503 = vpop.f32.mrb[0].mxu0
  %v1504 = vadd.f32 %v1407, %v1503
  %v1505 = vpop.f32.mrb[0].mxu0
  %1506 = vmatprep.mubr.bf16.mxu0 0
  %1507 = vmatmul.mubr.bf16.gmra.mrb[0].mxu0 %v523
  %v1508 = vpop.f32.mrb[0].mxu0
  %v1509 = vadd.f32 %v1412, %v1508
  %v1510 = vpop.f32.mrb[0].mxu0
  %v1511 = vpop.f32.mrb[0].mxu0
  %v1512 = vadd.f32 %v1415, %v1511
  %v1513 = vpop.f32.mrb[0].mxu0
  %1514 = vmatprep.mubr.bf16.mxu0 0
  %1515 = vmatmul.mubr.bf16.gmra.mrb[0].mxu0 %v532
  %v1516 = vpop.f32.mrb[0].mxu0
  %v1517 = vadd.f32 %v1420, %v1516
  %v1518 = vpop.f32.mrb[0].mxu0
  %v1519 = vpop.f32.mrb[0].mxu0
  %v1520 = vadd.f32 %v1423, %v1519
  %v1521 = vpop.f32.mrb[0].mxu0
  %1522 = vmatprep.mubr.bf16.mxu0 0
  %1523 = vmatmul.mubr.bf16.gmra.mrb[0].mxu0 %v541
  %v1524 = vpop.f32.mrb[0].mxu0
  %v1525 = vadd.f32 %v1428, %v1524
  %v1526 = vpop.f32.mrb[0].mxu0
  %v1527 = vpop.f32.mrb[0].mxu0
  %v1528 = vadd.f32 %v1431, %v1527
  %v1529 = vpop.f32.mrb[0].mxu0
  %1530 = vdwg.mxu0
  %v1531 = vmax.f32 %v1469, 0.0
  %v1532 = vmax.f32 %v1472, 0.0
  %v1533 = vmax.f32 %v1477, 0.0
  %v1534 = vmax.f32 %v1480, 0.0
  %v1535 = vmax.f32 %v1485, 0.0
  %v1536 = vmax.f32 %v1488, 0.0
  %v1537 = vmax.f32 %v1493, 0.0
  %v1538 = vmax.f32 %v1496, 0.0
  %v1539 = vmax.f32 %v1501, 0.0
  %v1540 = vmax.f32 %v1504, 0.0
  %v1541 = vmax.f32 %v1509, 0.0
  %v1542 = vmax.f32 %v1512, 0.0
  %v1543 = vmax.f32 %v1517, 0.0
  %v1544 = vmax.f32 %v1520, 0.0
  %v1545 = vmax.f32 %v1525, 0.0
  %v1546 = vmax.f32 %v1528, 0.0
  %v1547 = vpack.c.bf16 %v1532, %v1531
  %v1548 = vpack.c.bf16 %v1534, %v1533
  %v1549 = vpack.c.bf16 %v1536, %v1535
  %v1550 = vpack.c.bf16 %v1538, %v1537
  %v1551 = vpack.c.bf16 %v1540, %v1539
  %v1552 = vpack.c.bf16 %v1542, %v1541
  %v1553 = vpack.c.bf16 %v1544, %v1543
  %v1554 = vpack.c.bf16 %v1546, %v1545
  %v1563 = vunpack.c.l.b16 %v1547
  %v1564 = vunpack.c.h.b16 %v1547
  %v1565 = vunpack.c.l.b16 %v1548
  %v1566 = vunpack.c.h.b16 %v1548
  %v1567 = vunpack.c.l.b16 %v1549
  %v1568 = vunpack.c.h.b16 %v1549
  %v1569 = vunpack.c.l.b16 %v1550
  %v1570 = vunpack.c.h.b16 %v1550
  %v1571 = vunpack.c.l.b16 %v1551
  %v1572 = vunpack.c.h.b16 %v1551
  %v1573 = vunpack.c.l.b16 %v1552
  %v1574 = vunpack.c.h.b16 %v1552
  %v1575 = vunpack.c.l.b16 %v1553
  %v1576 = vunpack.c.h.b16 %v1553
  %v1577 = vunpack.c.l.b16 %v1554
  %v1578 = vunpack.c.h.b16 %v1554
  %v1579 = vpack.c.b16 %v1563, %v1563
  %v1580 = vpack.c.b16 %v1564, %v1564
  %v1581 = vpack.c.b16 %v1565, %v1565
  %v1582 = vpack.c.b16 %v1566, %v1566
  %v1583 = vpack.c.b16 %v1567, %v1567
  %v1584 = vpack.c.b16 %v1568, %v1568
  %v1585 = vpack.c.b16 %v1569, %v1569
  %v1586 = vpack.c.b16 %v1570, %v1570
  %v1587 = vpack.c.b16 %v1571, %v1571
  %v1588 = vpack.c.b16 %v1572, %v1572
  %v1589 = vpack.c.b16 %v1573, %v1573
  %v1590 = vpack.c.b16 %v1574, %v1574
  %v1591 = vpack.c.b16 %v1575, %v1575
  %v1592 = vpack.c.b16 %v1576, %v1576
  %v1593 = vpack.c.b16 %v1577, %v1577
  %v1594 = vpack.c.b16 %v1578, %v1578
  %1611 = vst [vmem:[%s3] sm:$0xf] %v1579
  %1612 = vst [vmem:[%s3 + $0x4] sm:$0xf] %v1580
  %1613 = vst [vmem:[%s3 + $0x8] sm:$0xf] %v1581
  %1614 = vst [vmem:[%s3 + $0xc] sm:$0xf] %v1582
  %1615 = vst [vmem:[%s3 + $0x10] sm:$0xf] %v1583
  %1616 = vst [vmem:[%s3 + $0x14] sm:$0xf] %v1584
  %1617 = vst [vmem:[%s3 + $0x18] sm:$0xf] %v1585
  %1618 = vst [vmem:[%s3 + $0x1c] sm:$0xf] %v1586
  %1619 = vst [vmem:[%s3 + $0x20] sm:$0xf] %v1587
  %1620 = vst [vmem:[%s3 + $0x24] sm:$0xf] %v1588
  %1621 = vst [vmem:[%s3 + $0x28] sm:$0xf] %v1589
  %1622 = vst [vmem:[%s3 + $0x2c] sm:$0xf] %v1590
  %1623 = vst [vmem:[%s3 + $0x30] sm:$0xf] %v1591
  %1624 = vst [vmem:[%s3 + $0x34] sm:$0xf] %v1592
  %1625 = vst [vmem:[%s3 + $0x38] sm:$0xf] %v1593
  %1626 = vst [vmem:[%s3 + $0x3c] sm:$0xf] %v1594
  // Predicated region
  $region14: #{_lambda_.43} parent=0 // pred_check
    _
  $region15: #{_lambda_.43} parent=0 // pred_check_branch
    %1628 = sbr.rel (0) target = $region17
  $region16: #{_lambda_.43} parent=0 // pred_region
    _
  $region17: #{_lambda_.43} parent=0 // pred_fallthru
    _
  // Predicated region
  $region18: #{_lambda_.43} parent=0 // pred_check
    _
  $region19: #{_lambda_.43} parent=0 // pred_check_branch
    %1630 = sbr.rel (0) target = $region21
  $region20: #{_lambda_.43} parent=0 // pred_region
    _
  $region21: #{_lambda_.43} parent=0 // pred_fallthru
    _

// kernel: _lambda_.45
$region0: #{_lambda_.45}
  #allocation0 [shape = 'u32[]', space=smem, size = 0x4, offset = 0x4, fixed_abs, tag = 'smem constant byte address 0x4 - core index']
  #allocation1 [shape = 'u32[144,128]{1,0:T(1,128)}', space=vmem, size = 0x12000, scoped, tag = 'internal scratch']
  %s0 = inlined_call_operand.vmem [shape: bf16[32,128], index: 0, kind: input, shape index: {}]
  %s1 = inlined_call_operand.vmem [shape: bf16[128,128], index: 1, kind: input, shape index: {}]
  %s2 = inlined_call_operand.vmem [shape: f32[1,128], index: 2, kind: input, shape index: {}]
  %s3 = inlined_call_operand.vmem [shape: bf16[32,128], index: 3, kind: output, shape index: {}]
  %s4 = sld [smem:[#allocation0]]
  $region22: #{_lambda_.45} parent=0
    _
  %s6 = ssub.s32 1, %s4
  %s7 = scalar_select 0, %s6, %s4
  // Predicated region
  $region2: #{_lambda_.45} parent=0 // pred_check
    _
  $region3: #{_lambda_.45} parent=0 // pred_check_branch
    %9 = sbr.rel (0) target = $region5
  $region4: #{_lambda_.45} parent=0 // pred_region
    _
  $region5: #{_lambda_.45} parent=0 // pred_fallthru
    _
  // Predicated region
  $region6: #{_lambda_.45} parent=0 // pred_check
    _
  $region7: #{_lambda_.45} parent=0 // pred_check_branch
    %11 = sbr.rel (0) target = $region9
  $region8: #{_lambda_.45} parent=0 // pred_region
    _
  $region9: #{_lambda_.45} parent=0 // pred_fallthru
    _
  // Predicated region
  $region10: #{_lambda_.45} parent=0 // pred_check
    _
  $region11: #{_lambda_.45} parent=0 // pred_check_branch
    %13 = sbr.rel (0) target = $region13
  $region12: #{_lambda_.45} parent=0 // pred_region
    _
  $region13: #{_lambda_.45} parent=0 // pred_fallthru
    _
  %v15 = vld [vmem:[%s0] sm:$0xf]
  %v16 = vld [vmem:[%s0 + $0x4] sm:$0xf]
  %v17 = vld [vmem:[%s0 + $0x8] sm:$0xf]
  %v18 = vld [vmem:[%s0 + $0xc] sm:$0xf]
  %v19 = vld [vmem:[%s1] sm:$0xf]
  %v20 = vld [vmem:[%s1 + $0x4] sm:$0xf]
  %v21 = vld [vmem:[%s1 + $0x8] sm:$0xf]
  %v22 = vld [vmem:[%s1 + $0xc] sm:$0xf]
  %v23 = vld [vmem:[%s1 + $0x10] sm:$0xf]
  %v24 = vld [vmem:[%s1 + $0x14] sm:$0xf]
  %v25 = vld [vmem:[%s1 + $0x18] sm:$0xf]
  %v26 = vld [vmem:[%s1 + $0x1c] sm:$0xf]
  %v27 = vld [vmem:[%s1 + $0x20] sm:$0xf]
  %v28 = vld [vmem:[%s1 + $0x24] sm:$0xf]
  %v29 = vld [vmem:[%s1 + $0x28] sm:$0xf]
  %v30 = vld [vmem:[%s1 + $0x2c] sm:$0xf]
  %v31 = vld [vmem:[%s1 + $0x30] sm:$0xf]
  %v32 = vld [vmem:[%s1 + $0x34] sm:$0xf]
  %v33 = vld [vmem:[%s1 + $0x38] sm:$0xf]
  %v34 = vld [vmem:[%s1 + $0x3c] sm:$0xf]
  %v35 = vld [vmem:[%s2] sm:$0x1]
  %v37 = vlaneseq
  %v38 = vshrl.u32 %v37, 7
  %v39 = vsub.s32 0, %v38
  %v40 = vrot.slane %v35, %v39
  %v46 = vunpack.c.l.b16 %v15
  %v47 = vunpack.c.l.b16 %v16
  %v48 = vunpack.c.l.b16 %v17
  %v49 = vunpack.c.l.b16 %v18
  %v50 = vpack.c.b16 %v47, %v46
  %v51 = vpack.c.b16 %v49, %v48
  %v70 = vunpack.c.l.b16 %v19
  %v71 = vunpack.c.l.b16 %v20
  %v72 = vunpack.c.l.b16 %v21
  %v73 = vunpack.c.l.b16 %v22
  %v74 = vunpack.c.l.b16 %v23
  %v75 = vunpack.c.l.b16 %v24
  %v76 = vunpack.c.l.b16 %v25
  %v77 = vunpack.c.l.b16 %v26
  %v78 = vunpack.c.l.b16 %v27
  %v79 = vunpack.c.l.b16 %v28
  %v80 = vunpack.c.l.b16 %v29
  %v81 = vunpack.c.l.b16 %v30
  %v82 = vunpack.c.l.b16 %v31
  %v83 = vunpack.c.l.b16 %v32
  %v84 = vunpack.c.l.b16 %v33
  %v85 = vunpack.c.l.b16 %v34
  %v86 = vpack.c.b16 %v71, %v70
  %v87 = vpack.c.b16 %v73, %v72
  %v88 = vpack.c.b16 %v75, %v74
  %v89 = vpack.c.b16 %v77, %v76
  %v90 = vpack.c.b16 %v79, %v78
  %v91 = vpack.c.b16 %v81, %v80
  %v92 = vpack.c.b16 %v83, %v82
  %v93 = vpack.c.b16 %v85, %v84
  %102 = vmatprep.subr.bf16.mxu0 0
  %103 = vmatpush1.bf16.msra.mxu0 %v86
  %104 = vmatprep.subr.bf16.mxu0 0
  %105 = vmatpush1.bf16.msra.mxu0 %v87
  %106 = vmatprep.subr.bf16.mxu0 0
  %107 = vmatpush1.bf16.msra.mxu0 %v88
  %108 = vmatprep.subr.bf16.mxu0 0
  %109 = vmatpush1.bf16.msra.mxu0 %v89
  %110 = vmatprep.subr.bf16.mxu0 0
  %111 = vmatpush1.bf16.msra.mxu0 %v90
  %112 = vmatprep.subr.bf16.mxu0 0
  %113 = vmatpush1.bf16.msra.mxu0 %v91
  %114 = vmatprep.subr.bf16.mxu0 0
  %115 = vmatpush1.bf16.msra.mxu0 %v92
  %116 = vmatprep.subr.bf16.mxu0 0
  %117 = vmatpush1.bf16.msra.mxu0 %v93
  %118 = vmatprep.subr.bf16.mxu0 0
  %119 = vmatpush1.bf16.msra.mxu0 0
  %120 = vmatprep.subr.bf16.mxu0 0
  %121 = vmatpush1.bf16.msra.mxu0 0
  %122 = vmatprep.subr.bf16.mxu0 0
  %123 = vmatpush1.bf16.msra.mxu0 0
  %124 = vmatprep.subr.bf16.mxu0 0
  %125 = vmatpush1.bf16.msra.mxu0 0
  %126 = vmatprep.subr.bf16.mxu0 0
  %127 = vmatpush1.bf16.msra.mxu0 0
  %128 = vmatprep.subr.bf16.mxu0 0
  %129 = vmatpush1.bf16.msra.mxu0 0
  %130 = vmatprep.subr.bf16.mxu0 0
  %131 = vmatpush1.bf16.msra.mxu0 0
  %132 = vmatprep.subr.bf16.mxu0 0
  %133 = vmatpush1.bf16.msra.mxu0 0
  %134 = vmatprep.mubr.bf16.mxu0 0
  %135 = vmatmul.mubr.bf16.gmra.mrb[0].mxu0 %v50
  %v136 = vpop.f32.mrb[0].mxu0
  %v137 = vadd.f32 %v40, %v136
  %v138 = vpop.f32.mrb[0].mxu0
  %v139 = vpop.f32.mrb[0].mxu0
  %v140 = vadd.f32 %v40, %v139
  %v141 = vpop.f32.mrb[0].mxu0
  %142 = vmatprep.mubr.bf16.mxu0 0
  %143 = vmatmul.mubr.bf16.gmra.mrb[0].mxu0 %v51
  %v144 = vpop.f32.mrb[0].mxu0
  %v145 = vadd.f32 %v40, %v144
  %v146 = vpop.f32.mrb[0].mxu0
  %v147 = vpop.f32.mrb[0].mxu0
  %v148 = vadd.f32 %v40, %v147
  %v149 = vpop.f32.mrb[0].mxu0
  %150 = vdwg.mxu0
  %v151 = vpack.c.bf16 %v140, %v137
  %v152 = vpack.c.bf16 %v148, %v145
  %v155 = vunpack.c.l.b16 %v151
  %v156 = vunpack.c.h.b16 %v151
  %v157 = vunpack.c.l.b16 %v152
  %v158 = vunpack.c.h.b16 %v152
  %v159 = vpack.c.b16 %v155, %v155
  %v160 = vpack.c.b16 %v156, %v156
  %v161 = vpack.c.b16 %v157, %v157
  %v162 = vpack.c.b16 %v158, %v158
  %167 = vst [vmem:[%s3] sm:$0xf] %v159
  %168 = vst [vmem:[%s3 + $0x4] sm:$0xf] %v160
  %169 = vst [vmem:[%s3 + $0x8] sm:$0xf] %v161
  %170 = vst [vmem:[%s3 + $0xc] sm:$0xf] %v162
  // Predicated region
  $region14: #{_lambda_.45} parent=0 // pred_check
    _
  $region15: #{_lambda_.45} parent=0 // pred_check_branch
    %172 = sbr.rel (0) target = $region17
  $region16: #{_lambda_.45} parent=0 // pred_region
    _
  $region17: #{_lambda_.45} parent=0 // pred_fallthru
    _
  // Predicated region
  $region18: #{_lambda_.45} parent=0 // pred_check
    _
  $region19: #{_lambda_.45} parent=0 // pred_check_branch
    %174 = sbr.rel (0) target = $region21
  $region20: #{_lambda_.45} parent=0 // pred_region
    _
  $region21: #{_lambda_.45} parent=0 // pred_fallthru
    _

// kernel: _lambda_.48
$region0: #{_lambda_.48}
  #allocation0 [shape = 'u32[]', space=smem, size = 0x4, offset = 0x4, fixed_abs, tag = 'smem constant byte address 0x4 - core index']
  #allocation1 [shape = 'u32[144,128]{1,0:T(1,128)}', space=vmem, size = 0x12000, scoped, tag = 'internal scratch']
  %s0 = inlined_call_operand.vmem [shape: bf16[32,128], index: 0, kind: input, shape index: {}]
  %s1 = inlined_call_operand.vmem [shape: bf16[128,128], index: 1, kind: input, shape index: {}]
  %s2 = inlined_call_operand.vmem [shape: f32[1,128], index: 2, kind: input, shape index: {}]
  %s3 = inlined_call_operand.vmem [shape: bf16[32,128], index: 3, kind: input, shape index: {}]
  %s4 = inlined_call_operand.vmem [shape: bf16[32,128], index: 4, kind: output, shape index: {}]
  %s5 = sld [smem:[#allocation0]]
  $region26: #{_lambda_.48} parent=0
    _
  %s7 = ssub.s32 1, %s5
  %s8 = scalar_select 0, %s7, %s5
  // Predicated region
  $region2: #{_lambda_.48} parent=0 // pred_check
    _
  $region3: #{_lambda_.48} parent=0 // pred_check_branch
    %10 = sbr.rel (0) target = $region5
  $region4: #{_lambda_.48} parent=0 // pred_region
    _
  $region5: #{_lambda_.48} parent=0 // pred_fallthru
    _
  // Predicated region
  $region6: #{_lambda_.48} parent=0 // pred_check
    _
  $region7: #{_lambda_.48} parent=0 // pred_check_branch
    %12 = sbr.rel (0) target = $region9
  $region8: #{_lambda_.48} parent=0 // pred_region
    _
  $region9: #{_lambda_.48} parent=0 // pred_fallthru
    _
  // Predicated region
  $region10: #{_lambda_.48} parent=0 // pred_check
    _
  $region11: #{_lambda_.48} parent=0 // pred_check_branch
    %14 = sbr.rel (0) target = $region13
  $region12: #{_lambda_.48} parent=0 // pred_region
    _
  $region13: #{_lambda_.48} parent=0 // pred_fallthru
    _
  // Predicated region
  $region14: #{_lambda_.48} parent=0 // pred_check
    _
  $region15: #{_lambda_.48} parent=0 // pred_check_branch
    %16 = sbr.rel (0) target = $region17
  $region16: #{_lambda_.48} parent=0 // pred_region
    _
  $region17: #{_lambda_.48} parent=0 // pred_fallthru
    _
  %v18 = vld [vmem:[%s0] sm:$0xf]
  %v19 = vld [vmem:[%s0 + $0x4] sm:$0xf]
  %v20 = vld [vmem:[%s0 + $0x8] sm:$0xf]
  %v21 = vld [vmem:[%s0 + $0xc] sm:$0xf]
  %v22 = vld [vmem:[%s1] sm:$0xf]
  %v23 = vld [vmem:[%s1 + $0x4] sm:$0xf]
  %v24 = vld [vmem:[%s1 + $0x8] sm:$0xf]
  %v25 = vld [vmem:[%s1 + $0xc] sm:$0xf]
  %v26 = vld [vmem:[%s1 + $0x10] sm:$0xf]
  %v27 = vld [vmem:[%s1 + $0x14] sm:$0xf]
  %v28 = vld [vmem:[%s1 + $0x18] sm:$0xf]
  %v29 = vld [vmem:[%s1 + $0x1c] sm:$0xf]
  %v30 = vld [vmem:[%s1 + $0x20] sm:$0xf]
  %v31 = vld [vmem:[%s1 + $0x24] sm:$0xf]
  %v32 = vld [vmem:[%s1 + $0x28] sm:$0xf]
  %v33 = vld [vmem:[%s1 + $0x2c] sm:$0xf]
  %v34 = vld [vmem:[%s1 + $0x30] sm:$0xf]
  %v35 = vld [vmem:[%s1 + $0x34] sm:$0xf]
  %v36 = vld [vmem:[%s1 + $0x38] sm:$0xf]
  %v37 = vld [vmem:[%s1 + $0x3c] sm:$0xf]
  %v38 = vld [vmem:[%s2] sm:$0x1]
  %v40 = vlaneseq
  %v41 = vshrl.u32 %v40, 7
  %v42 = vsub.s32 0, %v41
  %v43 = vrot.slane %v38, %v42
  %v49 = vunpack.c.l.b16 %v18
  %v50 = vunpack.c.l.b16 %v19
  %v51 = vunpack.c.l.b16 %v20
  %v52 = vunpack.c.l.b16 %v21
  %v53 = vpack.c.b16 %v50, %v49
  %v54 = vpack.c.b16 %v52, %v51
  %v73 = vunpack.c.l.b16 %v22
  %v74 = vunpack.c.l.b16 %v23
  %v75 = vunpack.c.l.b16 %v24
  %v76 = vunpack.c.l.b16 %v25
  %v77 = vunpack.c.l.b16 %v26
  %v78 = vunpack.c.l.b16 %v27
  %v79 = vunpack.c.l.b16 %v28
  %v80 = vunpack.c.l.b16 %v29
  %v81 = vunpack.c.l.b16 %v30
  %v82 = vunpack.c.l.b16 %v31
  %v83 = vunpack.c.l.b16 %v32
  %v84 = vunpack.c.l.b16 %v33
  %v85 = vunpack.c.l.b16 %v34
  %v86 = vunpack.c.l.b16 %v35
  %v87 = vunpack.c.l.b16 %v36
  %v88 = vunpack.c.l.b16 %v37
  %v89 = vpack.c.b16 %v74, %v73
  %v90 = vpack.c.b16 %v76, %v75
  %v91 = vpack.c.b16 %v78, %v77
  %v92 = vpack.c.b16 %v80, %v79
  %v93 = vpack.c.b16 %v82, %v81
  %v94 = vpack.c.b16 %v84, %v83
  %v95 = vpack.c.b16 %v86, %v85
  %v96 = vpack.c.b16 %v88, %v87
  %105 = vmatprep.subr.bf16.mxu0 0
  %106 = vmatpush1.bf16.msra.mxu0 %v89
  %107 = vmatprep.subr.bf16.mxu0 0
  %108 = vmatpush1.bf16.msra.mxu0 %v90
  %109 = vmatprep.subr.bf16.mxu0 0
  %110 = vmatpush1.bf16.msra.mxu0 %v91
  %111 = vmatprep.subr.bf16.mxu0 0
  %112 = vmatpush1.bf16.msra.mxu0 %v92
  %113 = vmatprep.subr.bf16.mxu0 0
  %114 = vmatpush1.bf16.msra.mxu0 %v93
  %115 = vmatprep.subr.bf16.mxu0 0
  %116 = vmatpush1.bf16.msra.mxu0 %v94
  %117 = vmatprep.subr.bf16.mxu0 0
  %118 = vmatpush1.bf16.msra.mxu0 %v95
  %119 = vmatprep.subr.bf16.mxu0 0
  %120 = vmatpush1.bf16.msra.mxu0 %v96
  %121 = vmatprep.subr.bf16.mxu0 0
  %122 = vmatpush1.bf16.msra.mxu0 0
  %123 = vmatprep.subr.bf16.mxu0 0
  %124 = vmatpush1.bf16.msra.mxu0 0
  %125 = vmatprep.subr.bf16.mxu0 0
  %126 = vmatpush1.bf16.msra.mxu0 0
  %127 = vmatprep.subr.bf16.mxu0 0
  %128 = vmatpush1.bf16.msra.mxu0 0
  %129 = vmatprep.subr.bf16.mxu0 0
  %130 = vmatpush1.bf16.msra.mxu0 0
  %131 = vmatprep.subr.bf16.mxu0 0
  %132 = vmatpush1.bf16.msra.mxu0 0
  %133 = vmatprep.subr.bf16.mxu0 0
  %134 = vmatpush1.bf16.msra.mxu0 0
  %135 = vmatprep.subr.bf16.mxu0 0
  %136 = vmatpush1.bf16.msra.mxu0 0
  %137 = vmatprep.mubr.bf16.mxu0 0
  %138 = vmatmul.mubr.bf16.gmra.mrb[0].mxu0 %v53
  %v139 = vpop.f32.mrb[0].mxu0
  %v140 = vadd.f32 %v43, %v139
  %v141 = vpop.f32.mrb[0].mxu0
  %v142 = vpop.f32.mrb[0].mxu0
  %v143 = vadd.f32 %v43, %v142
  %v144 = vpop.f32.mrb[0].mxu0
  %145 = vmatprep.mubr.bf16.mxu0 0
  %146 = vmatmul.mubr.bf16.gmra.mrb[0].mxu0 %v54
  %v147 = vpop.f32.mrb[0].mxu0
  %v148 = vadd.f32 %v43, %v147
  %v149 = vpop.f32.mrb[0].mxu0
  %v150 = vpop.f32.mrb[0].mxu0
  %v151 = vadd.f32 %v43, %v150
  %v152 = vpop.f32.mrb[0].mxu0
  %153 = vdwg.mxu0
  %v154 = vld [vmem:[%s3] sm:$0xf]
  %v155 = vld [vmem:[%s3 + $0x4] sm:$0xf]
  %v156 = vld [vmem:[%s3 + $0x8] sm:$0xf]
  %v157 = vld [vmem:[%s3 + $0xc] sm:$0xf]
  %v158 = vunpack.c.l.bf16 %v154
  %v159 = vunpack.c.l.bf16 %v155
  %v160 = vunpack.c.l.bf16 %v156
  %v161 = vunpack.c.l.bf16 %v157
  %v162 = vadd.f32 %v140, %v158
  %v163 = vadd.f32 %v143, %v159
  %v164 = vadd.f32 %v148, %v160
  %v165 = vadd.f32 %v151, %v161
  %v166 = vmax.f32 %v162, 0.0
  %v167 = vmax.f32 %v163, 0.0
  %v168 = vmax.f32 %v164, 0.0
  %v169 = vmax.f32 %v165, 0.0
  %v170 = vpack.c.bf16 %v167, %v166
  %v171 = vpack.c.bf16 %v169, %v168
  %v174 = vunpack.c.l.b16 %v170
  %v175 = vunpack.c.h.b16 %v170
  %v176 = vunpack.c.l.b16 %v171
  %v177 = vunpack.c.h.b16 %v171
  %v178 = vpack.c.b16 %v174, %v174
  %v179 = vpack.c.b16 %v175, %v175
  %v180 = vpack.c.b16 %v176, %v176
  %v181 = vpack.c.b16 %v177, %v177
  %186 = vst [vmem:[%s4] sm:$0xf] %v178
  %187 = vst [vmem:[%s4 + $0x4] sm:$0xf] %v179
  %188 = vst [vmem:[%s4 + $0x8] sm:$0xf] %v180
  %189 = vst [vmem:[%s4 + $0xc] sm:$0xf] %v181
  // Predicated region
  $region18: #{_lambda_.48} parent=0 // pred_check
    _
  $region19: #{_lambda_.48} parent=0 // pred_check_branch
    %191 = sbr.rel (0) target = $region21
  $region20: #{_lambda_.48} parent=0 // pred_region
    _
  $region21: #{_lambda_.48} parent=0 // pred_fallthru
    _
  // Predicated region
  $region22: #{_lambda_.48} parent=0 // pred_check
    _
  $region23: #{_lambda_.48} parent=0 // pred_check_branch
    %193 = sbr.rel (0) target = $region25
  $region24: #{_lambda_.48} parent=0 // pred_region
    _
  $region25: #{_lambda_.48} parent=0 // pred_fallthru
    _

// kernel: _lambda_.47
$region0: #{_lambda_.47}
  #allocation0 [shape = 'u32[]', space=smem, size = 0x4, offset = 0x4, fixed_abs, tag = 'smem constant byte address 0x4 - core index']
  #allocation1 [shape = 'u32[144,128]{1,0:T(1,128)}', space=vmem, size = 0x12000, scoped, tag = 'internal scratch']
  %s0 = inlined_call_operand.vmem [shape: bf16[32,1152], index: 0, kind: input, shape index: {}]
  %s1 = inlined_call_operand.vmem [shape: bf16[1152,128], index: 1, kind: input, shape index: {}]
  %s2 = inlined_call_operand.vmem [shape: f32[1,128], index: 2, kind: input, shape index: {}]
  %s3 = inlined_call_operand.vmem [shape: bf16[32,128], index: 3, kind: output, shape index: {}]
  %s4 = sld [smem:[#allocation0]]
  $region22: #{_lambda_.47} parent=0
    _
  %s6 = ssub.s32 1, %s4
  %s7 = scalar_select 0, %s6, %s4
  // Predicated region
  $region2: #{_lambda_.47} parent=0 // pred_check
    _
  $region3: #{_lambda_.47} parent=0 // pred_check_branch
    %9 = sbr.rel (0) target = $region5
  $region4: #{_lambda_.47} parent=0 // pred_region
    _
  $region5: #{_lambda_.47} parent=0 // pred_fallthru
    _
  // Predicated region
  $region6: #{_lambda_.47} parent=0 // pred_check
    _
  $region7: #{_lambda_.47} parent=0 // pred_check_branch
    %11 = sbr.rel (0) target = $region9
  $region8: #{_lambda_.47} parent=0 // pred_region
    _
  $region9: #{_lambda_.47} parent=0 // pred_fallthru
    _
  // Predicated region
  $region10: #{_lambda_.47} parent=0 // pred_check
    _
  $region11: #{_lambda_.47} parent=0 // pred_check_branch
    %13 = sbr.rel (0) target = $region13
  $region12: #{_lambda_.47} parent=0 // pred_region
    _
  $region13: #{_lambda_.47} parent=0 // pred_fallthru
    _
  %v15 = vld [vmem:[%s0] sm:$0xff]
  %v16 = vld [vmem:[%s0 + $0x8] sm:$0xff]
  %v17 = vld [vmem:[%s0 + $0x10] sm:$0xff]
  %v18 = vld [vmem:[%s0 + $0x18] sm:$0xff]
  %v19 = vld [vmem:[%s0 + $0x20] sm:$0xf]
  %v20 = vld [vmem:[%s0 + $0x24] sm:$0xff]
  %v21 = vld [vmem:[%s0 + $0x2c] sm:$0xff]
  %v22 = vld [vmem:[%s0 + $0x34] sm:$0xff]
  %v23 = vld [vmem:[%s0 + $0x3c] sm:$0xff]
  %v24 = vld [vmem:[%s0 + $0x44] sm:$0xf]
  %v25 = vld [vmem:[%s0 + $0x48] sm:$0xff]
  %v26 = vld [vmem:[%s0 + $0x50] sm:$0xff]
  %v27 = vld [vmem:[%s0 + $0x58] sm:$0xff]
  %v28 = vld [vmem:[%s0 + $0x60] sm:$0xff]
  %v29 = vld [vmem:[%s0 + $0x68] sm:$0xf]
  %v30 = vld [vmem:[%s0 + $0x6c] sm:$0xff]
  %v31 = vld [vmem:[%s0 + $0x74] sm:$0xff]
  %v32 = vld [vmem:[%s0 + $0x7c] sm:$0xff]
  %v33 = vld [vmem:[%s0 + $0x84] sm:$0xff]
  %v34 = vld [vmem:[%s0 + $0x8c] sm:$0xf]
  %v35 = vld [vmem:[%s1] sm:$0xf]
  %v36 = vld [vmem:[%s1 + $0x4] sm:$0xf]
  %v37 = vld [vmem:[%s1 + $0x8] sm:$0xf]
  %v38 = vld [vmem:[%s1 + $0xc] sm:$0xf]
  %v39 = vld [vmem:[%s1 + $0x10] sm:$0xf]
  %v40 = vld [vmem:[%s1 + $0x14] sm:$0xf]
  %v41 = vld [vmem:[%s1 + $0x18] sm:$0xf]
  %v42 = vld [vmem:[%s1 + $0x1c] sm:$0xf]
  %v43 = vld [vmem:[%s1 + $0x20] sm:$0xf]
  %v44 = vld [vmem:[%s1 + $0x24] sm:$0xf]
  %v45 = vld [vmem:[%s1 + $0x28] sm:$0xf]
  %v46 = vld [vmem:[%s1 + $0x2c] sm:$0xf]
  %v47 = vld [vmem:[%s1 + $0x30] sm:$0xf]
  %v48 = vld [vmem:[%s1 + $0x34] sm:$0xf]
  %v49 = vld [vmem:[%s1 + $0x38] sm:$0xf]
  %v50 = vld [vmem:[%s1 + $0x3c] sm:$0xf]
  %v51 = vld [vmem:[%s1 + $0x40] sm:$0xf]
  %v52 = vld [vmem:[%s1 + $0x44] sm:$0xf]
  %v53 = vld [vmem:[%s1 + $0x48] sm:$0xf]
  %v54 = vld [vmem:[%s1 + $0x4c] sm:$0xf]
  %v55 = vld [vmem:[%s1 + $0x50] sm:$0xf]
  %v56 = vld [vmem:[%s1 + $0x54] sm:$0xf]
  %v57 = vld [vmem:[%s1 + $0x58] sm:$0xf]
  %v58 = vld [vmem:[%s1 + $0x5c] sm:$0xf]
  %v59 = vld [vmem:[%s1 + $0x60] sm:$0xf]
  %v60 = vld [vmem:[%s1 + $0x64] sm:$0xf]
  %v61 = vld [vmem:[%s1 + $0x68] sm:$0xf]
  %v62 = vld [vmem:[%s1 + $0x6c] sm:$0xf]
  %v63 = vld [vmem:[%s1 + $0x70] sm:$0xf]
  %v64 = vld [vmem:[%s1 + $0x74] sm:$0xf]
  %v65 = vld [vmem:[%s1 + $0x78] sm:$0xf]
  %v66 = vld [vmem:[%s1 + $0x7c] sm:$0xf]
  %v67 = vld [vmem:[%s1 + $0x80] sm:$0xf]
  %v68 = vld [vmem:[%s1 + $0x84] sm:$0xf]
  %v69 = vld [vmem:[%s1 + $0x88] sm:$0xf]
  %v70 = vld [vmem:[%s1 + $0x8c] sm:$0xf]
  %v71 = vld [vmem:[%s1 + $0x90] sm:$0xf]
  %v72 = vld [vmem:[%s1 + $0x94] sm:$0xf]
  %v73 = vld [vmem:[%s1 + $0x98] sm:$0xf]
  %v74 = vld [vmem:[%s1 + $0x9c] sm:$0xf]
  %v75 = vld [vmem:[%s1 + $0xa0] sm:$0xf]
  %v76 = vld [vmem:[%s1 + $0xa4] sm:$0xf]
  %v77 = vld [vmem:[%s1 + $0xa8] sm:$0xf]
  %v78 = vld [vmem:[%s1 + $0xac] sm:$0xf]
  %v79 = vld [vmem:[%s1 + $0xb0] sm:$0xf]
  %v80 = vld [vmem:[%s1 + $0xb4] sm:$0xf]
  %v81 = vld [vmem:[%s1 + $0xb8] sm:$0xf]
  %v82 = vld [vmem:[%s1 + $0xbc] sm:$0xf]
  %v83 = vld [vmem:[%s1 + $0xc0] sm:$0xf]
  %v84 = vld [vmem:[%s1 + $0xc4] sm:$0xf]
  %v85 = vld [vmem:[%s1 + $0xc8] sm:$0xf]
  %v86 = vld [vmem:[%s1 + $0xcc] sm:$0xf]
  %v87 = vld [vmem:[%s1 + $0xd0] sm:$0xf]
  %v88 = vld [vmem:[%s1 + $0xd4] sm:$0xf]
  %v89 = vld [vmem:[%s1 + $0xd8] sm:$0xf]
  %v90 = vld [vmem:[%s1 + $0xdc] sm:$0xf]
  %v91 = vld [vmem:[%s1 + $0xe0] sm:$0xf]
  %v92 = vld [vmem:[%s1 + $0xe4] sm:$0xf]
  %v93 = vld [vmem:[%s1 + $0xe8] sm:$0xf]
  %v94 = vld [vmem:[%s1 + $0xec] sm:$0xf]
  %v95 = vld [vmem:[%s1 + $0xf0] sm:$0xf]
  %v96 = vld [vmem:[%s1 + $0xf4] sm:$0xf]
  %v97 = vld [vmem:[%s1 + $0xf8] sm:$0xf]
  %v98 = vld [vmem:[%s1 + $0xfc] sm:$0xf]
  %v99 = vld [vmem:[%s1 + $0x100] sm:$0xf]
  %v100 = vld [vmem:[%s1 + $0x104] sm:$0xf]
  %v101 = vld [vmem:[%s1 + $0x108] sm:$0xf]
  %v102 = vld [vmem:[%s1 + $0x10c] sm:$0xf]
  %v103 = vld [vmem:[%s1 + $0x110] sm:$0xf]
  %v104 = vld [vmem:[%s1 + $0x114] sm:$0xf]
  %v105 = vld [vmem:[%s1 + $0x118] sm:$0xf]
  %v106 = vld [vmem:[%s1 + $0x11c] sm:$0xf]
  %v107 = vld [vmem:[%s1 + $0x120] sm:$0xf]
  %v108 = vld [vmem:[%s1 + $0x124] sm:$0xf]
  %v109 = vld [vmem:[%s1 + $0x128] sm:$0xf]
  %v110 = vld [vmem:[%s1 + $0x12c] sm:$0xf]
  %v111 = vld [vmem:[%s1 + $0x130] sm:$0xf]
  %v112 = vld [vmem:[%s1 + $0x134] sm:$0xf]
  %v113 = vld [vmem:[%s1 + $0x138] sm:$0xf]
  %v114 = vld [vmem:[%s1 + $0x13c] sm:$0xf]
  %v115 = vld [vmem:[%s1 + $0x140] sm:$0xf]
  %v116 = vld [vmem:[%s1 + $0x144] sm:$0xf]
  %v117 = vld [vmem:[%s1 + $0x148] sm:$0xf]
  %v118 = vld [vmem:[%s1 + $0x14c] sm:$0xf]
  %v119 = vld [vmem:[%s1 + $0x150] sm:$0xf]
  %v120 = vld [vmem:[%s1 + $0x154] sm:$0xf]
  %v121 = vld [vmem:[%s1 + $0x158] sm:$0xf]
  %v122 = vld [vmem:[%s1 + $0x15c] sm:$0xf]
  %v123 = vld [vmem:[%s1 + $0x160] sm:$0xf]
  %v124 = vld [vmem:[%s1 + $0x164] sm:$0xf]
  %v125 = vld [vmem:[%s1 + $0x168] sm:$0xf]
  %v126 = vld [vmem:[%s1 + $0x16c] sm:$0xf]
  %v127 = vld [vmem:[%s1 + $0x170] sm:$0xf]
  %v128 = vld [vmem:[%s1 + $0x174] sm:$0xf]
  %v129 = vld [vmem:[%s1 + $0x178] sm:$0xf]
  %v130 = vld [vmem:[%s1 + $0x17c] sm:$0xf]
  %v131 = vld [vmem:[%s1 + $0x180] sm:$0xf]
  %v132 = vld [vmem:[%s1 + $0x184] sm:$0xf]
  %v133 = vld [vmem:[%s1 + $0x188] sm:$0xf]
  %v134 = vld [vmem:[%s1 + $0x18c] sm:$0xf]
  %v135 = vld [vmem:[%s1 + $0x190] sm:$0xf]
  %v136 = vld [vmem:[%s1 + $0x194] sm:$0xf]
  %v137 = vld [vmem:[%s1 + $0x198] sm:$0xf]
  %v138 = vld [vmem:[%s1 + $0x19c] sm:$0xf]
  %v139 = vld [vmem:[%s1 + $0x1a0] sm:$0xf]
  %v140 = vld [vmem:[%s1 + $0x1a4] sm:$0xf]
  %v141 = vld [vmem:[%s1 + $0x1a8] sm:$0xf]
  %v142 = vld [vmem:[%s1 + $0x1ac] sm:$0xf]
  %v143 = vld [vmem:[%s1 + $0x1b0] sm:$0xf]
  %v144 = vld [vmem:[%s1 + $0x1b4] sm:$0xf]
  %v145 = vld [vmem:[%s1 + $0x1b8] sm:$0xf]
  %v146 = vld [vmem:[%s1 + $0x1bc] sm:$0xf]
  %v147 = vld [vmem:[%s1 + $0x1c0] sm:$0xf]
  %v148 = vld [vmem:[%s1 + $0x1c4] sm:$0xf]
  %v149 = vld [vmem:[%s1 + $0x1c8] sm:$0xf]
  %v150 = vld [vmem:[%s1 + $0x1cc] sm:$0xf]
  %v151 = vld [vmem:[%s1 + $0x1d0] sm:$0xf]
  %v152 = vld [vmem:[%s1 + $0x1d4] sm:$0xf]
  %v153 = vld [vmem:[%s1 + $0x1d8] sm:$0xf]
  %v154 = vld [vmem:[%s1 + $0x1dc] sm:$0xf]
  %v155 = vld [vmem:[%s1 + $0x1e0] sm:$0xf]
  %v156 = vld [vmem:[%s1 + $0x1e4] sm:$0xf]
  %v157 = vld [vmem:[%s1 + $0x1e8] sm:$0xf]
  %v158 = vld [vmem:[%s1 + $0x1ec] sm:$0xf]
  %v159 = vld [vmem:[%s1 + $0x1f0] sm:$0xf]
  %v160 = vld [vmem:[%s1 + $0x1f4] sm:$0xf]
  %v161 = vld [vmem:[%s1 + $0x1f8] sm:$0xf]
  %v162 = vld [vmem:[%s1 + $0x1fc] sm:$0xf]
  %v163 = vld [vmem:[%s1 + $0x200] sm:$0xf]
  %v164 = vld [vmem:[%s1 + $0x204] sm:$0xf]
  %v165 = vld [vmem:[%s1 + $0x208] sm:$0xf]
  %v166 = vld [vmem:[%s1 + $0x20c] sm:$0xf]
  %v167 = vld [vmem:[%s1 + $0x210] sm:$0xf]
  %v168 = vld [vmem:[%s1 + $0x214] sm:$0xf]
  %v169 = vld [vmem:[%s1 + $0x218] sm:$0xf]
  %v170 = vld [vmem:[%s1 + $0x21c] sm:$0xf]
  %v171 = vld [vmem:[%s1 + $0x220] sm:$0xf]
  %v172 = vld [vmem:[%s1 + $0x224] sm:$0xf]
  %v173 = vld [vmem:[%s1 + $0x228] sm:$0xf]
  %v174 = vld [vmem:[%s1 + $0x22c] sm:$0xf]
  %v175 = vld [vmem:[%s1 + $0x230] sm:$0xf]
  %v176 = vld [vmem:[%s1 + $0x234] sm:$0xf]
  %v177 = vld [vmem:[%s1 + $0x238] sm:$0xf]
  %v178 = vld [vmem:[%s1 + $0x23c] sm:$0xf]
  %v179 = vld [vmem:[%s2] sm:$0x1]
  %v181 = vlaneseq
  %v182 = vshrl.u32 %v181, 7
  %v183 = vsub.s32 0, %v182
  %v184 = vrot.slane %v179, %v183
  %v206 = vunpack.c.l.b16 %v15
  %v207 = vunpack.c.h.b16 %v15
  %v208 = vunpack.c.l.b16 %v16
  %v209 = vunpack.c.h.b16 %v16
  %v210 = vunpack.c.l.b16 %v17
  %v211 = vunpack.c.h.b16 %v17
  %v212 = vunpack.c.l.b16 %v18
  %v213 = vunpack.c.h.b16 %v18
  %v214 = vunpack.c.l.b16 %v19
  %v215 = vunpack.c.l.b16 %v20
  %v216 = vunpack.c.h.b16 %v20
  %v217 = vunpack.c.l.b16 %v21
  %v218 = vunpack.c.h.b16 %v21
  %v219 = vunpack.c.l.b16 %v22
  %v220 = vunpack.c.h.b16 %v22
  %v221 = vunpack.c.l.b16 %v23
  %v222 = vunpack.c.h.b16 %v23
  %v223 = vunpack.c.l.b16 %v24
  %v224 = vunpack.c.l.b16 %v25
  %v225 = vunpack.c.h.b16 %v25
  %v226 = vunpack.c.l.b16 %v26
  %v227 = vunpack.c.h.b16 %v26
  %v228 = vunpack.c.l.b16 %v27
  %v229 = vunpack.c.h.b16 %v27
  %v230 = vunpack.c.l.b16 %v28
  %v231 = vunpack.c.h.b16 %v28
  %v232 = vunpack.c.l.b16 %v29
  %v233 = vunpack.c.l.b16 %v30
  %v234 = vunpack.c.h.b16 %v30
  %v235 = vunpack.c.l.b16 %v31
  %v236 = vunpack.c.h.b16 %v31
  %v237 = vunpack.c.l.b16 %v32
  %v238 = vunpack.c.h.b16 %v32
  %v239 = vunpack.c.l.b16 %v33
  %v240 = vunpack.c.h.b16 %v33
  %v241 = vunpack.c.l.b16 %v34
  %v242 = vpack.c.b16 %v215, %v206
  %v243 = vpack.c.b16 %v216, %v207
  %v244 = vpack.c.b16 %v217, %v208
  %v245 = vpack.c.b16 %v218, %v209
  %v246 = vpack.c.b16 %v219, %v210
  %v247 = vpack.c.b16 %v220, %v211
  %v248 = vpack.c.b16 %v221, %v212
  %v249 = vpack.c.b16 %v222, %v213
  %v250 = vpack.c.b16 %v223, %v214
  %v251 = vpack.c.b16 %v233, %v224
  %v252 = vpack.c.b16 %v234, %v225
  %v253 = vpack.c.b16 %v235, %v226
  %v254 = vpack.c.b16 %v236, %v227
  %v255 = vpack.c.b16 %v237, %v228
  %v256 = vpack.c.b16 %v238, %v229
  %v257 = vpack.c.b16 %v239, %v230
  %v258 = vpack.c.b16 %v240, %v231
  %v259 = vpack.c.b16 %v241, %v232
  %v422 = vunpack.c.l.b16 %v35
  %v423 = vunpack.c.l.b16 %v36
  %v424 = vunpack.c.l.b16 %v37
  %v425 = vunpack.c.l.b16 %v38
  %v426 = vunpack.c.l.b16 %v39
  %v427 = vunpack.c.l.b16 %v40
  %v428 = vunpack.c.l.b16 %v41
  %v429 = vunpack.c.l.b16 %v42
  %v430 = vunpack.c.l.b16 %v43
  %v431 = vunpack.c.l.b16 %v44
  %v432 = vunpack.c.l.b16 %v45
  %v433 = vunpack.c.l.b16 %v46
  %v434 = vunpack.c.l.b16 %v47
  %v435 = vunpack.c.l.b16 %v48
  %v436 = vunpack.c.l.b16 %v49
  %v437 = vunpack.c.l.b16 %v50
  %v438 = vunpack.c.l.b16 %v51
  %v439 = vunpack.c.l.b16 %v52
  %v440 = vunpack.c.l.b16 %v53
  %v441 = vunpack.c.l.b16 %v54
  %v442 = vunpack.c.l.b16 %v55
  %v443 = vunpack.c.l.b16 %v56
  %v444 = vunpack.c.l.b16 %v57
  %v445 = vunpack.c.l.b16 %v58
  %v446 = vunpack.c.l.b16 %v59
  %v447 = vunpack.c.l.b16 %v60
  %v448 = vunpack.c.l.b16 %v61
  %v449 = vunpack.c.l.b16 %v62
  %v450 = vunpack.c.l.b16 %v63
  %v451 = vunpack.c.l.b16 %v64
  %v452 = vunpack.c.l.b16 %v65
  %v453 = vunpack.c.l.b16 %v66
  %v454 = vunpack.c.l.b16 %v67
  %v455 = vunpack.c.l.b16 %v68
  %v456 = vunpack.c.l.b16 %v69
  %v457 = vunpack.c.l.b16 %v70
  %v458 = vunpack.c.l.b16 %v71
  %v459 = vunpack.c.l.b16 %v72
  %v460 = vunpack.c.l.b16 %v73
  %v461 = vunpack.c.l.b16 %v74
  %v462 = vunpack.c.l.b16 %v75
  %v463 = vunpack.c.l.b16 %v76
  %v464 = vunpack.c.l.b16 %v77
  %v465 = vunpack.c.l.b16 %v78
  %v466 = vunpack.c.l.b16 %v79
  %v467 = vunpack.c.l.b16 %v80
  %v468 = vunpack.c.l.b16 %v81
  %v469 = vunpack.c.l.b16 %v82
  %v470 = vunpack.c.l.b16 %v83
  %v471 = vunpack.c.l.b16 %v84
  %v472 = vunpack.c.l.b16 %v85
  %v473 = vunpack.c.l.b16 %v86
  %v474 = vunpack.c.l.b16 %v87
  %v475 = vunpack.c.l.b16 %v88
  %v476 = vunpack.c.l.b16 %v89
  %v477 = vunpack.c.l.b16 %v90
  %v478 = vunpack.c.l.b16 %v91
  %v479 = vunpack.c.l.b16 %v92
  %v480 = vunpack.c.l.b16 %v93
  %v481 = vunpack.c.l.b16 %v94
  %v482 = vunpack.c.l.b16 %v95
  %v483 = vunpack.c.l.b16 %v96
  %v484 = vunpack.c.l.b16 %v97
  %v485 = vunpack.c.l.b16 %v98
  %v486 = vunpack.c.l.b16 %v99
  %v487 = vunpack.c.l.b16 %v100
  %v488 = vunpack.c.l.b16 %v101
  %v489 = vunpack.c.l.b16 %v102
  %v490 = vunpack.c.l.b16 %v103
  %v491 = vunpack.c.l.b16 %v104
  %v492 = vunpack.c.l.b16 %v105
  %v493 = vunpack.c.l.b16 %v106
  %v494 = vunpack.c.l.b16 %v107
  %v495 = vunpack.c.l.b16 %v108
  %v496 = vunpack.c.l.b16 %v109
  %v497 = vunpack.c.l.b16 %v110
  %v498 = vunpack.c.l.b16 %v111
  %v499 = vunpack.c.l.b16 %v112
  %v500 = vunpack.c.l.b16 %v113
  %v501 = vunpack.c.l.b16 %v114
  %v502 = vunpack.c.l.b16 %v115
  %v503 = vunpack.c.l.b16 %v116
  %v504 = vunpack.c.l.b16 %v117
  %v505 = vunpack.c.l.b16 %v118
  %v506 = vunpack.c.l.b16 %v119
  %v507 = vunpack.c.l.b16 %v120
  %v508 = vunpack.c.l.b16 %v121
  %v509 = vunpack.c.l.b16 %v122
  %v510 = vunpack.c.l.b16 %v123
  %v511 = vunpack.c.l.b16 %v124
  %v512 = vunpack.c.l.b16 %v125
  %v513 = vunpack.c.l.b16 %v126
  %v514 = vunpack.c.l.b16 %v127
  %v515 = vunpack.c.l.b16 %v128
  %v516 = vunpack.c.l.b16 %v129
  %v517 = vunpack.c.l.b16 %v130
  %v518 = vunpack.c.l.b16 %v131
  %v519 = vunpack.c.l.b16 %v132
  %v520 = vunpack.c.l.b16 %v133
  %v521 = vunpack.c.l.b16 %v134
  %v522 = vunpack.c.l.b16 %v135
  %v523 = vunpack.c.l.b16 %v136
  %v524 = vunpack.c.l.b16 %v137
  %v525 = vunpack.c.l.b16 %v138
  %v526 = vunpack.c.l.b16 %v139
  %v527 = vunpack.c.l.b16 %v140
  %v528 = vunpack.c.l.b16 %v141
  %v529 = vunpack.c.l.b16 %v142
  %v530 = vunpack.c.l.b16 %v143
  %v531 = vunpack.c.l.b16 %v144
  %v532 = vunpack.c.l.b16 %v145
  %v533 = vunpack.c.l.b16 %v146
  %v534 = vunpack.c.l.b16 %v147
  %v535 = vunpack.c.l.b16 %v148
  %v536 = vunpack.c.l.b16 %v149
  %v537 = vunpack.c.l.b16 %v150
  %v538 = vunpack.c.l.b16 %v151
  %v539 = vunpack.c.l.b16 %v152
  %v540 = vunpack.c.l.b16 %v153
  %v541 = vunpack.c.l.b16 %v154
  %v542 = vunpack.c.l.b16 %v155
  %v543 = vunpack.c.l.b16 %v156
  %v544 = vunpack.c.l.b16 %v157
  %v545 = vunpack.c.l.b16 %v158
  %v546 = vunpack.c.l.b16 %v159
  %v547 = vunpack.c.l.b16 %v160
  %v548 = vunpack.c.l.b16 %v161
  %v549 = vunpack.c.l.b16 %v162
  %v550 = vunpack.c.l.b16 %v163
  %v551 = vunpack.c.l.b16 %v164
  %v552 = vunpack.c.l.b16 %v165
  %v553 = vunpack.c.l.b16 %v166
  %v554 = vunpack.c.l.b16 %v167
  %v555 = vunpack.c.l.b16 %v168
  %v556 = vunpack.c.l.b16 %v169
  %v557 = vunpack.c.l.b16 %v170
  %v558 = vunpack.c.l.b16 %v171
  %v559 = vunpack.c.l.b16 %v172
  %v560 = vunpack.c.l.b16 %v173
  %v561 = vunpack.c.l.b16 %v174
  %v562 = vunpack.c.l.b16 %v175
  %v563 = vunpack.c.l.b16 %v176
  %v564 = vunpack.c.l.b16 %v177
  %v565 = vunpack.c.l.b16 %v178
  %v566 = vpack.c.b16 %v423, %v422
  %v567 = vpack.c.b16 %v425, %v424
  %v568 = vpack.c.b16 %v427, %v426
  %v569 = vpack.c.b16 %v429, %v428
  %v570 = vpack.c.b16 %v431, %v430
  %v571 = vpack.c.b16 %v433, %v432
  %v572 = vpack.c.b16 %v435, %v434
  %v573 = vpack.c.b16 %v437, %v436
  %v574 = vpack.c.b16 %v439, %v438
  %v575 = vpack.c.b16 %v441, %v440
  %v576 = vpack.c.b16 %v443, %v442
  %v577 = vpack.c.b16 %v445, %v444
  %v578 = vpack.c.b16 %v447, %v446
  %v579 = vpack.c.b16 %v449, %v448
  %v580 = vpack.c.b16 %v451, %v450
  %v581 = vpack.c.b16 %v453, %v452
  %v582 = vpack.c.b16 %v455, %v454
  %v583 = vpack.c.b16 %v457, %v456
  %v584 = vpack.c.b16 %v459, %v458
  %v585 = vpack.c.b16 %v461, %v460
  %v586 = vpack.c.b16 %v463, %v462
  %v587 = vpack.c.b16 %v465, %v464
  %v588 = vpack.c.b16 %v467, %v466
  %v589 = vpack.c.b16 %v469, %v468
  %v590 = vpack.c.b16 %v471, %v470
  %v591 = vpack.c.b16 %v473, %v472
  %v592 = vpack.c.b16 %v475, %v474
  %v593 = vpack.c.b16 %v477, %v476
  %v594 = vpack.c.b16 %v479, %v478
  %v595 = vpack.c.b16 %v481, %v480
  %v596 = vpack.c.b16 %v483, %v482
  %v597 = vpack.c.b16 %v485, %v484
  %v598 = vpack.c.b16 %v487, %v486
  %v599 = vpack.c.b16 %v489, %v488
  %v600 = vpack.c.b16 %v491, %v490
  %v601 = vpack.c.b16 %v493, %v492
  %v602 = vpack.c.b16 %v495, %v494
  %v603 = vpack.c.b16 %v497, %v496
  %v604 = vpack.c.b16 %v499, %v498
  %v605 = vpack.c.b16 %v501, %v500
  %v606 = vpack.c.b16 %v503, %v502
  %v607 = vpack.c.b16 %v505, %v504
  %v608 = vpack.c.b16 %v507, %v506
  %v609 = vpack.c.b16 %v509, %v508
  %v610 = vpack.c.b16 %v511, %v510
  %v611 = vpack.c.b16 %v513, %v512
  %v612 = vpack.c.b16 %v515, %v514
  %v613 = vpack.c.b16 %v517, %v516
  %v614 = vpack.c.b16 %v519, %v518
  %v615 = vpack.c.b16 %v521, %v520
  %v616 = vpack.c.b16 %v523, %v522
  %v617 = vpack.c.b16 %v525, %v524
  %v618 = vpack.c.b16 %v527, %v526
  %v619 = vpack.c.b16 %v529, %v528
  %v620 = vpack.c.b16 %v531, %v530
  %v621 = vpack.c.b16 %v533, %v532
  %v622 = vpack.c.b16 %v535, %v534
  %v623 = vpack.c.b16 %v537, %v536
  %v624 = vpack.c.b16 %v539, %v538
  %v625 = vpack.c.b16 %v541, %v540
  %v626 = vpack.c.b16 %v543, %v542
  %v627 = vpack.c.b16 %v545, %v544
  %v628 = vpack.c.b16 %v547, %v546
  %v629 = vpack.c.b16 %v549, %v548
  %v630 = vpack.c.b16 %v551, %v550
  %v631 = vpack.c.b16 %v553, %v552
  %v632 = vpack.c.b16 %v555, %v554
  %v633 = vpack.c.b16 %v557, %v556
  %v634 = vpack.c.b16 %v559, %v558
  %v635 = vpack.c.b16 %v561, %v560
  %v636 = vpack.c.b16 %v563, %v562
  %v637 = vpack.c.b16 %v565, %v564
  %710 = vmatprep.subr.bf16.mxu0 0
  %711 = vmatpush1.bf16.msra.mxu0 %v566
  %712 = vmatprep.subr.bf16.mxu0 0
  %713 = vmatpush1.bf16.msra.mxu0 %v567
  %714 = vmatprep.subr.bf16.mxu0 0
  %715 = vmatpush1.bf16.msra.mxu0 %v568
  %716 = vmatprep.subr.bf16.mxu0 0
  %717 = vmatpush1.bf16.msra.mxu0 %v569
  %718 = vmatprep.subr.bf16.mxu0 0
  %719 = vmatpush1.bf16.msra.mxu0 %v570
  %720 = vmatprep.subr.bf16.mxu0 0
  %721 = vmatpush1.bf16.msra.mxu0 %v571
  %722 = vmatprep.subr.bf16.mxu0 0
  %723 = vmatpush1.bf16.msra.mxu0 %v572
  %724 = vmatprep.subr.bf16.mxu0 0
  %725 = vmatpush1.bf16.msra.mxu0 %v573
  %726 = vmatprep.subr.bf16.mxu0 0
  %727 = vmatpush1.bf16.msra.mxu0 %v574
  %728 = vmatprep.subr.bf16.mxu0 0
  %729 = vmatpush1.bf16.msra.mxu0 %v575
  %730 = vmatprep.subr.bf16.mxu0 0
  %731 = vmatpush1.bf16.msra.mxu0 %v576
  %732 = vmatprep.subr.bf16.mxu0 0
  %733 = vmatpush1.bf16.msra.mxu0 %v577
  %734 = vmatprep.subr.bf16.mxu0 0
  %735 = vmatpush1.bf16.msra.mxu0 %v578
  %736 = vmatprep.subr.bf16.mxu0 0
  %737 = vmatpush1.bf16.msra.mxu0 %v579
  %738 = vmatprep.subr.bf16.mxu0 0
  %739 = vmatpush1.bf16.msra.mxu0 %v580
  %740 = vmatprep.subr.bf16.mxu0 0
  %741 = vmatpush1.bf16.msra.mxu0 %v581
  %742 = vmatprep.mubr.bf16.mxu0 %v243
  %743 = vmatmul.mubr.bf16.gmra.mrb[0].mxu0 %v242
  %v744 = vpop.f32.mrb[0].mxu0
  %v745 = vadd.f32 %v184, %v744
  %v746 = vpop.f32.mrb[0].mxu0
  %v747 = vpop.f32.mrb[0].mxu0
  %v748 = vadd.f32 %v184, %v747
  %v749 = vpop.f32.mrb[0].mxu0
  %750 = vmatprep.mubr.bf16.mxu0 %v252
  %751 = vmatmul.mubr.bf16.gmra.mrb[0].mxu0 %v251
  %v752 = vpop.f32.mrb[0].mxu0
  %v753 = vadd.f32 %v184, %v752
  %v754 = vpop.f32.mrb[0].mxu0
  %v755 = vpop.f32.mrb[0].mxu0
  %v756 = vadd.f32 %v184, %v755
  %v757 = vpop.f32.mrb[0].mxu0
  %758 = vdwg.mxu0
  %759 = vmatprep.subr.bf16.mxu0 0
  %760 = vmatpush1.bf16.msra.mxu0 %v582
  %761 = vmatprep.subr.bf16.mxu0 0
  %762 = vmatpush1.bf16.msra.mxu0 %v583
  %763 = vmatprep.subr.bf16.mxu0 0
  %764 = vmatpush1.bf16.msra.mxu0 %v584
  %765 = vmatprep.subr.bf16.mxu0 0
  %766 = vmatpush1.bf16.msra.mxu0 %v585
  %767 = vmatprep.subr.bf16.mxu0 0
  %768 = vmatpush1.bf16.msra.mxu0 %v586
  %769 = vmatprep.subr.bf16.mxu0 0
  %770 = vmatpush1.bf16.msra.mxu0 %v587
  %771 = vmatprep.subr.bf16.mxu0 0
  %772 = vmatpush1.bf16.msra.mxu0 %v588
  %773 = vmatprep.subr.bf16.mxu0 0
  %774 = vmatpush1.bf16.msra.mxu0 %v589
  %775 = vmatprep.subr.bf16.mxu0 0
  %776 = vmatpush1.bf16.msra.mxu0 %v590
  %777 = vmatprep.subr.bf16.mxu0 0
  %778 = vmatpush1.bf16.msra.mxu0 %v591
  %779 = vmatprep.subr.bf16.mxu0 0
  %780 = vmatpush1.bf16.msra.mxu0 %v592
  %781 = vmatprep.subr.bf16.mxu0 0
  %782 = vmatpush1.bf16.msra.mxu0 %v593
  %783 = vmatprep.subr.bf16.mxu0 0
  %784 = vmatpush1.bf16.msra.mxu0 %v594
  %785 = vmatprep.subr.bf16.mxu0 0
  %786 = vmatpush1.bf16.msra.mxu0 %v595
  %787 = vmatprep.subr.bf16.mxu0 0
  %788 = vmatpush1.bf16.msra.mxu0 %v596
  %789 = vmatprep.subr.bf16.mxu0 0
  %790 = vmatpush1.bf16.msra.mxu0 %v597
  %791 = vmatprep.mubr.bf16.mxu0 %v245
  %792 = vmatmul.mubr.bf16.gmra.mrb[0].mxu0 %v244
  %v793 = vpop.f32.mrb[0].mxu0
  %v794 = vadd.f32 %v745, %v793
  %v795 = vpop.f32.mrb[0].mxu0
  %v796 = vpop.f32.mrb[0].mxu0
  %v797 = vadd.f32 %v748, %v796
  %v798 = vpop.f32.mrb[0].mxu0
  %799 = vmatprep.mubr.bf16.mxu0 %v254
  %800 = vmatmul.mubr.bf16.gmra.mrb[0].mxu0 %v253
  %v801 = vpop.f32.mrb[0].mxu0
  %v802 = vadd.f32 %v753, %v801
  %v803 = vpop.f32.mrb[0].mxu0
  %v804 = vpop.f32.mrb[0].mxu0
  %v805 = vadd.f32 %v756, %v804
  %v806 = vpop.f32.mrb[0].mxu0
  %807 = vdwg.mxu0
  %808 = vmatprep.subr.bf16.mxu0 0
  %809 = vmatpush1.bf16.msra.mxu0 %v598
  %810 = vmatprep.subr.bf16.mxu0 0
  %811 = vmatpush1.bf16.msra.mxu0 %v599
  %812 = vmatprep.subr.bf16.mxu0 0
  %813 = vmatpush1.bf16.msra.mxu0 %v600
  %814 = vmatprep.subr.bf16.mxu0 0
  %815 = vmatpush1.bf16.msra.mxu0 %v601
  %816 = vmatprep.subr.bf16.mxu0 0
  %817 = vmatpush1.bf16.msra.mxu0 %v602
  %818 = vmatprep.subr.bf16.mxu0 0
  %819 = vmatpush1.bf16.msra.mxu0 %v603
  %820 = vmatprep.subr.bf16.mxu0 0
  %821 = vmatpush1.bf16.msra.mxu0 %v604
  %822 = vmatprep.subr.bf16.mxu0 0
  %823 = vmatpush1.bf16.msra.mxu0 %v605
  %824 = vmatprep.subr.bf16.mxu0 0
  %825 = vmatpush1.bf16.msra.mxu0 %v606
  %826 = vmatprep.subr.bf16.mxu0 0
  %827 = vmatpush1.bf16.msra.mxu0 %v607
  %828 = vmatprep.subr.bf16.mxu0 0
  %829 = vmatpush1.bf16.msra.mxu0 %v608
  %830 = vmatprep.subr.bf16.mxu0 0
  %831 = vmatpush1.bf16.msra.mxu0 %v609
  %832 = vmatprep.subr.bf16.mxu0 0
  %833 = vmatpush1.bf16.msra.mxu0 %v610
  %834 = vmatprep.subr.bf16.mxu0 0
  %835 = vmatpush1.bf16.msra.mxu0 %v611
  %836 = vmatprep.subr.bf16.mxu0 0
  %837 = vmatpush1.bf16.msra.mxu0 %v612
  %838 = vmatprep.subr.bf16.mxu0 0
  %839 = vmatpush1.bf16.msra.mxu0 %v613
  %840 = vmatprep.mubr.bf16.mxu0 %v247
  %841 = vmatmul.mubr.bf16.gmra.mrb[0].mxu0 %v246
  %v842 = vpop.f32.mrb[0].mxu0
  %v843 = vadd.f32 %v794, %v842
  %v844 = vpop.f32.mrb[0].mxu0
  %v845 = vpop.f32.mrb[0].mxu0
  %v846 = vadd.f32 %v797, %v845
  %v847 = vpop.f32.mrb[0].mxu0
  %848 = vmatprep.mubr.bf16.mxu0 %v256
  %849 = vmatmul.mubr.bf16.gmra.mrb[0].mxu0 %v255
  %v850 = vpop.f32.mrb[0].mxu0
  %v851 = vadd.f32 %v802, %v850
  %v852 = vpop.f32.mrb[0].mxu0
  %v853 = vpop.f32.mrb[0].mxu0
  %v854 = vadd.f32 %v805, %v853
  %v855 = vpop.f32.mrb[0].mxu0
  %856 = vdwg.mxu0
  %857 = vmatprep.subr.bf16.mxu0 0
  %858 = vmatpush1.bf16.msra.mxu0 %v614
  %859 = vmatprep.subr.bf16.mxu0 0
  %860 = vmatpush1.bf16.msra.mxu0 %v615
  %861 = vmatprep.subr.bf16.mxu0 0
  %862 = vmatpush1.bf16.msra.mxu0 %v616
  %863 = vmatprep.subr.bf16.mxu0 0
  %864 = vmatpush1.bf16.msra.mxu0 %v617
  %865 = vmatprep.subr.bf16.mxu0 0
  %866 = vmatpush1.bf16.msra.mxu0 %v618
  %867 = vmatprep.subr.bf16.mxu0 0
  %868 = vmatpush1.bf16.msra.mxu0 %v619
  %869 = vmatprep.subr.bf16.mxu0 0
  %870 = vmatpush1.bf16.msra.mxu0 %v620
  %871 = vmatprep.subr.bf16.mxu0 0
  %872 = vmatpush1.bf16.msra.mxu0 %v621
  %873 = vmatprep.subr.bf16.mxu0 0
  %874 = vmatpush1.bf16.msra.mxu0 %v622
  %875 = vmatprep.subr.bf16.mxu0 0
  %876 = vmatpush1.bf16.msra.mxu0 %v623
  %877 = vmatprep.subr.bf16.mxu0 0
  %878 = vmatpush1.bf16.msra.mxu0 %v624
  %879 = vmatprep.subr.bf16.mxu0 0
  %880 = vmatpush1.bf16.msra.mxu0 %v625
  %881 = vmatprep.subr.bf16.mxu0 0
  %882 = vmatpush1.bf16.msra.mxu0 %v626
  %883 = vmatprep.subr.bf16.mxu0 0
  %884 = vmatpush1.bf16.msra.mxu0 %v627
  %885 = vmatprep.subr.bf16.mxu0 0
  %886 = vmatpush1.bf16.msra.mxu0 %v628
  %887 = vmatprep.subr.bf16.mxu0 0
  %888 = vmatpush1.bf16.msra.mxu0 %v629
  %889 = vmatprep.mubr.bf16.mxu0 %v249
  %890 = vmatmul.mubr.bf16.gmra.mrb[0].mxu0 %v248
  %v891 = vpop.f32.mrb[0].mxu0
  %v892 = vadd.f32 %v843, %v891
  %v893 = vpop.f32.mrb[0].mxu0
  %v894 = vpop.f32.mrb[0].mxu0
  %v895 = vadd.f32 %v846, %v894
  %v896 = vpop.f32.mrb[0].mxu0
  %897 = vmatprep.mubr.bf16.mxu0 %v258
  %898 = vmatmul.mubr.bf16.gmra.mrb[0].mxu0 %v257
  %v899 = vpop.f32.mrb[0].mxu0
  %v900 = vadd.f32 %v851, %v899
  %v901 = vpop.f32.mrb[0].mxu0
  %v902 = vpop.f32.mrb[0].mxu0
  %v903 = vadd.f32 %v854, %v902
  %v904 = vpop.f32.mrb[0].mxu0
  %905 = vdwg.mxu0
  %906 = vmatprep.subr.bf16.mxu0 0
  %907 = vmatpush1.bf16.msra.mxu0 %v630
  %908 = vmatprep.subr.bf16.mxu0 0
  %909 = vmatpush1.bf16.msra.mxu0 %v631
  %910 = vmatprep.subr.bf16.mxu0 0
  %911 = vmatpush1.bf16.msra.mxu0 %v632
  %912 = vmatprep.subr.bf16.mxu0 0
  %913 = vmatpush1.bf16.msra.mxu0 %v633
  %914 = vmatprep.subr.bf16.mxu0 0
  %915 = vmatpush1.bf16.msra.mxu0 %v634
  %916 = vmatprep.subr.bf16.mxu0 0
  %917 = vmatpush1.bf16.msra.mxu0 %v635
  %918 = vmatprep.subr.bf16.mxu0 0
  %919 = vmatpush1.bf16.msra.mxu0 %v636
  %920 = vmatprep.subr.bf16.mxu0 0
  %921 = vmatpush1.bf16.msra.mxu0 %v637
  %922 = vmatprep.subr.bf16.mxu0 0
  %923 = vmatpush1.bf16.msra.mxu0 0
  %924 = vmatprep.subr.bf16.mxu0 0
  %925 = vmatpush1.bf16.msra.mxu0 0
  %926 = vmatprep.subr.bf16.mxu0 0
  %927 = vmatpush1.bf16.msra.mxu0 0
  %928 = vmatprep.subr.bf16.mxu0 0
  %929 = vmatpush1.bf16.msra.mxu0 0
  %930 = vmatprep.subr.bf16.mxu0 0
  %931 = vmatpush1.bf16.msra.mxu0 0
  %932 = vmatprep.subr.bf16.mxu0 0
  %933 = vmatpush1.bf16.msra.mxu0 0
  %934 = vmatprep.subr.bf16.mxu0 0
  %935 = vmatpush1.bf16.msra.mxu0 0
  %936 = vmatprep.subr.bf16.mxu0 0
  %937 = vmatpush1.bf16.msra.mxu0 0
  %938 = vmatprep.mubr.bf16.mxu0 0
  %939 = vmatmul.mubr.bf16.gmra.mrb[0].mxu0 %v250
  %v940 = vpop.f32.mrb[0].mxu0
  %v941 = vadd.f32 %v892, %v940
  %v942 = vpop.f32.mrb[0].mxu0
  %v943 = vpop.f32.mrb[0].mxu0
  %v944 = vadd.f32 %v895, %v943
  %v945 = vpop.f32.mrb[0].mxu0
  %946 = vmatprep.mubr.bf16.mxu0 0
  %947 = vmatmul.mubr.bf16.gmra.mrb[0].mxu0 %v259
  %v948 = vpop.f32.mrb[0].mxu0
  %v949 = vadd.f32 %v900, %v948
  %v950 = vpop.f32.mrb[0].mxu0
  %v951 = vpop.f32.mrb[0].mxu0
  %v952 = vadd.f32 %v903, %v951
  %v953 = vpop.f32.mrb[0].mxu0
  %954 = vdwg.mxu0
  %v955 = vmax.f32 %v941, 0.0
  %v956 = vmax.f32 %v944, 0.0
  %v957 = vmax.f32 %v949, 0.0
  %v958 = vmax.f32 %v952, 0.0
  %v959 = vpack.c.bf16 %v956, %v955
  %v960 = vpack.c.bf16 %v958, %v957
  %v963 = vunpack.c.l.b16 %v959
  %v964 = vunpack.c.h.b16 %v959
  %v965 = vunpack.c.l.b16 %v960
  %v966 = vunpack.c.h.b16 %v960
  %v967 = vpack.c.b16 %v963, %v963
  %v968 = vpack.c.b16 %v964, %v964
  %v969 = vpack.c.b16 %v965, %v965
  %v970 = vpack.c.b16 %v966, %v966
  %975 = vst [vmem:[%s3] sm:$0xf] %v967
  %976 = vst [vmem:[%s3 + $0x4] sm:$0xf] %v968
  %977 = vst [vmem:[%s3 + $0x8] sm:$0xf] %v969
  %978 = vst [vmem:[%s3 + $0xc] sm:$0xf] %v970
  // Predicated region
  $region14: #{_lambda_.47} parent=0 // pred_check
    _
  $region15: #{_lambda_.47} parent=0 // pred_check_branch
    %980 = sbr.rel (0) target = $region17
  $region16: #{_lambda_.47} parent=0 // pred_region
    _
  $region17: #{_lambda_.47} parent=0 // pred_fallthru
    _
  // Predicated region
  $region18: #{_lambda_.47} parent=0 // pred_check
    _
  $region19: #{_lambda_.47} parent=0 // pred_check_branch
    %982 = sbr.rel (0) target = $region21
  $region20: #{_lambda_.47} parent=0 // pred_region
    _
  $region21: #{_lambda_.47} parent=0 // pred_fallthru
    _

// kernel: _lambda_.50
$region0: #{_lambda_.50}
  #allocation0 [shape = 'u32[]', space=smem, size = 0x4, offset = 0x4, fixed_abs, tag = 'smem constant byte address 0x4 - core index']
  #allocation1 [shape = 'u32[144,128]{1,0:T(1,128)}', space=vmem, size = 0x12000, scoped, tag = 'internal scratch']
  %s0 = inlined_call_operand.vmem [shape: bf16[32,128], index: 0, kind: input, shape index: {}]
  %s1 = inlined_call_operand.vmem [shape: bf16[128,128], index: 1, kind: input, shape index: {}]
  %s2 = inlined_call_operand.vmem [shape: f32[1,128], index: 2, kind: input, shape index: {}]
  %s3 = inlined_call_operand.vmem [shape: bf16[32,128], index: 3, kind: output, shape index: {}]
  %s4 = sld [smem:[#allocation0]]
  $region22: #{_lambda_.50} parent=0
    _
  %s6 = ssub.s32 1, %s4
  %s7 = scalar_select 0, %s6, %s4
  // Predicated region
  $region2: #{_lambda_.50} parent=0 // pred_check
    _
  $region3: #{_lambda_.50} parent=0 // pred_check_branch
    %9 = sbr.rel (0) target = $region5
  $region4: #{_lambda_.50} parent=0 // pred_region
    _
  $region5: #{_lambda_.50} parent=0 // pred_fallthru
    _
  // Predicated region
  $region6: #{_lambda_.50} parent=0 // pred_check
    _
  $region7: #{_lambda_.50} parent=0 // pred_check_branch
    %11 = sbr.rel (0) target = $region9
  $region8: #{_lambda_.50} parent=0 // pred_region
    _
  $region9: #{_lambda_.50} parent=0 // pred_fallthru
    _
  // Predicated region
  $region10: #{_lambda_.50} parent=0 // pred_check
    _
  $region11: #{_lambda_.50} parent=0 // pred_check_branch
    %13 = sbr.rel (0) target = $region13
  $region12: #{_lambda_.50} parent=0 // pred_region
    _
  $region13: #{_lambda_.50} parent=0 // pred_fallthru
    _
  %v15 = vld [vmem:[%s0] sm:$0xf]
  %v16 = vld [vmem:[%s0 + $0x4] sm:$0xf]
  %v17 = vld [vmem:[%s0 + $0x8] sm:$0xf]
  %v18 = vld [vmem:[%s0 + $0xc] sm:$0xf]
  %v19 = vld [vmem:[%s1] sm:$0xf]
  %v20 = vld [vmem:[%s1 + $0x4] sm:$0xf]
  %v21 = vld [vmem:[%s1 + $0x8] sm:$0xf]
  %v22 = vld [vmem:[%s1 + $0xc] sm:$0xf]
  %v23 = vld [vmem:[%s1 + $0x10] sm:$0xf]
  %v24 = vld [vmem:[%s1 + $0x14] sm:$0xf]
  %v25 = vld [vmem:[%s1 + $0x18] sm:$0xf]
  %v26 = vld [vmem:[%s1 + $0x1c] sm:$0xf]
  %v27 = vld [vmem:[%s1 + $0x20] sm:$0xf]
  %v28 = vld [vmem:[%s1 + $0x24] sm:$0xf]
  %v29 = vld [vmem:[%s1 + $0x28] sm:$0xf]
  %v30 = vld [vmem:[%s1 + $0x2c] sm:$0xf]
  %v31 = vld [vmem:[%s1 + $0x30] sm:$0xf]
  %v32 = vld [vmem:[%s1 + $0x34] sm:$0xf]
  %v33 = vld [vmem:[%s1 + $0x38] sm:$0xf]
  %v34 = vld [vmem:[%s1 + $0x3c] sm:$0xf]
  %v35 = vld [vmem:[%s2] sm:$0x1]
  %v37 = vlaneseq
  %v38 = vshrl.u32 %v37, 7
  %v39 = vsub.s32 0, %v38
  %v40 = vrot.slane %v35, %v39
  %v46 = vunpack.c.l.b16 %v15
  %v47 = vunpack.c.l.b16 %v16
  %v48 = vunpack.c.l.b16 %v17
  %v49 = vunpack.c.l.b16 %v18
  %v50 = vpack.c.b16 %v47, %v46
  %v51 = vpack.c.b16 %v49, %v48
  %v70 = vunpack.c.l.b16 %v19
  %v71 = vunpack.c.l.b16 %v20
  %v72 = vunpack.c.l.b16 %v21
  %v73 = vunpack.c.l.b16 %v22
  %v74 = vunpack.c.l.b16 %v23
  %v75 = vunpack.c.l.b16 %v24
  %v76 = vunpack.c.l.b16 %v25
  %v77 = vunpack.c.l.b16 %v26
  %v78 = vunpack.c.l.b16 %v27
  %v79 = vunpack.c.l.b16 %v28
  %v80 = vunpack.c.l.b16 %v29
  %v81 = vunpack.c.l.b16 %v30
  %v82 = vunpack.c.l.b16 %v31
  %v83 = vunpack.c.l.b16 %v32
  %v84 = vunpack.c.l.b16 %v33
  %v85 = vunpack.c.l.b16 %v34
  %v86 = vpack.c.b16 %v71, %v70
  %v87 = vpack.c.b16 %v73, %v72
  %v88 = vpack.c.b16 %v75, %v74
  %v89 = vpack.c.b16 %v77, %v76
  %v90 = vpack.c.b16 %v79, %v78
  %v91 = vpack.c.b16 %v81, %v80
  %v92 = vpack.c.b16 %v83, %v82
  %v93 = vpack.c.b16 %v85, %v84
  %102 = vmatprep.subr.bf16.mxu0 0
  %103 = vmatpush1.bf16.msra.mxu0 %v86
  %104 = vmatprep.subr.bf16.mxu0 0
  %105 = vmatpush1.bf16.msra.mxu0 %v87
  %106 = vmatprep.subr.bf16.mxu0 0
  %107 = vmatpush1.bf16.msra.mxu0 %v88
  %108 = vmatprep.subr.bf16.mxu0 0
  %109 = vmatpush1.bf16.msra.mxu0 %v89
  %110 = vmatprep.subr.bf16.mxu0 0
  %111 = vmatpush1.bf16.msra.mxu0 %v90
  %112 = vmatprep.subr.bf16.mxu0 0
  %113 = vmatpush1.bf16.msra.mxu0 %v91
  %114 = vmatprep.subr.bf16.mxu0 0
  %115 = vmatpush1.bf16.msra.mxu0 %v92
  %116 = vmatprep.subr.bf16.mxu0 0
  %117 = vmatpush1.bf16.msra.mxu0 %v93
  %118 = vmatprep.subr.bf16.mxu0 0
  %119 = vmatpush1.bf16.msra.mxu0 0
  %120 = vmatprep.subr.bf16.mxu0 0
  %121 = vmatpush1.bf16.msra.mxu0 0
  %122 = vmatprep.subr.bf16.mxu0 0
  %123 = vmatpush1.bf16.msra.mxu0 0
  %124 = vmatprep.subr.bf16.mxu0 0
  %125 = vmatpush1.bf16.msra.mxu0 0
  %126 = vmatprep.subr.bf16.mxu0 0
  %127 = vmatpush1.bf16.msra.mxu0 0
  %128 = vmatprep.subr.bf16.mxu0 0
  %129 = vmatpush1.bf16.msra.mxu0 0
  %130 = vmatprep.subr.bf16.mxu0 0
  %131 = vmatpush1.bf16.msra.mxu0 0
  %132 = vmatprep.subr.bf16.mxu0 0
  %133 = vmatpush1.bf16.msra.mxu0 0
  %134 = vmatprep.mubr.bf16.mxu0 0
  %135 = vmatmul.mubr.bf16.gmra.mrb[0].mxu0 %v50
  %v136 = vpop.f32.mrb[0].mxu0
  %v137 = vadd.f32 %v40, %v136
  %v138 = vpop.f32.mrb[0].mxu0
  %v139 = vpop.f32.mrb[0].mxu0
  %v140 = vadd.f32 %v40, %v139
  %v141 = vpop.f32.mrb[0].mxu0
  %142 = vmatprep.mubr.bf16.mxu0 0
  %143 = vmatmul.mubr.bf16.gmra.mrb[0].mxu0 %v51
  %v144 = vpop.f32.mrb[0].mxu0
  %v145 = vadd.f32 %v40, %v144
  %v146 = vpop.f32.mrb[0].mxu0
  %v147 = vpop.f32.mrb[0].mxu0
  %v148 = vadd.f32 %v40, %v147
  %v149 = vpop.f32.mrb[0].mxu0
  %150 = vdwg.mxu0
  %v151 = vmax.f32 %v137, 0.0
  %v152 = vmax.f32 %v140, 0.0
  %v153 = vmax.f32 %v145, 0.0
  %v154 = vmax.f32 %v148, 0.0
  %v155 = vpack.c.bf16 %v152, %v151
  %v156 = vpack.c.bf16 %v154, %v153
  %v159 = vunpack.c.l.b16 %v155
  %v160 = vunpack.c.h.b16 %v155
  %v161 = vunpack.c.l.b16 %v156
  %v162 = vunpack.c.h.b16 %v156
  %v163 = vpack.c.b16 %v159, %v159
  %v164 = vpack.c.b16 %v160, %v160
  %v165 = vpack.c.b16 %v161, %v161
  %v166 = vpack.c.b16 %v162, %v162
  %171 = vst [vmem:[%s3] sm:$0xf] %v163
  %172 = vst [vmem:[%s3 + $0x4] sm:$0xf] %v164
  %173 = vst [vmem:[%s3 + $0x8] sm:$0xf] %v165
  %174 = vst [vmem:[%s3 + $0xc] sm:$0xf] %v166
  // Predicated region
  $region14: #{_lambda_.50} parent=0 // pred_check
    _
  $region15: #{_lambda_.50} parent=0 // pred_check_branch
    %176 = sbr.rel (0) target = $region17
  $region16: #{_lambda_.50} parent=0 // pred_region
    _
  $region17: #{_lambda_.50} parent=0 // pred_fallthru
    _
  // Predicated region
  $region18: #{_lambda_.50} parent=0 // pred_check
    _
  $region19: #{_lambda_.50} parent=0 // pred_check_branch
    %178 = sbr.rel (0) target = $region21
  $region20: #{_lambda_.50} parent=0 // pred_region
    _
  $region21: #{_lambda_.50} parent=0 // pred_fallthru
    _

// kernel: _lambda_.52
$region0: #{_lambda_.52}
  #allocation0 [shape = 'u32[]', space=smem, size = 0x4, offset = 0x4, fixed_abs, tag = 'smem constant byte address 0x4 - core index']
  #allocation1 [shape = 'u32[144,128]{1,0:T(1,128)}', space=vmem, size = 0x12000, scoped, tag = 'internal scratch']
  %s0 = inlined_call_operand.vmem [shape: bf16[8,128], index: 0, kind: input, shape index: {}]
  %s1 = inlined_call_operand.vmem [shape: bf16[128,128], index: 1, kind: input, shape index: {}]
  %s2 = inlined_call_operand.vmem [shape: f32[1,128], index: 2, kind: input, shape index: {}]
  %s3 = inlined_call_operand.vmem [shape: bf16[8,128], index: 3, kind: input, shape index: {}]
  %s4 = inlined_call_operand.vmem [shape: bf16[8,128], index: 4, kind: output, shape index: {}]
  %s5 = sld [smem:[#allocation0]]
  $region26: #{_lambda_.52} parent=0
    _
  %s7 = ssub.s32 1, %s5
  %s8 = scalar_select 0, %s7, %s5
  // Predicated region
  $region2: #{_lambda_.52} parent=0 // pred_check
    _
  $region3: #{_lambda_.52} parent=0 // pred_check_branch
    %10 = sbr.rel (0) target = $region5
  $region4: #{_lambda_.52} parent=0 // pred_region
    _
  $region5: #{_lambda_.52} parent=0 // pred_fallthru
    _
  // Predicated region
  $region6: #{_lambda_.52} parent=0 // pred_check
    _
  $region7: #{_lambda_.52} parent=0 // pred_check_branch
    %12 = sbr.rel (0) target = $region9
  $region8: #{_lambda_.52} parent=0 // pred_region
    _
  $region9: #{_lambda_.52} parent=0 // pred_fallthru
    _
  // Predicated region
  $region10: #{_lambda_.52} parent=0 // pred_check
    _
  $region11: #{_lambda_.52} parent=0 // pred_check_branch
    %14 = sbr.rel (0) target = $region13
  $region12: #{_lambda_.52} parent=0 // pred_region
    _
  $region13: #{_lambda_.52} parent=0 // pred_fallthru
    _
  // Predicated region
  $region14: #{_lambda_.52} parent=0 // pred_check
    _
  $region15: #{_lambda_.52} parent=0 // pred_check_branch
    %16 = sbr.rel (0) target = $region17
  $region16: #{_lambda_.52} parent=0 // pred_region
    _
  $region17: #{_lambda_.52} parent=0 // pred_fallthru
    _
  %v18 = vld [vmem:[%s0] sm:$0xf]
  %v19 = vld [vmem:[%s1] sm:$0xf]
  %v20 = vld [vmem:[%s1 + $0x4] sm:$0xf]
  %v21 = vld [vmem:[%s1 + $0x8] sm:$0xf]
  %v22 = vld [vmem:[%s1 + $0xc] sm:$0xf]
  %v23 = vld [vmem:[%s1 + $0x10] sm:$0xf]
  %v24 = vld [vmem:[%s1 + $0x14] sm:$0xf]
  %v25 = vld [vmem:[%s1 + $0x18] sm:$0xf]
  %v26 = vld [vmem:[%s1 + $0x1c] sm:$0xf]
  %v27 = vld [vmem:[%s1 + $0x20] sm:$0xf]
  %v28 = vld [vmem:[%s1 + $0x24] sm:$0xf]
  %v29 = vld [vmem:[%s1 + $0x28] sm:$0xf]
  %v30 = vld [vmem:[%s1 + $0x2c] sm:$0xf]
  %v31 = vld [vmem:[%s1 + $0x30] sm:$0xf]
  %v32 = vld [vmem:[%s1 + $0x34] sm:$0xf]
  %v33 = vld [vmem:[%s1 + $0x38] sm:$0xf]
  %v34 = vld [vmem:[%s1 + $0x3c] sm:$0xf]
  %v35 = vld [vmem:[%s2] sm:$0x1]
  %v37 = vlaneseq
  %v38 = vshrl.u32 %v37, 7
  %v39 = vsub.s32 0, %v38
  %v40 = vrot.slane %v35, %v39
  %v58 = vunpack.c.l.b16 %v19
  %v59 = vunpack.c.l.b16 %v20
  %v60 = vunpack.c.l.b16 %v21
  %v61 = vunpack.c.l.b16 %v22
  %v62 = vunpack.c.l.b16 %v23
  %v63 = vunpack.c.l.b16 %v24
  %v64 = vunpack.c.l.b16 %v25
  %v65 = vunpack.c.l.b16 %v26
  %v66 = vunpack.c.l.b16 %v27
  %v67 = vunpack.c.l.b16 %v28
  %v68 = vunpack.c.l.b16 %v29
  %v69 = vunpack.c.l.b16 %v30
  %v70 = vunpack.c.l.b16 %v31
  %v71 = vunpack.c.l.b16 %v32
  %v72 = vunpack.c.l.b16 %v33
  %v73 = vunpack.c.l.b16 %v34
  %v74 = vpack.c.b16 %v59, %v58
  %v75 = vpack.c.b16 %v61, %v60
  %v76 = vpack.c.b16 %v63, %v62
  %v77 = vpack.c.b16 %v65, %v64
  %v78 = vpack.c.b16 %v67, %v66
  %v79 = vpack.c.b16 %v69, %v68
  %v80 = vpack.c.b16 %v71, %v70
  %v81 = vpack.c.b16 %v73, %v72
  %90 = vmatprep.subr.bf16.mxu0 0
  %91 = vmatpush1.bf16.msra.mxu0 %v74
  %92 = vmatprep.subr.bf16.mxu0 0
  %93 = vmatpush1.bf16.msra.mxu0 %v75
  %94 = vmatprep.subr.bf16.mxu0 0
  %95 = vmatpush1.bf16.msra.mxu0 %v76
  %96 = vmatprep.subr.bf16.mxu0 0
  %97 = vmatpush1.bf16.msra.mxu0 %v77
  %98 = vmatprep.subr.bf16.mxu0 0
  %99 = vmatpush1.bf16.msra.mxu0 %v78
  %100 = vmatprep.subr.bf16.mxu0 0
  %101 = vmatpush1.bf16.msra.mxu0 %v79
  %102 = vmatprep.subr.bf16.mxu0 0
  %103 = vmatpush1.bf16.msra.mxu0 %v80
  %104 = vmatprep.subr.bf16.mxu0 0
  %105 = vmatpush1.bf16.msra.mxu0 %v81
  %106 = vmatprep.subr.bf16.mxu0 0
  %107 = vmatpush1.bf16.msra.mxu0 0
  %108 = vmatprep.subr.bf16.mxu0 0
  %109 = vmatpush1.bf16.msra.mxu0 0
  %110 = vmatprep.subr.bf16.mxu0 0
  %111 = vmatpush1.bf16.msra.mxu0 0
  %112 = vmatprep.subr.bf16.mxu0 0
  %113 = vmatpush1.bf16.msra.mxu0 0
  %114 = vmatprep.subr.bf16.mxu0 0
  %115 = vmatpush1.bf16.msra.mxu0 0
  %116 = vmatprep.subr.bf16.mxu0 0
  %117 = vmatpush1.bf16.msra.mxu0 0
  %118 = vmatprep.subr.bf16.mxu0 0
  %119 = vmatpush1.bf16.msra.mxu0 0
  %120 = vmatprep.subr.bf16.mxu0 0
  %121 = vmatpush1.bf16.msra.mxu0 0
  %122 = vmatprep.mubr.bf16.mxu0 0
  %123 = vmatmul.mubr.bf16.gmra.mrb[0].mxu0 %v18
  %v124 = vpop.f32.mrb[0].mxu0
  %v125 = vadd.f32 %v40, %v124
  %v126 = vpop.f32.mrb[0].mxu0
  %v127 = vpop.f32.mrb[0].mxu0
  %v128 = vpop.f32.mrb[0].mxu0
  %129 = vdwg.mxu0
  %v130 = vld [vmem:[%s3] sm:$0xf]
  %v131 = vunpack.c.l.bf16 %v130
  %v132 = vadd.f32 %v125, %v131
  %v133 = vmax.f32 %v132, 0.0
  %v134 = vpack.c.bf16 %v133, %v133
  %135 = vst [vmem:[%s4] sm:$0xf] %v134
  // Predicated region
  $region18: #{_lambda_.52} parent=0 // pred_check
    _
  $region19: #{_lambda_.52} parent=0 // pred_check_branch
    %137 = sbr.rel (0) target = $region21
  $region20: #{_lambda_.52} parent=0 // pred_region
    _
  $region21: #{_lambda_.52} parent=0 // pred_fallthru
    _
  // Predicated region
  $region22: #{_lambda_.52} parent=0 // pred_check
    _
  $region23: #{_lambda_.52} parent=0 // pred_check_branch
    %139 = sbr.rel (0) target = $region25
  $region24: #{_lambda_.52} parent=0 // pred_region
    _
  $region25: #{_lambda_.52} parent=0 // pred_fallthru
    _

// kernel: _lambda_.49
$region0: #{_lambda_.49}
  #allocation0 [shape = 'u32[]', space=smem, size = 0x4, offset = 0x4, fixed_abs, tag = 'smem constant byte address 0x4 - core index']
  #allocation1 [shape = 'u32[144,128]{1,0:T(1,128)}', space=vmem, size = 0x12000, scoped, tag = 'internal scratch']
  %s0 = inlined_call_operand.vmem [shape: bf16[8,128], index: 0, kind: input, shape index: {}]
  %s1 = inlined_call_operand.vmem [shape: bf16[128,128], index: 1, kind: input, shape index: {}]
  %s2 = inlined_call_operand.vmem [shape: f32[1,128], index: 2, kind: input, shape index: {}]
  %s3 = inlined_call_operand.vmem [shape: bf16[8,128], index: 3, kind: output, shape index: {}]
  %s4 = sld [smem:[#allocation0]]
  $region22: #{_lambda_.49} parent=0
    _
  %s6 = ssub.s32 1, %s4
  %s7 = scalar_select 0, %s6, %s4
  // Predicated region
  $region2: #{_lambda_.49} parent=0 // pred_check
    _
  $region3: #{_lambda_.49} parent=0 // pred_check_branch
    %9 = sbr.rel (0) target = $region5
  $region4: #{_lambda_.49} parent=0 // pred_region
    _
  $region5: #{_lambda_.49} parent=0 // pred_fallthru
    _
  // Predicated region
  $region6: #{_lambda_.49} parent=0 // pred_check
    _
  $region7: #{_lambda_.49} parent=0 // pred_check_branch
    %11 = sbr.rel (0) target = $region9
  $region8: #{_lambda_.49} parent=0 // pred_region
    _
  $region9: #{_lambda_.49} parent=0 // pred_fallthru
    _
  // Predicated region
  $region10: #{_lambda_.49} parent=0 // pred_check
    _
  $region11: #{_lambda_.49} parent=0 // pred_check_branch
    %13 = sbr.rel (0) target = $region13
  $region12: #{_lambda_.49} parent=0 // pred_region
    _
  $region13: #{_lambda_.49} parent=0 // pred_fallthru
    _
  %v15 = vld [vmem:[%s0] sm:$0xf]
  %v16 = vld [vmem:[%s1] sm:$0xf]
  %v17 = vld [vmem:[%s1 + $0x4] sm:$0xf]
  %v18 = vld [vmem:[%s1 + $0x8] sm:$0xf]
  %v19 = vld [vmem:[%s1 + $0xc] sm:$0xf]
  %v20 = vld [vmem:[%s1 + $0x10] sm:$0xf]
  %v21 = vld [vmem:[%s1 + $0x14] sm:$0xf]
  %v22 = vld [vmem:[%s1 + $0x18] sm:$0xf]
  %v23 = vld [vmem:[%s1 + $0x1c] sm:$0xf]
  %v24 = vld [vmem:[%s1 + $0x20] sm:$0xf]
  %v25 = vld [vmem:[%s1 + $0x24] sm:$0xf]
  %v26 = vld [vmem:[%s1 + $0x28] sm:$0xf]
  %v27 = vld [vmem:[%s1 + $0x2c] sm:$0xf]
  %v28 = vld [vmem:[%s1 + $0x30] sm:$0xf]
  %v29 = vld [vmem:[%s1 + $0x34] sm:$0xf]
  %v30 = vld [vmem:[%s1 + $0x38] sm:$0xf]
  %v31 = vld [vmem:[%s1 + $0x3c] sm:$0xf]
  %v32 = vld [vmem:[%s2] sm:$0x1]
  %v34 = vlaneseq
  %v35 = vshrl.u32 %v34, 7
  %v36 = vsub.s32 0, %v35
  %v37 = vrot.slane %v32, %v36
  %v55 = vunpack.c.l.b16 %v16
  %v56 = vunpack.c.l.b16 %v17
  %v57 = vunpack.c.l.b16 %v18
  %v58 = vunpack.c.l.b16 %v19
  %v59 = vunpack.c.l.b16 %v20
  %v60 = vunpack.c.l.b16 %v21
  %v61 = vunpack.c.l.b16 %v22
  %v62 = vunpack.c.l.b16 %v23
  %v63 = vunpack.c.l.b16 %v24
  %v64 = vunpack.c.l.b16 %v25
  %v65 = vunpack.c.l.b16 %v26
  %v66 = vunpack.c.l.b16 %v27
  %v67 = vunpack.c.l.b16 %v28
  %v68 = vunpack.c.l.b16 %v29
  %v69 = vunpack.c.l.b16 %v30
  %v70 = vunpack.c.l.b16 %v31
  %v71 = vpack.c.b16 %v56, %v55
  %v72 = vpack.c.b16 %v58, %v57
  %v73 = vpack.c.b16 %v60, %v59
  %v74 = vpack.c.b16 %v62, %v61
  %v75 = vpack.c.b16 %v64, %v63
  %v76 = vpack.c.b16 %v66, %v65
  %v77 = vpack.c.b16 %v68, %v67
  %v78 = vpack.c.b16 %v70, %v69
  %87 = vmatprep.subr.bf16.mxu0 0
  %88 = vmatpush1.bf16.msra.mxu0 %v71
  %89 = vmatprep.subr.bf16.mxu0 0
  %90 = vmatpush1.bf16.msra.mxu0 %v72
  %91 = vmatprep.subr.bf16.mxu0 0
  %92 = vmatpush1.bf16.msra.mxu0 %v73
  %93 = vmatprep.subr.bf16.mxu0 0
  %94 = vmatpush1.bf16.msra.mxu0 %v74
  %95 = vmatprep.subr.bf16.mxu0 0
  %96 = vmatpush1.bf16.msra.mxu0 %v75
  %97 = vmatprep.subr.bf16.mxu0 0
  %98 = vmatpush1.bf16.msra.mxu0 %v76
  %99 = vmatprep.subr.bf16.mxu0 0
  %100 = vmatpush1.bf16.msra.mxu0 %v77
  %101 = vmatprep.subr.bf16.mxu0 0
  %102 = vmatpush1.bf16.msra.mxu0 %v78
  %103 = vmatprep.subr.bf16.mxu0 0
  %104 = vmatpush1.bf16.msra.mxu0 0
  %105 = vmatprep.subr.bf16.mxu0 0
  %106 = vmatpush1.bf16.msra.mxu0 0
  %107 = vmatprep.subr.bf16.mxu0 0
  %108 = vmatpush1.bf16.msra.mxu0 0
  %109 = vmatprep.subr.bf16.mxu0 0
  %110 = vmatpush1.bf16.msra.mxu0 0
  %111 = vmatprep.subr.bf16.mxu0 0
  %112 = vmatpush1.bf16.msra.mxu0 0
  %113 = vmatprep.subr.bf16.mxu0 0
  %114 = vmatpush1.bf16.msra.mxu0 0
  %115 = vmatprep.subr.bf16.mxu0 0
  %116 = vmatpush1.bf16.msra.mxu0 0
  %117 = vmatprep.subr.bf16.mxu0 0
  %118 = vmatpush1.bf16.msra.mxu0 0
  %119 = vmatprep.mubr.bf16.mxu0 0
  %120 = vmatmul.mubr.bf16.gmra.mrb[0].mxu0 %v15
  %v121 = vpop.f32.mrb[0].mxu0
  %v122 = vadd.f32 %v37, %v121
  %v123 = vpop.f32.mrb[0].mxu0
  %v124 = vpop.f32.mrb[0].mxu0
  %v125 = vpop.f32.mrb[0].mxu0
  %126 = vdwg.mxu0
  %v127 = vpack.c.bf16 %v122, %v122
  %128 = vst [vmem:[%s3] sm:$0xf] %v127
  // Predicated region
  $region14: #{_lambda_.49} parent=0 // pred_check
    _
  $region15: #{_lambda_.49} parent=0 // pred_check_branch
    %130 = sbr.rel (0) target = $region17
  $region16: #{_lambda_.49} parent=0 // pred_region
    _
  $region17: #{_lambda_.49} parent=0 // pred_fallthru
    _
  // Predicated region
  $region18: #{_lambda_.49} parent=0 // pred_check
    _
  $region19: #{_lambda_.49} parent=0 // pred_check_branch
    %132 = sbr.rel (0) target = $region21
  $region20: #{_lambda_.49} parent=0 // pred_region
    _
  $region21: #{_lambda_.49} parent=0 // pred_fallthru
    _

// kernel: _lambda_.54
$region0: #{_lambda_.54}
  #allocation0 [shape = 'u32[]', space=smem, size = 0x4, offset = 0x4, fixed_abs, tag = 'smem constant byte address 0x4 - core index']
  #allocation1 [shape = 'u32[144,128]{1,0:T(1,128)}', space=vmem, size = 0x12000, scoped, tag = 'internal scratch']
  %s0 = inlined_call_operand.vmem [shape: bf16[8,128], index: 0, kind: input, shape index: {}]
  %s1 = inlined_call_operand.vmem [shape: bf16[128,128], index: 1, kind: input, shape index: {}]
  %s2 = inlined_call_operand.vmem [shape: f32[1,128], index: 2, kind: input, shape index: {}]
  %s3 = inlined_call_operand.vmem [shape: bf16[8,128], index: 3, kind: output, shape index: {}]
  %s4 = sld [smem:[#allocation0]]
  $region22: #{_lambda_.54} parent=0
    _
  %s6 = ssub.s32 1, %s4
  %s7 = scalar_select 0, %s6, %s4
  // Predicated region
  $region2: #{_lambda_.54} parent=0 // pred_check
    _
  $region3: #{_lambda_.54} parent=0 // pred_check_branch
    %9 = sbr.rel (0) target = $region5
  $region4: #{_lambda_.54} parent=0 // pred_region
    _
  $region5: #{_lambda_.54} parent=0 // pred_fallthru
    _
  // Predicated region
  $region6: #{_lambda_.54} parent=0 // pred_check
    _
  $region7: #{_lambda_.54} parent=0 // pred_check_branch
    %11 = sbr.rel (0) target = $region9
  $region8: #{_lambda_.54} parent=0 // pred_region
    _
  $region9: #{_lambda_.54} parent=0 // pred_fallthru
    _
  // Predicated region
  $region10: #{_lambda_.54} parent=0 // pred_check
    _
  $region11: #{_lambda_.54} parent=0 // pred_check_branch
    %13 = sbr.rel (0) target = $region13
  $region12: #{_lambda_.54} parent=0 // pred_region
    _
  $region13: #{_lambda_.54} parent=0 // pred_fallthru
    _
  %v15 = vld [vmem:[%s0] sm:$0xf]
  %v16 = vld [vmem:[%s1] sm:$0xf]
  %v17 = vld [vmem:[%s1 + $0x4] sm:$0xf]
  %v18 = vld [vmem:[%s1 + $0x8] sm:$0xf]
  %v19 = vld [vmem:[%s1 + $0xc] sm:$0xf]
  %v20 = vld [vmem:[%s1 + $0x10] sm:$0xf]
  %v21 = vld [vmem:[%s1 + $0x14] sm:$0xf]
  %v22 = vld [vmem:[%s1 + $0x18] sm:$0xf]
  %v23 = vld [vmem:[%s1 + $0x1c] sm:$0xf]
  %v24 = vld [vmem:[%s1 + $0x20] sm:$0xf]
  %v25 = vld [vmem:[%s1 + $0x24] sm:$0xf]
  %v26 = vld [vmem:[%s1 + $0x28] sm:$0xf]
  %v27 = vld [vmem:[%s1 + $0x2c] sm:$0xf]
  %v28 = vld [vmem:[%s1 + $0x30] sm:$0xf]
  %v29 = vld [vmem:[%s1 + $0x34] sm:$0xf]
  %v30 = vld [vmem:[%s1 + $0x38] sm:$0xf]
  %v31 = vld [vmem:[%s1 + $0x3c] sm:$0xf]
  %v32 = vld [vmem:[%s2] sm:$0x1]
  %v34 = vlaneseq
  %v35 = vshrl.u32 %v34, 7
  %v36 = vsub.s32 0, %v35
  %v37 = vrot.slane %v32, %v36
  %v55 = vunpack.c.l.b16 %v16
  %v56 = vunpack.c.l.b16 %v17
  %v57 = vunpack.c.l.b16 %v18
  %v58 = vunpack.c.l.b16 %v19
  %v59 = vunpack.c.l.b16 %v20
  %v60 = vunpack.c.l.b16 %v21
  %v61 = vunpack.c.l.b16 %v22
  %v62 = vunpack.c.l.b16 %v23
  %v63 = vunpack.c.l.b16 %v24
  %v64 = vunpack.c.l.b16 %v25
  %v65 = vunpack.c.l.b16 %v26
  %v66 = vunpack.c.l.b16 %v27
  %v67 = vunpack.c.l.b16 %v28
  %v68 = vunpack.c.l.b16 %v29
  %v69 = vunpack.c.l.b16 %v30
  %v70 = vunpack.c.l.b16 %v31
  %v71 = vpack.c.b16 %v56, %v55
  %v72 = vpack.c.b16 %v58, %v57
  %v73 = vpack.c.b16 %v60, %v59
  %v74 = vpack.c.b16 %v62, %v61
  %v75 = vpack.c.b16 %v64, %v63
  %v76 = vpack.c.b16 %v66, %v65
  %v77 = vpack.c.b16 %v68, %v67
  %v78 = vpack.c.b16 %v70, %v69
  %87 = vmatprep.subr.bf16.mxu0 0
  %88 = vmatpush1.bf16.msra.mxu0 %v71
  %89 = vmatprep.subr.bf16.mxu0 0
  %90 = vmatpush1.bf16.msra.mxu0 %v72
  %91 = vmatprep.subr.bf16.mxu0 0
  %92 = vmatpush1.bf16.msra.mxu0 %v73
  %93 = vmatprep.subr.bf16.mxu0 0
  %94 = vmatpush1.bf16.msra.mxu0 %v74
  %95 = vmatprep.subr.bf16.mxu0 0
  %96 = vmatpush1.bf16.msra.mxu0 %v75
  %97 = vmatprep.subr.bf16.mxu0 0
  %98 = vmatpush1.bf16.msra.mxu0 %v76
  %99 = vmatprep.subr.bf16.mxu0 0
  %100 = vmatpush1.bf16.msra.mxu0 %v77
  %101 = vmatprep.subr.bf16.mxu0 0
  %102 = vmatpush1.bf16.msra.mxu0 %v78
  %103 = vmatprep.subr.bf16.mxu0 0
  %104 = vmatpush1.bf16.msra.mxu0 0
  %105 = vmatprep.subr.bf16.mxu0 0
  %106 = vmatpush1.bf16.msra.mxu0 0
  %107 = vmatprep.subr.bf16.mxu0 0
  %108 = vmatpush1.bf16.msra.mxu0 0
  %109 = vmatprep.subr.bf16.mxu0 0
  %110 = vmatpush1.bf16.msra.mxu0 0
  %111 = vmatprep.subr.bf16.mxu0 0
  %112 = vmatpush1.bf16.msra.mxu0 0
  %113 = vmatprep.subr.bf16.mxu0 0
  %114 = vmatpush1.bf16.msra.mxu0 0
  %115 = vmatprep.subr.bf16.mxu0 0
  %116 = vmatpush1.bf16.msra.mxu0 0
  %117 = vmatprep.subr.bf16.mxu0 0
  %118 = vmatpush1.bf16.msra.mxu0 0
  %119 = vmatprep.mubr.bf16.mxu0 0
  %120 = vmatmul.mubr.bf16.gmra.mrb[0].mxu0 %v15
  %v121 = vpop.f32.mrb[0].mxu0
  %v122 = vadd.f32 %v37, %v121
  %v123 = vpop.f32.mrb[0].mxu0
  %v124 = vpop.f32.mrb[0].mxu0
  %v125 = vpop.f32.mrb[0].mxu0
  %126 = vdwg.mxu0
  %v127 = vmax.f32 %v122, 0.0
  %v128 = vpack.c.bf16 %v127, %v127
  %129 = vst [vmem:[%s3] sm:$0xf] %v128
  // Predicated region
  $region14: #{_lambda_.54} parent=0 // pred_check
    _
  $region15: #{_lambda_.54} parent=0 // pred_check_branch
    %131 = sbr.rel (0) target = $region17
  $region16: #{_lambda_.54} parent=0 // pred_region
    _
  $region17: #{_lambda_.54} parent=0 // pred_fallthru
    _
  // Predicated region
  $region18: #{_lambda_.54} parent=0 // pred_check
    _
  $region19: #{_lambda_.54} parent=0 // pred_check_branch
    %133 = sbr.rel (0) target = $region21
  $region20: #{_lambda_.54} parent=0 // pred_region
    _
  $region21: #{_lambda_.54} parent=0 // pred_fallthru
    _

// kernel: _lambda_.51
$region0: #{_lambda_.51}
  #allocation0 [shape = 'u32[]', space=smem, size = 0x4, offset = 0x4, fixed_abs, tag = 'smem constant byte address 0x4 - core index']
  #allocation1 [shape = 'u32[144,128]{1,0:T(1,128)}', space=vmem, size = 0x12000, scoped, tag = 'internal scratch']
  %s0 = inlined_call_operand.vmem [shape: bf16[8,1152], index: 0, kind: input, shape index: {}]
  %s1 = inlined_call_operand.vmem [shape: bf16[1152,128], index: 1, kind: input, shape index: {}]
  %s2 = inlined_call_operand.vmem [shape: f32[1,128], index: 2, kind: input, shape index: {}]
  %s3 = inlined_call_operand.vmem [shape: bf16[8,128], index: 3, kind: output, shape index: {}]
  %s4 = sld [smem:[#allocation0]]
  $region22: #{_lambda_.51} parent=0
    _
  %s6 = ssub.s32 1, %s4
  %s7 = scalar_select 0, %s6, %s4
  // Predicated region
  $region2: #{_lambda_.51} parent=0 // pred_check
    _
  $region3: #{_lambda_.51} parent=0 // pred_check_branch
    %9 = sbr.rel (0) target = $region5
  $region4: #{_lambda_.51} parent=0 // pred_region
    _
  $region5: #{_lambda_.51} parent=0 // pred_fallthru
    _
  // Predicated region
  $region6: #{_lambda_.51} parent=0 // pred_check
    _
  $region7: #{_lambda_.51} parent=0 // pred_check_branch
    %11 = sbr.rel (0) target = $region9
  $region8: #{_lambda_.51} parent=0 // pred_region
    _
  $region9: #{_lambda_.51} parent=0 // pred_fallthru
    _
  // Predicated region
  $region10: #{_lambda_.51} parent=0 // pred_check
    _
  $region11: #{_lambda_.51} parent=0 // pred_check_branch
    %13 = sbr.rel (0) target = $region13
  $region12: #{_lambda_.51} parent=0 // pred_region
    _
  $region13: #{_lambda_.51} parent=0 // pred_fallthru
    _
  %v15 = vld [vmem:[%s0] sm:$0xff]
  %v16 = vld [vmem:[%s0 + $0x8] sm:$0xff]
  %v17 = vld [vmem:[%s0 + $0x10] sm:$0xff]
  %v18 = vld [vmem:[%s0 + $0x18] sm:$0xff]
  %v19 = vld [vmem:[%s0 + $0x20] sm:$0xf]
  %v20 = vld [vmem:[%s1] sm:$0xf]
  %v21 = vld [vmem:[%s1 + $0x4] sm:$0xf]
  %v22 = vld [vmem:[%s1 + $0x8] sm:$0xf]
  %v23 = vld [vmem:[%s1 + $0xc] sm:$0xf]
  %v24 = vld [vmem:[%s1 + $0x10] sm:$0xf]
  %v25 = vld [vmem:[%s1 + $0x14] sm:$0xf]
  %v26 = vld [vmem:[%s1 + $0x18] sm:$0xf]
  %v27 = vld [vmem:[%s1 + $0x1c] sm:$0xf]
  %v28 = vld [vmem:[%s1 + $0x20] sm:$0xf]
  %v29 = vld [vmem:[%s1 + $0x24] sm:$0xf]
  %v30 = vld [vmem:[%s1 + $0x28] sm:$0xf]
  %v31 = vld [vmem:[%s1 + $0x2c] sm:$0xf]
  %v32 = vld [vmem:[%s1 + $0x30] sm:$0xf]
  %v33 = vld [vmem:[%s1 + $0x34] sm:$0xf]
  %v34 = vld [vmem:[%s1 + $0x38] sm:$0xf]
  %v35 = vld [vmem:[%s1 + $0x3c] sm:$0xf]
  %v36 = vld [vmem:[%s1 + $0x40] sm:$0xf]
  %v37 = vld [vmem:[%s1 + $0x44] sm:$0xf]
  %v38 = vld [vmem:[%s1 + $0x48] sm:$0xf]
  %v39 = vld [vmem:[%s1 + $0x4c] sm:$0xf]
  %v40 = vld [vmem:[%s1 + $0x50] sm:$0xf]
  %v41 = vld [vmem:[%s1 + $0x54] sm:$0xf]
  %v42 = vld [vmem:[%s1 + $0x58] sm:$0xf]
  %v43 = vld [vmem:[%s1 + $0x5c] sm:$0xf]
  %v44 = vld [vmem:[%s1 + $0x60] sm:$0xf]
  %v45 = vld [vmem:[%s1 + $0x64] sm:$0xf]
  %v46 = vld [vmem:[%s1 + $0x68] sm:$0xf]
  %v47 = vld [vmem:[%s1 + $0x6c] sm:$0xf]
  %v48 = vld [vmem:[%s1 + $0x70] sm:$0xf]
  %v49 = vld [vmem:[%s1 + $0x74] sm:$0xf]
  %v50 = vld [vmem:[%s1 + $0x78] sm:$0xf]
  %v51 = vld [vmem:[%s1 + $0x7c] sm:$0xf]
  %v52 = vld [vmem:[%s1 + $0x80] sm:$0xf]
  %v53 = vld [vmem:[%s1 + $0x84] sm:$0xf]
  %v54 = vld [vmem:[%s1 + $0x88] sm:$0xf]
  %v55 = vld [vmem:[%s1 + $0x8c] sm:$0xf]
  %v56 = vld [vmem:[%s1 + $0x90] sm:$0xf]
  %v57 = vld [vmem:[%s1 + $0x94] sm:$0xf]
  %v58 = vld [vmem:[%s1 + $0x98] sm:$0xf]
  %v59 = vld [vmem:[%s1 + $0x9c] sm:$0xf]
  %v60 = vld [vmem:[%s1 + $0xa0] sm:$0xf]
  %v61 = vld [vmem:[%s1 + $0xa4] sm:$0xf]
  %v62 = vld [vmem:[%s1 + $0xa8] sm:$0xf]
  %v63 = vld [vmem:[%s1 + $0xac] sm:$0xf]
  %v64 = vld [vmem:[%s1 + $0xb0] sm:$0xf]
  %v65 = vld [vmem:[%s1 + $0xb4] sm:$0xf]
  %v66 = vld [vmem:[%s1 + $0xb8] sm:$0xf]
  %v67 = vld [vmem:[%s1 + $0xbc] sm:$0xf]
  %v68 = vld [vmem:[%s1 + $0xc0] sm:$0xf]
  %v69 = vld [vmem:[%s1 + $0xc4] sm:$0xf]
  %v70 = vld [vmem:[%s1 + $0xc8] sm:$0xf]
  %v71 = vld [vmem:[%s1 + $0xcc] sm:$0xf]
  %v72 = vld [vmem:[%s1 + $0xd0] sm:$0xf]
  %v73 = vld [vmem:[%s1 + $0xd4] sm:$0xf]
  %v74 = vld [vmem:[%s1 + $0xd8] sm:$0xf]
  %v75 = vld [vmem:[%s1 + $0xdc] sm:$0xf]
  %v76 = vld [vmem:[%s1 + $0xe0] sm:$0xf]
  %v77 = vld [vmem:[%s1 + $0xe4] sm:$0xf]
  %v78 = vld [vmem:[%s1 + $0xe8] sm:$0xf]
  %v79 = vld [vmem:[%s1 + $0xec] sm:$0xf]
  %v80 = vld [vmem:[%s1 + $0xf0] sm:$0xf]
  %v81 = vld [vmem:[%s1 + $0xf4] sm:$0xf]
  %v82 = vld [vmem:[%s1 + $0xf8] sm:$0xf]
  %v83 = vld [vmem:[%s1 + $0xfc] sm:$0xf]
  %v84 = vld [vmem:[%s1 + $0x100] sm:$0xf]
  %v85 = vld [vmem:[%s1 + $0x104] sm:$0xf]
  %v86 = vld [vmem:[%s1 + $0x108] sm:$0xf]
  %v87 = vld [vmem:[%s1 + $0x10c] sm:$0xf]
  %v88 = vld [vmem:[%s1 + $0x110] sm:$0xf]
  %v89 = vld [vmem:[%s1 + $0x114] sm:$0xf]
  %v90 = vld [vmem:[%s1 + $0x118] sm:$0xf]
  %v91 = vld [vmem:[%s1 + $0x11c] sm:$0xf]
  %v92 = vld [vmem:[%s1 + $0x120] sm:$0xf]
  %v93 = vld [vmem:[%s1 + $0x124] sm:$0xf]
  %v94 = vld [vmem:[%s1 + $0x128] sm:$0xf]
  %v95 = vld [vmem:[%s1 + $0x12c] sm:$0xf]
  %v96 = vld [vmem:[%s1 + $0x130] sm:$0xf]
  %v97 = vld [vmem:[%s1 + $0x134] sm:$0xf]
  %v98 = vld [vmem:[%s1 + $0x138] sm:$0xf]
  %v99 = vld [vmem:[%s1 + $0x13c] sm:$0xf]
  %v100 = vld [vmem:[%s1 + $0x140] sm:$0xf]
  %v101 = vld [vmem:[%s1 + $0x144] sm:$0xf]
  %v102 = vld [vmem:[%s1 + $0x148] sm:$0xf]
  %v103 = vld [vmem:[%s1 + $0x14c] sm:$0xf]
  %v104 = vld [vmem:[%s1 + $0x150] sm:$0xf]
  %v105 = vld [vmem:[%s1 + $0x154] sm:$0xf]
  %v106 = vld [vmem:[%s1 + $0x158] sm:$0xf]
  %v107 = vld [vmem:[%s1 + $0x15c] sm:$0xf]
  %v108 = vld [vmem:[%s1 + $0x160] sm:$0xf]
  %v109 = vld [vmem:[%s1 + $0x164] sm:$0xf]
  %v110 = vld [vmem:[%s1 + $0x168] sm:$0xf]
  %v111 = vld [vmem:[%s1 + $0x16c] sm:$0xf]
  %v112 = vld [vmem:[%s1 + $0x170] sm:$0xf]
  %v113 = vld [vmem:[%s1 + $0x174] sm:$0xf]
  %v114 = vld [vmem:[%s1 + $0x178] sm:$0xf]
  %v115 = vld [vmem:[%s1 + $0x17c] sm:$0xf]
  %v116 = vld [vmem:[%s1 + $0x180] sm:$0xf]
  %v117 = vld [vmem:[%s1 + $0x184] sm:$0xf]
  %v118 = vld [vmem:[%s1 + $0x188] sm:$0xf]
  %v119 = vld [vmem:[%s1 + $0x18c] sm:$0xf]
  %v120 = vld [vmem:[%s1 + $0x190] sm:$0xf]
  %v121 = vld [vmem:[%s1 + $0x194] sm:$0xf]
  %v122 = vld [vmem:[%s1 + $0x198] sm:$0xf]
  %v123 = vld [vmem:[%s1 + $0x19c] sm:$0xf]
  %v124 = vld [vmem:[%s1 + $0x1a0] sm:$0xf]
  %v125 = vld [vmem:[%s1 + $0x1a4] sm:$0xf]
  %v126 = vld [vmem:[%s1 + $0x1a8] sm:$0xf]
  %v127 = vld [vmem:[%s1 + $0x1ac] sm:$0xf]
  %v128 = vld [vmem:[%s1 + $0x1b0] sm:$0xf]
  %v129 = vld [vmem:[%s1 + $0x1b4] sm:$0xf]
  %v130 = vld [vmem:[%s1 + $0x1b8] sm:$0xf]
  %v131 = vld [vmem:[%s1 + $0x1bc] sm:$0xf]
  %v132 = vld [vmem:[%s1 + $0x1c0] sm:$0xf]
  %v133 = vld [vmem:[%s1 + $0x1c4] sm:$0xf]
  %v134 = vld [vmem:[%s1 + $0x1c8] sm:$0xf]
  %v135 = vld [vmem:[%s1 + $0x1cc] sm:$0xf]
  %v136 = vld [vmem:[%s1 + $0x1d0] sm:$0xf]
  %v137 = vld [vmem:[%s1 + $0x1d4] sm:$0xf]
  %v138 = vld [vmem:[%s1 + $0x1d8] sm:$0xf]
  %v139 = vld [vmem:[%s1 + $0x1dc] sm:$0xf]
  %v140 = vld [vmem:[%s1 + $0x1e0] sm:$0xf]
  %v141 = vld [vmem:[%s1 + $0x1e4] sm:$0xf]
  %v142 = vld [vmem:[%s1 + $0x1e8] sm:$0xf]
  %v143 = vld [vmem:[%s1 + $0x1ec] sm:$0xf]
  %v144 = vld [vmem:[%s1 + $0x1f0] sm:$0xf]
  %v145 = vld [vmem:[%s1 + $0x1f4] sm:$0xf]
  %v146 = vld [vmem:[%s1 + $0x1f8] sm:$0xf]
  %v147 = vld [vmem:[%s1 + $0x1fc] sm:$0xf]
  %v148 = vld [vmem:[%s1 + $0x200] sm:$0xf]
  %v149 = vld [vmem:[%s1 + $0x204] sm:$0xf]
  %v150 = vld [vmem:[%s1 + $0x208] sm:$0xf]
  %v151 = vld [vmem:[%s1 + $0x20c] sm:$0xf]
  %v152 = vld [vmem:[%s1 + $0x210] sm:$0xf]
  %v153 = vld [vmem:[%s1 + $0x214] sm:$0xf]
  %v154 = vld [vmem:[%s1 + $0x218] sm:$0xf]
  %v155 = vld [vmem:[%s1 + $0x21c] sm:$0xf]
  %v156 = vld [vmem:[%s1 + $0x220] sm:$0xf]
  %v157 = vld [vmem:[%s1 + $0x224] sm:$0xf]
  %v158 = vld [vmem:[%s1 + $0x228] sm:$0xf]
  %v159 = vld [vmem:[%s1 + $0x22c] sm:$0xf]
  %v160 = vld [vmem:[%s1 + $0x230] sm:$0xf]
  %v161 = vld [vmem:[%s1 + $0x234] sm:$0xf]
  %v162 = vld [vmem:[%s1 + $0x238] sm:$0xf]
  %v163 = vld [vmem:[%s1 + $0x23c] sm:$0xf]
  %v164 = vld [vmem:[%s2] sm:$0x1]
  %v166 = vlaneseq
  %v167 = vshrl.u32 %v166, 7
  %v168 = vsub.s32 0, %v167
  %v169 = vrot.slane %v164, %v168
  %v176 = vunpack.c.l.b16 %v15
  %v177 = vunpack.c.h.b16 %v15
  %v178 = vunpack.c.l.b16 %v16
  %v179 = vunpack.c.h.b16 %v16
  %v180 = vunpack.c.l.b16 %v17
  %v181 = vunpack.c.h.b16 %v17
  %v182 = vunpack.c.l.b16 %v18
  %v183 = vunpack.c.h.b16 %v18
  %v184 = vunpack.c.l.b16 %v19
  %v185 = vpack.c.b16 %v176, %v176
  %v186 = vpack.c.b16 %v177, %v177
  %v187 = vpack.c.b16 %v178, %v178
  %v188 = vpack.c.b16 %v179, %v179
  %v189 = vpack.c.b16 %v180, %v180
  %v190 = vpack.c.b16 %v181, %v181
  %v191 = vpack.c.b16 %v182, %v182
  %v192 = vpack.c.b16 %v183, %v183
  %v193 = vpack.c.b16 %v184, %v184
  %v347 = vunpack.c.l.b16 %v20
  %v348 = vunpack.c.l.b16 %v21
  %v349 = vunpack.c.l.b16 %v22
  %v350 = vunpack.c.l.b16 %v23
  %v351 = vunpack.c.l.b16 %v24
  %v352 = vunpack.c.l.b16 %v25
  %v353 = vunpack.c.l.b16 %v26
  %v354 = vunpack.c.l.b16 %v27
  %v355 = vunpack.c.l.b16 %v28
  %v356 = vunpack.c.l.b16 %v29
  %v357 = vunpack.c.l.b16 %v30
  %v358 = vunpack.c.l.b16 %v31
  %v359 = vunpack.c.l.b16 %v32
  %v360 = vunpack.c.l.b16 %v33
  %v361 = vunpack.c.l.b16 %v34
  %v362 = vunpack.c.l.b16 %v35
  %v363 = vunpack.c.l.b16 %v36
  %v364 = vunpack.c.l.b16 %v37
  %v365 = vunpack.c.l.b16 %v38
  %v366 = vunpack.c.l.b16 %v39
  %v367 = vunpack.c.l.b16 %v40
  %v368 = vunpack.c.l.b16 %v41
  %v369 = vunpack.c.l.b16 %v42
  %v370 = vunpack.c.l.b16 %v43
  %v371 = vunpack.c.l.b16 %v44
  %v372 = vunpack.c.l.b16 %v45
  %v373 = vunpack.c.l.b16 %v46
  %v374 = vunpack.c.l.b16 %v47
  %v375 = vunpack.c.l.b16 %v48
  %v376 = vunpack.c.l.b16 %v49
  %v377 = vunpack.c.l.b16 %v50
  %v378 = vunpack.c.l.b16 %v51
  %v379 = vunpack.c.l.b16 %v52
  %v380 = vunpack.c.l.b16 %v53
  %v381 = vunpack.c.l.b16 %v54
  %v382 = vunpack.c.l.b16 %v55
  %v383 = vunpack.c.l.b16 %v56
  %v384 = vunpack.c.l.b16 %v57
  %v385 = vunpack.c.l.b16 %v58
  %v386 = vunpack.c.l.b16 %v59
  %v387 = vunpack.c.l.b16 %v60
  %v388 = vunpack.c.l.b16 %v61
  %v389 = vunpack.c.l.b16 %v62
  %v390 = vunpack.c.l.b16 %v63
  %v391 = vunpack.c.l.b16 %v64
  %v392 = vunpack.c.l.b16 %v65
  %v393 = vunpack.c.l.b16 %v66
  %v394 = vunpack.c.l.b16 %v67
  %v395 = vunpack.c.l.b16 %v68
  %v396 = vunpack.c.l.b16 %v69
  %v397 = vunpack.c.l.b16 %v70
  %v398 = vunpack.c.l.b16 %v71
  %v399 = vunpack.c.l.b16 %v72
  %v400 = vunpack.c.l.b16 %v73
  %v401 = vunpack.c.l.b16 %v74
  %v402 = vunpack.c.l.b16 %v75
  %v403 = vunpack.c.l.b16 %v76
  %v404 = vunpack.c.l.b16 %v77
  %v405 = vunpack.c.l.b16 %v78
  %v406 = vunpack.c.l.b16 %v79
  %v407 = vunpack.c.l.b16 %v80
  %v408 = vunpack.c.l.b16 %v81
  %v409 = vunpack.c.l.b16 %v82
  %v410 = vunpack.c.l.b16 %v83
  %v411 = vunpack.c.l.b16 %v84
  %v412 = vunpack.c.l.b16 %v85
  %v413 = vunpack.c.l.b16 %v86
  %v414 = vunpack.c.l.b16 %v87
  %v415 = vunpack.c.l.b16 %v88
  %v416 = vunpack.c.l.b16 %v89
  %v417 = vunpack.c.l.b16 %v90
  %v418 = vunpack.c.l.b16 %v91
  %v419 = vunpack.c.l.b16 %v92
  %v420 = vunpack.c.l.b16 %v93
  %v421 = vunpack.c.l.b16 %v94
  %v422 = vunpack.c.l.b16 %v95
  %v423 = vunpack.c.l.b16 %v96
  %v424 = vunpack.c.l.b16 %v97
  %v425 = vunpack.c.l.b16 %v98
  %v426 = vunpack.c.l.b16 %v99
  %v427 = vunpack.c.l.b16 %v100
  %v428 = vunpack.c.l.b16 %v101
  %v429 = vunpack.c.l.b16 %v102
  %v430 = vunpack.c.l.b16 %v103
  %v431 = vunpack.c.l.b16 %v104
  %v432 = vunpack.c.l.b16 %v105
  %v433 = vunpack.c.l.b16 %v106
  %v434 = vunpack.c.l.b16 %v107
  %v435 = vunpack.c.l.b16 %v108
  %v436 = vunpack.c.l.b16 %v109
  %v437 = vunpack.c.l.b16 %v110
  %v438 = vunpack.c.l.b16 %v111
  %v439 = vunpack.c.l.b16 %v112
  %v440 = vunpack.c.l.b16 %v113
  %v441 = vunpack.c.l.b16 %v114
  %v442 = vunpack.c.l.b16 %v115
  %v443 = vunpack.c.l.b16 %v116
  %v444 = vunpack.c.l.b16 %v117
  %v445 = vunpack.c.l.b16 %v118
  %v446 = vunpack.c.l.b16 %v119
  %v447 = vunpack.c.l.b16 %v120
  %v448 = vunpack.c.l.b16 %v121
  %v449 = vunpack.c.l.b16 %v122
  %v450 = vunpack.c.l.b16 %v123
  %v451 = vunpack.c.l.b16 %v124
  %v452 = vunpack.c.l.b16 %v125
  %v453 = vunpack.c.l.b16 %v126
  %v454 = vunpack.c.l.b16 %v127
  %v455 = vunpack.c.l.b16 %v128
  %v456 = vunpack.c.l.b16 %v129
  %v457 = vunpack.c.l.b16 %v130
  %v458 = vunpack.c.l.b16 %v131
  %v459 = vunpack.c.l.b16 %v132
  %v460 = vunpack.c.l.b16 %v133
  %v461 = vunpack.c.l.b16 %v134
  %v462 = vunpack.c.l.b16 %v135
  %v463 = vunpack.c.l.b16 %v136
  %v464 = vunpack.c.l.b16 %v137
  %v465 = vunpack.c.l.b16 %v138
  %v466 = vunpack.c.l.b16 %v139
  %v467 = vunpack.c.l.b16 %v140
  %v468 = vunpack.c.l.b16 %v141
  %v469 = vunpack.c.l.b16 %v142
  %v470 = vunpack.c.l.b16 %v143
  %v471 = vunpack.c.l.b16 %v144
  %v472 = vunpack.c.l.b16 %v145
  %v473 = vunpack.c.l.b16 %v146
  %v474 = vunpack.c.l.b16 %v147
  %v475 = vunpack.c.l.b16 %v148
  %v476 = vunpack.c.l.b16 %v149
  %v477 = vunpack.c.l.b16 %v150
  %v478 = vunpack.c.l.b16 %v151
  %v479 = vunpack.c.l.b16 %v152
  %v480 = vunpack.c.l.b16 %v153
  %v481 = vunpack.c.l.b16 %v154
  %v482 = vunpack.c.l.b16 %v155
  %v483 = vunpack.c.l.b16 %v156
  %v484 = vunpack.c.l.b16 %v157
  %v485 = vunpack.c.l.b16 %v158
  %v486 = vunpack.c.l.b16 %v159
  %v487 = vunpack.c.l.b16 %v160
  %v488 = vunpack.c.l.b16 %v161
  %v489 = vunpack.c.l.b16 %v162
  %v490 = vunpack.c.l.b16 %v163
  %v491 = vpack.c.b16 %v348, %v347
  %v492 = vpack.c.b16 %v350, %v349
  %v493 = vpack.c.b16 %v352, %v351
  %v494 = vpack.c.b16 %v354, %v353
  %v495 = vpack.c.b16 %v356, %v355
  %v496 = vpack.c.b16 %v358, %v357
  %v497 = vpack.c.b16 %v360, %v359
  %v498 = vpack.c.b16 %v362, %v361
  %v499 = vpack.c.b16 %v364, %v363
  %v500 = vpack.c.b16 %v366, %v365
  %v501 = vpack.c.b16 %v368, %v367
  %v502 = vpack.c.b16 %v370, %v369
  %v503 = vpack.c.b16 %v372, %v371
  %v504 = vpack.c.b16 %v374, %v373
  %v505 = vpack.c.b16 %v376, %v375
  %v506 = vpack.c.b16 %v378, %v377
  %v507 = vpack.c.b16 %v380, %v379
  %v508 = vpack.c.b16 %v382, %v381
  %v509 = vpack.c.b16 %v384, %v383
  %v510 = vpack.c.b16 %v386, %v385
  %v511 = vpack.c.b16 %v388, %v387
  %v512 = vpack.c.b16 %v390, %v389
  %v513 = vpack.c.b16 %v392, %v391
  %v514 = vpack.c.b16 %v394, %v393
  %v515 = vpack.c.b16 %v396, %v395
  %v516 = vpack.c.b16 %v398, %v397
  %v517 = vpack.c.b16 %v400, %v399
  %v518 = vpack.c.b16 %v402, %v401
  %v519 = vpack.c.b16 %v404, %v403
  %v520 = vpack.c.b16 %v406, %v405
  %v521 = vpack.c.b16 %v408, %v407
  %v522 = vpack.c.b16 %v410, %v409
  %v523 = vpack.c.b16 %v412, %v411
  %v524 = vpack.c.b16 %v414, %v413
  %v525 = vpack.c.b16 %v416, %v415
  %v526 = vpack.c.b16 %v418, %v417
  %v527 = vpack.c.b16 %v420, %v419
  %v528 = vpack.c.b16 %v422, %v421
  %v529 = vpack.c.b16 %v424, %v423
  %v530 = vpack.c.b16 %v426, %v425
  %v531 = vpack.c.b16 %v428, %v427
  %v532 = vpack.c.b16 %v430, %v429
  %v533 = vpack.c.b16 %v432, %v431
  %v534 = vpack.c.b16 %v434, %v433
  %v535 = vpack.c.b16 %v436, %v435
  %v536 = vpack.c.b16 %v438, %v437
  %v537 = vpack.c.b16 %v440, %v439
  %v538 = vpack.c.b16 %v442, %v441
  %v539 = vpack.c.b16 %v444, %v443
  %v540 = vpack.c.b16 %v446, %v445
  %v541 = vpack.c.b16 %v448, %v447
  %v542 = vpack.c.b16 %v450, %v449
  %v543 = vpack.c.b16 %v452, %v451
  %v544 = vpack.c.b16 %v454, %v453
  %v545 = vpack.c.b16 %v456, %v455
  %v546 = vpack.c.b16 %v458, %v457
  %v547 = vpack.c.b16 %v460, %v459
  %v548 = vpack.c.b16 %v462, %v461
  %v549 = vpack.c.b16 %v464, %v463
  %v550 = vpack.c.b16 %v466, %v465
  %v551 = vpack.c.b16 %v468, %v467
  %v552 = vpack.c.b16 %v470, %v469
  %v553 = vpack.c.b16 %v472, %v471
  %v554 = vpack.c.b16 %v474, %v473
  %v555 = vpack.c.b16 %v476, %v475
  %v556 = vpack.c.b16 %v478, %v477
  %v557 = vpack.c.b16 %v480, %v479
  %v558 = vpack.c.b16 %v482, %v481
  %v559 = vpack.c.b16 %v484, %v483
  %v560 = vpack.c.b16 %v486, %v485
  %v561 = vpack.c.b16 %v488, %v487
  %v562 = vpack.c.b16 %v490, %v489
  %635 = vmatprep.subr.bf16.mxu0 0
  %636 = vmatpush1.bf16.msra.mxu0 %v491
  %637 = vmatprep.subr.bf16.mxu0 0
  %638 = vmatpush1.bf16.msra.mxu0 %v492
  %639 = vmatprep.subr.bf16.mxu0 0
  %640 = vmatpush1.bf16.msra.mxu0 %v493
  %641 = vmatprep.subr.bf16.mxu0 0
  %642 = vmatpush1.bf16.msra.mxu0 %v494
  %643 = vmatprep.subr.bf16.mxu0 0
  %644 = vmatpush1.bf16.msra.mxu0 %v495
  %645 = vmatprep.subr.bf16.mxu0 0
  %646 = vmatpush1.bf16.msra.mxu0 %v496
  %647 = vmatprep.subr.bf16.mxu0 0
  %648 = vmatpush1.bf16.msra.mxu0 %v497
  %649 = vmatprep.subr.bf16.mxu0 0
  %650 = vmatpush1.bf16.msra.mxu0 %v498
  %651 = vmatprep.subr.bf16.mxu0 0
  %652 = vmatpush1.bf16.msra.mxu0 %v499
  %653 = vmatprep.subr.bf16.mxu0 0
  %654 = vmatpush1.bf16.msra.mxu0 %v500
  %655 = vmatprep.subr.bf16.mxu0 0
  %656 = vmatpush1.bf16.msra.mxu0 %v501
  %657 = vmatprep.subr.bf16.mxu0 0
  %658 = vmatpush1.bf16.msra.mxu0 %v502
  %659 = vmatprep.subr.bf16.mxu0 0
  %660 = vmatpush1.bf16.msra.mxu0 %v503
  %661 = vmatprep.subr.bf16.mxu0 0
  %662 = vmatpush1.bf16.msra.mxu0 %v504
  %663 = vmatprep.subr.bf16.mxu0 0
  %664 = vmatpush1.bf16.msra.mxu0 %v505
  %665 = vmatprep.subr.bf16.mxu0 0
  %666 = vmatpush1.bf16.msra.mxu0 %v506
  %667 = vmatprep.mubr.bf16.mxu0 %v186
  %668 = vmatmul.mubr.bf16.gmra.mrb[0].mxu0 %v185
  %v669 = vpop.f32.mrb[0].mxu0
  %v670 = vadd.f32 %v169, %v669
  %v671 = vpop.f32.mrb[0].mxu0
  %v672 = vpop.f32.mrb[0].mxu0
  %v673 = vpop.f32.mrb[0].mxu0
  %674 = vdwg.mxu0
  %675 = vmatprep.subr.bf16.mxu0 0
  %676 = vmatpush1.bf16.msra.mxu0 %v507
  %677 = vmatprep.subr.bf16.mxu0 0
  %678 = vmatpush1.bf16.msra.mxu0 %v508
  %679 = vmatprep.subr.bf16.mxu0 0
  %680 = vmatpush1.bf16.msra.mxu0 %v509
  %681 = vmatprep.subr.bf16.mxu0 0
  %682 = vmatpush1.bf16.msra.mxu0 %v510
  %683 = vmatprep.subr.bf16.mxu0 0
  %684 = vmatpush1.bf16.msra.mxu0 %v511
  %685 = vmatprep.subr.bf16.mxu0 0
  %686 = vmatpush1.bf16.msra.mxu0 %v512
  %687 = vmatprep.subr.bf16.mxu0 0
  %688 = vmatpush1.bf16.msra.mxu0 %v513
  %689 = vmatprep.subr.bf16.mxu0 0
  %690 = vmatpush1.bf16.msra.mxu0 %v514
  %691 = vmatprep.subr.bf16.mxu0 0
  %692 = vmatpush1.bf16.msra.mxu0 %v515
  %693 = vmatprep.subr.bf16.mxu0 0
  %694 = vmatpush1.bf16.msra.mxu0 %v516
  %695 = vmatprep.subr.bf16.mxu0 0
  %696 = vmatpush1.bf16.msra.mxu0 %v517
  %697 = vmatprep.subr.bf16.mxu0 0
  %698 = vmatpush1.bf16.msra.mxu0 %v518
  %699 = vmatprep.subr.bf16.mxu0 0
  %700 = vmatpush1.bf16.msra.mxu0 %v519
  %701 = vmatprep.subr.bf16.mxu0 0
  %702 = vmatpush1.bf16.msra.mxu0 %v520
  %703 = vmatprep.subr.bf16.mxu0 0
  %704 = vmatpush1.bf16.msra.mxu0 %v521
  %705 = vmatprep.subr.bf16.mxu0 0
  %706 = vmatpush1.bf16.msra.mxu0 %v522
  %707 = vmatprep.mubr.bf16.mxu0 %v188
  %708 = vmatmul.mubr.bf16.gmra.mrb[0].mxu0 %v187
  %v709 = vpop.f32.mrb[0].mxu0
  %v710 = vadd.f32 %v670, %v709
  %v711 = vpop.f32.mrb[0].mxu0
  %v712 = vpop.f32.mrb[0].mxu0
  %v713 = vpop.f32.mrb[0].mxu0
  %714 = vdwg.mxu0
  %715 = vmatprep.subr.bf16.mxu0 0
  %716 = vmatpush1.bf16.msra.mxu0 %v523
  %717 = vmatprep.subr.bf16.mxu0 0
  %718 = vmatpush1.bf16.msra.mxu0 %v524
  %719 = vmatprep.subr.bf16.mxu0 0
  %720 = vmatpush1.bf16.msra.mxu0 %v525
  %721 = vmatprep.subr.bf16.mxu0 0
  %722 = vmatpush1.bf16.msra.mxu0 %v526
  %723 = vmatprep.subr.bf16.mxu0 0
  %724 = vmatpush1.bf16.msra.mxu0 %v527
  %725 = vmatprep.subr.bf16.mxu0 0
  %726 = vmatpush1.bf16.msra.mxu0 %v528
  %727 = vmatprep.subr.bf16.mxu0 0
  %728 = vmatpush1.bf16.msra.mxu0 %v529
  %729 = vmatprep.subr.bf16.mxu0 0
  %730 = vmatpush1.bf16.msra.mxu0 %v530
  %731 = vmatprep.subr.bf16.mxu0 0
  %732 = vmatpush1.bf16.msra.mxu0 %v531
  %733 = vmatprep.subr.bf16.mxu0 0
  %734 = vmatpush1.bf16.msra.mxu0 %v532
  %735 = vmatprep.subr.bf16.mxu0 0
  %736 = vmatpush1.bf16.msra.mxu0 %v533
  %737 = vmatprep.subr.bf16.mxu0 0
  %738 = vmatpush1.bf16.msra.mxu0 %v534
  %739 = vmatprep.subr.bf16.mxu0 0
  %740 = vmatpush1.bf16.msra.mxu0 %v535
  %741 = vmatprep.subr.bf16.mxu0 0
  %742 = vmatpush1.bf16.msra.mxu0 %v536
  %743 = vmatprep.subr.bf16.mxu0 0
  %744 = vmatpush1.bf16.msra.mxu0 %v537
  %745 = vmatprep.subr.bf16.mxu0 0
  %746 = vmatpush1.bf16.msra.mxu0 %v538
  %747 = vmatprep.mubr.bf16.mxu0 %v190
  %748 = vmatmul.mubr.bf16.gmra.mrb[0].mxu0 %v189
  %v749 = vpop.f32.mrb[0].mxu0
  %v750 = vadd.f32 %v710, %v749
  %v751 = vpop.f32.mrb[0].mxu0
  %v752 = vpop.f32.mrb[0].mxu0
  %v753 = vpop.f32.mrb[0].mxu0
  %754 = vdwg.mxu0
  %755 = vmatprep.subr.bf16.mxu0 0
  %756 = vmatpush1.bf16.msra.mxu0 %v539
  %757 = vmatprep.subr.bf16.mxu0 0
  %758 = vmatpush1.bf16.msra.mxu0 %v540
  %759 = vmatprep.subr.bf16.mxu0 0
  %760 = vmatpush1.bf16.msra.mxu0 %v541
  %761 = vmatprep.subr.bf16.mxu0 0
  %762 = vmatpush1.bf16.msra.mxu0 %v542
  %763 = vmatprep.subr.bf16.mxu0 0
  %764 = vmatpush1.bf16.msra.mxu0 %v543
  %765 = vmatprep.subr.bf16.mxu0 0
  %766 = vmatpush1.bf16.msra.mxu0 %v544
  %767 = vmatprep.subr.bf16.mxu0 0
  %768 = vmatpush1.bf16.msra.mxu0 %v545
  %769 = vmatprep.subr.bf16.mxu0 0
  %770 = vmatpush1.bf16.msra.mxu0 %v546
  %771 = vmatprep.subr.bf16.mxu0 0
  %772 = vmatpush1.bf16.msra.mxu0 %v547
  %773 = vmatprep.subr.bf16.mxu0 0
  %774 = vmatpush1.bf16.msra.mxu0 %v548
  %775 = vmatprep.subr.bf16.mxu0 0
  %776 = vmatpush1.bf16.msra.mxu0 %v549
  %777 = vmatprep.subr.bf16.mxu0 0
  %778 = vmatpush1.bf16.msra.mxu0 %v550
  %779 = vmatprep.subr.bf16.mxu0 0
  %780 = vmatpush1.bf16.msra.mxu0 %v551
  %781 = vmatprep.subr.bf16.mxu0 0
  %782 = vmatpush1.bf16.msra.mxu0 %v552
  %783 = vmatprep.subr.bf16.mxu0 0
  %784 = vmatpush1.bf16.msra.mxu0 %v553
  %785 = vmatprep.subr.bf16.mxu0 0
  %786 = vmatpush1.bf16.msra.mxu0 %v554
  %787 = vmatprep.mubr.bf16.mxu0 %v192
  %788 = vmatmul.mubr.bf16.gmra.mrb[0].mxu0 %v191
  %v789 = vpop.f32.mrb[0].mxu0
  %v790 = vadd.f32 %v750, %v789
  %v791 = vpop.f32.mrb[0].mxu0
  %v792 = vpop.f32.mrb[0].mxu0
  %v793 = vpop.f32.mrb[0].mxu0
  %794 = vdwg.mxu0
  %795 = vmatprep.subr.bf16.mxu0 0
  %796 = vmatpush1.bf16.msra.mxu0 %v555
  %797 = vmatprep.subr.bf16.mxu0 0
  %798 = vmatpush1.bf16.msra.mxu0 %v556
  %799 = vmatprep.subr.bf16.mxu0 0
  %800 = vmatpush1.bf16.msra.mxu0 %v557
  %801 = vmatprep.subr.bf16.mxu0 0
  %802 = vmatpush1.bf16.msra.mxu0 %v558
  %803 = vmatprep.subr.bf16.mxu0 0
  %804 = vmatpush1.bf16.msra.mxu0 %v559
  %805 = vmatprep.subr.bf16.mxu0 0
  %806 = vmatpush1.bf16.msra.mxu0 %v560
  %807 = vmatprep.subr.bf16.mxu0 0
  %808 = vmatpush1.bf16.msra.mxu0 %v561
  %809 = vmatprep.subr.bf16.mxu0 0
  %810 = vmatpush1.bf16.msra.mxu0 %v562
  %811 = vmatprep.subr.bf16.mxu0 0
  %812 = vmatpush1.bf16.msra.mxu0 0
  %813 = vmatprep.subr.bf16.mxu0 0
  %814 = vmatpush1.bf16.msra.mxu0 0
  %815 = vmatprep.subr.bf16.mxu0 0
  %816 = vmatpush1.bf16.msra.mxu0 0
  %817 = vmatprep.subr.bf16.mxu0 0
  %818 = vmatpush1.bf16.msra.mxu0 0
  %819 = vmatprep.subr.bf16.mxu0 0
  %820 = vmatpush1.bf16.msra.mxu0 0
  %821 = vmatprep.subr.bf16.mxu0 0
  %822 = vmatpush1.bf16.msra.mxu0 0
  %823 = vmatprep.subr.bf16.mxu0 0
  %824 = vmatpush1.bf16.msra.mxu0 0
  %825 = vmatprep.subr.bf16.mxu0 0
  %826 = vmatpush1.bf16.msra.mxu0 0
  %827 = vmatprep.mubr.bf16.mxu0 0
  %828 = vmatmul.mubr.bf16.gmra.mrb[0].mxu0 %v193
  %v829 = vpop.f32.mrb[0].mxu0
  %v830 = vadd.f32 %v790, %v829
  %v831 = vpop.f32.mrb[0].mxu0
  %v832 = vpop.f32.mrb[0].mxu0
  %v833 = vpop.f32.mrb[0].mxu0
  %834 = vdwg.mxu0
  %v835 = vmax.f32 %v830, 0.0
  %v836 = vpack.c.bf16 %v835, %v835
  %837 = vst [vmem:[%s3] sm:$0xf] %v836
  // Predicated region
  $region14: #{_lambda_.51} parent=0 // pred_check
    _
  $region15: #{_lambda_.51} parent=0 // pred_check_branch
    %839 = sbr.rel (0) target = $region17
  $region16: #{_lambda_.51} parent=0 // pred_region
    _
  $region17: #{_lambda_.51} parent=0 // pred_fallthru
    _
  // Predicated region
  $region18: #{_lambda_.51} parent=0 // pred_check
    _
  $region19: #{_lambda_.51} parent=0 // pred_check_branch
    %841 = sbr.rel (0) target = $region21
  $region20: #{_lambda_.51} parent=0 // pred_region
    _
  $region21: #{_lambda_.51} parent=0 // pred_fallthru
    _

// kernel: _lambda_.58
$region0: #{_lambda_.58}
  #allocation0 [shape = 'u32[]', space=smem, size = 0x4, offset = 0x4, fixed_abs, tag = 'smem constant byte address 0x4 - core index']
  #allocation1 [shape = 'u32[144,128]{1,0:T(1,128)}', space=vmem, size = 0x12000, scoped, tag = 'internal scratch']
  %s0 = inlined_call_operand.vmem [shape: bf16[128,256], index: 0, kind: input, shape index: {}]
  %s1 = inlined_call_operand.vmem [shape: bf16[256,128], index: 1, kind: input, shape index: {}]
  %s2 = inlined_call_operand.vmem [shape: f32[1,128], index: 2, kind: input, shape index: {}]
  %s3 = inlined_call_operand.vmem [shape: bf16[128,128], index: 3, kind: output, shape index: {}]
  %s4 = sld [smem:[#allocation0]]
  $region22: #{_lambda_.58} parent=0
    _
  %s6 = ssub.s32 1, %s4
  %s7 = scalar_select 0, %s6, %s4
  // Predicated region
  $region2: #{_lambda_.58} parent=0 // pred_check
    _
  $region3: #{_lambda_.58} parent=0 // pred_check_branch
    %9 = sbr.rel (0) target = $region5
  $region4: #{_lambda_.58} parent=0 // pred_region
    _
  $region5: #{_lambda_.58} parent=0 // pred_fallthru
    _
  // Predicated region
  $region6: #{_lambda_.58} parent=0 // pred_check
    _
  $region7: #{_lambda_.58} parent=0 // pred_check_branch
    %11 = sbr.rel (0) target = $region9
  $region8: #{_lambda_.58} parent=0 // pred_region
    _
  $region9: #{_lambda_.58} parent=0 // pred_fallthru
    _
  // Predicated region
  $region10: #{_lambda_.58} parent=0 // pred_check
    _
  $region11: #{_lambda_.58} parent=0 // pred_check_branch
    %13 = sbr.rel (0) target = $region13
  $region12: #{_lambda_.58} parent=0 // pred_region
    _
  $region13: #{_lambda_.58} parent=0 // pred_fallthru
    _
  %v15 = vld [vmem:[%s0] sm:$0xff]
  %v16 = vld [vmem:[%s0 + $0x8] sm:$0xff]
  %v17 = vld [vmem:[%s0 + $0x10] sm:$0xff]
  %v18 = vld [vmem:[%s0 + $0x18] sm:$0xff]
  %v19 = vld [vmem:[%s0 + $0x20] sm:$0xff]
  %v20 = vld [vmem:[%s0 + $0x28] sm:$0xff]
  %v21 = vld [vmem:[%s0 + $0x30] sm:$0xff]
  %v22 = vld [vmem:[%s0 + $0x38] sm:$0xff]
  %v23 = vld [vmem:[%s0 + $0x40] sm:$0xff]
  %v24 = vld [vmem:[%s0 + $0x48] sm:$0xff]
  %v25 = vld [vmem:[%s0 + $0x50] sm:$0xff]
  %v26 = vld [vmem:[%s0 + $0x58] sm:$0xff]
  %v27 = vld [vmem:[%s0 + $0x60] sm:$0xff]
  %v28 = vld [vmem:[%s0 + $0x68] sm:$0xff]
  %v29 = vld [vmem:[%s0 + $0x70] sm:$0xff]
  %v30 = vld [vmem:[%s0 + $0x78] sm:$0xff]
  %v31 = vld [vmem:[%s1] sm:$0xf]
  %v32 = vld [vmem:[%s1 + $0x4] sm:$0xf]
  %v33 = vld [vmem:[%s1 + $0x8] sm:$0xf]
  %v34 = vld [vmem:[%s1 + $0xc] sm:$0xf]
  %v35 = vld [vmem:[%s1 + $0x10] sm:$0xf]
  %v36 = vld [vmem:[%s1 + $0x14] sm:$0xf]
  %v37 = vld [vmem:[%s1 + $0x18] sm:$0xf]
  %v38 = vld [vmem:[%s1 + $0x1c] sm:$0xf]
  %v39 = vld [vmem:[%s1 + $0x20] sm:$0xf]
  %v40 = vld [vmem:[%s1 + $0x24] sm:$0xf]
  %v41 = vld [vmem:[%s1 + $0x28] sm:$0xf]
  %v42 = vld [vmem:[%s1 + $0x2c] sm:$0xf]
  %v43 = vld [vmem:[%s1 + $0x30] sm:$0xf]
  %v44 = vld [vmem:[%s1 + $0x34] sm:$0xf]
  %v45 = vld [vmem:[%s1 + $0x38] sm:$0xf]
  %v46 = vld [vmem:[%s1 + $0x3c] sm:$0xf]
  %v47 = vld [vmem:[%s1 + $0x40] sm:$0xf]
  %v48 = vld [vmem:[%s1 + $0x44] sm:$0xf]
  %v49 = vld [vmem:[%s1 + $0x48] sm:$0xf]
  %v50 = vld [vmem:[%s1 + $0x4c] sm:$0xf]
  %v51 = vld [vmem:[%s1 + $0x50] sm:$0xf]
  %v52 = vld [vmem:[%s1 + $0x54] sm:$0xf]
  %v53 = vld [vmem:[%s1 + $0x58] sm:$0xf]
  %v54 = vld [vmem:[%s1 + $0x5c] sm:$0xf]
  %v55 = vld [vmem:[%s1 + $0x60] sm:$0xf]
  %v56 = vld [vmem:[%s1 + $0x64] sm:$0xf]
  %v57 = vld [vmem:[%s1 + $0x68] sm:$0xf]
  %v58 = vld [vmem:[%s1 + $0x6c] sm:$0xf]
  %v59 = vld [vmem:[%s1 + $0x70] sm:$0xf]
  %v60 = vld [vmem:[%s1 + $0x74] sm:$0xf]
  %v61 = vld [vmem:[%s1 + $0x78] sm:$0xf]
  %v62 = vld [vmem:[%s1 + $0x7c] sm:$0xf]
  %v63 = vld [vmem:[%s2] sm:$0x1]
  %v65 = vlaneseq
  %v66 = vshrl.u32 %v65, 7
  %v67 = vsub.s32 0, %v66
  %v68 = vrot.slane %v63, %v67
  %v86 = vunpack.c.l.b16 %v15
  %v87 = vunpack.c.h.b16 %v15
  %v88 = vunpack.c.l.b16 %v16
  %v89 = vunpack.c.h.b16 %v16
  %v90 = vunpack.c.l.b16 %v17
  %v91 = vunpack.c.h.b16 %v17
  %v92 = vunpack.c.l.b16 %v18
  %v93 = vunpack.c.h.b16 %v18
  %v94 = vunpack.c.l.b16 %v19
  %v95 = vunpack.c.h.b16 %v19
  %v96 = vunpack.c.l.b16 %v20
  %v97 = vunpack.c.h.b16 %v20
  %v98 = vunpack.c.l.b16 %v21
  %v99 = vunpack.c.h.b16 %v21
  %v100 = vunpack.c.l.b16 %v22
  %v101 = vunpack.c.h.b16 %v22
  %v102 = vunpack.c.l.b16 %v23
  %v103 = vunpack.c.h.b16 %v23
  %v104 = vunpack.c.l.b16 %v24
  %v105 = vunpack.c.h.b16 %v24
  %v106 = vunpack.c.l.b16 %v25
  %v107 = vunpack.c.h.b16 %v25
  %v108 = vunpack.c.l.b16 %v26
  %v109 = vunpack.c.h.b16 %v26
  %v110 = vunpack.c.l.b16 %v27
  %v111 = vunpack.c.h.b16 %v27
  %v112 = vunpack.c.l.b16 %v28
  %v113 = vunpack.c.h.b16 %v28
  %v114 = vunpack.c.l.b16 %v29
  %v115 = vunpack.c.h.b16 %v29
  %v116 = vunpack.c.l.b16 %v30
  %v117 = vunpack.c.h.b16 %v30
  %v118 = vpack.c.b16 %v88, %v86
  %v119 = vpack.c.b16 %v89, %v87
  %v120 = vpack.c.b16 %v92, %v90
  %v121 = vpack.c.b16 %v93, %v91
  %v122 = vpack.c.b16 %v96, %v94
  %v123 = vpack.c.b16 %v97, %v95
  %v124 = vpack.c.b16 %v100, %v98
  %v125 = vpack.c.b16 %v101, %v99
  %v126 = vpack.c.b16 %v104, %v102
  %v127 = vpack.c.b16 %v105, %v103
  %v128 = vpack.c.b16 %v108, %v106
  %v129 = vpack.c.b16 %v109, %v107
  %v130 = vpack.c.b16 %v112, %v110
  %v131 = vpack.c.b16 %v113, %v111
  %v132 = vpack.c.b16 %v116, %v114
  %v133 = vpack.c.b16 %v117, %v115
  %v182 = vunpack.c.l.b16 %v31
  %v183 = vunpack.c.l.b16 %v32
  %v184 = vunpack.c.l.b16 %v33
  %v185 = vunpack.c.l.b16 %v34
  %v186 = vunpack.c.l.b16 %v35
  %v187 = vunpack.c.l.b16 %v36
  %v188 = vunpack.c.l.b16 %v37
  %v189 = vunpack.c.l.b16 %v38
  %v190 = vunpack.c.l.b16 %v39
  %v191 = vunpack.c.l.b16 %v40
  %v192 = vunpack.c.l.b16 %v41
  %v193 = vunpack.c.l.b16 %v42
  %v194 = vunpack.c.l.b16 %v43
  %v195 = vunpack.c.l.b16 %v44
  %v196 = vunpack.c.l.b16 %v45
  %v197 = vunpack.c.l.b16 %v46
  %v198 = vunpack.c.l.b16 %v47
  %v199 = vunpack.c.l.b16 %v48
  %v200 = vunpack.c.l.b16 %v49
  %v201 = vunpack.c.l.b16 %v50
  %v202 = vunpack.c.l.b16 %v51
  %v203 = vunpack.c.l.b16 %v52
  %v204 = vunpack.c.l.b16 %v53
  %v205 = vunpack.c.l.b16 %v54
  %v206 = vunpack.c.l.b16 %v55
  %v207 = vunpack.c.l.b16 %v56
  %v208 = vunpack.c.l.b16 %v57
  %v209 = vunpack.c.l.b16 %v58
  %v210 = vunpack.c.l.b16 %v59
  %v211 = vunpack.c.l.b16 %v60
  %v212 = vunpack.c.l.b16 %v61
  %v213 = vunpack.c.l.b16 %v62
  %v214 = vpack.c.b16 %v183, %v182
  %v215 = vpack.c.b16 %v185, %v184
  %v216 = vpack.c.b16 %v187, %v186
  %v217 = vpack.c.b16 %v189, %v188
  %v218 = vpack.c.b16 %v191, %v190
  %v219 = vpack.c.b16 %v193, %v192
  %v220 = vpack.c.b16 %v195, %v194
  %v221 = vpack.c.b16 %v197, %v196
  %v222 = vpack.c.b16 %v199, %v198
  %v223 = vpack.c.b16 %v201, %v200
  %v224 = vpack.c.b16 %v203, %v202
  %v225 = vpack.c.b16 %v205, %v204
  %v226 = vpack.c.b16 %v207, %v206
  %v227 = vpack.c.b16 %v209, %v208
  %v228 = vpack.c.b16 %v211, %v210
  %v229 = vpack.c.b16 %v213, %v212
  %246 = vmatprep.subr.bf16.mxu0 0
  %247 = vmatpush1.bf16.msra.mxu0 %v214
  %248 = vmatprep.subr.bf16.mxu0 0
  %249 = vmatpush1.bf16.msra.mxu0 %v215
  %250 = vmatprep.subr.bf16.mxu0 0
  %251 = vmatpush1.bf16.msra.mxu0 %v216
  %252 = vmatprep.subr.bf16.mxu0 0
  %253 = vmatpush1.bf16.msra.mxu0 %v217
  %254 = vmatprep.subr.bf16.mxu0 0
  %255 = vmatpush1.bf16.msra.mxu0 %v218
  %256 = vmatprep.subr.bf16.mxu0 0
  %257 = vmatpush1.bf16.msra.mxu0 %v219
  %258 = vmatprep.subr.bf16.mxu0 0
  %259 = vmatpush1.bf16.msra.mxu0 %v220
  %260 = vmatprep.subr.bf16.mxu0 0
  %261 = vmatpush1.bf16.msra.mxu0 %v221
  %262 = vmatprep.subr.bf16.mxu0 0
  %263 = vmatpush1.bf16.msra.mxu0 %v222
  %264 = vmatprep.subr.bf16.mxu0 0
  %265 = vmatpush1.bf16.msra.mxu0 %v223
  %266 = vmatprep.subr.bf16.mxu0 0
  %267 = vmatpush1.bf16.msra.mxu0 %v224
  %268 = vmatprep.subr.bf16.mxu0 0
  %269 = vmatpush1.bf16.msra.mxu0 %v225
  %270 = vmatprep.subr.bf16.mxu0 0
  %271 = vmatpush1.bf16.msra.mxu0 %v226
  %272 = vmatprep.subr.bf16.mxu0 0
  %273 = vmatpush1.bf16.msra.mxu0 %v227
  %274 = vmatprep.subr.bf16.mxu0 0
  %275 = vmatpush1.bf16.msra.mxu0 %v228
  %276 = vmatprep.subr.bf16.mxu0 0
  %277 = vmatpush1.bf16.msra.mxu0 %v229
  %278 = vmatprep.mubr.bf16.mxu0 %v119
  %279 = vmatmul.mubr.bf16.gmra.mrb[0].mxu0 %v118
  %v280 = vpop.f32.mrb[0].mxu0
  %v281 = vadd.f32 %v68, %v280
  %v282 = vpop.f32.mrb[0].mxu0
  %v283 = vpop.f32.mrb[0].mxu0
  %v284 = vadd.f32 %v68, %v283
  %v285 = vpop.f32.mrb[0].mxu0
  %286 = vmatprep.mubr.bf16.mxu0 %v121
  %287 = vmatmul.mubr.bf16.gmra.mrb[0].mxu0 %v120
  %v288 = vpop.f32.mrb[0].mxu0
  %v289 = vadd.f32 %v68, %v288
  %v290 = vpop.f32.mrb[0].mxu0
  %v291 = vpop.f32.mrb[0].mxu0
  %v292 = vadd.f32 %v68, %v291
  %v293 = vpop.f32.mrb[0].mxu0
  %294 = vmatprep.mubr.bf16.mxu0 %v123
  %295 = vmatmul.mubr.bf16.gmra.mrb[0].mxu0 %v122
  %v296 = vpop.f32.mrb[0].mxu0
  %v297 = vadd.f32 %v68, %v296
  %v298 = vpop.f32.mrb[0].mxu0
  %v299 = vpop.f32.mrb[0].mxu0
  %v300 = vadd.f32 %v68, %v299
  %v301 = vpop.f32.mrb[0].mxu0
  %302 = vmatprep.mubr.bf16.mxu0 %v125
  %303 = vmatmul.mubr.bf16.gmra.mrb[0].mxu0 %v124
  %v304 = vpop.f32.mrb[0].mxu0
  %v305 = vadd.f32 %v68, %v304
  %v306 = vpop.f32.mrb[0].mxu0
  %v307 = vpop.f32.mrb[0].mxu0
  %v308 = vadd.f32 %v68, %v307
  %v309 = vpop.f32.mrb[0].mxu0
  %310 = vmatprep.mubr.bf16.mxu0 %v127
  %311 = vmatmul.mubr.bf16.gmra.mrb[0].mxu0 %v126
  %v312 = vpop.f32.mrb[0].mxu0
  %v313 = vadd.f32 %v68, %v312
  %v314 = vpop.f32.mrb[0].mxu0
  %v315 = vpop.f32.mrb[0].mxu0
  %v316 = vadd.f32 %v68, %v315
  %v317 = vpop.f32.mrb[0].mxu0
  %318 = vmatprep.mubr.bf16.mxu0 %v129
  %319 = vmatmul.mubr.bf16.gmra.mrb[0].mxu0 %v128
  %v320 = vpop.f32.mrb[0].mxu0
  %v321 = vadd.f32 %v68, %v320
  %v322 = vpop.f32.mrb[0].mxu0
  %v323 = vpop.f32.mrb[0].mxu0
  %v324 = vadd.f32 %v68, %v323
  %v325 = vpop.f32.mrb[0].mxu0
  %326 = vmatprep.mubr.bf16.mxu0 %v131
  %327 = vmatmul.mubr.bf16.gmra.mrb[0].mxu0 %v130
  %v328 = vpop.f32.mrb[0].mxu0
  %v329 = vadd.f32 %v68, %v328
  %v330 = vpop.f32.mrb[0].mxu0
  %v331 = vpop.f32.mrb[0].mxu0
  %v332 = vadd.f32 %v68, %v331
  %v333 = vpop.f32.mrb[0].mxu0
  %334 = vmatprep.mubr.bf16.mxu0 %v133
  %335 = vmatmul.mubr.bf16.gmra.mrb[0].mxu0 %v132
  %v336 = vpop.f32.mrb[0].mxu0
  %v337 = vadd.f32 %v68, %v336
  %v338 = vpop.f32.mrb[0].mxu0
  %v339 = vpop.f32.mrb[0].mxu0
  %v340 = vadd.f32 %v68, %v339
  %v341 = vpop.f32.mrb[0].mxu0
  %342 = vdwg.mxu0
  %v343 = vmax.f32 %v281, 0.0
  %v344 = vmax.f32 %v284, 0.0
  %v345 = vmax.f32 %v289, 0.0
  %v346 = vmax.f32 %v292, 0.0
  %v347 = vmax.f32 %v297, 0.0
  %v348 = vmax.f32 %v300, 0.0
  %v349 = vmax.f32 %v305, 0.0
  %v350 = vmax.f32 %v308, 0.0
  %v351 = vmax.f32 %v313, 0.0
  %v352 = vmax.f32 %v316, 0.0
  %v353 = vmax.f32 %v321, 0.0
  %v354 = vmax.f32 %v324, 0.0
  %v355 = vmax.f32 %v329, 0.0
  %v356 = vmax.f32 %v332, 0.0
  %v357 = vmax.f32 %v337, 0.0
  %v358 = vmax.f32 %v340, 0.0
  %v359 = vpack.c.bf16 %v344, %v343
  %v360 = vpack.c.bf16 %v346, %v345
  %v361 = vpack.c.bf16 %v348, %v347
  %v362 = vpack.c.bf16 %v350, %v349
  %v363 = vpack.c.bf16 %v352, %v351
  %v364 = vpack.c.bf16 %v354, %v353
  %v365 = vpack.c.bf16 %v356, %v355
  %v366 = vpack.c.bf16 %v358, %v357
  %v375 = vunpack.c.l.b16 %v359
  %v376 = vunpack.c.h.b16 %v359
  %v377 = vunpack.c.l.b16 %v360
  %v378 = vunpack.c.h.b16 %v360
  %v379 = vunpack.c.l.b16 %v361
  %v380 = vunpack.c.h.b16 %v361
  %v381 = vunpack.c.l.b16 %v362
  %v382 = vunpack.c.h.b16 %v362
  %v383 = vunpack.c.l.b16 %v363
  %v384 = vunpack.c.h.b16 %v363
  %v385 = vunpack.c.l.b16 %v364
  %v386 = vunpack.c.h.b16 %v364
  %v387 = vunpack.c.l.b16 %v365
  %v388 = vunpack.c.h.b16 %v365
  %v389 = vunpack.c.l.b16 %v366
  %v390 = vunpack.c.h.b16 %v366
  %v391 = vpack.c.b16 %v375, %v375
  %v392 = vpack.c.b16 %v376, %v376
  %v393 = vpack.c.b16 %v377, %v377
  %v394 = vpack.c.b16 %v378, %v378
  %v395 = vpack.c.b16 %v379, %v379
  %v396 = vpack.c.b16 %v380, %v380
  %v397 = vpack.c.b16 %v381, %v381
  %v398 = vpack.c.b16 %v382, %v382
  %v399 = vpack.c.b16 %v383, %v383
  %v400 = vpack.c.b16 %v384, %v384
  %v401 = vpack.c.b16 %v385, %v385
  %v402 = vpack.c.b16 %v386, %v386
  %v403 = vpack.c.b16 %v387, %v387
  %v404 = vpack.c.b16 %v388, %v388
  %v405 = vpack.c.b16 %v389, %v389
  %v406 = vpack.c.b16 %v390, %v390
  %423 = vst [vmem:[%s3] sm:$0xf] %v391
  %424 = vst [vmem:[%s3 + $0x4] sm:$0xf] %v392
  %425 = vst [vmem:[%s3 + $0x8] sm:$0xf] %v393
  %426 = vst [vmem:[%s3 + $0xc] sm:$0xf] %v394
  %427 = vst [vmem:[%s3 + $0x10] sm:$0xf] %v395
  %428 = vst [vmem:[%s3 + $0x14] sm:$0xf] %v396
  %429 = vst [vmem:[%s3 + $0x18] sm:$0xf] %v397
  %430 = vst [vmem:[%s3 + $0x1c] sm:$0xf] %v398
  %431 = vst [vmem:[%s3 + $0x20] sm:$0xf] %v399
  %432 = vst [vmem:[%s3 + $0x24] sm:$0xf] %v400
  %433 = vst [vmem:[%s3 + $0x28] sm:$0xf] %v401
  %434 = vst [vmem:[%s3 + $0x2c] sm:$0xf] %v402
  %435 = vst [vmem:[%s3 + $0x30] sm:$0xf] %v403
  %436 = vst [vmem:[%s3 + $0x34] sm:$0xf] %v404
  %437 = vst [vmem:[%s3 + $0x38] sm:$0xf] %v405
  %438 = vst [vmem:[%s3 + $0x3c] sm:$0xf] %v406
  // Predicated region
  $region14: #{_lambda_.58} parent=0 // pred_check
    _
  $region15: #{_lambda_.58} parent=0 // pred_check_branch
    %440 = sbr.rel (0) target = $region17
  $region16: #{_lambda_.58} parent=0 // pred_region
    _
  $region17: #{_lambda_.58} parent=0 // pred_fallthru
    _
  // Predicated region
  $region18: #{_lambda_.58} parent=0 // pred_check
    _
  $region19: #{_lambda_.58} parent=0 // pred_check_branch
    %442 = sbr.rel (0) target = $region21
  $region20: #{_lambda_.58} parent=0 // pred_region
    _
  $region21: #{_lambda_.58} parent=0 // pred_fallthru
    _

// kernel: _lambda_.59
$region0: #{_lambda_.59}
  #allocation0 [shape = 'u32[]', space=smem, size = 0x4, offset = 0x4, fixed_abs, tag = 'smem constant byte address 0x4 - core index']
  #allocation1 [shape = 'u32[144,128]{1,0:T(1,128)}', space=vmem, size = 0x12000, scoped, tag = 'internal scratch']
  %s0 = inlined_call_operand.vmem [shape: bf16[2,5,5,128], index: 0, kind: input, shape index: {}]
  %s1 = inlined_call_operand.vmem [shape: bf16[2,5,4,128], index: 1, kind: input, shape index: {}]
  %s2 = inlined_call_operand.vmem [shape: bf16[2,4,5,128], index: 2, kind: input, shape index: {}]
  %s3 = inlined_call_operand.vmem [shape: bf16[2,4,4,128], index: 3, kind: input, shape index: {}]
  %s4 = inlined_call_operand.vmem [shape: bf16[2,4,4,128], index: 4, kind: output, shape index: {}]
  %s5 = sld [smem:[#allocation0]]
  $region49: #{_lambda_.59} parent=0
    _
  %s7 = ssub.s32 1, %s5
  %s8 = scalar_select 0, %s7, %s5
  loop: start=0, step=1, limit=4
  $region2: #{_lambda_.59} parent=0 // loop_pre_header
    _
  $region3: #{_lambda_.59} parent=0 // loop_header
    %s10 = sphi 0, %s14
    %p11 = scmp.ge.s32.totalorder %s10, 4
    %s20 = sphi 0, %s22
    %s23 = sphi 0, %s20
    %s24 = sphi 0, %s23
    %s40 = sphi 0, %s24
    %s46 = sphi 0, %s48
    %s49 = sphi 0, %s46
    %s50 = sphi 0, %s49
    %s66 = sphi 0, %s50
    %s72 = sphi 0, %s74
    %s75 = sphi 0, %s72
    %s76 = sphi 0, %s75
    %s92 = sphi 0, %s76
    %s98 = sphi 0, %s100
    %s101 = sphi 0, %s98
    %s102 = sphi 0, %s101
    %s118 = sphi 0, %s102
    %s124 = sphi 0, %s126
    %s127 = sphi 0, %s124
    %s128 = sphi 0, %s127
    %s144 = sphi 0, %s128
  $region4: #{_lambda_.59} parent=0 // loop_header_branch
    %13 = sbr.rel (%p11) target = $region8
  $region5: #{_lambda_.59} parent=0 // loop_body
    %s15 = ssub.s32 %s10, 1
    %s16 = ssub.s32 %s10, 2
    %s17 = sadd.s32 %s10, 1
    %s18 = ssub.s32 %s10, %s17
    %p19 = scmp.eq.s32.totalorder %s18, 0
    %s21 = sadd.s32 %s20, 1
    %s22 = scalar_select %p19, %s20, %s21
    %p25 = pneg %p19
    %p26 = scmp.eq.s32.totalorder %s10, 1
    %p27 = por %p25, %p26
    %p28 = scmp.ne.s32.totalorder %s20, %s23
    %p29 = scmp.eq.s32.totalorder %s10, 0
    %p30 = por %p28, %p29
    %p31 = scmp.ne.s32.totalorder %s20, %s23
    %p32 = scmp.eq.s32.totalorder %s15, 1
    %p33 = por %p31, %p32
    %p34 = scmp.ne.s32.totalorder %s23, %s24
    %p35 = scmp.eq.s32.totalorder %s15, 0
    %p36 = por %p34, %p35
    %p37 = scmp.ne.s32.totalorder %s23, %s24
    %p38 = scmp.eq.s32.totalorder %s16, 1
    %p39 = por %p37, %p38
    %p41 = scmp.ne.s32.totalorder %s24, %s40
    %p42 = scmp.eq.s32.totalorder %s16, 0
    %p43 = por %p41, %p42
    %s44 = ssub.s32 %s10, %s17
    %p45 = scmp.eq.s32.totalorder %s44, 0
    %s47 = sadd.s32 %s46, 1
    %s48 = scalar_select %p45, %s46, %s47
    %p51 = pneg %p45
    %p52 = scmp.eq.s32.totalorder %s10, 1
    %p53 = por %p51, %p52
    %p54 = scmp.ne.s32.totalorder %s46, %s49
    %p55 = scmp.eq.s32.totalorder %s10, 0
    %p56 = por %p54, %p55
    %p57 = scmp.ne.s32.totalorder %s46, %s49
    %p58 = scmp.eq.s32.totalorder %s15, 1
    %p59 = por %p57, %p58
    %p60 = scmp.ne.s32.totalorder %s49, %s50
    %p61 = scmp.eq.s32.totalorder %s15, 0
    %p62 = por %p60, %p61
    %p63 = scmp.ne.s32.totalorder %s49, %s50
    %p64 = scmp.eq.s32.totalorder %s16, 1
    %p65 = por %p63, %p64
    %p67 = scmp.ne.s32.totalorder %s50, %s66
    %p68 = scmp.eq.s32.totalorder %s16, 0
    %p69 = por %p67, %p68
    %s70 = ssub.s32 %s10, %s17
    %p71 = scmp.eq.s32.totalorder %s70, 0
    %s73 = sadd.s32 %s72, 1
    %s74 = scalar_select %p71, %s72, %s73
    %p77 = pneg %p71
    %p78 = scmp.eq.s32.totalorder %s10, 1
    %p79 = por %p77, %p78
    %p80 = scmp.ne.s32.totalorder %s72, %s75
    %p81 = scmp.eq.s32.totalorder %s10, 0
    %p82 = por %p80, %p81
    %p83 = scmp.ne.s32.totalorder %s72, %s75
    %p84 = scmp.eq.s32.totalorder %s15, 1
    %p85 = por %p83, %p84
    %p86 = scmp.ne.s32.totalorder %s75, %s76
    %p87 = scmp.eq.s32.totalorder %s15, 0
    %p88 = por %p86, %p87
    %p89 = scmp.ne.s32.totalorder %s75, %s76
    %p90 = scmp.eq.s32.totalorder %s16, 1
    %p91 = por %p89, %p90
    %p93 = scmp.ne.s32.totalorder %s76, %s92
    %p94 = scmp.eq.s32.totalorder %s16, 0
    %p95 = por %p93, %p94
    %s96 = ssub.s32 %s10, %s17
    %p97 = scmp.eq.s32.totalorder %s96, 0
    %s99 = sadd.s32 %s98, 1
    %s100 = scalar_select %p97, %s98, %s99
    %p103 = pneg %p97
    %p104 = scmp.eq.s32.totalorder %s10, 1
    %p105 = por %p103, %p104
    %p106 = scmp.ne.s32.totalorder %s98, %s101
    %p107 = scmp.eq.s32.totalorder %s10, 0
    %p108 = por %p106, %p107
    %p109 = scmp.ne.s32.totalorder %s98, %s101
    %p110 = scmp.eq.s32.totalorder %s15, 1
    %p111 = por %p109, %p110
    %p112 = scmp.ne.s32.totalorder %s101, %s102
    %p113 = scmp.eq.s32.totalorder %s15, 0
    %p114 = por %p112, %p113
    %p115 = scmp.ne.s32.totalorder %s101, %s102
    %p116 = scmp.eq.s32.totalorder %s16, 1
    %p117 = por %p115, %p116
    %p119 = scmp.ne.s32.totalorder %s102, %s118
    %p120 = scmp.eq.s32.totalorder %s16, 0
    %p121 = por %p119, %p120
    %s122 = ssub.s32 %s10, %s17
    %p123 = scmp.eq.s32.totalorder %s122, 0
    %s125 = sadd.s32 %s124, 1
    %s126 = scalar_select %p123, %s124, %s125
    %p129 = pneg %p123
    %p130 = scmp.eq.s32.totalorder %s10, 1
    %p131 = por %p129, %p130
    %p132 = scmp.ne.s32.totalorder %s124, %s127
    %p133 = scmp.eq.s32.totalorder %s10, 0
    %p134 = por %p132, %p133
    %p135 = scmp.ne.s32.totalorder %s124, %s127
    %p136 = scmp.eq.s32.totalorder %s15, 1
    %p137 = por %p135, %p136
    %p138 = scmp.ne.s32.totalorder %s127, %s128
    %p139 = scmp.eq.s32.totalorder %s15, 0
    %p140 = por %p138, %p139
    %p141 = scmp.ne.s32.totalorder %s127, %s128
    %p142 = scmp.eq.s32.totalorder %s16, 1
    %p143 = por %p141, %p142
    %p145 = scmp.ne.s32.totalorder %s128, %s144
    %p146 = scmp.eq.s32.totalorder %s16, 0
    %p147 = por %p145, %p146
    %p148 = scmp.le.s32.totalorder 1, %s10
    %p149 = scmp.lt.s32.totalorder %s10, 3
    %p150 = pnand %p148, %p149
    %p151 = pneg %p150
    // Predicated region
    $region9: #{_lambda_.59} parent=5 // pred_check
      _
    $region10: #{_lambda_.59} parent=5 // pred_check_branch
      %153 = sbr.rel (%p150) target = $region12
    $region11: #{_lambda_.59} parent=5 // pred_region
      %s154 = ssub.s32 %s10, 1
    $region12: #{_lambda_.59} parent=5 // pred_fallthru
      _
    %p155 = scmp.lt.s32.totalorder %s10, 2
    // Predicated region
    $region13: #{_lambda_.59} parent=5 // pred_check
      %p156 = pneg %p155
    $region14: #{_lambda_.59} parent=5 // pred_check_branch
      %158 = sbr.rel (%p156) target = $region16
    $region15: #{_lambda_.59} parent=5 // pred_region
      // Predicated region
      $region17: #{_lambda_.59} parent=15 // pred_check
        %p159 = pneg %p30
      $region18: #{_lambda_.59} parent=15 // pred_check_branch
        %161 = sbr.rel (%p159) target = $region20
      $region19: #{_lambda_.59} parent=15 // pred_region
        %p162 = scmp.lt.s32.totalorder %s10, 1
        %s163 = scalar_select %p162, %s10, 1
        %s164 = smul.addr %s163, 5
        %s165 = smul.addr %s164, 4
        %s166 = scalar_lea.vmem %s0, %s165
      $region20: #{_lambda_.59} parent=15 // pred_fallthru
        _
      // Predicated region
      $region21: #{_lambda_.59} parent=15 // pred_check
        %p167 = pneg %p56
      $region22: #{_lambda_.59} parent=15 // pred_check_branch
        %169 = sbr.rel (%p167) target = $region24
      $region23: #{_lambda_.59} parent=15 // pred_region
        %p170 = scmp.lt.s32.totalorder %s10, 1
        %s171 = scalar_select %p170, %s10, 1
        %s172 = smul.addr %s171, 5
        %s173 = smul.addr %s172, 2
        %s174 = scalar_lea.vmem %s1, %s173
      $region24: #{_lambda_.59} parent=15 // pred_fallthru
        _
      // Predicated region
      $region25: #{_lambda_.59} parent=15 // pred_check
        %p175 = pneg %p82
      $region26: #{_lambda_.59} parent=15 // pred_check_branch
        %177 = sbr.rel (%p175) target = $region28
      $region27: #{_lambda_.59} parent=15 // pred_region
        %p178 = scmp.lt.s32.totalorder %s10, 1
        %s179 = scalar_select %p178, %s10, 1
        %s180 = smul.addr %s179, 4
        %s181 = smul.addr %s180, 4
        %s182 = scalar_lea.vmem %s2, %s181
      $region28: #{_lambda_.59} parent=15 // pred_fallthru
        _
      // Predicated region
      $region29: #{_lambda_.59} parent=15 // pred_check
        %p183 = pneg %p108
      $region30: #{_lambda_.59} parent=15 // pred_check_branch
        %185 = sbr.rel (%p183) target = $region32
      $region31: #{_lambda_.59} parent=15 // pred_region
        %p186 = scmp.lt.s32.totalorder %s10, 1
        %s187 = scalar_select %p186, %s10, 1
        %s188 = smul.addr %s187, 4
        %s189 = smul.addr %s188, 2
        %s190 = scalar_lea.vmem %s3, %s189
      $region32: #{_lambda_.59} parent=15 // pred_fallthru
        _
    $region16: #{_lambda_.59} parent=5 // pred_fallthru
      _
    %p191 = scmp.le.s32.totalorder 1, %s10
    %p192 = scmp.lt.s32.totalorder %s10, 3
    %p193 = pnand %p191, %p192
    %p194 = pneg %p193
    // Predicated region
    $region33: #{_lambda_.59} parent=5 // pred_check
      _
    $region34: #{_lambda_.59} parent=5 // pred_check_branch
      %196 = sbr.rel (%p193) target = $region36
    $region35: #{_lambda_.59} parent=5 // pred_region
      %s197 = ssub.s32 %s10, 1
      %p198 = scmp.lt.s32.totalorder %s15, 1
      %s199 = scalar_select %p198, %s15, 1
      %s200 = smul.addr %s199, 5
      %s201 = smul.addr %s200, 4
      %s202 = scalar_lea.vmem %s0, %s201
      %p203 = pneg %p36
      %p204 = pneg %p33
      %p205 = scmp.lt.s32.totalorder %s15, 1
      %s206 = scalar_select %p205, %s15, 1
      %s207 = smul.addr %s206, 5
      %s208 = smul.addr %s207, 2
      %s209 = scalar_lea.vmem %s1, %s208
      %p210 = pneg %p62
      %p211 = pneg %p59
      %p212 = scmp.lt.s32.totalorder %s15, 1
      %s213 = scalar_select %p212, %s15, 1
      %s214 = smul.addr %s213, 4
      %s215 = smul.addr %s214, 4
      %s216 = scalar_lea.vmem %s2, %s215
      %p217 = pneg %p88
      %p218 = pneg %p85
      %p219 = scmp.lt.s32.totalorder %s15, 1
      %s220 = scalar_select %p219, %s15, 1
      %s221 = smul.addr %s220, 4
      %s222 = smul.addr %s221, 2
      %s223 = scalar_lea.vmem %s3, %s222
      %p224 = pneg %p114
      %p225 = pneg %p111
      %p226 = pneg %p140
      %p227 = pneg %p137
      %p228 = scmp.lt.s32.totalorder %s15, 1
      %s229 = scalar_select %p228, %s15, 1
      %s230 = smul.addr %s229, 4
      %s231 = smul.addr %s230, 2
      %s232 = scalar_lea.vmem %s4, %s231
      %p233 = scmp.lt.s32.totalorder %s15, 1
      %s234 = scalar_select %p233, %s15, 1
      %s235 = smul.addr %s234, 5
      %s236 = smul.addr %s235, 4
      %s237 = scalar_lea.vmem %s0, %s236
      %p238 = scmp.lt.s32.totalorder %s15, 1
      %s239 = scalar_select %p238, %s15, 1
      %s240 = smul.addr %s239, 5
      %s241 = smul.addr %s240, 2
      %s242 = scalar_lea.vmem %s1, %s241
      %p243 = scmp.lt.s32.totalorder %s15, 1
      %s244 = scalar_select %p243, %s15, 1
      %s245 = smul.addr %s244, 4
      %s246 = smul.addr %s245, 4
      %s247 = scalar_lea.vmem %s2, %s246
      %p248 = scmp.lt.s32.totalorder %s15, 1
      %s249 = scalar_select %p248, %s15, 1
      %s250 = smul.addr %s249, 4
      %s251 = smul.addr %s250, 2
      %s252 = scalar_lea.vmem %s3, %s251
      %p253 = scmp.lt.s32.totalorder %s15, 1
      %s254 = scalar_select %p253, %s15, 1
      %s255 = smul.addr %s254, 4
      %s256 = smul.addr %s255, 2
      %s257 = scalar_lea.vmem %s4, %s256
      %v258 = vld [vmem:[%s237] sm:$0x7]
      %v259 = vld [vmem:[%s237 + $0x4] sm:$0x7]
      %v260 = vld [vmem:[%s237 + $0x8] sm:$0x7]
      %v261 = vld [vmem:[%s237 + $0xc] sm:$0x7]
      %v262 = vld [vmem:[%s237 + $0x10] sm:$0x7]
      %v263 = vld [vmem:[%s242] sm:$0x3]
      %v264 = vld [vmem:[%s242 + $0x2] sm:$0x3]
      %v265 = vld [vmem:[%s242 + $0x4] sm:$0x3]
      %v266 = vld [vmem:[%s242 + $0x6] sm:$0x3]
      %v267 = vld [vmem:[%s242 + $0x8] sm:$0x3]
      %v268 = vld [vmem:[%s247] sm:$0x7]
      %v269 = vld [vmem:[%s247 + $0x4] sm:$0x7]
      %v270 = vld [vmem:[%s247 + $0x8] sm:$0x7]
      %v271 = vld [vmem:[%s247 + $0xc] sm:$0x7]
      %v272 = vld [vmem:[%s252] sm:$0x3]
      %v273 = vld [vmem:[%s252 + $0x2] sm:$0x3]
      %v274 = vld [vmem:[%s252 + $0x4] sm:$0x3]
      %v275 = vld [vmem:[%s252 + $0x6] sm:$0x3]
      %v276 = vmax.bf16 %v272, %v258
      %v277 = vmax.bf16 %v273, %v259
      %v278 = vmax.bf16 %v274, %v260
      %v279 = vmax.bf16 %v275, %v261
      %v285 = vunpack.c.l.s4 1983009808
      %v286 = vunpack.c.0.s8 %v285
      %v287 = vlaneseq
      %v288 = vshrl.u32 %v287, 7
      %v289 = vsub.s32 %v286, %v288
      %v290 = vrot.slane %v258, %v289
      %v291 = vcombine.high %v290, %v290
      %v293 = vunpack.c.l.s4 1983009808
      %v294 = vunpack.c.0.s8 %v293
      %v295 = vlaneseq
      %v296 = vshrl.u32 %v295, 7
      %v297 = vsub.s32 %v294, %v296
      %v298 = vrot.slane %v259, %v297
      %v299 = vcombine.high %v298, %v298
      %v301 = vunpack.c.l.s4 1983009808
      %v302 = vunpack.c.0.s8 %v301
      %v303 = vlaneseq
      %v304 = vshrl.u32 %v303, 7
      %v305 = vsub.s32 %v302, %v304
      %v306 = vrot.slane %v260, %v305
      %v307 = vcombine.high %v306, %v306
      %v309 = vunpack.c.l.s4 1983009808
      %v310 = vunpack.c.0.s8 %v309
      %v311 = vlaneseq
      %v312 = vshrl.u32 %v311, 7
      %v313 = vsub.s32 %v310, %v312
      %v314 = vrot.slane %v261, %v313
      %v315 = vcombine.high %v314, %v314
      %vm316 = vsmask.f32 1280
      %vm317 = vsmask.f32 3336
      %vm318 = vmor %vm316, %vm317
      %vm319 = vsmask.f32 5392
      %vm320 = vmor %vm318, %vm319
      %vm321 = vsmask.f32 7448
      %vm322 = vmor %vm320, %vm321
      %v324 = vshrl.u32 %v290, 16
      %v326 = vrot.slane %v324, 6
      %v327 = vshll.u32 %v290, 16
      %v329 = vrot.slane %v327, 7
      %v330 = vor.u32 %v326, %v329
      %v331 = vrot.slane %v330, 2
      %v333 = vshll.u32 %v291, 16
      %v335 = vrot.slane %v333, 7
      %v336 = vsel %vm322, %v331, %v335
      %v338 = vshrl.u32 %v298, 16
      %v340 = vrot.slane %v338, 6
      %v341 = vshll.u32 %v298, 16
      %v343 = vrot.slane %v341, 7
      %v344 = vor.u32 %v340, %v343
      %v345 = vrot.slane %v344, 2
      %v347 = vshll.u32 %v299, 16
      %v349 = vrot.slane %v347, 7
      %v350 = vsel %vm322, %v345, %v349
      %v352 = vshrl.u32 %v306, 16
      %v354 = vrot.slane %v352, 6
      %v355 = vshll.u32 %v306, 16
      %v357 = vrot.slane %v355, 7
      %v358 = vor.u32 %v354, %v357
      %v359 = vrot.slane %v358, 2
      %v361 = vshll.u32 %v307, 16
      %v363 = vrot.slane %v361, 7
      %v364 = vsel %vm322, %v359, %v363
      %v366 = vshrl.u32 %v314, 16
      %v368 = vrot.slane %v366, 6
      %v369 = vshll.u32 %v314, 16
      %v371 = vrot.slane %v369, 7
      %v372 = vor.u32 %v368, %v371
      %v373 = vrot.slane %v372, 2
      %v375 = vshll.u32 %v315, 16
      %v377 = vrot.slane %v375, 7
      %v378 = vsel %vm322, %v373, %v377
      %v383 = vmax.bf16 %v276, %v336
      %v384 = vmax.bf16 %v277, %v350
      %v385 = vmax.bf16 %v278, %v364
      %v386 = vmax.bf16 %v279, %v378
      %v387 = vmax.bf16 %v383, %v259
      %v388 = vmax.bf16 %v384, %v260
      %v389 = vmax.bf16 %v385, %v261
      %v390 = vmax.bf16 %v386, %v262
      %v393 = vunpack.c.l.s4 1983009808
      %v394 = vunpack.c.0.s8 %v393
      %v395 = vlaneseq
      %v396 = vshrl.u32 %v395, 7
      %v397 = vsub.s32 %v394, %v396
      %v398 = vrot.slane %v262, %v397
      %v399 = vcombine.high %v398, %v398
      %v401 = vshrl.u32 %v398, 16
      %v403 = vrot.slane %v401, 6
      %v404 = vshll.u32 %v398, 16
      %v406 = vrot.slane %v404, 7
      %v407 = vor.u32 %v403, %v406
      %v408 = vrot.slane %v407, 2
      %v410 = vshll.u32 %v399, 16
      %v412 = vrot.slane %v410, 7
      %v413 = vsel %vm322, %v408, %v412
      %v415 = vmax.bf16 %v387, %v350
      %v416 = vmax.bf16 %v388, %v364
      %v417 = vmax.bf16 %v389, %v378
      %v418 = vmax.bf16 %v390, %v413
      %v419 = vmax.bf16 %v415, %v263
      %v420 = vmax.bf16 %v416, %v264
      %v421 = vmax.bf16 %v417, %v265
      %v422 = vmax.bf16 %v418, %v266
      %v423 = vmax.bf16 %v419, %v264
      %v424 = vmax.bf16 %v420, %v265
      %v425 = vmax.bf16 %v421, %v266
      %v426 = vmax.bf16 %v422, %v267
      %v427 = vmax.bf16 %v423, %v268
      %v428 = vmax.bf16 %v424, %v269
      %v429 = vmax.bf16 %v425, %v270
      %v430 = vmax.bf16 %v426, %v271
      %v436 = vunpack.c.l.s4 1983009808
      %v437 = vunpack.c.0.s8 %v436
      %v438 = vlaneseq
      %v439 = vshrl.u32 %v438, 7
      %v440 = vsub.s32 %v437, %v439
      %v441 = vrot.slane %v268, %v440
      %v442 = vcombine.high %v441, %v441
      %v444 = vunpack.c.l.s4 1983009808
      %v445 = vunpack.c.0.s8 %v444
      %v446 = vlaneseq
      %v447 = vshrl.u32 %v446, 7
      %v448 = vsub.s32 %v445, %v447
      %v449 = vrot.slane %v269, %v448
      %v450 = vcombine.high %v449, %v449
      %v452 = vunpack.c.l.s4 1983009808
      %v453 = vunpack.c.0.s8 %v452
      %v454 = vlaneseq
      %v455 = vshrl.u32 %v454, 7
      %v456 = vsub.s32 %v453, %v455
      %v457 = vrot.slane %v270, %v456
      %v458 = vcombine.high %v457, %v457
      %v460 = vunpack.c.l.s4 1983009808
      %v461 = vunpack.c.0.s8 %v460
      %v462 = vlaneseq
      %v463 = vshrl.u32 %v462, 7
      %v464 = vsub.s32 %v461, %v463
      %v465 = vrot.slane %v271, %v464
      %v466 = vcombine.high %v465, %v465
      %v468 = vshrl.u32 %v441, 16
      %v470 = vrot.slane %v468, 6
      %v471 = vshll.u32 %v441, 16
      %v473 = vrot.slane %v471, 7
      %v474 = vor.u32 %v470, %v473
      %v475 = vrot.slane %v474, 2
      %v477 = vshll.u32 %v442, 16
      %v479 = vrot.slane %v477, 7
      %v480 = vsel %vm322, %v475, %v479
      %v482 = vshrl.u32 %v449, 16
      %v484 = vrot.slane %v482, 6
      %v485 = vshll.u32 %v449, 16
      %v487 = vrot.slane %v485, 7
      %v488 = vor.u32 %v484, %v487
      %v489 = vrot.slane %v488, 2
      %v491 = vshll.u32 %v450, 16
      %v493 = vrot.slane %v491, 7
      %v494 = vsel %vm322, %v489, %v493
      %v496 = vshrl.u32 %v457, 16
      %v498 = vrot.slane %v496, 6
      %v499 = vshll.u32 %v457, 16
      %v501 = vrot.slane %v499, 7
      %v502 = vor.u32 %v498, %v501
      %v503 = vrot.slane %v502, 2
      %v505 = vshll.u32 %v458, 16
      %v507 = vrot.slane %v505, 7
      %v508 = vsel %vm322, %v503, %v507
      %v510 = vshrl.u32 %v465, 16
      %v512 = vrot.slane %v510, 6
      %v513 = vshll.u32 %v465, 16
      %v515 = vrot.slane %v513, 7
      %v516 = vor.u32 %v512, %v515
      %v517 = vrot.slane %v516, 2
      %v519 = vshll.u32 %v466, 16
      %v521 = vrot.slane %v519, 7
      %v522 = vsel %vm322, %v517, %v521
      %v527 = vmax.bf16 %v427, %v480
      %v528 = vmax.bf16 %v428, %v494
      %v529 = vmax.bf16 %v429, %v508
      %v530 = vmax.bf16 %v430, %v522
      %531 = vst [vmem:[%s257] sm:$0x3] %v527
      %532 = vst [vmem:[%s257 + $0x2] sm:$0x3] %v528
      %533 = vst [vmem:[%s257 + $0x4] sm:$0x3] %v529
      %534 = vst [vmem:[%s257 + $0x6] sm:$0x3] %v530
      %p535 = scmp.lt.s32.totalorder %s15, 1
      %s536 = scalar_select %p535, %s15, 1
      %s537 = smul.addr %s536, 4
      %s538 = smul.addr %s537, 2
      %s539 = scalar_lea.vmem %s4, %s538
      // Predicated region
      $region37: #{_lambda_.59} parent=35 // pred_check
        %p540 = pneg %p137
      $region38: #{_lambda_.59} parent=35 // pred_check_branch
        %542 = sbr.rel (%p540) target = $region40
      $region39: #{_lambda_.59} parent=35 // pred_region
        _
      $region40: #{_lambda_.59} parent=35 // pred_fallthru
        _
    $region36: #{_lambda_.59} parent=5 // pred_fallthru
      _
    %p543 = scmp.le.s32.totalorder 2, %s10
    // Predicated region
    $region41: #{_lambda_.59} parent=5 // pred_check
      %p544 = pneg %p543
    $region42: #{_lambda_.59} parent=5 // pred_check_branch
      %546 = sbr.rel (%p544) target = $region44
    $region43: #{_lambda_.59} parent=5 // pred_region
      %s547 = ssub.s32 %s10, 2
      // Predicated region
      $region45: #{_lambda_.59} parent=43 // pred_check
        %p548 = pneg %p143
      $region46: #{_lambda_.59} parent=43 // pred_check_branch
        %550 = sbr.rel (%p548) target = $region48
      $region47: #{_lambda_.59} parent=43 // pred_region
        %p551 = scmp.lt.s32.totalorder %s16, 1
        %s552 = scalar_select %p551, %s16, 1
        %s553 = smul.addr %s552, 4
        %s554 = smul.addr %s553, 2
        %s555 = scalar_lea.vmem %s4, %s554
      $region48: #{_lambda_.59} parent=43 // pred_fallthru
        _
    $region44: #{_lambda_.59} parent=5 // pred_fallthru
      _
  $region6: #{_lambda_.59} parent=0 // loop_footer
    %s14 = sadd.s32 1, %s10
  $region7: #{_lambda_.59} parent=0 // loop_footer_branch
    %9 = sbr.rel target = $region3
  $region8: #{_lambda_.59} parent=0 // loop_exit
    _

// kernel: _lambda_.76
$region0: #{_lambda_.76}
  #allocation0 [shape = 'u32[]', space=smem, size = 0x4, offset = 0x4, fixed_abs, tag = 'smem constant byte address 0x4 - core index']
  #allocation1 [shape = 'u32[144,128]{1,0:T(1,128)}', space=vmem, size = 0x12000, scoped, tag = 'internal scratch']
  %s0 = inlined_call_operand.vmem [shape: bf16[2,1,256], index: 0, kind: input, shape index: {}]
  %s1 = inlined_call_operand.vmem [shape: f32[2,256], index: 1, kind: output, shape index: {}]
  %s2 = sld [smem:[#allocation0]]
  $region14: #{_lambda_.76} parent=0
    _
  %s4 = ssub.s32 1, %s2
  %s5 = scalar_select 0, %s4, %s2
  // Predicated region
  $region2: #{_lambda_.76} parent=0 // pred_check
    _
  $region3: #{_lambda_.76} parent=0 // pred_check_branch
    %7 = sbr.rel (0) target = $region5
  $region4: #{_lambda_.76} parent=0 // pred_region
    _
  $region5: #{_lambda_.76} parent=0 // pred_fallthru
    _
  %v8 = vld [vmem:[%s0] sm:$0x3]
  %v9 = vld [vmem:[%s0 + $0x2] sm:$0x3]
  %v10 = vunpack.c.l.bf16 %v8
  %v11 = vunpack.c.l.bf16 %v9
  %v12 = vadd.f32 %v10, 0.0
  %v13 = vadd.f32 %v11, 0.0
  %v14 = vmul.f32 %v12, %v12
  %v15 = vmul.f32 %v13, %v13
  %v18 = vlaneseq
  %v19 = vshrl.u32 %v18, 7
  %v20 = vsub.s32 0, %v19
  %v21 = vrot.slane %v14, %v20
  %v22 = vlaneseq
  %v23 = vshrl.u32 %v22, 7
  %v24 = vsub.s32 2, %v23
  %v25 = vrot.slane %v14, %v24
  %v26 = vlaneseq
  %v27 = vshrl.u32 %v26, 7
  %v28 = vsub.s32 0, %v27
  %v29 = vrot.slane %v15, %v28
  %v30 = vlaneseq
  %v31 = vshrl.u32 %v30, 7
  %v32 = vsub.s32 2, %v31
  %v33 = vrot.slane %v15, %v32
  %vm34 = vcmask 1041409
  %v35 = vsel %vm34, %v29, %v21
  %v36 = vsel %vm34, %v33, %v25
  %vm39 = vcmask 1041408
  %v40 = vsel %vm39, %v35, 0.0
  %v41 = vsel %vm39, %v36, 0.0
  %v42 = vadd.f32 %v40, %v41
  %43 = vadd.xlane.f32.xlu0 %v42
  %v44 = vpop.xlane.xlu0 %43
  %v45 = vmax.f32 %v44, 1e-24
  %v46 = vrsqrt.pop %v45
  %v49 = vunpack.c.l.s4 269488144
  %v50 = vunpack.c.0.s8 %v49
  %v51 = vlaneseq
  %v52 = vshrl.u32 %v51, 7
  %v53 = vsub.s32 %v50, %v52
  %v54 = vrot.slane %v46, %v53
  %v55 = vrot.slane %v54, 1
  %v58 = vmul.f32 %v12, %v54
  %v59 = vmul.f32 %v13, %v55
  %vm62 = vcmask 1044484
  %v63 = vsel %vm62, %v58, %v58
  %vm64 = vcmask 1046534
  %v65 = vsel %vm64, %v58, %v63
  %v66 = vrot.slane %v59, 7
  %v67 = vsel %vm34, %v66, %v65
  %vm68 = vcmask 1043459
  %v69 = vsel %vm68, %v66, %v67
  %vm70 = vcmask 1045509
  %v71 = vsel %vm70, %v66, %v69
  %vm72 = vcmask 1047559
  %v73 = vsel %vm72, %v66, %v71
  %75 = vst [vmem:[%s1] sm:$0xf] %v73
  // Predicated region
  $region6: #{_lambda_.76} parent=0 // pred_check
    _
  $region7: #{_lambda_.76} parent=0 // pred_check_branch
    %77 = sbr.rel (0) target = $region9
  $region8: #{_lambda_.76} parent=0 // pred_region
    _
  $region9: #{_lambda_.76} parent=0 // pred_fallthru
    _
  // Predicated region
  $region10: #{_lambda_.76} parent=0 // pred_check
    _
  $region11: #{_lambda_.76} parent=0 // pred_check_branch
    %79 = sbr.rel (0) target = $region13
  $region12: #{_lambda_.76} parent=0 // pred_region
    _
  $region13: #{_lambda_.76} parent=0 // pred_fallthru
    _

// kernel: _lambda_.53
$region0: #{_lambda_.53}
  #allocation0 [shape = 'u32[]', space=smem, size = 0x4, offset = 0x4, fixed_abs, tag = 'smem constant byte address 0x4 - core index']
  #allocation1 [shape = 'u32[144,128]{1,0:T(1,128)}', space=vmem, size = 0x12000, scoped, tag = 'internal scratch']
  %s0 = inlined_call_operand.vmem [shape: bf16[8,128], index: 0, kind: input, shape index: {}]
  %s1 = inlined_call_operand.vmem [shape: bf16[128,256], index: 1, kind: input, shape index: {}]
  %s2 = inlined_call_operand.vmem [shape: f32[1,256], index: 2, kind: input, shape index: {}]
  %s3 = inlined_call_operand.vmem [shape: bf16[8,256], index: 3, kind: output, shape index: {}]
  %s4 = sld [smem:[#allocation0]]
  $region22: #{_lambda_.53} parent=0
    _
  %s6 = ssub.s32 1, %s4
  %s7 = scalar_select 0, %s6, %s4
  // Predicated region
  $region2: #{_lambda_.53} parent=0 // pred_check
    _
  $region3: #{_lambda_.53} parent=0 // pred_check_branch
    %9 = sbr.rel (0) target = $region5
  $region4: #{_lambda_.53} parent=0 // pred_region
    _
  $region5: #{_lambda_.53} parent=0 // pred_fallthru
    _
  // Predicated region
  $region6: #{_lambda_.53} parent=0 // pred_check
    _
  $region7: #{_lambda_.53} parent=0 // pred_check_branch
    %11 = sbr.rel (0) target = $region9
  $region8: #{_lambda_.53} parent=0 // pred_region
    _
  $region9: #{_lambda_.53} parent=0 // pred_fallthru
    _
  // Predicated region
  $region10: #{_lambda_.53} parent=0 // pred_check
    _
  $region11: #{_lambda_.53} parent=0 // pred_check_branch
    %13 = sbr.rel (0) target = $region13
  $region12: #{_lambda_.53} parent=0 // pred_region
    _
  $region13: #{_lambda_.53} parent=0 // pred_fallthru
    _
  %v15 = vld [vmem:[%s0] sm:$0xf]
  %v16 = vld [vmem:[%s1] sm:$0xff]
  %v17 = vld [vmem:[%s1 + $0x8] sm:$0xff]
  %v18 = vld [vmem:[%s1 + $0x10] sm:$0xff]
  %v19 = vld [vmem:[%s1 + $0x18] sm:$0xff]
  %v20 = vld [vmem:[%s1 + $0x20] sm:$0xff]
  %v21 = vld [vmem:[%s1 + $0x28] sm:$0xff]
  %v22 = vld [vmem:[%s1 + $0x30] sm:$0xff]
  %v23 = vld [vmem:[%s1 + $0x38] sm:$0xff]
  %v24 = vld [vmem:[%s1 + $0x40] sm:$0xff]
  %v25 = vld [vmem:[%s1 + $0x48] sm:$0xff]
  %v26 = vld [vmem:[%s1 + $0x50] sm:$0xff]
  %v27 = vld [vmem:[%s1 + $0x58] sm:$0xff]
  %v28 = vld [vmem:[%s1 + $0x60] sm:$0xff]
  %v29 = vld [vmem:[%s1 + $0x68] sm:$0xff]
  %v30 = vld [vmem:[%s1 + $0x70] sm:$0xff]
  %v31 = vld [vmem:[%s1 + $0x78] sm:$0xff]
  %v32 = vld [vmem:[%s2] sm:$0x3]
  %v34 = vlaneseq
  %v35 = vshrl.u32 %v34, 7
  %v36 = vsub.s32 0, %v35
  %v37 = vrot.slane %v32, %v36
  %v38 = vlaneseq
  %v39 = vshrl.u32 %v38, 7
  %v40 = vsub.s32 1, %v39
  %v41 = vrot.slane %v32, %v40
  %v60 = vunpack.c.l.b16 %v16
  %v61 = vunpack.c.h.b16 %v16
  %v62 = vunpack.c.l.b16 %v17
  %v63 = vunpack.c.h.b16 %v17
  %v64 = vunpack.c.l.b16 %v18
  %v65 = vunpack.c.h.b16 %v18
  %v66 = vunpack.c.l.b16 %v19
  %v67 = vunpack.c.h.b16 %v19
  %v68 = vunpack.c.l.b16 %v20
  %v69 = vunpack.c.h.b16 %v20
  %v70 = vunpack.c.l.b16 %v21
  %v71 = vunpack.c.h.b16 %v21
  %v72 = vunpack.c.l.b16 %v22
  %v73 = vunpack.c.h.b16 %v22
  %v74 = vunpack.c.l.b16 %v23
  %v75 = vunpack.c.h.b16 %v23
  %v76 = vunpack.c.l.b16 %v24
  %v77 = vunpack.c.h.b16 %v24
  %v78 = vunpack.c.l.b16 %v25
  %v79 = vunpack.c.h.b16 %v25
  %v80 = vunpack.c.l.b16 %v26
  %v81 = vunpack.c.h.b16 %v26
  %v82 = vunpack.c.l.b16 %v27
  %v83 = vunpack.c.h.b16 %v27
  %v84 = vunpack.c.l.b16 %v28
  %v85 = vunpack.c.h.b16 %v28
  %v86 = vunpack.c.l.b16 %v29
  %v87 = vunpack.c.h.b16 %v29
  %v88 = vunpack.c.l.b16 %v30
  %v89 = vunpack.c.h.b16 %v30
  %v90 = vunpack.c.l.b16 %v31
  %v91 = vunpack.c.h.b16 %v31
  %v92 = vpack.c.b16 %v62, %v60
  %v93 = vpack.c.b16 %v63, %v61
  %v94 = vpack.c.b16 %v66, %v64
  %v95 = vpack.c.b16 %v67, %v65
  %v96 = vpack.c.b16 %v70, %v68
  %v97 = vpack.c.b16 %v71, %v69
  %v98 = vpack.c.b16 %v74, %v72
  %v99 = vpack.c.b16 %v75, %v73
  %v100 = vpack.c.b16 %v78, %v76
  %v101 = vpack.c.b16 %v79, %v77
  %v102 = vpack.c.b16 %v82, %v80
  %v103 = vpack.c.b16 %v83, %v81
  %v104 = vpack.c.b16 %v86, %v84
  %v105 = vpack.c.b16 %v87, %v85
  %v106 = vpack.c.b16 %v90, %v88
  %v107 = vpack.c.b16 %v91, %v89
  %124 = vmatprep.subr.bf16.mxu0 %v93
  %125 = vmatpush1.bf16.msra.mxu0 %v92
  %126 = vmatprep.subr.bf16.mxu0 %v95
  %127 = vmatpush1.bf16.msra.mxu0 %v94
  %128 = vmatprep.subr.bf16.mxu0 %v97
  %129 = vmatpush1.bf16.msra.mxu0 %v96
  %130 = vmatprep.subr.bf16.mxu0 %v99
  %131 = vmatpush1.bf16.msra.mxu0 %v98
  %132 = vmatprep.subr.bf16.mxu0 %v101
  %133 = vmatpush1.bf16.msra.mxu0 %v100
  %134 = vmatprep.subr.bf16.mxu0 %v103
  %135 = vmatpush1.bf16.msra.mxu0 %v102
  %136 = vmatprep.subr.bf16.mxu0 %v105
  %137 = vmatpush1.bf16.msra.mxu0 %v104
  %138 = vmatprep.subr.bf16.mxu0 %v107
  %139 = vmatpush1.bf16.msra.mxu0 %v106
  %140 = vmatprep.subr.bf16.mxu0 0
  %141 = vmatpush1.bf16.msra.mxu0 0
  %142 = vmatprep.subr.bf16.mxu0 0
  %143 = vmatpush1.bf16.msra.mxu0 0
  %144 = vmatprep.subr.bf16.mxu0 0
  %145 = vmatpush1.bf16.msra.mxu0 0
  %146 = vmatprep.subr.bf16.mxu0 0
  %147 = vmatpush1.bf16.msra.mxu0 0
  %148 = vmatprep.subr.bf16.mxu0 0
  %149 = vmatpush1.bf16.msra.mxu0 0
  %150 = vmatprep.subr.bf16.mxu0 0
  %151 = vmatpush1.bf16.msra.mxu0 0
  %152 = vmatprep.subr.bf16.mxu0 0
  %153 = vmatpush1.bf16.msra.mxu0 0
  %154 = vmatprep.subr.bf16.mxu0 0
  %155 = vmatpush1.bf16.msra.mxu0 0
  %156 = vmatprep.mubr.bf16.mxu0 0
  %157 = vmatmul.mubr.bf16.gmra.mrb[0].mxu0 %v15
  %v158 = vpop.f32.mrb[0].mxu0
  %v159 = vadd.f32 %v37, %v158
  %v160 = vpop.f32.mrb[0].mxu0
  %v161 = vadd.f32 %v41, %v160
  %v162 = vpop.f32.mrb[0].mxu0
  %v163 = vpop.f32.mrb[0].mxu0
  %164 = vdwg.mxu0
  %v165 = vpack.c.bf16 %v159, %v159
  %v166 = vpack.c.bf16 %v161, %v161
  %v169 = vunpack.c.l.b16 %v165
  %v170 = vunpack.c.l.b16 %v166
  %v171 = vpack.c.b16 %v170, %v169
  %173 = vst [vmem:[%s3] sm:$0xff] %v171
  // Predicated region
  $region14: #{_lambda_.53} parent=0 // pred_check
    _
  $region15: #{_lambda_.53} parent=0 // pred_check_branch
    %175 = sbr.rel (0) target = $region17
  $region16: #{_lambda_.53} parent=0 // pred_region
    _
  $region17: #{_lambda_.53} parent=0 // pred_fallthru
    _
  // Predicated region
  $region18: #{_lambda_.53} parent=0 // pred_check
    _
  $region19: #{_lambda_.53} parent=0 // pred_check_branch
    %177 = sbr.rel (0) target = $region21
  $region20: #{_lambda_.53} parent=0 // pred_region
    _
  $region21: #{_lambda_.53} parent=0 // pred_fallthru
    _

// kernel: _lambda_.75
$region0: #{_lambda_.75}
  #allocation0 [shape = 'u32[]', space=smem, size = 0x4, offset = 0x4, fixed_abs, tag = 'smem constant byte address 0x4 - core index']
  #allocation1 [shape = 'u32[144,128]{1,0:T(1,128)}', space=vmem, size = 0x12000, scoped, tag = 'internal scratch']
  %s0 = inlined_call_operand.vmem [shape: bf16[8,128], index: 0, kind: input, shape index: {}]
  %s1 = inlined_call_operand.vmem [shape: bf16[128,256], index: 1, kind: input, shape index: {}]
  %s2 = inlined_call_operand.vmem [shape: f32[1,256], index: 2, kind: input, shape index: {}]
  %s3 = inlined_call_operand.vmem [shape: bf16[8,256], index: 3, kind: input, shape index: {}]
  %s4 = inlined_call_operand.vmem [shape: bf16[8,256], index: 4, kind: output, shape index: {}]
  %s5 = sld [smem:[#allocation0]]
  $region26: #{_lambda_.75} parent=0
    _
  %s7 = ssub.s32 1, %s5
  %s8 = scalar_select 0, %s7, %s5
  // Predicated region
  $region2: #{_lambda_.75} parent=0 // pred_check
    _
  $region3: #{_lambda_.75} parent=0 // pred_check_branch
    %10 = sbr.rel (0) target = $region5
  $region4: #{_lambda_.75} parent=0 // pred_region
    _
  $region5: #{_lambda_.75} parent=0 // pred_fallthru
    _
  // Predicated region
  $region6: #{_lambda_.75} parent=0 // pred_check
    _
  $region7: #{_lambda_.75} parent=0 // pred_check_branch
    %12 = sbr.rel (0) target = $region9
  $region8: #{_lambda_.75} parent=0 // pred_region
    _
  $region9: #{_lambda_.75} parent=0 // pred_fallthru
    _
  // Predicated region
  $region10: #{_lambda_.75} parent=0 // pred_check
    _
  $region11: #{_lambda_.75} parent=0 // pred_check_branch
    %14 = sbr.rel (0) target = $region13
  $region12: #{_lambda_.75} parent=0 // pred_region
    _
  $region13: #{_lambda_.75} parent=0 // pred_fallthru
    _
  // Predicated region
  $region14: #{_lambda_.75} parent=0 // pred_check
    _
  $region15: #{_lambda_.75} parent=0 // pred_check_branch
    %16 = sbr.rel (0) target = $region17
  $region16: #{_lambda_.75} parent=0 // pred_region
    _
  $region17: #{_lambda_.75} parent=0 // pred_fallthru
    _
  %v18 = vld [vmem:[%s0] sm:$0xf]
  %v19 = vld [vmem:[%s1] sm:$0xff]
  %v20 = vld [vmem:[%s1 + $0x8] sm:$0xff]
  %v21 = vld [vmem:[%s1 + $0x10] sm:$0xff]
  %v22 = vld [vmem:[%s1 + $0x18] sm:$0xff]
  %v23 = vld [vmem:[%s1 + $0x20] sm:$0xff]
  %v24 = vld [vmem:[%s1 + $0x28] sm:$0xff]
  %v25 = vld [vmem:[%s1 + $0x30] sm:$0xff]
  %v26 = vld [vmem:[%s1 + $0x38] sm:$0xff]
  %v27 = vld [vmem:[%s1 + $0x40] sm:$0xff]
  %v28 = vld [vmem:[%s1 + $0x48] sm:$0xff]
  %v29 = vld [vmem:[%s1 + $0x50] sm:$0xff]
  %v30 = vld [vmem:[%s1 + $0x58] sm:$0xff]
  %v31 = vld [vmem:[%s1 + $0x60] sm:$0xff]
  %v32 = vld [vmem:[%s1 + $0x68] sm:$0xff]
  %v33 = vld [vmem:[%s1 + $0x70] sm:$0xff]
  %v34 = vld [vmem:[%s1 + $0x78] sm:$0xff]
  %v35 = vld [vmem:[%s2] sm:$0x3]
  %v37 = vlaneseq
  %v38 = vshrl.u32 %v37, 7
  %v39 = vsub.s32 0, %v38
  %v40 = vrot.slane %v35, %v39
  %v41 = vlaneseq
  %v42 = vshrl.u32 %v41, 7
  %v43 = vsub.s32 1, %v42
  %v44 = vrot.slane %v35, %v43
  %v63 = vunpack.c.l.b16 %v19
  %v64 = vunpack.c.h.b16 %v19
  %v65 = vunpack.c.l.b16 %v20
  %v66 = vunpack.c.h.b16 %v20
  %v67 = vunpack.c.l.b16 %v21
  %v68 = vunpack.c.h.b16 %v21
  %v69 = vunpack.c.l.b16 %v22
  %v70 = vunpack.c.h.b16 %v22
  %v71 = vunpack.c.l.b16 %v23
  %v72 = vunpack.c.h.b16 %v23
  %v73 = vunpack.c.l.b16 %v24
  %v74 = vunpack.c.h.b16 %v24
  %v75 = vunpack.c.l.b16 %v25
  %v76 = vunpack.c.h.b16 %v25
  %v77 = vunpack.c.l.b16 %v26
  %v78 = vunpack.c.h.b16 %v26
  %v79 = vunpack.c.l.b16 %v27
  %v80 = vunpack.c.h.b16 %v27
  %v81 = vunpack.c.l.b16 %v28
  %v82 = vunpack.c.h.b16 %v28
  %v83 = vunpack.c.l.b16 %v29
  %v84 = vunpack.c.h.b16 %v29
  %v85 = vunpack.c.l.b16 %v30
  %v86 = vunpack.c.h.b16 %v30
  %v87 = vunpack.c.l.b16 %v31
  %v88 = vunpack.c.h.b16 %v31
  %v89 = vunpack.c.l.b16 %v32
  %v90 = vunpack.c.h.b16 %v32
  %v91 = vunpack.c.l.b16 %v33
  %v92 = vunpack.c.h.b16 %v33
  %v93 = vunpack.c.l.b16 %v34
  %v94 = vunpack.c.h.b16 %v34
  %v95 = vpack.c.b16 %v65, %v63
  %v96 = vpack.c.b16 %v66, %v64
  %v97 = vpack.c.b16 %v69, %v67
  %v98 = vpack.c.b16 %v70, %v68
  %v99 = vpack.c.b16 %v73, %v71
  %v100 = vpack.c.b16 %v74, %v72
  %v101 = vpack.c.b16 %v77, %v75
  %v102 = vpack.c.b16 %v78, %v76
  %v103 = vpack.c.b16 %v81, %v79
  %v104 = vpack.c.b16 %v82, %v80
  %v105 = vpack.c.b16 %v85, %v83
  %v106 = vpack.c.b16 %v86, %v84
  %v107 = vpack.c.b16 %v89, %v87
  %v108 = vpack.c.b16 %v90, %v88
  %v109 = vpack.c.b16 %v93, %v91
  %v110 = vpack.c.b16 %v94, %v92
  %127 = vmatprep.subr.bf16.mxu0 %v96
  %128 = vmatpush1.bf16.msra.mxu0 %v95
  %129 = vmatprep.subr.bf16.mxu0 %v98
  %130 = vmatpush1.bf16.msra.mxu0 %v97
  %131 = vmatprep.subr.bf16.mxu0 %v100
  %132 = vmatpush1.bf16.msra.mxu0 %v99
  %133 = vmatprep.subr.bf16.mxu0 %v102
  %134 = vmatpush1.bf16.msra.mxu0 %v101
  %135 = vmatprep.subr.bf16.mxu0 %v104
  %136 = vmatpush1.bf16.msra.mxu0 %v103
  %137 = vmatprep.subr.bf16.mxu0 %v106
  %138 = vmatpush1.bf16.msra.mxu0 %v105
  %139 = vmatprep.subr.bf16.mxu0 %v108
  %140 = vmatpush1.bf16.msra.mxu0 %v107
  %141 = vmatprep.subr.bf16.mxu0 %v110
  %142 = vmatpush1.bf16.msra.mxu0 %v109
  %143 = vmatprep.subr.bf16.mxu0 0
  %144 = vmatpush1.bf16.msra.mxu0 0
  %145 = vmatprep.subr.bf16.mxu0 0
  %146 = vmatpush1.bf16.msra.mxu0 0
  %147 = vmatprep.subr.bf16.mxu0 0
  %148 = vmatpush1.bf16.msra.mxu0 0
  %149 = vmatprep.subr.bf16.mxu0 0
  %150 = vmatpush1.bf16.msra.mxu0 0
  %151 = vmatprep.subr.bf16.mxu0 0
  %152 = vmatpush1.bf16.msra.mxu0 0
  %153 = vmatprep.subr.bf16.mxu0 0
  %154 = vmatpush1.bf16.msra.mxu0 0
  %155 = vmatprep.subr.bf16.mxu0 0
  %156 = vmatpush1.bf16.msra.mxu0 0
  %157 = vmatprep.subr.bf16.mxu0 0
  %158 = vmatpush1.bf16.msra.mxu0 0
  %159 = vmatprep.mubr.bf16.mxu0 0
  %160 = vmatmul.mubr.bf16.gmra.mrb[0].mxu0 %v18
  %v161 = vpop.f32.mrb[0].mxu0
  %v162 = vadd.f32 %v40, %v161
  %v163 = vpop.f32.mrb[0].mxu0
  %v164 = vadd.f32 %v44, %v163
  %v165 = vpop.f32.mrb[0].mxu0
  %v166 = vpop.f32.mrb[0].mxu0
  %167 = vdwg.mxu0
  %v168 = vld [vmem:[%s3] sm:$0xff]
  %v169 = vunpack.c.l.bf16 %v168
  %v170 = vunpack.c.h.bf16 %v168
  %v171 = vadd.f32 %v162, %v169
  %v172 = vadd.f32 %v164, %v170
  %v173 = vmax.f32 %v171, 0.0
  %v174 = vmax.f32 %v172, 0.0
  %v175 = vpack.c.bf16 %v173, %v173
  %v176 = vpack.c.bf16 %v174, %v174
  %v179 = vunpack.c.l.b16 %v175
  %v180 = vunpack.c.l.b16 %v176
  %v181 = vpack.c.b16 %v180, %v179
  %183 = vst [vmem:[%s4] sm:$0xff] %v181
  // Predicated region
  $region18: #{_lambda_.75} parent=0 // pred_check
    _
  $region19: #{_lambda_.75} parent=0 // pred_check_branch
    %185 = sbr.rel (0) target = $region21
  $region20: #{_lambda_.75} parent=0 // pred_region
    _
  $region21: #{_lambda_.75} parent=0 // pred_fallthru
    _
  // Predicated region
  $region22: #{_lambda_.75} parent=0 // pred_check
    _
  $region23: #{_lambda_.75} parent=0 // pred_check_branch
    %187 = sbr.rel (0) target = $region25
  $region24: #{_lambda_.75} parent=0 // pred_region
    _
  $region25: #{_lambda_.75} parent=0 // pred_fallthru
    _

// kernel: _lambda_.77
$region0: #{_lambda_.77}
  #allocation0 [shape = 'u32[]', space=smem, size = 0x4, offset = 0x4, fixed_abs, tag = 'smem constant byte address 0x4 - core index']
  #allocation1 [shape = 'u32[144,128]{1,0:T(1,128)}', space=vmem, size = 0x12000, scoped, tag = 'internal scratch']
  %s0 = inlined_call_operand.vmem [shape: bf16[8,512], index: 0, kind: input, shape index: {}]
  %s1 = inlined_call_operand.vmem [shape: bf16[512,128], index: 1, kind: input, shape index: {}]
  %s2 = inlined_call_operand.vmem [shape: f32[1,128], index: 2, kind: input, shape index: {}]
  %s3 = inlined_call_operand.vmem [shape: f32[8,128], index: 3, kind: output, shape index: {}]
  %s4 = sld [smem:[#allocation0]]
  $region22: #{_lambda_.77} parent=0
    _
  %s6 = ssub.s32 1, %s4
  %s7 = scalar_select 0, %s6, %s4
  // Predicated region
  $region2: #{_lambda_.77} parent=0 // pred_check
    _
  $region3: #{_lambda_.77} parent=0 // pred_check_branch
    %9 = sbr.rel (0) target = $region5
  $region4: #{_lambda_.77} parent=0 // pred_region
    _
  $region5: #{_lambda_.77} parent=0 // pred_fallthru
    _
  // Predicated region
  $region6: #{_lambda_.77} parent=0 // pred_check
    _
  $region7: #{_lambda_.77} parent=0 // pred_check_branch
    %11 = sbr.rel (0) target = $region9
  $region8: #{_lambda_.77} parent=0 // pred_region
    _
  $region9: #{_lambda_.77} parent=0 // pred_fallthru
    _
  // Predicated region
  $region10: #{_lambda_.77} parent=0 // pred_check
    _
  $region11: #{_lambda_.77} parent=0 // pred_check_branch
    %13 = sbr.rel (0) target = $region13
  $region12: #{_lambda_.77} parent=0 // pred_region
    _
  $region13: #{_lambda_.77} parent=0 // pred_fallthru
    _
  %v15 = vld [vmem:[%s0] sm:$0xff]
  %v16 = vld [vmem:[%s0 + $0x8] sm:$0xff]
  %v17 = vld [vmem:[%s1] sm:$0xf]
  %v18 = vld [vmem:[%s1 + $0x4] sm:$0xf]
  %v19 = vld [vmem:[%s1 + $0x8] sm:$0xf]
  %v20 = vld [vmem:[%s1 + $0xc] sm:$0xf]
  %v21 = vld [vmem:[%s1 + $0x10] sm:$0xf]
  %v22 = vld [vmem:[%s1 + $0x14] sm:$0xf]
  %v23 = vld [vmem:[%s1 + $0x18] sm:$0xf]
  %v24 = vld [vmem:[%s1 + $0x1c] sm:$0xf]
  %v25 = vld [vmem:[%s1 + $0x20] sm:$0xf]
  %v26 = vld [vmem:[%s1 + $0x24] sm:$0xf]
  %v27 = vld [vmem:[%s1 + $0x28] sm:$0xf]
  %v28 = vld [vmem:[%s1 + $0x2c] sm:$0xf]
  %v29 = vld [vmem:[%s1 + $0x30] sm:$0xf]
  %v30 = vld [vmem:[%s1 + $0x34] sm:$0xf]
  %v31 = vld [vmem:[%s1 + $0x38] sm:$0xf]
  %v32 = vld [vmem:[%s1 + $0x3c] sm:$0xf]
  %v33 = vld [vmem:[%s1 + $0x40] sm:$0xf]
  %v34 = vld [vmem:[%s1 + $0x44] sm:$0xf]
  %v35 = vld [vmem:[%s1 + $0x48] sm:$0xf]
  %v36 = vld [vmem:[%s1 + $0x4c] sm:$0xf]
  %v37 = vld [vmem:[%s1 + $0x50] sm:$0xf]
  %v38 = vld [vmem:[%s1 + $0x54] sm:$0xf]
  %v39 = vld [vmem:[%s1 + $0x58] sm:$0xf]
  %v40 = vld [vmem:[%s1 + $0x5c] sm:$0xf]
  %v41 = vld [vmem:[%s1 + $0x60] sm:$0xf]
  %v42 = vld [vmem:[%s1 + $0x64] sm:$0xf]
  %v43 = vld [vmem:[%s1 + $0x68] sm:$0xf]
  %v44 = vld [vmem:[%s1 + $0x6c] sm:$0xf]
  %v45 = vld [vmem:[%s1 + $0x70] sm:$0xf]
  %v46 = vld [vmem:[%s1 + $0x74] sm:$0xf]
  %v47 = vld [vmem:[%s1 + $0x78] sm:$0xf]
  %v48 = vld [vmem:[%s1 + $0x7c] sm:$0xf]
  %v49 = vld [vmem:[%s1 + $0x80] sm:$0xf]
  %v50 = vld [vmem:[%s1 + $0x84] sm:$0xf]
  %v51 = vld [vmem:[%s1 + $0x88] sm:$0xf]
  %v52 = vld [vmem:[%s1 + $0x8c] sm:$0xf]
  %v53 = vld [vmem:[%s1 + $0x90] sm:$0xf]
  %v54 = vld [vmem:[%s1 + $0x94] sm:$0xf]
  %v55 = vld [vmem:[%s1 + $0x98] sm:$0xf]
  %v56 = vld [vmem:[%s1 + $0x9c] sm:$0xf]
  %v57 = vld [vmem:[%s1 + $0xa0] sm:$0xf]
  %v58 = vld [vmem:[%s1 + $0xa4] sm:$0xf]
  %v59 = vld [vmem:[%s1 + $0xa8] sm:$0xf]
  %v60 = vld [vmem:[%s1 + $0xac] sm:$0xf]
  %v61 = vld [vmem:[%s1 + $0xb0] sm:$0xf]
  %v62 = vld [vmem:[%s1 + $0xb4] sm:$0xf]
  %v63 = vld [vmem:[%s1 + $0xb8] sm:$0xf]
  %v64 = vld [vmem:[%s1 + $0xbc] sm:$0xf]
  %v65 = vld [vmem:[%s1 + $0xc0] sm:$0xf]
  %v66 = vld [vmem:[%s1 + $0xc4] sm:$0xf]
  %v67 = vld [vmem:[%s1 + $0xc8] sm:$0xf]
  %v68 = vld [vmem:[%s1 + $0xcc] sm:$0xf]
  %v69 = vld [vmem:[%s1 + $0xd0] sm:$0xf]
  %v70 = vld [vmem:[%s1 + $0xd4] sm:$0xf]
  %v71 = vld [vmem:[%s1 + $0xd8] sm:$0xf]
  %v72 = vld [vmem:[%s1 + $0xdc] sm:$0xf]
  %v73 = vld [vmem:[%s1 + $0xe0] sm:$0xf]
  %v74 = vld [vmem:[%s1 + $0xe4] sm:$0xf]
  %v75 = vld [vmem:[%s1 + $0xe8] sm:$0xf]
  %v76 = vld [vmem:[%s1 + $0xec] sm:$0xf]
  %v77 = vld [vmem:[%s1 + $0xf0] sm:$0xf]
  %v78 = vld [vmem:[%s1 + $0xf4] sm:$0xf]
  %v79 = vld [vmem:[%s1 + $0xf8] sm:$0xf]
  %v80 = vld [vmem:[%s1 + $0xfc] sm:$0xf]
  %v81 = vld [vmem:[%s2] sm:$0x1]
  %v83 = vlaneseq
  %v84 = vshrl.u32 %v83, 7
  %v85 = vsub.s32 0, %v84
  %v86 = vrot.slane %v81, %v85
  %v90 = vunpack.c.l.b16 %v15
  %v91 = vunpack.c.h.b16 %v15
  %v92 = vunpack.c.l.b16 %v16
  %v93 = vunpack.c.h.b16 %v16
  %v94 = vpack.c.b16 %v90, %v90
  %v95 = vpack.c.b16 %v91, %v91
  %v96 = vpack.c.b16 %v92, %v92
  %v97 = vpack.c.b16 %v93, %v93
  %v166 = vunpack.c.l.b16 %v17
  %v167 = vunpack.c.l.b16 %v18
  %v168 = vunpack.c.l.b16 %v19
  %v169 = vunpack.c.l.b16 %v20
  %v170 = vunpack.c.l.b16 %v21
  %v171 = vunpack.c.l.b16 %v22
  %v172 = vunpack.c.l.b16 %v23
  %v173 = vunpack.c.l.b16 %v24
  %v174 = vunpack.c.l.b16 %v25
  %v175 = vunpack.c.l.b16 %v26
  %v176 = vunpack.c.l.b16 %v27
  %v177 = vunpack.c.l.b16 %v28
  %v178 = vunpack.c.l.b16 %v29
  %v179 = vunpack.c.l.b16 %v30
  %v180 = vunpack.c.l.b16 %v31
  %v181 = vunpack.c.l.b16 %v32
  %v182 = vunpack.c.l.b16 %v33
  %v183 = vunpack.c.l.b16 %v34
  %v184 = vunpack.c.l.b16 %v35
  %v185 = vunpack.c.l.b16 %v36
  %v186 = vunpack.c.l.b16 %v37
  %v187 = vunpack.c.l.b16 %v38
  %v188 = vunpack.c.l.b16 %v39
  %v189 = vunpack.c.l.b16 %v40
  %v190 = vunpack.c.l.b16 %v41
  %v191 = vunpack.c.l.b16 %v42
  %v192 = vunpack.c.l.b16 %v43
  %v193 = vunpack.c.l.b16 %v44
  %v194 = vunpack.c.l.b16 %v45
  %v195 = vunpack.c.l.b16 %v46
  %v196 = vunpack.c.l.b16 %v47
  %v197 = vunpack.c.l.b16 %v48
  %v198 = vunpack.c.l.b16 %v49
  %v199 = vunpack.c.l.b16 %v50
  %v200 = vunpack.c.l.b16 %v51
  %v201 = vunpack.c.l.b16 %v52
  %v202 = vunpack.c.l.b16 %v53
  %v203 = vunpack.c.l.b16 %v54
  %v204 = vunpack.c.l.b16 %v55
  %v205 = vunpack.c.l.b16 %v56
  %v206 = vunpack.c.l.b16 %v57
  %v207 = vunpack.c.l.b16 %v58
  %v208 = vunpack.c.l.b16 %v59
  %v209 = vunpack.c.l.b16 %v60
  %v210 = vunpack.c.l.b16 %v61
  %v211 = vunpack.c.l.b16 %v62
  %v212 = vunpack.c.l.b16 %v63
  %v213 = vunpack.c.l.b16 %v64
  %v214 = vunpack.c.l.b16 %v65
  %v215 = vunpack.c.l.b16 %v66
  %v216 = vunpack.c.l.b16 %v67
  %v217 = vunpack.c.l.b16 %v68
  %v218 = vunpack.c.l.b16 %v69
  %v219 = vunpack.c.l.b16 %v70
  %v220 = vunpack.c.l.b16 %v71
  %v221 = vunpack.c.l.b16 %v72
  %v222 = vunpack.c.l.b16 %v73
  %v223 = vunpack.c.l.b16 %v74
  %v224 = vunpack.c.l.b16 %v75
  %v225 = vunpack.c.l.b16 %v76
  %v226 = vunpack.c.l.b16 %v77
  %v227 = vunpack.c.l.b16 %v78
  %v228 = vunpack.c.l.b16 %v79
  %v229 = vunpack.c.l.b16 %v80
  %v230 = vpack.c.b16 %v167, %v166
  %v231 = vpack.c.b16 %v169, %v168
  %v232 = vpack.c.b16 %v171, %v170
  %v233 = vpack.c.b16 %v173, %v172
  %v234 = vpack.c.b16 %v175, %v174
  %v235 = vpack.c.b16 %v177, %v176
  %v236 = vpack.c.b16 %v179, %v178
  %v237 = vpack.c.b16 %v181, %v180
  %v238 = vpack.c.b16 %v183, %v182
  %v239 = vpack.c.b16 %v185, %v184
  %v240 = vpack.c.b16 %v187, %v186
  %v241 = vpack.c.b16 %v189, %v188
  %v242 = vpack.c.b16 %v191, %v190
  %v243 = vpack.c.b16 %v193, %v192
  %v244 = vpack.c.b16 %v195, %v194
  %v245 = vpack.c.b16 %v197, %v196
  %v246 = vpack.c.b16 %v199, %v198
  %v247 = vpack.c.b16 %v201, %v200
  %v248 = vpack.c.b16 %v203, %v202
  %v249 = vpack.c.b16 %v205, %v204
  %v250 = vpack.c.b16 %v207, %v206
  %v251 = vpack.c.b16 %v209, %v208
  %v252 = vpack.c.b16 %v211, %v210
  %v253 = vpack.c.b16 %v213, %v212
  %v254 = vpack.c.b16 %v215, %v214
  %v255 = vpack.c.b16 %v217, %v216
  %v256 = vpack.c.b16 %v219, %v218
  %v257 = vpack.c.b16 %v221, %v220
  %v258 = vpack.c.b16 %v223, %v222
  %v259 = vpack.c.b16 %v225, %v224
  %v260 = vpack.c.b16 %v227, %v226
  %v261 = vpack.c.b16 %v229, %v228
  %294 = vmatprep.subr.bf16.mxu0 0
  %295 = vmatpush1.bf16.msra.mxu0 %v230
  %296 = vmatprep.subr.bf16.mxu0 0
  %297 = vmatpush1.bf16.msra.mxu0 %v231
  %298 = vmatprep.subr.bf16.mxu0 0
  %299 = vmatpush1.bf16.msra.mxu0 %v232
  %300 = vmatprep.subr.bf16.mxu0 0
  %301 = vmatpush1.bf16.msra.mxu0 %v233
  %302 = vmatprep.subr.bf16.mxu0 0
  %303 = vmatpush1.bf16.msra.mxu0 %v234
  %304 = vmatprep.subr.bf16.mxu0 0
  %305 = vmatpush1.bf16.msra.mxu0 %v235
  %306 = vmatprep.subr.bf16.mxu0 0
  %307 = vmatpush1.bf16.msra.mxu0 %v236
  %308 = vmatprep.subr.bf16.mxu0 0
  %309 = vmatpush1.bf16.msra.mxu0 %v237
  %310 = vmatprep.subr.bf16.mxu0 0
  %311 = vmatpush1.bf16.msra.mxu0 %v238
  %312 = vmatprep.subr.bf16.mxu0 0
  %313 = vmatpush1.bf16.msra.mxu0 %v239
  %314 = vmatprep.subr.bf16.mxu0 0
  %315 = vmatpush1.bf16.msra.mxu0 %v240
  %316 = vmatprep.subr.bf16.mxu0 0
  %317 = vmatpush1.bf16.msra.mxu0 %v241
  %318 = vmatprep.subr.bf16.mxu0 0
  %319 = vmatpush1.bf16.msra.mxu0 %v242
  %320 = vmatprep.subr.bf16.mxu0 0
  %321 = vmatpush1.bf16.msra.mxu0 %v243
  %322 = vmatprep.subr.bf16.mxu0 0
  %323 = vmatpush1.bf16.msra.mxu0 %v244
  %324 = vmatprep.subr.bf16.mxu0 0
  %325 = vmatpush1.bf16.msra.mxu0 %v245
  %326 = vmatprep.mubr.bf16.mxu0 %v95
  %327 = vmatmul.mubr.bf16.gmra.mrb[0].mxu0 %v94
  %v328 = vpop.f32.mrb[0].mxu0
  %v329 = vadd.f32 %v86, %v328
  %v330 = vpop.f32.mrb[0].mxu0
  %v331 = vpop.f32.mrb[0].mxu0
  %v332 = vpop.f32.mrb[0].mxu0
  %333 = vdwg.mxu0
  %334 = vmatprep.subr.bf16.mxu0 0
  %335 = vmatpush1.bf16.msra.mxu0 %v246
  %336 = vmatprep.subr.bf16.mxu0 0
  %337 = vmatpush1.bf16.msra.mxu0 %v247
  %338 = vmatprep.subr.bf16.mxu0 0
  %339 = vmatpush1.bf16.msra.mxu0 %v248
  %340 = vmatprep.subr.bf16.mxu0 0
  %341 = vmatpush1.bf16.msra.mxu0 %v249
  %342 = vmatprep.subr.bf16.mxu0 0
  %343 = vmatpush1.bf16.msra.mxu0 %v250
  %344 = vmatprep.subr.bf16.mxu0 0
  %345 = vmatpush1.bf16.msra.mxu0 %v251
  %346 = vmatprep.subr.bf16.mxu0 0
  %347 = vmatpush1.bf16.msra.mxu0 %v252
  %348 = vmatprep.subr.bf16.mxu0 0
  %349 = vmatpush1.bf16.msra.mxu0 %v253
  %350 = vmatprep.subr.bf16.mxu0 0
  %351 = vmatpush1.bf16.msra.mxu0 %v254
  %352 = vmatprep.subr.bf16.mxu0 0
  %353 = vmatpush1.bf16.msra.mxu0 %v255
  %354 = vmatprep.subr.bf16.mxu0 0
  %355 = vmatpush1.bf16.msra.mxu0 %v256
  %356 = vmatprep.subr.bf16.mxu0 0
  %357 = vmatpush1.bf16.msra.mxu0 %v257
  %358 = vmatprep.subr.bf16.mxu0 0
  %359 = vmatpush1.bf16.msra.mxu0 %v258
  %360 = vmatprep.subr.bf16.mxu0 0
  %361 = vmatpush1.bf16.msra.mxu0 %v259
  %362 = vmatprep.subr.bf16.mxu0 0
  %363 = vmatpush1.bf16.msra.mxu0 %v260
  %364 = vmatprep.subr.bf16.mxu0 0
  %365 = vmatpush1.bf16.msra.mxu0 %v261
  %366 = vmatprep.mubr.bf16.mxu0 %v97
  %367 = vmatmul.mubr.bf16.gmra.mrb[0].mxu0 %v96
  %v368 = vpop.f32.mrb[0].mxu0
  %v369 = vadd.f32 %v329, %v368
  %v370 = vpop.f32.mrb[0].mxu0
  %v371 = vpop.f32.mrb[0].mxu0
  %v372 = vpop.f32.mrb[0].mxu0
  %373 = vdwg.mxu0
  %374 = vst [vmem:[%s3] sm:$0xff] %v369
  // Predicated region
  $region14: #{_lambda_.77} parent=0 // pred_check
    _
  $region15: #{_lambda_.77} parent=0 // pred_check_branch
    %376 = sbr.rel (0) target = $region17
  $region16: #{_lambda_.77} parent=0 // pred_region
    _
  $region17: #{_lambda_.77} parent=0 // pred_fallthru
    _
  // Predicated region
  $region18: #{_lambda_.77} parent=0 // pred_check
    _
  $region19: #{_lambda_.77} parent=0 // pred_check_branch
    %378 = sbr.rel (0) target = $region21
  $region20: #{_lambda_.77} parent=0 // pred_region
    _
  $region21: #{_lambda_.77} parent=0 // pred_fallthru
    _

</llo_original>
